<compile_context>
chip_gen: v7x
topology: tpu7x:2x2x1
jax: 0.10.0
libtpu: 0.0.40
codegen_flags: <defaults>
</compile_context>

<pallas_src>
import functools

import jax
import jax.numpy as jnp
import numpy as np
from jax import lax
from jax.experimental import pallas as pl
from jax.experimental.pallas import tpu as pltpu

# MXU operand precision: bf16 operands + f32 accumulation is the native MXU
# path on v5e/v6e/v7x (2-4x over f32 emulation).  Set to jnp.float32 to recover
# near-exact parity with the float32 reference.
MATMUL_DTYPE = jnp.bfloat16
_VMEM_LIMIT_BYTES = 64 * 1024 * 1024   # fits v7x physical VMEM; raise on v5e/v6e.


# ------------------------- in-kernel exact GELU ----------------------------- #

_INV_SQRT2 = 0.7071067811865476


def _gelu(x):
    """Exact (erf-based) GELU, matching PyTorch F.gelu default to ~1e-6.

    erf via Abramowitz & Stegun 7.1.26 (|err| < 1.5e-7).  The divide is an EUP
    approx-reciprocal plus one Newton step (keeps VALU slots free, ~f32 accurate);
    exp also runs on the EUP.
    """
    z = x * _INV_SQRT2
    az = jnp.abs(z)
    denom = 1.0 + 0.3275911 * az
    r = pl.reciprocal(denom, approx=True)
    t = r * (2.0 - denom * r)                       # one Newton-Raphson step
    poly = ((((1.061405429 * t - 1.453152027) * t + 1.421413741) * t
             - 0.284496736) * t + 0.254829592) * t
    erf_az = 1.0 - poly * jnp.exp(-az * az)
    erf_z = jnp.where(z < 0, -erf_az, erf_az)
    return 0.5 * x * (1.0 + erf_z)


# --------------------------- in-kernel conv pieces --------------------------- #

def _zero_halo_ring(pad_ref, H, W, C):
    # Zero only the 1-pixel halo ring; the (H, W) interior is fully overwritten
    # every grid step.  Done every step (cheap, O(perimeter)) so it is also safe
    # when the "parallel" batch axis is sharded across TensorCores, each of
    # which owns its own scratch buffer.
    z_row = jnp.zeros((1, W + 2, C), jnp.float32)
    pad_ref[0:1, :, :] = z_row
    pad_ref[H + 1:H + 2, :, :] = z_row
    z_col = jnp.zeros((H, 1, C), jnp.float32)
    pad_ref[1:1 + H, 0:1, :] = z_col
    pad_ref[1:1 + H, W + 1:W + 2, :] = z_col


def _accumulate_conv3x3(pad_ref, w_ref, H, W, Cin, Cout):
    """3x3 'same' conv as 9 per-tap MXU dots accumulated in float32.

    pad_ref: (H+2, W+2, Cin) f32 VMEM scratch holding the zero-halo'd input.
    w_ref:   (9*Cin, Cout) resident weights, tap-major, MATMUL_DTYPE.
    Returns: (H*W, Cout) float32.
    """
    acc = jnp.zeros((H * W, Cout), jnp.float32)
    for dy in range(3):
        for dx in range(3):
            tap = pad_ref[dy:dy + H, dx:dx + W, :].reshape(H * W, Cin)
            wk = w_ref[(dy * 3 + dx) * Cin:(dy * 3 + dx + 1) * Cin, :]
            acc += jnp.dot(tap.astype(MATMUL_DTYPE), wk,
                           preferred_element_type=jnp.float32)
    return acc


# ------------------------------ Pallas kernels ------------------------------- #

def _residual_block_kernel(x_ref, w1_ref, b1_ref, w2_ref, b2_ref, o_ref,
                           pad_ref, *, H, W, C):
    """Fused ResidualBlock: out = x + conv1x1(gelu(conv3x3(gelu(x)))).

    The intermediate activation stays in VMEM (no HBM round trip between the
    3x3 and the 1x1 conv).
    """
    _zero_halo_ring(pad_ref, H, W, C)

    x = x_ref[...]                                   # (H, W, C) float32
    pad_ref[1:1 + H, 1:1 + W, :] = _gelu(x)

    h = _accumulate_conv3x3(pad_ref, w1_ref, H, W, C, C) + b1_ref[...]
    h = _gelu(h)
    h = jnp.dot(h.astype(MATMUL_DTYPE), w2_ref[...],
                preferred_element_type=jnp.float32) + b2_ref[...]
    o_ref[...] = (h.reshape(H, W, C) + x).astype(o_ref.dtype)


def _conv3x3_kernel(x_ref, w_ref, b_ref, o_ref, pad_ref, *, H, W, Cin, Cout,
                    gelu_in, gelu_out):
    """Fused [GELU] -> 3x3 conv (pad=1) -> +bias -> [GELU]."""
    _zero_halo_ring(pad_ref, H, W, Cin)

    x = x_ref[...]
    if gelu_in:
        x = _gelu(x)
    pad_ref[1:1 + H, 1:1 + W, :] = x

    acc = _accumulate_conv3x3(pad_ref, w_ref, H, W, Cin, Cout) + b_ref[...]
    if gelu_out:
        acc = _gelu(acc)
    o_ref[...] = acc.reshape(H, W, Cout).astype(o_ref.dtype)


# ------------------------------ call wrappers -------------------------------- #

def residual_block(x, w1, b1, w2, b2):
    """One pallas_call per ResidualBlock (3x3 + 1x1 convs fused)."""
    N, H, W, C = x.shape
    assert w1.shape == (9 * C, C) and w2.shape == (C, C)
    kernel = functools.partial(_residual_block_kernel, H=H, W=W, C=C)
    return pl.pallas_call(
        kernel,
        out_shape=jax.ShapeDtypeStruct((N, H, W, C), x.dtype),
        grid=(N,),
        in_specs=[
            pl.BlockSpec((None, H, W, C), lambda n: (n, 0, 0, 0)),
            pl.BlockSpec((9 * C, C), lambda n: (0, 0)),    # weights: resident
            pl.BlockSpec((1, C), lambda n: (0, 0)),        # bias:    resident
            pl.BlockSpec((C, C), lambda n: (0, 0)),
            pl.BlockSpec((1, C), lambda n: (0, 0)),
        ],
        out_specs=pl.BlockSpec((None, H, W, C), lambda n: (n, 0, 0, 0)),
        scratch_shapes=[pltpu.VMEM((H + 2, W + 2, C), jnp.float32)],
        compiler_params=pltpu.CompilerParams(
            dimension_semantics=("parallel",),
            vmem_limit_bytes=_VMEM_LIMIT_BYTES),
    )(x,
      w1.astype(MATMUL_DTYPE), b1.reshape(1, C).astype(jnp.float32),
      w2.astype(MATMUL_DTYPE), b2.reshape(1, C).astype(jnp.float32))


def upsample_conv3x3(x, w, b, *, gelu_in=False, gelu_out=False):
    """2x nearest upsample fused into a 3x3 conv via 4-way (row, col) parity
    weight folding.  The kernel runs a plain 3x3 conv on the ORIGINAL image and
    writes 4*Cout parity channels; interleaving them back to (2H, 2W, Cout) is
    a cheap XLA reshape/transpose outside the kernel.  Exact, including the
    zero-padding boundary."""
    N, H, W, Cin = x.shape
    Cout = w.shape[-1]
    assert w.shape == (9 * Cin, Cout)

    wt = w.reshape(3, 3, Cin, Cout)
    zr = jnp.zeros_like(wt[0:1])
    # Row parity: output row 2y+ry reads input rows {y-1, y, y+1}.
    r0 = jnp.concatenate([wt[0:1], wt[1:2] + wt[2:3], zr], axis=0)   # ry = 0
    r1 = jnp.concatenate([zr, wt[0:1] + wt[1:2], wt[2:3]], axis=0)   # ry = 1

    def col_fold(rr):                                                # rx = 0, 1
        zc = jnp.zeros_like(rr[:, 0:1])
        c0 = jnp.concatenate([rr[:, 0:1], rr[:, 1:2] + rr[:, 2:3], zc], axis=1)
        c1 = jnp.concatenate([zc, rr[:, 0:1] + rr[:, 1:2], rr[:, 2:3]], axis=1)
        return c0, c1

    w00, w01 = col_fold(r0)
    w10, w11 = col_fold(r1)
    w_fold = jnp.concatenate([w00, w01, w10, w11], axis=-1)          # (3,3,Cin,4*Cout)
    w_fold = w_fold.reshape(9 * Cin, 4 * Cout).astype(MATMUL_DTYPE)
    b_fold = jnp.tile(b, 4).reshape(1, 4 * Cout).astype(jnp.float32)
    Ck = 4 * Cout

    kernel = functools.partial(_conv3x3_kernel, H=H, W=W, Cin=Cin, Cout=Ck,
                               gelu_in=gelu_in, gelu_out=gelu_out)
    out = pl.pallas_call(
        kernel,
        out_shape=jax.ShapeDtypeStruct((N, H, W, Ck), x.dtype),
        grid=(N,),
        in_specs=[
            pl.BlockSpec((None, H, W, Cin), lambda n: (n, 0, 0, 0)),
            pl.BlockSpec((9 * Cin, Ck), lambda n: (0, 0)),   # weights: resident
            pl.BlockSpec((1, Ck), lambda n: (0, 0)),         # bias:    resident
        ],
        out_specs=pl.BlockSpec((None, H, W, Ck), lambda n: (n, 0, 0, 0)),
        scratch_shapes=[pltpu.VMEM((H + 2, W + 2, Cin), jnp.float32)],
        compiler_params=pltpu.CompilerParams(
            dimension_semantics=("parallel",),
            vmem_limit_bytes=_VMEM_LIMIT_BYTES),
    )(x, w_fold, b_fold)

    # (N, H, W, (ry, rx, Cout)) -> (N, 2H, 2W, Cout): interleave the parities.
    out = out.reshape(N, H, W, 2, 2, Cout).transpose(0, 1, 3, 2, 4, 5)
    return out.reshape(N, 2 * H, 2 * W, Cout)


# --------------------------- model (forward pass) ---------------------------- #

def decoder_forward(params, x):
    h = residual_block(x, params["rb1_w1"], params["rb1_b1"],
                       params["rb1_w2"], params["rb1_b2"])
    h = residual_block(h, params["rb2_w1"], params["rb2_b1"],
                       params["rb2_w2"], params["rb2_b2"])
    # UpsampleBlock: upsample -> conv -> gelu -> upsample -> conv (all fused).
    h = upsample_conv3x3(h, params["up_w1"], params["up_b1"], gelu_out=True)
    return upsample_conv3x3(h, params["up_w2"], params["up_b2"])


# --------------------------- pure-JAX reference ------------------------------ #

def _gelu_ref(x):
    return jax.nn.gelu(x, approximate=False)   # PyTorch F.gelu default


def _ref_conv(x, w, b, ksize, pad, compute_dtype):
    Cin = x.shape[-1]
    Cout = w.shape[-1]
    w_hwio = w.reshape(ksize, ksize, Cin, Cout)
    y = lax.conv_general_dilated(
        x.astype(compute_dtype), w_hwio.astype(compute_dtype),
        window_strides=(1, 1), padding=((pad, pad), (pad, pad)),
        dimension_numbers=("NHWC", "HWIO", "NHWC"),
        preferred_element_type=jnp.float32)
    return y + b.reshape(1, 1, 1, Cout).astype(jnp.float32)


def decoder_forward_ref(params, x, compute_dtype=jnp.float32):
    def up2(t):
        return jnp.repeat(jnp.repeat(t, 2, axis=1), 2, axis=2)

    def res_block(t, name):
        h = _gelu_ref(t)
        h = _ref_conv(h, params[f"{name}_w1"], params[f"{name}_b1"], 3, 1,
                      compute_dtype)
        h = _gelu_ref(h)
        h = _ref_conv(h, params[f"{name}_w2"], params[f"{name}_b2"], 1, 0,
                      compute_dtype)
        return h + t

    h = res_block(x, "rb1")
    h = res_block(h, "rb2")
    h = up2(h)
    h = _ref_conv(h, params["up_w1"], params["up_b1"], 3, 1, compute_dtype)
    h = _gelu_ref(h)
    h = up2(h)
    return _ref_conv(h, params["up_w2"], params["up_b2"], 3, 1, compute_dtype)


# ------------------------------ parameter init ------------------------------- #

def _init_conv(key, ksize, cin, cout):
    kw, kb = jax.random.split(key)
    fan_in = cin * ksize * ksize
    bound = 1.0 / np.sqrt(fan_in)
    w = jax.random.uniform(kw, (ksize * ksize * cin, cout), jnp.float32,
                           -bound, bound)
    b = jax.random.uniform(kb, (cout,), jnp.float32, -bound, bound)
    return w, b


def init_decoder_params(key, in_dim, out_dim):
    ks = jax.random.split(key, 6)
    p = {}
    p["rb1_w1"], p["rb1_b1"] = _init_conv(ks[0], 3, in_dim, in_dim)
    p["rb1_w2"], p["rb1_b2"] = _init_conv(ks[1], 1, in_dim, in_dim)
    p["rb2_w1"], p["rb2_b1"] = _init_conv(ks[2], 3, in_dim, in_dim)
    p["rb2_w2"], p["rb2_b2"] = _init_conv(ks[3], 1, in_dim, in_dim)
    p["up_w1"], p["up_b1"] = _init_conv(ks[4], 3, in_dim, in_dim)
    p["up_w2"], p["up_b2"] = _init_conv(ks[5], 3, in_dim, out_dim)
    return p


# ----------------------------------- main ------------------------------------ #

if __name__ == "__main__":
    IN_DIM, OUT_DIM = 32, 3          # small stand-in for the default (256, 3)
    N, H, W = 2, 8, 8

    key = jax.random.PRNGKey(0)
    kp, kx = jax.random.split(key)
    params = init_decoder_params(kp, IN_DIM, OUT_DIM)
    x = jax.random.normal(kx, (N, H, W, IN_DIM), jnp.float32)   # NHWC

    fwd = jax.jit(decoder_forward)
    out = fwd(params, x)
    jax.block_until_ready(out)
    assert out.shape == (N, 4 * H, 4 * W, OUT_DIM), out.shape

    # Structural check: a reference computed with the SAME numerics as the
    # kernel (bf16 operands, f32 accumulation).  Catches indexing / fold /
    # interleave / fusion bugs at tight tolerance.
    ref_matched = decoder_forward_ref(params, x, compute_dtype=MATMUL_DTYPE)
    err_matched = float(jnp.max(jnp.abs(out - ref_matched)))

    # End-to-end check against the pure float32 reference (slack accounts for
    # bf16 MXU operand rounding across the 6 conv layers).
    ref_f32 = decoder_forward_ref(params, x, compute_dtype=jnp.float32)
    err_f32 = float(jnp.max(jnp.abs(out - ref_f32)))

    assert err_matched < 2e-2, f"matched-numerics max abs error too large: {err_matched}"
    assert err_f32 < 6e-2, f"float32-reference max abs error too large: {err_f32}"

    print("KERNEL_OK")
</pallas_src>

<mosaic_0001>
module attributes {stable_mosaic.version = 11 : i64} {
  func.func @_residual_block_kernel(%arg0: i32, %arg1: memref<1x8x8x32xf32, #tpu.memory_space<vmem>>, %arg2: memref<288x32xbf16, #tpu.memory_space<vmem>>, %arg3: memref<1x32xf32, #tpu.memory_space<vmem>>, %arg4: memref<32x32xbf16, #tpu.memory_space<vmem>>, %arg5: memref<1x32xf32, #tpu.memory_space<vmem>>, %arg6: memref<1x8x8x32xf32, #tpu.memory_space<vmem>>, %arg7: memref<10x10x32xf32, #tpu.memory_space<vmem>>) attributes {dimension_semantics = [#tpu.dimension_semantics<parallel>], iteration_bounds = array<i64: 2>, scalar_prefetch = 0 : i64, scratch_operands = 1 : i64, tpu.core_type = #tpu.core_type<tc>, window_params = [{transform_indices = @transform_0, window_bounds = array<i64: 1, 8, 8, 32>}, {pipeline_mode = #tpu.pipeline_mode<synchronous>, transform_indices = @transform_1, window_bounds = array<i64: 288, 32>}, {pipeline_mode = #tpu.pipeline_mode<synchronous>, transform_indices = @transform_2, window_bounds = array<i64: 1, 32>}, {pipeline_mode = #tpu.pipeline_mode<synchronous>, transform_indices = @transform_3, window_bounds = array<i64: 32, 32>}, {pipeline_mode = #tpu.pipeline_mode<synchronous>, transform_indices = @transform_4, window_bounds = array<i64: 1, 32>}, {transform_indices = @transform_5, window_bounds = array<i64: 1, 8, 8, 32>}]} {
    %cst = arith.constant 0.000000e+00 : f32
    %0 = vector.broadcast %cst : f32 to vector<1x10x32xf32>
    %c0 = arith.constant 0 : index
    %c0_0 = arith.constant 0 : index
    %c0_1 = arith.constant 0 : index
    %1 = vector.load %arg7[%c0, %c0_0, %c0_1] : memref<10x10x32xf32, #tpu.memory_space<vmem>>, vector<1x10x32xf32>
    tpu.vector_store %arg7[%c0, %c0_0, %c0_1], %0 {strides = array<i32>} : memref<10x10x32xf32, #tpu.memory_space<vmem>>, vector<1x10x32xf32>,
    %c9 = arith.constant 9 : index
    %c0_2 = arith.constant 0 : index
    %c0_3 = arith.constant 0 : index
    %2 = vector.load %arg7[%c9, %c0_2, %c0_3] : memref<10x10x32xf32, #tpu.memory_space<vmem>>, vector<1x10x32xf32>
    tpu.vector_store %arg7[%c9, %c0_2, %c0_3], %0 {strides = array<i32>} : memref<10x10x32xf32, #tpu.memory_space<vmem>>, vector<1x10x32xf32>,
    %cst_4 = arith.constant 0.000000e+00 : f32
    %3 = vector.broadcast %cst_4 : f32 to vector<8x1x32xf32>
    %c1 = arith.constant 1 : index
    %c0_5 = arith.constant 0 : index
    %c0_6 = arith.constant 0 : index
    %4 = vector.load %arg7[%c1, %c0_5, %c0_6] : memref<10x10x32xf32, #tpu.memory_space<vmem>>, vector<8x1x32xf32>
    tpu.vector_store %arg7[%c1, %c0_5, %c0_6], %3 {strides = array<i32>} : memref<10x10x32xf32, #tpu.memory_space<vmem>>, vector<8x1x32xf32>,
    %c1_7 = arith.constant 1 : index
    %c9_8 = arith.constant 9 : index
    %c0_9 = arith.constant 0 : index
    %5 = vector.load %arg7[%c1_7, %c9_8, %c0_9] : memref<10x10x32xf32, #tpu.memory_space<vmem>>, vector<8x1x32xf32>
    tpu.vector_store %arg7[%c1_7, %c9_8, %c0_9], %3 {strides = array<i32>} : memref<10x10x32xf32, #tpu.memory_space<vmem>>, vector<8x1x32xf32>,
    %c0_10 = arith.constant 0 : index
    %c0_11 = arith.constant 0 : index
    %c0_12 = arith.constant 0 : index
    %c0_13 = arith.constant 0 : index
    %6 = vector.load %arg1[%c0_10, %c0_11, %c0_12, %c0_13] : memref<1x8x8x32xf32, #tpu.memory_space<vmem>>, vector<1x8x8x32xf32>
    %7 = vector.shape_cast %6 : vector<1x8x8x32xf32> to vector<8x8x32xf32>
    %cst_14 = arith.constant 0.707106769 : f32
    %8 = vector.broadcast %cst_14 : f32 to vector<8x8x32xf32>
    %9 = arith.mulf %7, %8 : vector<8x8x32xf32>
    %10 = math.absf %9 : vector<8x8x32xf32>
    %cst_15 = arith.constant 0.327591091 : f32
    %11 = vector.broadcast %cst_15 : f32 to vector<8x8x32xf32>
    %12 = arith.mulf %11, %10 : vector<8x8x32xf32>
    %cst_16 = arith.constant 1.000000e+00 : f32
    %13 = vector.broadcast %cst_16 : f32 to vector<8x8x32xf32>
    %14 = arith.addf %13, %12 : vector<8x8x32xf32>
    %15 = tpu.reciprocal %14 {approx = true} : vector<8x8x32xf32> -> vector<8x8x32xf32>
    %16 = arith.mulf %14, %15 : vector<8x8x32xf32>
    %cst_17 = arith.constant 2.000000e+00 : f32
    %17 = vector.broadcast %cst_17 : f32 to vector<8x8x32xf32>
    %18 = arith.subf %17, %16 : vector<8x8x32xf32>
    %19 = arith.mulf %15, %18 : vector<8x8x32xf32>
    %cst_18 = arith.constant 1.06140542 : f32
    %20 = vector.broadcast %cst_18 : f32 to vector<8x8x32xf32>
    %21 = arith.mulf %20, %19 : vector<8x8x32xf32>
    %cst_19 = arith.constant 1.45315206 : f32
    %22 = vector.broadcast %cst_19 : f32 to vector<8x8x32xf32>
    %23 = arith.subf %21, %22 : vector<8x8x32xf32>
    %24 = arith.mulf %23, %19 : vector<8x8x32xf32>
    %cst_20 = arith.constant 1.42141378 : f32
    %25 = vector.broadcast %cst_20 : f32 to vector<8x8x32xf32>
    %26 = arith.addf %24, %25 : vector<8x8x32xf32>
    %27 = arith.mulf %26, %19 : vector<8x8x32xf32>
    %cst_21 = arith.constant 0.284496725 : f32
    %28 = vector.broadcast %cst_21 : f32 to vector<8x8x32xf32>
    %29 = arith.subf %27, %28 : vector<8x8x32xf32>
    %30 = arith.mulf %29, %19 : vector<8x8x32xf32>
    %cst_22 = arith.constant 0.254829586 : f32
    %31 = vector.broadcast %cst_22 : f32 to vector<8x8x32xf32>
    %32 = arith.addf %30, %31 : vector<8x8x32xf32>
    %33 = arith.mulf %32, %19 : vector<8x8x32xf32>
    %cst_23 = arith.constant 0.000000e+00 : f32
    %34 = vector.broadcast %cst_23 : f32 to vector<8x8x32xf32>
    %35 = arith.subf %34, %10 : vector<8x8x32xf32>
    %36 = arith.mulf %35, %10 : vector<8x8x32xf32>
    %37 = math.exp %36 : vector<8x8x32xf32>
    %38 = arith.mulf %33, %37 : vector<8x8x32xf32>
    %cst_24 = arith.constant 1.000000e+00 : f32
    %39 = vector.broadcast %cst_24 : f32 to vector<8x8x32xf32>
    %40 = arith.subf %39, %38 : vector<8x8x32xf32>
    %cst_25 = arith.constant 0.000000e+00 : f32
    %41 = vector.broadcast %cst_25 : f32 to vector<8x8x32xf32>
    %42 = arith.cmpf olt, %9, %41 : vector<8x8x32xf32>
    %cst_26 = arith.constant 0.000000e+00 : f32
    %43 = vector.broadcast %cst_26 : f32 to vector<8x8x32xf32>
    %44 = arith.subf %43, %40 : vector<8x8x32xf32>
    %45 = arith.select %42, %44, %40 : vector<8x8x32xi1>, vector<8x8x32xf32>
    %cst_27 = arith.constant 5.000000e-01 : f32
    %46 = vector.broadcast %cst_27 : f32 to vector<8x8x32xf32>
    %47 = arith.mulf %46, %7 : vector<8x8x32xf32>
    %cst_28 = arith.constant 1.000000e+00 : f32
    %48 = vector.broadcast %cst_28 : f32 to vector<8x8x32xf32>
    %49 = arith.addf %48, %45 : vector<8x8x32xf32>
    %50 = arith.mulf %47, %49 : vector<8x8x32xf32>
    %c1_29 = arith.constant 1 : index
    %c1_30 = arith.constant 1 : index
    %c0_31 = arith.constant 0 : index
    %51 = vector.load %arg7[%c1_29, %c1_30, %c0_31] : memref<10x10x32xf32, #tpu.memory_space<vmem>>, vector<8x8x32xf32>
    tpu.vector_store %arg7[%c1_29, %c1_30, %c0_31], %50 {strides = array<i32>} : memref<10x10x32xf32, #tpu.memory_space<vmem>>, vector<8x8x32xf32>,
    %cst_32 = arith.constant 0.000000e+00 : f32
    %52 = vector.broadcast %cst_32 : f32 to vector<64x32xf32>
    %c0_33 = arith.constant 0 : index
    %c0_34 = arith.constant 0 : index
    %c0_35 = arith.constant 0 : index
    %53 = vector.load %arg7[%c0_33, %c0_34, %c0_35] : memref<10x10x32xf32, #tpu.memory_space<vmem>>, vector<8x8x32xf32>
    %54 = vector.shape_cast %53 : vector<8x8x32xf32> to vector<64x32xf32>
    %c0_36 = arith.constant 0 : index
    %c0_37 = arith.constant 0 : index
    %55 = vector.load %arg2[%c0_36, %c0_37] : memref<288x32xbf16, #tpu.memory_space<vmem>>, vector<32x32xbf16>
    %56 = arith.truncf %54 : vector<64x32xf32> to vector<64x32xbf16>
    %cst_38 = arith.constant dense<0.000000e+00> : vector<64x32xf32>
    %57 = tpu.matmul %56, %55, %cst_38 {dimension_numbers = #tpu.dot_dimension_numbers<[1], [0], [0], [1], [0, 0, 1, 1], [], []>} : vector<64x32xbf16>, vector<32x32xbf16>, vector<64x32xf32> -> vector<64x32xf32>
    %58 = arith.addf %52, %57 : vector<64x32xf32>
    %c0_39 = arith.constant 0 : index
    %c1_40 = arith.constant 1 : index
    %c0_41 = arith.constant 0 : index
    %59 = vector.load %arg7[%c0_39, %c1_40, %c0_41] : memref<10x10x32xf32, #tpu.memory_space<vmem>>, vector<8x8x32xf32>
    %60 = vector.shape_cast %59 : vector<8x8x32xf32> to vector<64x32xf32>
    %c32 = arith.constant 32 : index
    %c0_42 = arith.constant 0 : index
    %61 = vector.load %arg2[%c32, %c0_42] : memref<288x32xbf16, #tpu.memory_space<vmem>>, vector<32x32xbf16>
    %62 = arith.truncf %60 : vector<64x32xf32> to vector<64x32xbf16>
    %cst_43 = arith.constant dense<0.000000e+00> : vector<64x32xf32>
    %63 = tpu.matmul %62, %61, %cst_43 {dimension_numbers = #tpu.dot_dimension_numbers<[1], [0], [0], [1], [0, 0, 1, 1], [], []>} : vector<64x32xbf16>, vector<32x32xbf16>, vector<64x32xf32> -> vector<64x32xf32>
    %64 = arith.addf %58, %63 : vector<64x32xf32>
    %c0_44 = arith.constant 0 : index
    %c2 = arith.constant 2 : index
    %c0_45 = arith.constant 0 : index
    %65 = vector.load %arg7[%c0_44, %c2, %c0_45] : memref<10x10x32xf32, #tpu.memory_space<vmem>>, vector<8x8x32xf32>
    %66 = vector.shape_cast %65 : vector<8x8x32xf32> to vector<64x32xf32>
    %c64 = arith.constant 64 : index
    %c0_46 = arith.constant 0 : index
    %67 = vector.load %arg2[%c64, %c0_46] : memref<288x32xbf16, #tpu.memory_space<vmem>>, vector<32x32xbf16>
    %68 = arith.truncf %66 : vector<64x32xf32> to vector<64x32xbf16>
    %cst_47 = arith.constant dense<0.000000e+00> : vector<64x32xf32>
    %69 = tpu.matmul %68, %67, %cst_47 {dimension_numbers = #tpu.dot_dimension_numbers<[1], [0], [0], [1], [0, 0, 1, 1], [], []>} : vector<64x32xbf16>, vector<32x32xbf16>, vector<64x32xf32> -> vector<64x32xf32>
    %70 = arith.addf %64, %69 : vector<64x32xf32>
    %c1_48 = arith.constant 1 : index
    %c0_49 = arith.constant 0 : index
    %c0_50 = arith.constant 0 : index
    %71 = vector.load %arg7[%c1_48, %c0_49, %c0_50] : memref<10x10x32xf32, #tpu.memory_space<vmem>>, vector<8x8x32xf32>
    %72 = vector.shape_cast %71 : vector<8x8x32xf32> to vector<64x32xf32>
    %c96 = arith.constant 96 : index
    %c0_51 = arith.constant 0 : index
    %73 = vector.load %arg2[%c96, %c0_51] : memref<288x32xbf16, #tpu.memory_space<vmem>>, vector<32x32xbf16>
    %74 = arith.truncf %72 : vector<64x32xf32> to vector<64x32xbf16>
    %cst_52 = arith.constant dense<0.000000e+00> : vector<64x32xf32>
    %75 = tpu.matmul %74, %73, %cst_52 {dimension_numbers = #tpu.dot_dimension_numbers<[1], [0], [0], [1], [0, 0, 1, 1], [], []>} : vector<64x32xbf16>, vector<32x32xbf16>, vector<64x32xf32> -> vector<64x32xf32>
    %76 = arith.addf %70, %75 : vector<64x32xf32>
    %c1_53 = arith.constant 1 : index
    %c1_54 = arith.constant 1 : index
    %c0_55 = arith.constant 0 : index
    %77 = vector.load %arg7[%c1_53, %c1_54, %c0_55] : memref<10x10x32xf32, #tpu.memory_space<vmem>>, vector<8x8x32xf32>
    %78 = vector.shape_cast %77 : vector<8x8x32xf32> to vector<64x32xf32>
    %c128 = arith.constant 128 : index
    %c0_56 = arith.constant 0 : index
    %79 = vector.load %arg2[%c128, %c0_56] : memref<288x32xbf16, #tpu.memory_space<vmem>>, vector<32x32xbf16>
    %80 = arith.truncf %78 : vector<64x32xf32> to vector<64x32xbf16>
    %cst_57 = arith.constant dense<0.000000e+00> : vector<64x32xf32>
    %81 = tpu.matmul %80, %79, %cst_57 {dimension_numbers = #tpu.dot_dimension_numbers<[1], [0], [0], [1], [0, 0, 1, 1], [], []>} : vector<64x32xbf16>, vector<32x32xbf16>, vector<64x32xf32> -> vector<64x32xf32>
    %82 = arith.addf %76, %81 : vector<64x32xf32>
    %c1_58 = arith.constant 1 : index
    %c2_59 = arith.constant 2 : index
    %c0_60 = arith.constant 0 : index
    %83 = vector.load %arg7[%c1_58, %c2_59, %c0_60] : memref<10x10x32xf32, #tpu.memory_space<vmem>>, vector<8x8x32xf32>
    %84 = vector.shape_cast %83 : vector<8x8x32xf32> to vector<64x32xf32>
    %c160 = arith.constant 160 : index
    %c0_61 = arith.constant 0 : index
    %85 = vector.load %arg2[%c160, %c0_61] : memref<288x32xbf16, #tpu.memory_space<vmem>>, vector<32x32xbf16>
    %86 = arith.truncf %84 : vector<64x32xf32> to vector<64x32xbf16>
    %cst_62 = arith.constant dense<0.000000e+00> : vector<64x32xf32>
    %87 = tpu.matmul %86, %85, %cst_62 {dimension_numbers = #tpu.dot_dimension_numbers<[1], [0], [0], [1], [0, 0, 1, 1], [], []>} : vector<64x32xbf16>, vector<32x32xbf16>, vector<64x32xf32> -> vector<64x32xf32>
    %88 = arith.addf %82, %87 : vector<64x32xf32>
    %c2_63 = arith.constant 2 : index
    %c0_64 = arith.constant 0 : index
    %c0_65 = arith.constant 0 : index
    %89 = vector.load %arg7[%c2_63, %c0_64, %c0_65] : memref<10x10x32xf32, #tpu.memory_space<vmem>>, vector<8x8x32xf32>
    %90 = vector.shape_cast %89 : vector<8x8x32xf32> to vector<64x32xf32>
    %c192 = arith.constant 192 : index
    %c0_66 = arith.constant 0 : index
    %91 = vector.load %arg2[%c192, %c0_66] : memref<288x32xbf16, #tpu.memory_space<vmem>>, vector<32x32xbf16>
    %92 = arith.truncf %90 : vector<64x32xf32> to vector<64x32xbf16>
    %cst_67 = arith.constant dense<0.000000e+00> : vector<64x32xf32>
    %93 = tpu.matmul %92, %91, %cst_67 {dimension_numbers = #tpu.dot_dimension_numbers<[1], [0], [0], [1], [0, 0, 1, 1], [], []>} : vector<64x32xbf16>, vector<32x32xbf16>, vector<64x32xf32> -> vector<64x32xf32>
    %94 = arith.addf %88, %93 : vector<64x32xf32>
    %c2_68 = arith.constant 2 : index
    %c1_69 = arith.constant 1 : index
    %c0_70 = arith.constant 0 : index
    %95 = vector.load %arg7[%c2_68, %c1_69, %c0_70] : memref<10x10x32xf32, #tpu.memory_space<vmem>>, vector<8x8x32xf32>
    %96 = vector.shape_cast %95 : vector<8x8x32xf32> to vector<64x32xf32>
    %c224 = arith.constant 224 : index
    %c0_71 = arith.constant 0 : index
    %97 = vector.load %arg2[%c224, %c0_71] : memref<288x32xbf16, #tpu.memory_space<vmem>>, vector<32x32xbf16>
    %98 = arith.truncf %96 : vector<64x32xf32> to vector<64x32xbf16>
    %cst_72 = arith.constant dense<0.000000e+00> : vector<64x32xf32>
    %99 = tpu.matmul %98, %97, %cst_72 {dimension_numbers = #tpu.dot_dimension_numbers<[1], [0], [0], [1], [0, 0, 1, 1], [], []>} : vector<64x32xbf16>, vector<32x32xbf16>, vector<64x32xf32> -> vector<64x32xf32>
    %100 = arith.addf %94, %99 : vector<64x32xf32>
    %c2_73 = arith.constant 2 : index
    %c2_74 = arith.constant 2 : index
    %c0_75 = arith.constant 0 : index
    %101 = vector.load %arg7[%c2_73, %c2_74, %c0_75] : memref<10x10x32xf32, #tpu.memory_space<vmem>>, vector<8x8x32xf32>
    %102 = vector.shape_cast %101 : vector<8x8x32xf32> to vector<64x32xf32>
    %c256 = arith.constant 256 : index
    %c0_76 = arith.constant 0 : index
    %103 = vector.load %arg2[%c256, %c0_76] : memref<288x32xbf16, #tpu.memory_space<vmem>>, vector<32x32xbf16>
    %104 = arith.truncf %102 : vector<64x32xf32> to vector<64x32xbf16>
    %cst_77 = arith.constant dense<0.000000e+00> : vector<64x32xf32>
    %105 = tpu.matmul %104, %103, %cst_77 {dimension_numbers = #tpu.dot_dimension_numbers<[1], [0], [0], [1], [0, 0, 1, 1], [], []>} : vector<64x32xbf16>, vector<32x32xbf16>, vector<64x32xf32> -> vector<64x32xf32>
    %106 = arith.addf %100, %105 : vector<64x32xf32>
    %c0_78 = arith.constant 0 : index
    %c0_79 = arith.constant 0 : index
    %107 = vector.load %arg3[%c0_78, %c0_79] : memref<1x32xf32, #tpu.memory_space<vmem>>, vector<1x32xf32>
    %108 = vector.broadcast %107 : vector<1x32xf32> to vector<64x32xf32>
    %109 = arith.addf %106, %108 : vector<64x32xf32>
    %cst_80 = arith.constant 0.707106769 : f32
    %110 = vector.broadcast %cst_80 : f32 to vector<64x32xf32>
    %111 = arith.mulf %109, %110 : vector<64x32xf32>
    %112 = math.absf %111 : vector<64x32xf32>
    %cst_81 = arith.constant 0.327591091 : f32
    %113 = vector.broadcast %cst_81 : f32 to vector<64x32xf32>
    %114 = arith.mulf %113, %112 : vector<64x32xf32>
    %cst_82 = arith.constant 1.000000e+00 : f32
    %115 = vector.broadcast %cst_82 : f32 to vector<64x32xf32>
    %116 = arith.addf %115, %114 : vector<64x32xf32>
    %117 = tpu.reciprocal %116 {approx = true} : vector<64x32xf32> -> vector<64x32xf32>
    %118 = arith.mulf %116, %117 : vector<64x32xf32>
    %cst_83 = arith.constant 2.000000e+00 : f32
    %119 = vector.broadcast %cst_83 : f32 to vector<64x32xf32>
    %120 = arith.subf %119, %118 : vector<64x32xf32>
    %121 = arith.mulf %117, %120 : vector<64x32xf32>
    %cst_84 = arith.constant 1.06140542 : f32
    %122 = vector.broadcast %cst_84 : f32 to vector<64x32xf32>
    %123 = arith.mulf %122, %121 : vector<64x32xf32>
    %cst_85 = arith.constant 1.45315206 : f32
    %124 = vector.broadcast %cst_85 : f32 to vector<64x32xf32>
    %125 = arith.subf %123, %124 : vector<64x32xf32>
    %126 = arith.mulf %125, %121 : vector<64x32xf32>
    %cst_86 = arith.constant 1.42141378 : f32
    %127 = vector.broadcast %cst_86 : f32 to vector<64x32xf32>
    %128 = arith.addf %126, %127 : vector<64x32xf32>
    %129 = arith.mulf %128, %121 : vector<64x32xf32>
    %cst_87 = arith.constant 0.284496725 : f32
    %130 = vector.broadcast %cst_87 : f32 to vector<64x32xf32>
    %131 = arith.subf %129, %130 : vector<64x32xf32>
    %132 = arith.mulf %131, %121 : vector<64x32xf32>
    %cst_88 = arith.constant 0.254829586 : f32
    %133 = vector.broadcast %cst_88 : f32 to vector<64x32xf32>
    %134 = arith.addf %132, %133 : vector<64x32xf32>
    %135 = arith.mulf %134, %121 : vector<64x32xf32>
    %cst_89 = arith.constant 0.000000e+00 : f32
    %136 = vector.broadcast %cst_89 : f32 to vector<64x32xf32>
    %137 = arith.subf %136, %112 : vector<64x32xf32>
    %138 = arith.mulf %137, %112 : vector<64x32xf32>
    %139 = math.exp %138 : vector<64x32xf32>
    %140 = arith.mulf %135, %139 : vector<64x32xf32>
    %cst_90 = arith.constant 1.000000e+00 : f32
    %141 = vector.broadcast %cst_90 : f32 to vector<64x32xf32>
    %142 = arith.subf %141, %140 : vector<64x32xf32>
    %cst_91 = arith.constant 0.000000e+00 : f32
    %143 = vector.broadcast %cst_91 : f32 to vector<64x32xf32>
    %144 = arith.cmpf olt, %111, %143 : vector<64x32xf32>
    %cst_92 = arith.constant 0.000000e+00 : f32
    %145 = vector.broadcast %cst_92 : f32 to vector<64x32xf32>
    %146 = arith.subf %145, %142 : vector<64x32xf32>
    %147 = arith.select %144, %146, %142 : vector<64x32xi1>, vector<64x32xf32>
    %cst_93 = arith.constant 5.000000e-01 : f32
    %148 = vector.broadcast %cst_93 : f32 to vector<64x32xf32>
    %149 = arith.mulf %148, %109 : vector<64x32xf32>
    %cst_94 = arith.constant 1.000000e+00 : f32
    %150 = vector.broadcast %cst_94 : f32 to vector<64x32xf32>
    %151 = arith.addf %150, %147 : vector<64x32xf32>
    %152 = arith.mulf %149, %151 : vector<64x32xf32>
    %153 = arith.truncf %152 : vector<64x32xf32> to vector<64x32xbf16>
    %c0_95 = arith.constant 0 : index
    %c0_96 = arith.constant 0 : index
    %154 = vector.load %arg4[%c0_95, %c0_96] : memref<32x32xbf16, #tpu.memory_space<vmem>>, vector<32x32xbf16>
    %cst_97 = arith.constant dense<0.000000e+00> : vector<64x32xf32>
    %155 = tpu.matmul %153, %154, %cst_97 {dimension_numbers = #tpu.dot_dimension_numbers<[1], [0], [0], [1], [0, 0, 1, 1], [], []>} : vector<64x32xbf16>, vector<32x32xbf16>, vector<64x32xf32> -> vector<64x32xf32>
    %c0_98 = arith.constant 0 : index
    %c0_99 = arith.constant 0 : index
    %156 = vector.load %arg5[%c0_98, %c0_99] : memref<1x32xf32, #tpu.memory_space<vmem>>, vector<1x32xf32>
    %157 = vector.broadcast %156 : vector<1x32xf32> to vector<64x32xf32>
    %158 = arith.addf %155, %157 : vector<64x32xf32>
    %159 = vector.shape_cast %158 : vector<64x32xf32> to vector<8x8x32xf32>
    %160 = arith.addf %159, %7 : vector<8x8x32xf32>
    %c0_100 = arith.constant 0 : index
    %c0_101 = arith.constant 0 : index
    %c0_102 = arith.constant 0 : index
    %c0_103 = arith.constant 0 : index
    %161 = vector.load %arg6[%c0_100, %c0_101, %c0_102, %c0_103] : memref<1x8x8x32xf32, #tpu.memory_space<vmem>>, vector<1x8x8x32xf32>
    %162 = vector.shape_cast %161 : vector<1x8x8x32xf32> to vector<8x8x32xf32>
    %163 = vector.shape_cast %160 : vector<8x8x32xf32> to vector<1x8x8x32xf32>
    tpu.vector_store %arg6[%c0_100, %c0_101, %c0_102, %c0_103], %163 {strides = array<i32>} : memref<1x8x8x32xf32, #tpu.memory_space<vmem>>, vector<1x8x8x32xf32>,
    return
  }
  func.func @transform_0(%arg0: i32) -> (i32, i32, i32, i32) {
    %c0_i32 = arith.constant 0 : i32
    %c0_i32_0 = arith.constant 0 : i32
    %c0_i32_1 = arith.constant 0 : i32
    %c0_i32_2 = arith.constant 0 : i32
    return %arg0, %c0_i32, %c0_i32_0, %c0_i32_1 : i32, i32, i32, i32
  }
  func.func @transform_1(%arg0: i32) -> (i32, i32) {
    %c0_i32 = arith.constant 0 : i32
    %c0_i32_0 = arith.constant 0 : i32
    %c0_i32_1 = arith.constant 0 : i32
    return %c0_i32, %c0_i32_0 : i32, i32
  }
  func.func @transform_2(%arg0: i32) -> (i32, i32) {
    %c0_i32 = arith.constant 0 : i32
    %c0_i32_0 = arith.constant 0 : i32
    %c0_i32_1 = arith.constant 0 : i32
    return %c0_i32, %c0_i32_0 : i32, i32
  }
  func.func @transform_3(%arg0: i32) -> (i32, i32) {
    %c0_i32 = arith.constant 0 : i32
    %c0_i32_0 = arith.constant 0 : i32
    %c0_i32_1 = arith.constant 0 : i32
    return %c0_i32, %c0_i32_0 : i32, i32
  }
  func.func @transform_4(%arg0: i32) -> (i32, i32) {
    %c0_i32 = arith.constant 0 : i32
    %c0_i32_0 = arith.constant 0 : i32
    %c0_i32_1 = arith.constant 0 : i32
    return %c0_i32, %c0_i32_0 : i32, i32
  }
  func.func @transform_5(%arg0: i32) -> (i32, i32, i32, i32) {
    %c0_i32 = arith.constant 0 : i32
    %c0_i32_0 = arith.constant 0 : i32
    %c0_i32_1 = arith.constant 0 : i32
    %c0_i32_2 = arith.constant 0 : i32
    return %arg0, %c0_i32, %c0_i32_0, %c0_i32_1 : i32, i32, i32, i32
  }
}

module attributes {stable_mosaic.version = 11 : i64} {
  func.func @_conv3x3_kernel(%arg0: i32, %arg1: memref<1x8x8x32xf32, #tpu.memory_space<vmem>>, %arg2: memref<288x128xbf16, #tpu.memory_space<vmem>>, %arg3: memref<1x128xf32, #tpu.memory_space<vmem>>, %arg4: memref<1x8x8x128xf32, #tpu.memory_space<vmem>>, %arg5: memref<10x10x32xf32, #tpu.memory_space<vmem>>) attributes {dimension_semantics = [#tpu.dimension_semantics<parallel>], iteration_bounds = array<i64: 2>, scalar_prefetch = 0 : i64, scratch_operands = 1 : i64, tpu.core_type = #tpu.core_type<tc>, window_params = [{transform_indices = @transform_0, window_bounds = array<i64: 1, 8, 8, 32>}, {pipeline_mode = #tpu.pipeline_mode<synchronous>, transform_indices = @transform_1, window_bounds = array<i64: 288, 128>}, {pipeline_mode = #tpu.pipeline_mode<synchronous>, transform_indices = @transform_2, window_bounds = array<i64: 1, 128>}, {transform_indices = @transform_3, window_bounds = array<i64: 1, 8, 8, 128>}]} {
    %cst = arith.constant 0.000000e+00 : f32
    %0 = vector.broadcast %cst : f32 to vector<1x10x32xf32>
    %c0 = arith.constant 0 : index
    %c0_0 = arith.constant 0 : index
    %c0_1 = arith.constant 0 : index
    %1 = vector.load %arg5[%c0, %c0_0, %c0_1] : memref<10x10x32xf32, #tpu.memory_space<vmem>>, vector<1x10x32xf32>
    tpu.vector_store %arg5[%c0, %c0_0, %c0_1], %0 {strides = array<i32>} : memref<10x10x32xf32, #tpu.memory_space<vmem>>, vector<1x10x32xf32>,
    %c9 = arith.constant 9 : index
    %c0_2 = arith.constant 0 : index
    %c0_3 = arith.constant 0 : index
    %2 = vector.load %arg5[%c9, %c0_2, %c0_3] : memref<10x10x32xf32, #tpu.memory_space<vmem>>, vector<1x10x32xf32>
    tpu.vector_store %arg5[%c9, %c0_2, %c0_3], %0 {strides = array<i32>} : memref<10x10x32xf32, #tpu.memory_space<vmem>>, vector<1x10x32xf32>,
    %cst_4 = arith.constant 0.000000e+00 : f32
    %3 = vector.broadcast %cst_4 : f32 to vector<8x1x32xf32>
    %c1 = arith.constant 1 : index
    %c0_5 = arith.constant 0 : index
    %c0_6 = arith.constant 0 : index
    %4 = vector.load %arg5[%c1, %c0_5, %c0_6] : memref<10x10x32xf32, #tpu.memory_space<vmem>>, vector<8x1x32xf32>
    tpu.vector_store %arg5[%c1, %c0_5, %c0_6], %3 {strides = array<i32>} : memref<10x10x32xf32, #tpu.memory_space<vmem>>, vector<8x1x32xf32>,
    %c1_7 = arith.constant 1 : index
    %c9_8 = arith.constant 9 : index
    %c0_9 = arith.constant 0 : index
    %5 = vector.load %arg5[%c1_7, %c9_8, %c0_9] : memref<10x10x32xf32, #tpu.memory_space<vmem>>, vector<8x1x32xf32>
    tpu.vector_store %arg5[%c1_7, %c9_8, %c0_9], %3 {strides = array<i32>} : memref<10x10x32xf32, #tpu.memory_space<vmem>>, vector<8x1x32xf32>,
    %c0_10 = arith.constant 0 : index
    %c0_11 = arith.constant 0 : index
    %c0_12 = arith.constant 0 : index
    %c0_13 = arith.constant 0 : index
    %6 = vector.load %arg1[%c0_10, %c0_11, %c0_12, %c0_13] : memref<1x8x8x32xf32, #tpu.memory_space<vmem>>, vector<1x8x8x32xf32>
    %7 = vector.shape_cast %6 : vector<1x8x8x32xf32> to vector<8x8x32xf32>
    %c1_14 = arith.constant 1 : index
    %c1_15 = arith.constant 1 : index
    %c0_16 = arith.constant 0 : index
    %8 = vector.load %arg5[%c1_14, %c1_15, %c0_16] : memref<10x10x32xf32, #tpu.memory_space<vmem>>, vector<8x8x32xf32>
    tpu.vector_store %arg5[%c1_14, %c1_15, %c0_16], %7 {strides = array<i32>} : memref<10x10x32xf32, #tpu.memory_space<vmem>>, vector<8x8x32xf32>,
    %cst_17 = arith.constant 0.000000e+00 : f32
    %9 = vector.broadcast %cst_17 : f32 to vector<64x128xf32>
    %c0_18 = arith.constant 0 : index
    %c0_19 = arith.constant 0 : index
    %c0_20 = arith.constant 0 : index
    %10 = vector.load %arg5[%c0_18, %c0_19, %c0_20] : memref<10x10x32xf32, #tpu.memory_space<vmem>>, vector<8x8x32xf32>
    %11 = vector.shape_cast %10 : vector<8x8x32xf32> to vector<64x32xf32>
    %c0_21 = arith.constant 0 : index
    %c0_22 = arith.constant 0 : index
    %12 = vector.load %arg2[%c0_21, %c0_22] : memref<288x128xbf16, #tpu.memory_space<vmem>>, vector<32x128xbf16>
    %13 = arith.truncf %11 : vector<64x32xf32> to vector<64x32xbf16>
    %cst_23 = arith.constant dense<0.000000e+00> : vector<64x128xf32>
    %14 = tpu.matmul %13, %12, %cst_23 {dimension_numbers = #tpu.dot_dimension_numbers<[1], [0], [0], [1], [0, 0, 1, 1], [], []>} : vector<64x32xbf16>, vector<32x128xbf16>, vector<64x128xf32> -> vector<64x128xf32>
    %15 = arith.addf %9, %14 : vector<64x128xf32>
    %c0_24 = arith.constant 0 : index
    %c1_25 = arith.constant 1 : index
    %c0_26 = arith.constant 0 : index
    %16 = vector.load %arg5[%c0_24, %c1_25, %c0_26] : memref<10x10x32xf32, #tpu.memory_space<vmem>>, vector<8x8x32xf32>
    %17 = vector.shape_cast %16 : vector<8x8x32xf32> to vector<64x32xf32>
    %c32 = arith.constant 32 : index
    %c0_27 = arith.constant 0 : index
    %18 = vector.load %arg2[%c32, %c0_27] : memref<288x128xbf16, #tpu.memory_space<vmem>>, vector<32x128xbf16>
    %19 = arith.truncf %17 : vector<64x32xf32> to vector<64x32xbf16>
    %cst_28 = arith.constant dense<0.000000e+00> : vector<64x128xf32>
    %20 = tpu.matmul %19, %18, %cst_28 {dimension_numbers = #tpu.dot_dimension_numbers<[1], [0], [0], [1], [0, 0, 1, 1], [], []>} : vector<64x32xbf16>, vector<32x128xbf16>, vector<64x128xf32> -> vector<64x128xf32>
    %21 = arith.addf %15, %20 : vector<64x128xf32>
    %c0_29 = arith.constant 0 : index
    %c2 = arith.constant 2 : index
    %c0_30 = arith.constant 0 : index
    %22 = vector.load %arg5[%c0_29, %c2, %c0_30] : memref<10x10x32xf32, #tpu.memory_space<vmem>>, vector<8x8x32xf32>
    %23 = vector.shape_cast %22 : vector<8x8x32xf32> to vector<64x32xf32>
    %c64 = arith.constant 64 : index
    %c0_31 = arith.constant 0 : index
    %24 = vector.load %arg2[%c64, %c0_31] : memref<288x128xbf16, #tpu.memory_space<vmem>>, vector<32x128xbf16>
    %25 = arith.truncf %23 : vector<64x32xf32> to vector<64x32xbf16>
    %cst_32 = arith.constant dense<0.000000e+00> : vector<64x128xf32>
    %26 = tpu.matmul %25, %24, %cst_32 {dimension_numbers = #tpu.dot_dimension_numbers<[1], [0], [0], [1], [0, 0, 1, 1], [], []>} : vector<64x32xbf16>, vector<32x128xbf16>, vector<64x128xf32> -> vector<64x128xf32>
    %27 = arith.addf %21, %26 : vector<64x128xf32>
    %c1_33 = arith.constant 1 : index
    %c0_34 = arith.constant 0 : index
    %c0_35 = arith.constant 0 : index
    %28 = vector.load %arg5[%c1_33, %c0_34, %c0_35] : memref<10x10x32xf32, #tpu.memory_space<vmem>>, vector<8x8x32xf32>
    %29 = vector.shape_cast %28 : vector<8x8x32xf32> to vector<64x32xf32>
    %c96 = arith.constant 96 : index
    %c0_36 = arith.constant 0 : index
    %30 = vector.load %arg2[%c96, %c0_36] : memref<288x128xbf16, #tpu.memory_space<vmem>>, vector<32x128xbf16>
    %31 = arith.truncf %29 : vector<64x32xf32> to vector<64x32xbf16>
    %cst_37 = arith.constant dense<0.000000e+00> : vector<64x128xf32>
    %32 = tpu.matmul %31, %30, %cst_37 {dimension_numbers = #tpu.dot_dimension_numbers<[1], [0], [0], [1], [0, 0, 1, 1], [], []>} : vector<64x32xbf16>, vector<32x128xbf16>, vector<64x128xf32> -> vector<64x128xf32>
    %33 = arith.addf %27, %32 : vector<64x128xf32>
    %c1_38 = arith.constant 1 : index
    %c1_39 = arith.constant 1 : index
    %c0_40 = arith.constant 0 : index
    %34 = vector.load %arg5[%c1_38, %c1_39, %c0_40] : memref<10x10x32xf32, #tpu.memory_space<vmem>>, vector<8x8x32xf32>
    %35 = vector.shape_cast %34 : vector<8x8x32xf32> to vector<64x32xf32>
    %c128 = arith.constant 128 : index
    %c0_41 = arith.constant 0 : index
    %36 = vector.load %arg2[%c128, %c0_41] : memref<288x128xbf16, #tpu.memory_space<vmem>>, vector<32x128xbf16>
    %37 = arith.truncf %35 : vector<64x32xf32> to vector<64x32xbf16>
    %cst_42 = arith.constant dense<0.000000e+00> : vector<64x128xf32>
    %38 = tpu.matmul %37, %36, %cst_42 {dimension_numbers = #tpu.dot_dimension_numbers<[1], [0], [0], [1], [0, 0, 1, 1], [], []>} : vector<64x32xbf16>, vector<32x128xbf16>, vector<64x128xf32> -> vector<64x128xf32>
    %39 = arith.addf %33, %38 : vector<64x128xf32>
    %c1_43 = arith.constant 1 : index
    %c2_44 = arith.constant 2 : index
    %c0_45 = arith.constant 0 : index
    %40 = vector.load %arg5[%c1_43, %c2_44, %c0_45] : memref<10x10x32xf32, #tpu.memory_space<vmem>>, vector<8x8x32xf32>
    %41 = vector.shape_cast %40 : vector<8x8x32xf32> to vector<64x32xf32>
    %c160 = arith.constant 160 : index
    %c0_46 = arith.constant 0 : index
    %42 = vector.load %arg2[%c160, %c0_46] : memref<288x128xbf16, #tpu.memory_space<vmem>>, vector<32x128xbf16>
    %43 = arith.truncf %41 : vector<64x32xf32> to vector<64x32xbf16>
    %cst_47 = arith.constant dense<0.000000e+00> : vector<64x128xf32>
    %44 = tpu.matmul %43, %42, %cst_47 {dimension_numbers = #tpu.dot_dimension_numbers<[1], [0], [0], [1], [0, 0, 1, 1], [], []>} : vector<64x32xbf16>, vector<32x128xbf16>, vector<64x128xf32> -> vector<64x128xf32>
    %45 = arith.addf %39, %44 : vector<64x128xf32>
    %c2_48 = arith.constant 2 : index
    %c0_49 = arith.constant 0 : index
    %c0_50 = arith.constant 0 : index
    %46 = vector.load %arg5[%c2_48, %c0_49, %c0_50] : memref<10x10x32xf32, #tpu.memory_space<vmem>>, vector<8x8x32xf32>
    %47 = vector.shape_cast %46 : vector<8x8x32xf32> to vector<64x32xf32>
    %c192 = arith.constant 192 : index
    %c0_51 = arith.constant 0 : index
    %48 = vector.load %arg2[%c192, %c0_51] : memref<288x128xbf16, #tpu.memory_space<vmem>>, vector<32x128xbf16>
    %49 = arith.truncf %47 : vector<64x32xf32> to vector<64x32xbf16>
    %cst_52 = arith.constant dense<0.000000e+00> : vector<64x128xf32>
    %50 = tpu.matmul %49, %48, %cst_52 {dimension_numbers = #tpu.dot_dimension_numbers<[1], [0], [0], [1], [0, 0, 1, 1], [], []>} : vector<64x32xbf16>, vector<32x128xbf16>, vector<64x128xf32> -> vector<64x128xf32>
    %51 = arith.addf %45, %50 : vector<64x128xf32>
    %c2_53 = arith.constant 2 : index
    %c1_54 = arith.constant 1 : index
    %c0_55 = arith.constant 0 : index
    %52 = vector.load %arg5[%c2_53, %c1_54, %c0_55] : memref<10x10x32xf32, #tpu.memory_space<vmem>>, vector<8x8x32xf32>
    %53 = vector.shape_cast %52 : vector<8x8x32xf32> to vector<64x32xf32>
    %c224 = arith.constant 224 : index
    %c0_56 = arith.constant 0 : index
    %54 = vector.load %arg2[%c224, %c0_56] : memref<288x128xbf16, #tpu.memory_space<vmem>>, vector<32x128xbf16>
    %55 = arith.truncf %53 : vector<64x32xf32> to vector<64x32xbf16>
    %cst_57 = arith.constant dense<0.000000e+00> : vector<64x128xf32>
    %56 = tpu.matmul %55, %54, %cst_57 {dimension_numbers = #tpu.dot_dimension_numbers<[1], [0], [0], [1], [0, 0, 1, 1], [], []>} : vector<64x32xbf16>, vector<32x128xbf16>, vector<64x128xf32> -> vector<64x128xf32>
    %57 = arith.addf %51, %56 : vector<64x128xf32>
    %c2_58 = arith.constant 2 : index
    %c2_59 = arith.constant 2 : index
    %c0_60 = arith.constant 0 : index
    %58 = vector.load %arg5[%c2_58, %c2_59, %c0_60] : memref<10x10x32xf32, #tpu.memory_space<vmem>>, vector<8x8x32xf32>
    %59 = vector.shape_cast %58 : vector<8x8x32xf32> to vector<64x32xf32>
    %c256 = arith.constant 256 : index
    %c0_61 = arith.constant 0 : index
    %60 = vector.load %arg2[%c256, %c0_61] : memref<288x128xbf16, #tpu.memory_space<vmem>>, vector<32x128xbf16>
    %61 = arith.truncf %59 : vector<64x32xf32> to vector<64x32xbf16>
    %cst_62 = arith.constant dense<0.000000e+00> : vector<64x128xf32>
    %62 = tpu.matmul %61, %60, %cst_62 {dimension_numbers = #tpu.dot_dimension_numbers<[1], [0], [0], [1], [0, 0, 1, 1], [], []>} : vector<64x32xbf16>, vector<32x128xbf16>, vector<64x128xf32> -> vector<64x128xf32>
    %63 = arith.addf %57, %62 : vector<64x128xf32>
    %c0_63 = arith.constant 0 : index
    %c0_64 = arith.constant 0 : index
    %64 = vector.load %arg3[%c0_63, %c0_64] : memref<1x128xf32, #tpu.memory_space<vmem>>, vector<1x128xf32>
    %65 = vector.broadcast %64 : vector<1x128xf32> to vector<64x128xf32>
    %66 = arith.addf %63, %65 : vector<64x128xf32>
    %cst_65 = arith.constant 0.707106769 : f32
    %67 = vector.broadcast %cst_65 : f32 to vector<64x128xf32>
    %68 = arith.mulf %66, %67 : vector<64x128xf32>
    %69 = math.absf %68 : vector<64x128xf32>
    %cst_66 = arith.constant 0.327591091 : f32
    %70 = vector.broadcast %cst_66 : f32 to vector<64x128xf32>
    %71 = arith.mulf %70, %69 : vector<64x128xf32>
    %cst_67 = arith.constant 1.000000e+00 : f32
    %72 = vector.broadcast %cst_67 : f32 to vector<64x128xf32>
    %73 = arith.addf %72, %71 : vector<64x128xf32>
    %74 = tpu.reciprocal %73 {approx = true} : vector<64x128xf32> -> vector<64x128xf32>
    %75 = arith.mulf %73, %74 : vector<64x128xf32>
    %cst_68 = arith.constant 2.000000e+00 : f32
    %76 = vector.broadcast %cst_68 : f32 to vector<64x128xf32>
    %77 = arith.subf %76, %75 : vector<64x128xf32>
    %78 = arith.mulf %74, %77 : vector<64x128xf32>
    %cst_69 = arith.constant 1.06140542 : f32
    %79 = vector.broadcast %cst_69 : f32 to vector<64x128xf32>
    %80 = arith.mulf %79, %78 : vector<64x128xf32>
    %cst_70 = arith.constant 1.45315206 : f32
    %81 = vector.broadcast %cst_70 : f32 to vector<64x128xf32>
    %82 = arith.subf %80, %81 : vector<64x128xf32>
    %83 = arith.mulf %82, %78 : vector<64x128xf32>
    %cst_71 = arith.constant 1.42141378 : f32
    %84 = vector.broadcast %cst_71 : f32 to vector<64x128xf32>
    %85 = arith.addf %83, %84 : vector<64x128xf32>
    %86 = arith.mulf %85, %78 : vector<64x128xf32>
    %cst_72 = arith.constant 0.284496725 : f32
    %87 = vector.broadcast %cst_72 : f32 to vector<64x128xf32>
    %88 = arith.subf %86, %87 : vector<64x128xf32>
    %89 = arith.mulf %88, %78 : vector<64x128xf32>
    %cst_73 = arith.constant 0.254829586 : f32
    %90 = vector.broadcast %cst_73 : f32 to vector<64x128xf32>
    %91 = arith.addf %89, %90 : vector<64x128xf32>
    %92 = arith.mulf %91, %78 : vector<64x128xf32>
    %cst_74 = arith.constant 0.000000e+00 : f32
    %93 = vector.broadcast %cst_74 : f32 to vector<64x128xf32>
    %94 = arith.subf %93, %69 : vector<64x128xf32>
    %95 = arith.mulf %94, %69 : vector<64x128xf32>
    %96 = math.exp %95 : vector<64x128xf32>
    %97 = arith.mulf %92, %96 : vector<64x128xf32>
    %cst_75 = arith.constant 1.000000e+00 : f32
    %98 = vector.broadcast %cst_75 : f32 to vector<64x128xf32>
    %99 = arith.subf %98, %97 : vector<64x128xf32>
    %cst_76 = arith.constant 0.000000e+00 : f32
    %100 = vector.broadcast %cst_76 : f32 to vector<64x128xf32>
    %101 = arith.cmpf olt, %68, %100 : vector<64x128xf32>
    %cst_77 = arith.constant 0.000000e+00 : f32
    %102 = vector.broadcast %cst_77 : f32 to vector<64x128xf32>
    %103 = arith.subf %102, %99 : vector<64x128xf32>
    %104 = arith.select %101, %103, %99 : vector<64x128xi1>, vector<64x128xf32>
    %cst_78 = arith.constant 5.000000e-01 : f32
    %105 = vector.broadcast %cst_78 : f32 to vector<64x128xf32>
    %106 = arith.mulf %105, %66 : vector<64x128xf32>
    %cst_79 = arith.constant 1.000000e+00 : f32
    %107 = vector.broadcast %cst_79 : f32 to vector<64x128xf32>
    %108 = arith.addf %107, %104 : vector<64x128xf32>
    %109 = arith.mulf %106, %108 : vector<64x128xf32>
    %110 = vector.shape_cast %109 : vector<64x128xf32> to vector<8x8x128xf32>
    %c0_80 = arith.constant 0 : index
    %c0_81 = arith.constant 0 : index
    %c0_82 = arith.constant 0 : index
    %c0_83 = arith.constant 0 : index
    %111 = vector.load %arg4[%c0_80, %c0_81, %c0_82, %c0_83] : memref<1x8x8x128xf32, #tpu.memory_space<vmem>>, vector<1x8x8x128xf32>
    %112 = vector.shape_cast %111 : vector<1x8x8x128xf32> to vector<8x8x128xf32>
    %113 = vector.shape_cast %110 : vector<8x8x128xf32> to vector<1x8x8x128xf32>
    tpu.vector_store %arg4[%c0_80, %c0_81, %c0_82, %c0_83], %113 {strides = array<i32>} : memref<1x8x8x128xf32, #tpu.memory_space<vmem>>, vector<1x8x8x128xf32>,
    return
  }
  func.func @transform_0(%arg0: i32) -> (i32, i32, i32, i32) {
    %c0_i32 = arith.constant 0 : i32
    %c0_i32_0 = arith.constant 0 : i32
    %c0_i32_1 = arith.constant 0 : i32
    %c0_i32_2 = arith.constant 0 : i32
    return %arg0, %c0_i32, %c0_i32_0, %c0_i32_1 : i32, i32, i32, i32
  }
  func.func @transform_1(%arg0: i32) -> (i32, i32) {
    %c0_i32 = arith.constant 0 : i32
    %c0_i32_0 = arith.constant 0 : i32
    %c0_i32_1 = arith.constant 0 : i32
    return %c0_i32, %c0_i32_0 : i32, i32
  }
  func.func @transform_2(%arg0: i32) -> (i32, i32) {
    %c0_i32 = arith.constant 0 : i32
    %c0_i32_0 = arith.constant 0 : i32
    %c0_i32_1 = arith.constant 0 : i32
    return %c0_i32, %c0_i32_0 : i32, i32
  }
  func.func @transform_3(%arg0: i32) -> (i32, i32, i32, i32) {
    %c0_i32 = arith.constant 0 : i32
    %c0_i32_0 = arith.constant 0 : i32
    %c0_i32_1 = arith.constant 0 : i32
    %c0_i32_2 = arith.constant 0 : i32
    return %arg0, %c0_i32, %c0_i32_0, %c0_i32_1 : i32, i32, i32, i32
  }
}

module attributes {stable_mosaic.version = 11 : i64} {
  func.func @_conv3x3_kernel(%arg0: i32, %arg1: memref<1x16x16x32xf32, #tpu.memory_space<vmem>>, %arg2: memref<288x12xbf16, #tpu.memory_space<vmem>>, %arg3: memref<1x12xf32, #tpu.memory_space<vmem>>, %arg4: memref<1x16x16x12xf32, #tpu.memory_space<vmem>>, %arg5: memref<18x18x32xf32, #tpu.memory_space<vmem>>) attributes {dimension_semantics = [#tpu.dimension_semantics<parallel>], iteration_bounds = array<i64: 2>, scalar_prefetch = 0 : i64, scratch_operands = 1 : i64, tpu.core_type = #tpu.core_type<tc>, window_params = [{transform_indices = @transform_0, window_bounds = array<i64: 1, 16, 16, 32>}, {pipeline_mode = #tpu.pipeline_mode<synchronous>, transform_indices = @transform_1, window_bounds = array<i64: 288, 12>}, {pipeline_mode = #tpu.pipeline_mode<synchronous>, transform_indices = @transform_2, window_bounds = array<i64: 1, 12>}, {transform_indices = @transform_3, window_bounds = array<i64: 1, 16, 16, 12>}]} {
    %cst = arith.constant 0.000000e+00 : f32
    %0 = vector.broadcast %cst : f32 to vector<1x18x32xf32>
    %c0 = arith.constant 0 : index
    %c0_0 = arith.constant 0 : index
    %c0_1 = arith.constant 0 : index
    %1 = vector.load %arg5[%c0, %c0_0, %c0_1] : memref<18x18x32xf32, #tpu.memory_space<vmem>>, vector<1x18x32xf32>
    tpu.vector_store %arg5[%c0, %c0_0, %c0_1], %0 {strides = array<i32>} : memref<18x18x32xf32, #tpu.memory_space<vmem>>, vector<1x18x32xf32>,
    %c17 = arith.constant 17 : index
    %c0_2 = arith.constant 0 : index
    %c0_3 = arith.constant 0 : index
    %2 = vector.load %arg5[%c17, %c0_2, %c0_3] : memref<18x18x32xf32, #tpu.memory_space<vmem>>, vector<1x18x32xf32>
    tpu.vector_store %arg5[%c17, %c0_2, %c0_3], %0 {strides = array<i32>} : memref<18x18x32xf32, #tpu.memory_space<vmem>>, vector<1x18x32xf32>,
    %cst_4 = arith.constant 0.000000e+00 : f32
    %3 = vector.broadcast %cst_4 : f32 to vector<16x1x32xf32>
    %c1 = arith.constant 1 : index
    %c0_5 = arith.constant 0 : index
    %c0_6 = arith.constant 0 : index
    %4 = vector.load %arg5[%c1, %c0_5, %c0_6] : memref<18x18x32xf32, #tpu.memory_space<vmem>>, vector<16x1x32xf32>
    tpu.vector_store %arg5[%c1, %c0_5, %c0_6], %3 {strides = array<i32>} : memref<18x18x32xf32, #tpu.memory_space<vmem>>, vector<16x1x32xf32>,
    %c1_7 = arith.constant 1 : index
    %c17_8 = arith.constant 17 : index
    %c0_9 = arith.constant 0 : index
    %5 = vector.load %arg5[%c1_7, %c17_8, %c0_9] : memref<18x18x32xf32, #tpu.memory_space<vmem>>, vector<16x1x32xf32>
    tpu.vector_store %arg5[%c1_7, %c17_8, %c0_9], %3 {strides = array<i32>} : memref<18x18x32xf32, #tpu.memory_space<vmem>>, vector<16x1x32xf32>,
    %c0_10 = arith.constant 0 : index
    %c0_11 = arith.constant 0 : index
    %c0_12 = arith.constant 0 : index
    %c0_13 = arith.constant 0 : index
    %6 = vector.load %arg1[%c0_10, %c0_11, %c0_12, %c0_13] : memref<1x16x16x32xf32, #tpu.memory_space<vmem>>, vector<1x16x16x32xf32>
    %7 = vector.shape_cast %6 : vector<1x16x16x32xf32> to vector<16x16x32xf32>
    %c1_14 = arith.constant 1 : index
    %c1_15 = arith.constant 1 : index
    %c0_16 = arith.constant 0 : index
    %8 = vector.load %arg5[%c1_14, %c1_15, %c0_16] : memref<18x18x32xf32, #tpu.memory_space<vmem>>, vector<16x16x32xf32>
    tpu.vector_store %arg5[%c1_14, %c1_15, %c0_16], %7 {strides = array<i32>} : memref<18x18x32xf32, #tpu.memory_space<vmem>>, vector<16x16x32xf32>,
    %cst_17 = arith.constant 0.000000e+00 : f32
    %9 = vector.broadcast %cst_17 : f32 to vector<256x12xf32>
    %c0_18 = arith.constant 0 : index
    %c0_19 = arith.constant 0 : index
    %c0_20 = arith.constant 0 : index
    %10 = vector.load %arg5[%c0_18, %c0_19, %c0_20] : memref<18x18x32xf32, #tpu.memory_space<vmem>>, vector<16x16x32xf32>
    %11 = vector.shape_cast %10 : vector<16x16x32xf32> to vector<256x32xf32>
    %c0_21 = arith.constant 0 : index
    %c0_22 = arith.constant 0 : index
    %12 = vector.load %arg2[%c0_21, %c0_22] : memref<288x12xbf16, #tpu.memory_space<vmem>>, vector<32x12xbf16>
    %13 = arith.truncf %11 : vector<256x32xf32> to vector<256x32xbf16>
    %cst_23 = arith.constant dense<0.000000e+00> : vector<256x12xf32>
    %14 = tpu.matmul %13, %12, %cst_23 {dimension_numbers = #tpu.dot_dimension_numbers<[1], [0], [0], [1], [0, 0, 1, 1], [], []>} : vector<256x32xbf16>, vector<32x12xbf16>, vector<256x12xf32> -> vector<256x12xf32>
    %15 = arith.addf %9, %14 : vector<256x12xf32>
    %c0_24 = arith.constant 0 : index
    %c1_25 = arith.constant 1 : index
    %c0_26 = arith.constant 0 : index
    %16 = vector.load %arg5[%c0_24, %c1_25, %c0_26] : memref<18x18x32xf32, #tpu.memory_space<vmem>>, vector<16x16x32xf32>
    %17 = vector.shape_cast %16 : vector<16x16x32xf32> to vector<256x32xf32>
    %c32 = arith.constant 32 : index
    %c0_27 = arith.constant 0 : index
    %18 = vector.load %arg2[%c32, %c0_27] : memref<288x12xbf16, #tpu.memory_space<vmem>>, vector<32x12xbf16>
    %19 = arith.truncf %17 : vector<256x32xf32> to vector<256x32xbf16>
    %cst_28 = arith.constant dense<0.000000e+00> : vector<256x12xf32>
    %20 = tpu.matmul %19, %18, %cst_28 {dimension_numbers = #tpu.dot_dimension_numbers<[1], [0], [0], [1], [0, 0, 1, 1], [], []>} : vector<256x32xbf16>, vector<32x12xbf16>, vector<256x12xf32> -> vector<256x12xf32>
    %21 = arith.addf %15, %20 : vector<256x12xf32>
    %c0_29 = arith.constant 0 : index
    %c2 = arith.constant 2 : index
    %c0_30 = arith.constant 0 : index
    %22 = vector.load %arg5[%c0_29, %c2, %c0_30] : memref<18x18x32xf32, #tpu.memory_space<vmem>>, vector<16x16x32xf32>
    %23 = vector.shape_cast %22 : vector<16x16x32xf32> to vector<256x32xf32>
    %c64 = arith.constant 64 : index
    %c0_31 = arith.constant 0 : index
    %24 = vector.load %arg2[%c64, %c0_31] : memref<288x12xbf16, #tpu.memory_space<vmem>>, vector<32x12xbf16>
    %25 = arith.truncf %23 : vector<256x32xf32> to vector<256x32xbf16>
    %cst_32 = arith.constant dense<0.000000e+00> : vector<256x12xf32>
    %26 = tpu.matmul %25, %24, %cst_32 {dimension_numbers = #tpu.dot_dimension_numbers<[1], [0], [0], [1], [0, 0, 1, 1], [], []>} : vector<256x32xbf16>, vector<32x12xbf16>, vector<256x12xf32> -> vector<256x12xf32>
    %27 = arith.addf %21, %26 : vector<256x12xf32>
    %c1_33 = arith.constant 1 : index
    %c0_34 = arith.constant 0 : index
    %c0_35 = arith.constant 0 : index
    %28 = vector.load %arg5[%c1_33, %c0_34, %c0_35] : memref<18x18x32xf32, #tpu.memory_space<vmem>>, vector<16x16x32xf32>
    %29 = vector.shape_cast %28 : vector<16x16x32xf32> to vector<256x32xf32>
    %c96 = arith.constant 96 : index
    %c0_36 = arith.constant 0 : index
    %30 = vector.load %arg2[%c96, %c0_36] : memref<288x12xbf16, #tpu.memory_space<vmem>>, vector<32x12xbf16>
    %31 = arith.truncf %29 : vector<256x32xf32> to vector<256x32xbf16>
    %cst_37 = arith.constant dense<0.000000e+00> : vector<256x12xf32>
    %32 = tpu.matmul %31, %30, %cst_37 {dimension_numbers = #tpu.dot_dimension_numbers<[1], [0], [0], [1], [0, 0, 1, 1], [], []>} : vector<256x32xbf16>, vector<32x12xbf16>, vector<256x12xf32> -> vector<256x12xf32>
    %33 = arith.addf %27, %32 : vector<256x12xf32>
    %c1_38 = arith.constant 1 : index
    %c1_39 = arith.constant 1 : index
    %c0_40 = arith.constant 0 : index
    %34 = vector.load %arg5[%c1_38, %c1_39, %c0_40] : memref<18x18x32xf32, #tpu.memory_space<vmem>>, vector<16x16x32xf32>
    %35 = vector.shape_cast %34 : vector<16x16x32xf32> to vector<256x32xf32>
    %c128 = arith.constant 128 : index
    %c0_41 = arith.constant 0 : index
    %36 = vector.load %arg2[%c128, %c0_41] : memref<288x12xbf16, #tpu.memory_space<vmem>>, vector<32x12xbf16>
    %37 = arith.truncf %35 : vector<256x32xf32> to vector<256x32xbf16>
    %cst_42 = arith.constant dense<0.000000e+00> : vector<256x12xf32>
    %38 = tpu.matmul %37, %36, %cst_42 {dimension_numbers = #tpu.dot_dimension_numbers<[1], [0], [0], [1], [0, 0, 1, 1], [], []>} : vector<256x32xbf16>, vector<32x12xbf16>, vector<256x12xf32> -> vector<256x12xf32>
    %39 = arith.addf %33, %38 : vector<256x12xf32>
    %c1_43 = arith.constant 1 : index
    %c2_44 = arith.constant 2 : index
    %c0_45 = arith.constant 0 : index
    %40 = vector.load %arg5[%c1_43, %c2_44, %c0_45] : memref<18x18x32xf32, #tpu.memory_space<vmem>>, vector<16x16x32xf32>
    %41 = vector.shape_cast %40 : vector<16x16x32xf32> to vector<256x32xf32>
    %c160 = arith.constant 160 : index
    %c0_46 = arith.constant 0 : index
    %42 = vector.load %arg2[%c160, %c0_46] : memref<288x12xbf16, #tpu.memory_space<vmem>>, vector<32x12xbf16>
    %43 = arith.truncf %41 : vector<256x32xf32> to vector<256x32xbf16>
    %cst_47 = arith.constant dense<0.000000e+00> : vector<256x12xf32>
    %44 = tpu.matmul %43, %42, %cst_47 {dimension_numbers = #tpu.dot_dimension_numbers<[1], [0], [0], [1], [0, 0, 1, 1], [], []>} : vector<256x32xbf16>, vector<32x12xbf16>, vector<256x12xf32> -> vector<256x12xf32>
    %45 = arith.addf %39, %44 : vector<256x12xf32>
    %c2_48 = arith.constant 2 : index
    %c0_49 = arith.constant 0 : index
    %c0_50 = arith.constant 0 : index
    %46 = vector.load %arg5[%c2_48, %c0_49, %c0_50] : memref<18x18x32xf32, #tpu.memory_space<vmem>>, vector<16x16x32xf32>
    %47 = vector.shape_cast %46 : vector<16x16x32xf32> to vector<256x32xf32>
    %c192 = arith.constant 192 : index
    %c0_51 = arith.constant 0 : index
    %48 = vector.load %arg2[%c192, %c0_51] : memref<288x12xbf16, #tpu.memory_space<vmem>>, vector<32x12xbf16>
    %49 = arith.truncf %47 : vector<256x32xf32> to vector<256x32xbf16>
    %cst_52 = arith.constant dense<0.000000e+00> : vector<256x12xf32>
    %50 = tpu.matmul %49, %48, %cst_52 {dimension_numbers = #tpu.dot_dimension_numbers<[1], [0], [0], [1], [0, 0, 1, 1], [], []>} : vector<256x32xbf16>, vector<32x12xbf16>, vector<256x12xf32> -> vector<256x12xf32>
    %51 = arith.addf %45, %50 : vector<256x12xf32>
    %c2_53 = arith.constant 2 : index
    %c1_54 = arith.constant 1 : index
    %c0_55 = arith.constant 0 : index
    %52 = vector.load %arg5[%c2_53, %c1_54, %c0_55] : memref<18x18x32xf32, #tpu.memory_space<vmem>>, vector<16x16x32xf32>
    %53 = vector.shape_cast %52 : vector<16x16x32xf32> to vector<256x32xf32>
    %c224 = arith.constant 224 : index
    %c0_56 = arith.constant 0 : index
    %54 = vector.load %arg2[%c224, %c0_56] : memref<288x12xbf16, #tpu.memory_space<vmem>>, vector<32x12xbf16>
    %55 = arith.truncf %53 : vector<256x32xf32> to vector<256x32xbf16>
    %cst_57 = arith.constant dense<0.000000e+00> : vector<256x12xf32>
    %56 = tpu.matmul %55, %54, %cst_57 {dimension_numbers = #tpu.dot_dimension_numbers<[1], [0], [0], [1], [0, 0, 1, 1], [], []>} : vector<256x32xbf16>, vector<32x12xbf16>, vector<256x12xf32> -> vector<256x12xf32>
    %57 = arith.addf %51, %56 : vector<256x12xf32>
    %c2_58 = arith.constant 2 : index
    %c2_59 = arith.constant 2 : index
    %c0_60 = arith.constant 0 : index
    %58 = vector.load %arg5[%c2_58, %c2_59, %c0_60] : memref<18x18x32xf32, #tpu.memory_space<vmem>>, vector<16x16x32xf32>
    %59 = vector.shape_cast %58 : vector<16x16x32xf32> to vector<256x32xf32>
    %c256 = arith.constant 256 : index
    %c0_61 = arith.constant 0 : index
    %60 = vector.load %arg2[%c256, %c0_61] : memref<288x12xbf16, #tpu.memory_space<vmem>>, vector<32x12xbf16>
    %61 = arith.truncf %59 : vector<256x32xf32> to vector<256x32xbf16>
    %cst_62 = arith.constant dense<0.000000e+00> : vector<256x12xf32>
    %62 = tpu.matmul %61, %60, %cst_62 {dimension_numbers = #tpu.dot_dimension_numbers<[1], [0], [0], [1], [0, 0, 1, 1], [], []>} : vector<256x32xbf16>, vector<32x12xbf16>, vector<256x12xf32> -> vector<256x12xf32>
    %63 = arith.addf %57, %62 : vector<256x12xf32>
    %c0_63 = arith.constant 0 : index
    %c0_64 = arith.constant 0 : index
    %64 = vector.load %arg3[%c0_63, %c0_64] : memref<1x12xf32, #tpu.memory_space<vmem>>, vector<1x12xf32>
    %65 = vector.broadcast %64 : vector<1x12xf32> to vector<256x12xf32>
    %66 = arith.addf %63, %65 : vector<256x12xf32>
    %67 = vector.shape_cast %66 : vector<256x12xf32> to vector<16x16x12xf32>
    %c0_65 = arith.constant 0 : index
    %c0_66 = arith.constant 0 : index
    %c0_67 = arith.constant 0 : index
    %c0_68 = arith.constant 0 : index
    %68 = vector.load %arg4[%c0_65, %c0_66, %c0_67, %c0_68] : memref<1x16x16x12xf32, #tpu.memory_space<vmem>>, vector<1x16x16x12xf32>
    %69 = vector.shape_cast %68 : vector<1x16x16x12xf32> to vector<16x16x12xf32>
    %70 = vector.shape_cast %67 : vector<16x16x12xf32> to vector<1x16x16x12xf32>
    tpu.vector_store %arg4[%c0_65, %c0_66, %c0_67, %c0_68], %70 {strides = array<i32>} : memref<1x16x16x12xf32, #tpu.memory_space<vmem>>, vector<1x16x16x12xf32>,
    return
  }
  func.func @transform_0(%arg0: i32) -> (i32, i32, i32, i32) {
    %c0_i32 = arith.constant 0 : i32
    %c0_i32_0 = arith.constant 0 : i32
    %c0_i32_1 = arith.constant 0 : i32
    %c0_i32_2 = arith.constant 0 : i32
    return %arg0, %c0_i32, %c0_i32_0, %c0_i32_1 : i32, i32, i32, i32
  }
  func.func @transform_1(%arg0: i32) -> (i32, i32) {
    %c0_i32 = arith.constant 0 : i32
    %c0_i32_0 = arith.constant 0 : i32
    %c0_i32_1 = arith.constant 0 : i32
    return %c0_i32, %c0_i32_0 : i32, i32
  }
  func.func @transform_2(%arg0: i32) -> (i32, i32) {
    %c0_i32 = arith.constant 0 : i32
    %c0_i32_0 = arith.constant 0 : i32
    %c0_i32_1 = arith.constant 0 : i32
    return %c0_i32, %c0_i32_0 : i32, i32
  }
  func.func @transform_3(%arg0: i32) -> (i32, i32, i32, i32) {
    %c0_i32 = arith.constant 0 : i32
    %c0_i32_0 = arith.constant 0 : i32
    %c0_i32_1 = arith.constant 0 : i32
    %c0_i32_2 = arith.constant 0 : i32
    return %arg0, %c0_i32, %c0_i32_0, %c0_i32_1 : i32, i32, i32, i32
  }
}

</mosaic_0001>

<llo_original>
// kernel: tile.14
$region0: #{tile.14}
  %s0 = inlined_call_operand.vmem [shape: f32[4,32], index: 0, kind: input, shape index: {}]
  %s1 = inlined_call_operand.hbm [shape: f32[1,128], index: 1, kind: output, shape index: {}]
  $region1: #{tile.14} parent=0
    #allocation0 [shape = 'u8[512]{0}', space=vmem, size = 0x400, scoped, tag = 'operand span for operand 1']
    #allocation1 [shape = 's32[1]{0}', space=sflag, size = 0x4, scoped, tag = 'scoped memory for tile.14']
    #allocation2 [shape = 'u8[4096]{0}', space=vmem, size = 0x1000, scoped, tag = 'scoped mem for output reshape']
    #allocation3 [shape = 'u8[4096]{0}', space=vmem, size = 0x1000, scoped, tag = 'scoped mem for input reshape']
    %2 = vsyncpa [#allocation1], 0
    %s4 = sshllo.u32 0, 4
    %v5 = vld [vmem:[%s0] sm:%s4]
    %6 = vst [vmem:[#allocation3] sm:%s4] %v5
    %v7 = vld [vmem:[#allocation3] sm:$0x1]
    %vm8 = vcmask 261120
    %9 = vst.msk [vmem:[#allocation2] sm:$0x1] %vm8, %v7
    %s10 = scalar_lea.vmem [#allocation3], 3
    %v11 = vld [vmem:[%s10] sm:$0x1]
    %12 = vrot.lane.b32.xlu0 %v11, 96
    %v13 = vpop.permute.xlu0 %12
    %vm14 = vcmask 1048320
    %15 = vst.msk [vmem:[#allocation2] sm:$0x1] %vm14, %v13
    %s16 = scalar_lea.vmem [#allocation3], 2
    %v17 = vld [vmem:[%s16] sm:$0x1]
    %18 = vrot.lane.b32.xlu0 %v17, 64
    %v19 = vpop.permute.xlu0 %18
    %vm20 = vcmask 785920
    %21 = vst.msk [vmem:[#allocation2] sm:$0x1] %vm20, %v19
    %s22 = scalar_lea.vmem [#allocation3], 1
    %v23 = vld [vmem:[%s22] sm:$0x1]
    %24 = vrot.lane.b32.xlu0 %v23, 32
    %v25 = vpop.permute.xlu0 %24
    %vm26 = vcmask 523520
    %27 = vst.msk [vmem:[#allocation2] sm:$0x1] %vm26, %v25
    %s29 = sshllo.u32 0, 1
    %v31 = vld [vmem:[#allocation2] sm:%s29]
    %s32 = sshllo.u32 0, 1
    %33 = vst [vmem:[#allocation0] sm:%s32] %v31
    %s35 = ssub.s32 16, 16
    %36 = vsyncadd [#allocation1], %s35
    %s38 = sshll.u32 [#allocation0], 4
    %s39 = int_to_ptr.vmem [resolvable:$true] %s38
    %41 = dma.vmem_to_hbm [thread:$0]  %s39, 16, %s1, [#allocation1]
    %42 = dma.done [#allocation1], 16
    %43 = vsyncpa [#allocation1], 1

// kernel: tile.19
$region0: #{tile.19}
  %s0 = inlined_call_operand.vmem [shape: f32[4,3], index: 0, kind: input, shape index: {}]
  %s1 = inlined_call_operand.hbm [shape: f32[1,12], index: 1, kind: output, shape index: {}]
  $region1: #{tile.19} parent=0
    #allocation0 [shape = 'u8[512]{0}', space=vmem, size = 0x400, scoped, tag = 'operand span for operand 1']
    #allocation1 [shape = 's32[1]{0}', space=sflag, size = 0x4, scoped, tag = 'scoped memory for tile.19']
    #allocation2 [shape = 'u8[4096]{0}', space=vmem, size = 0x1000, scoped, tag = 'scoped mem for output reshape']
    #allocation3 [shape = 'u8[4096]{0}', space=vmem, size = 0x1000, scoped, tag = 'scoped mem for input reshape']
    %2 = vsyncpa [#allocation1], 0
    %s4 = sshllo.u32 0, 4
    %v5 = vld [vmem:[%s0] sm:%s4]
    %6 = vst [vmem:[#allocation3] sm:%s4] %v5
    %v7 = vld [vmem:[#allocation3] sm:$0x1]
    %vm8 = vcmask 23552
    %9 = vst.msk [vmem:[#allocation2] sm:$0x1] %vm8, %v7
    %s10 = scalar_lea.vmem [#allocation3], 3
    %v11 = vld [vmem:[%s10] sm:$0x1]
    %12 = vrot.lane.b32.xlu0 %v11, 9
    %v13 = vpop.permute.xlu0 %12
    %vm14 = vcmask 97352
    %15 = vst.msk [vmem:[#allocation2] sm:$0x1] %vm14, %v13
    %s16 = scalar_lea.vmem [#allocation3], 2
    %v17 = vld [vmem:[%s16] sm:$0x1]
    %18 = vrot.lane.b32.xlu0 %v17, 6
    %v19 = vpop.permute.xlu0 %18
    %vm20 = vcmask 72752
    %21 = vst.msk [vmem:[#allocation2] sm:$0x1] %vm20, %v19
    %s22 = scalar_lea.vmem [#allocation3], 1
    %v23 = vld [vmem:[%s22] sm:$0x1]
    %24 = vrot.lane.b32.xlu0 %v23, 3
    %v25 = vpop.permute.xlu0 %24
    %vm26 = vcmask 48152
    %27 = vst.msk [vmem:[#allocation2] sm:$0x1] %vm26, %v25
    %s29 = sshllo.u32 0, 1
    %v31 = vld [vmem:[#allocation2] sm:%s29]
    %s32 = sshllo.u32 0, 1
    %33 = vst [vmem:[#allocation0] sm:%s32] %v31
    %s35 = ssub.s32 16, 16
    %36 = vsyncadd [#allocation1], %s35
    %s38 = sshll.u32 [#allocation0], 4
    %s39 = int_to_ptr.vmem [resolvable:$true] %s38
    %41 = dma.vmem_to_hbm [thread:$0]  %s39, 16, %s1, [#allocation1]
    %42 = dma.done [#allocation1], 16
    %43 = vsyncpa [#allocation1], 1

// kernel: tile.13
$region0: #{tile.13}
  #allocation2 [shape = 's32[1]{0}', space=sflag, size = 0x4, scoped, tag = 'scoped memory for tile.13']
  %s0 = inlined_call_operand.hbm [shape: f32[32], index: 0, kind: input, shape index: {}]
  %s1 = inlined_call_operand.vmem [shape: f32[4,32], index: 1, kind: output, shape index: {}]
  $region1: #{tile.13} parent=0
    #allocation0 [shape = 'u8[512]{0}', space=vmem, size = 0x400, scoped, tag = 'operand span for operand 0']
    #allocation1 [shape = 's32[1]{0}', space=sflag, size = 0x4, scoped, tag = 'scoped memory for tile.13']
    %2 = vsyncpa [#allocation1], 0
    // Predicated region
    $region2: #{tile.13} parent=1 // pred_check
      _
    $region3: #{tile.13} parent=1 // pred_check_branch
      %4 = sbr.rel (0) target = $region5
    $region4: #{tile.13} parent=1 // pred_region
      %s6 = ssub.s32 16, 16
      %7 = vsyncadd [#allocation1], %s6
      %s9 = sshll.u32 [#allocation0], 4
      %s10 = int_to_ptr.vmem [resolvable:$true] %s9
      %12 = dma.hbm_to_vmem [thread:$0]  %s0, 16, %s10, [#allocation1]
    $region5: #{tile.13} parent=1 // pred_fallthru
      _
    // Predicated region
    $region6: #{tile.13} parent=1 // pred_check
      _
    $region7: #{tile.13} parent=1 // pred_check_branch
      %14 = sbr.rel (0) target = $region9
    $region8: #{tile.13} parent=1 // pred_region
      %15 = dma.done [#allocation1], 16
    $region9: #{tile.13} parent=1 // pred_fallthru
      _
    %v16 = vld [vmem:[#allocation0] ss:$0 sm:$0xff]
    %17 = vst [vmem:[%s1] sm:$0xf] %v16
    %18 = vsyncpa [#allocation1], 1

// kernel: tile.18
$region0: #{tile.18}
  #allocation2 [shape = 's32[1]{0}', space=sflag, size = 0x4, scoped, tag = 'scoped memory for tile.18']
  %s0 = inlined_call_operand.hbm [shape: f32[3], index: 0, kind: input, shape index: {}]
  %s1 = inlined_call_operand.vmem [shape: f32[4,3], index: 1, kind: output, shape index: {}]
  $region1: #{tile.18} parent=0
    #allocation0 [shape = 'u8[512]{0}', space=vmem, size = 0x400, scoped, tag = 'operand span for operand 0']
    #allocation1 [shape = 's32[1]{0}', space=sflag, size = 0x4, scoped, tag = 'scoped memory for tile.18']
    %2 = vsyncpa [#allocation1], 0
    // Predicated region
    $region2: #{tile.18} parent=1 // pred_check
      _
    $region3: #{tile.18} parent=1 // pred_check_branch
      %4 = sbr.rel (0) target = $region5
    $region4: #{tile.18} parent=1 // pred_region
      %s6 = ssub.s32 16, 16
      %7 = vsyncadd [#allocation1], %s6
      %s9 = sshll.u32 [#allocation0], 4
      %s10 = int_to_ptr.vmem [resolvable:$true] %s9
      %12 = dma.hbm_to_vmem [thread:$0]  %s0, 16, %s10, [#allocation1]
    $region5: #{tile.18} parent=1 // pred_fallthru
      _
    // Predicated region
    $region6: #{tile.18} parent=1 // pred_check
      _
    $region7: #{tile.18} parent=1 // pred_check_branch
      %14 = sbr.rel (0) target = $region9
    $region8: #{tile.18} parent=1 // pred_region
      %15 = dma.done [#allocation1], 16
    $region9: #{tile.18} parent=1 // pred_fallthru
      _
    %v16 = vld [vmem:[#allocation0] ss:$0 sm:$0xff]
    %17 = vst [vmem:[%s1] sm:$0xf] %v16
    %18 = vsyncpa [#allocation1], 1

// kernel: decoder_forward.4
$region0: #{decoder_forward.4}
  #allocation0 [shape = 'u32[]', space=smem, size = 0x4, offset = 0x4, fixed_abs, tag = 'smem constant byte address 0x4 - core index']
  #allocation1 [shape = 'u32[144,128]{1,0:T(1,128)}', space=vmem, size = 0x12000, scoped, tag = 'internal scratch']
  #allocation2 [shape = 'f32[10,10,32]{2,1,0:T(8,128)}', space=vmem, size = 0x14000, scoped, tag = 'scratch operand']
  %s0 = inlined_call_operand.hbm [shape: f32[2,8,8,32], index: 0, kind: input, shape index: {}]
  %s1 = inlined_call_operand.hbm [shape: bf16[288,32], index: 1, kind: input, shape index: {}]
  %s2 = inlined_call_operand.hbm [shape: f32[1,32], index: 2, kind: input, shape index: {}]
  %s3 = inlined_call_operand.hbm [shape: bf16[32,32], index: 3, kind: input, shape index: {}]
  %s4 = inlined_call_operand.hbm [shape: f32[1,32], index: 4, kind: input, shape index: {}]
  %s5 = inlined_call_operand.hbm [shape: f32[2,8,8,32], index: 5, kind: output, shape index: {}]
  %s6 = sld [smem:[#allocation0]]
  $region73: #{decoder_forward.4} parent=0
    _
  %s8 = ssub.s32 1, %s6
  %s9 = scalar_select 0, %s8, %s6
  $region1: #{decoder_forward.4} parent=0
    #allocation3 [shape = 'u8[65536]{0}', space=vmem, size = 0x10000, scoped, tag = 'input window, operand 0']
    #allocation4 [shape = 's32[2]{0}', space=sflag, size = 0x8, scoped, tag = 'scoped memory for decoder_forward.4']
    #allocation5 [shape = 's32[2]{0}', space=sflag, size = 0x8, scoped, tag = 'scoped memory for decoder_forward.4']
    #allocation6 [shape = 'u8[73728]{0}', space=vmem, size = 0x12000, scoped, tag = 'input window, operand 1, single buffered']
    #allocation7 [shape = 's32[1]{0}', space=sflag, size = 0x4, scoped, tag = 'scoped memory for decoder_forward.4']
    #allocation8 [shape = 'u8[512]{0}', space=vmem, size = 0x400, scoped, tag = 'input window, operand 2, single buffered']
    #allocation9 [shape = 'u8[8192]{0}', space=vmem, size = 0x2000, scoped, tag = 'input window, operand 3, single buffered']
    #allocation10 [shape = 's32[1]{0}', space=sflag, size = 0x4, scoped, tag = 'scoped memory for decoder_forward.4']
    #allocation11 [shape = 'u8[512]{0}', space=vmem, size = 0x400, scoped, tag = 'input window, operand 4, single buffered']
    #allocation12 [shape = 'u8[65536]{0}', space=vmem, size = 0x10000, scoped, tag = 'output window, operand 0']
    %10 = vsyncpa [#allocation4], 0
    %s11 = scalar_lea.sflag [#allocation4], 1
    %12 = vsyncpa %s11, 0
    %13 = vsyncpa [#allocation7], 0
    %14 = vsyncpa [#allocation10], 0
    %15 = vsyncpa [#allocation5], 0
    %s16 = scalar_lea.sflag [#allocation5], 1
    %17 = vsyncpa %s16, 0
    loop: start=0, step=1, limit=4
    $region2: #{decoder_forward.4} parent=1 // loop_pre_header
      _
    $region3: #{decoder_forward.4} parent=1 // loop_header
      %s19 = sphi 0, %s23
      %p20 = scmp.ge.s32.totalorder %s19, 4
      %s29 = sphi 0, %s31
      %s32 = sphi 0, %s29
      %s33 = sphi 0, %s32
      %s49 = sphi 0, %s33
      %s53 = sphi 0, %s53
      %s55 = sphi 0, %s53
      %s56 = sphi 0, %s55
      %s70 = sphi 0, %s56
      %s74 = sphi 0, %s74
      %s76 = sphi 0, %s74
      %s77 = sphi 0, %s76
      %s91 = sphi 0, %s77
      %s95 = sphi 0, %s95
      %s97 = sphi 0, %s95
      %s98 = sphi 0, %s97
      %s112 = sphi 0, %s98
      %s116 = sphi 0, %s116
      %s118 = sphi 0, %s116
      %s119 = sphi 0, %s118
      %s133 = sphi 0, %s119
      %s139 = sphi 0, %s141
      %s142 = sphi 0, %s139
      %s143 = sphi 0, %s142
      %s159 = sphi 0, %s143
    $region4: #{decoder_forward.4} parent=1 // loop_header_branch
      %22 = sbr.rel (%p20) target = $region8
    $region5: #{decoder_forward.4} parent=1 // loop_body
      %s24 = ssub.s32 %s19, 1
      %s25 = ssub.s32 %s19, 2
      %s26 = sadd.s32 %s19, 1
      %s27 = ssub.s32 %s19, %s26
      %p28 = scmp.eq.s32.totalorder %s27, 0
      %s30 = sadd.s32 %s29, 1
      %s31 = scalar_select %p28, %s29, %s30
      %p34 = pneg %p28
      %p35 = scmp.eq.s32.totalorder %s19, 1
      %p36 = por %p34, %p35
      %p37 = scmp.ne.s32.totalorder %s29, %s32
      %p38 = scmp.eq.s32.totalorder %s19, 0
      %p39 = por %p37, %p38
      %p40 = scmp.ne.s32.totalorder %s29, %s32
      %p41 = scmp.eq.s32.totalorder %s24, 1
      %p42 = por %p40, %p41
      %p43 = scmp.ne.s32.totalorder %s32, %s33
      %p44 = scmp.eq.s32.totalorder %s24, 0
      %p45 = por %p43, %p44
      %p46 = scmp.ne.s32.totalorder %s32, %s33
      %p47 = scmp.eq.s32.totalorder %s25, 1
      %p48 = por %p46, %p47
      %p50 = scmp.ne.s32.totalorder %s33, %s49
      %p51 = scmp.eq.s32.totalorder %s25, 0
      %p52 = por %p50, %p51
      %s54 = sadd.s32 %s53, 1
      %p57 = scmp.eq.s32.totalorder %s19, 1
      %p58 = scmp.ne.s32.totalorder %s53, %s55
      %p59 = scmp.eq.s32.totalorder %s19, 0
      %p60 = por %p58, %p59
      %p61 = scmp.ne.s32.totalorder %s53, %s55
      %p62 = scmp.eq.s32.totalorder %s24, 1
      %p63 = por %p61, %p62
      %p64 = scmp.ne.s32.totalorder %s55, %s56
      %p65 = scmp.eq.s32.totalorder %s24, 0
      %p66 = por %p64, %p65
      %p67 = scmp.ne.s32.totalorder %s55, %s56
      %p68 = scmp.eq.s32.totalorder %s25, 1
      %p69 = por %p67, %p68
      %p71 = scmp.ne.s32.totalorder %s56, %s70
      %p72 = scmp.eq.s32.totalorder %s25, 0
      %p73 = por %p71, %p72
      %s75 = sadd.s32 %s74, 1
      %p78 = scmp.eq.s32.totalorder %s19, 1
      %p79 = scmp.ne.s32.totalorder %s74, %s76
      %p80 = scmp.eq.s32.totalorder %s19, 0
      %p81 = por %p79, %p80
      %p82 = scmp.ne.s32.totalorder %s74, %s76
      %p83 = scmp.eq.s32.totalorder %s24, 1
      %p84 = por %p82, %p83
      %p85 = scmp.ne.s32.totalorder %s76, %s77
      %p86 = scmp.eq.s32.totalorder %s24, 0
      %p87 = por %p85, %p86
      %p88 = scmp.ne.s32.totalorder %s76, %s77
      %p89 = scmp.eq.s32.totalorder %s25, 1
      %p90 = por %p88, %p89
      %p92 = scmp.ne.s32.totalorder %s77, %s91
      %p93 = scmp.eq.s32.totalorder %s25, 0
      %p94 = por %p92, %p93
      %s96 = sadd.s32 %s95, 1
      %p99 = scmp.eq.s32.totalorder %s19, 1
      %p100 = scmp.ne.s32.totalorder %s95, %s97
      %p101 = scmp.eq.s32.totalorder %s19, 0
      %p102 = por %p100, %p101
      %p103 = scmp.ne.s32.totalorder %s95, %s97
      %p104 = scmp.eq.s32.totalorder %s24, 1
      %p105 = por %p103, %p104
      %p106 = scmp.ne.s32.totalorder %s97, %s98
      %p107 = scmp.eq.s32.totalorder %s24, 0
      %p108 = por %p106, %p107
      %p109 = scmp.ne.s32.totalorder %s97, %s98
      %p110 = scmp.eq.s32.totalorder %s25, 1
      %p111 = por %p109, %p110
      %p113 = scmp.ne.s32.totalorder %s98, %s112
      %p114 = scmp.eq.s32.totalorder %s25, 0
      %p115 = por %p113, %p114
      %s117 = sadd.s32 %s116, 1
      %p120 = scmp.eq.s32.totalorder %s19, 1
      %p121 = scmp.ne.s32.totalorder %s116, %s118
      %p122 = scmp.eq.s32.totalorder %s19, 0
      %p123 = por %p121, %p122
      %p124 = scmp.ne.s32.totalorder %s116, %s118
      %p125 = scmp.eq.s32.totalorder %s24, 1
      %p126 = por %p124, %p125
      %p127 = scmp.ne.s32.totalorder %s118, %s119
      %p128 = scmp.eq.s32.totalorder %s24, 0
      %p129 = por %p127, %p128
      %p130 = scmp.ne.s32.totalorder %s118, %s119
      %p131 = scmp.eq.s32.totalorder %s25, 1
      %p132 = por %p130, %p131
      %p134 = scmp.ne.s32.totalorder %s119, %s133
      %p135 = scmp.eq.s32.totalorder %s25, 0
      %p136 = por %p134, %p135
      %s137 = ssub.s32 %s19, %s26
      %p138 = scmp.eq.s32.totalorder %s137, 0
      %s140 = sadd.s32 %s139, 1
      %s141 = scalar_select %p138, %s139, %s140
      %p144 = pneg %p138
      %p145 = scmp.eq.s32.totalorder %s19, 1
      %p146 = por %p144, %p145
      %p147 = scmp.ne.s32.totalorder %s139, %s142
      %p148 = scmp.eq.s32.totalorder %s19, 0
      %p149 = por %p147, %p148
      %p150 = scmp.ne.s32.totalorder %s139, %s142
      %p151 = scmp.eq.s32.totalorder %s24, 1
      %p152 = por %p150, %p151
      %p153 = scmp.ne.s32.totalorder %s142, %s143
      %p154 = scmp.eq.s32.totalorder %s24, 0
      %p155 = por %p153, %p154
      %p156 = scmp.ne.s32.totalorder %s142, %s143
      %p157 = scmp.eq.s32.totalorder %s25, 1
      %p158 = por %p156, %p157
      %p160 = scmp.ne.s32.totalorder %s143, %s159
      %p161 = scmp.eq.s32.totalorder %s25, 0
      %p162 = por %p160, %p161
      %p163 = scmp.le.s32.totalorder 1, %s19
      %p164 = scmp.lt.s32.totalorder %s19, 3
      %p165 = pnand %p163, %p164
      %p166 = pneg %p165
      // Predicated region
      $region9: #{decoder_forward.4} parent=5 // pred_check
        _
      $region10: #{decoder_forward.4} parent=5 // pred_check_branch
        %168 = sbr.rel (%p165) target = $region12
      $region11: #{decoder_forward.4} parent=5 // pred_region
        %s169 = ssub.s32 %s19, 1
        // Predicated region
        $region13: #{decoder_forward.4} parent=11 // pred_check
          %p170 = pneg %p66
        $region14: #{decoder_forward.4} parent=11 // pred_check_branch
          %172 = sbr.rel (%p170) target = $region16
        $region15: #{decoder_forward.4} parent=11 // pred_region
          %s174 = ssub.s32 2304, 2304
          %175 = vsyncadd [#allocation7], %s174
          %s176 = sshll.u32 [#allocation6], 4
          %s177 = int_to_ptr.vmem [resolvable:$true] %s176
          %182 = dma.hbm_to_vmem [thread:$0]  %s1, 2304, %s177, [#allocation7], 64, 64, 4
        $region16: #{decoder_forward.4} parent=11 // pred_fallthru
          _
        // Predicated region
        $region17: #{decoder_forward.4} parent=11 // pred_check
          %p183 = pneg %p87
        $region18: #{decoder_forward.4} parent=11 // pred_check_branch
          %185 = sbr.rel (%p183) target = $region20
        $region19: #{decoder_forward.4} parent=11 // pred_region
          %s187 = ssub.s32 16, 16
          %188 = vsyncadd [#allocation7], %s187
          %s190 = sshll.u32 [#allocation8], 4
          %s191 = int_to_ptr.vmem [resolvable:$true] %s190
          %193 = dma.hbm_to_vmem [thread:$0]  %s2, 16, %s191, [#allocation7]
        $region20: #{decoder_forward.4} parent=11 // pred_fallthru
          _
        // Predicated region
        $region21: #{decoder_forward.4} parent=11 // pred_check
          %p194 = pneg %p108
        $region22: #{decoder_forward.4} parent=11 // pred_check_branch
          %196 = sbr.rel (%p194) target = $region24
        $region23: #{decoder_forward.4} parent=11 // pred_region
          %s198 = ssub.s32 256, 256
          %199 = vsyncadd [#allocation10], %s198
          %s200 = sshll.u32 [#allocation9], 4
          %s201 = int_to_ptr.vmem [resolvable:$true] %s200
          %206 = dma.hbm_to_vmem [thread:$0]  %s3, 256, %s201, [#allocation10], 64, 64, 4
        $region24: #{decoder_forward.4} parent=11 // pred_fallthru
          _
        // Predicated region
        $region25: #{decoder_forward.4} parent=11 // pred_check
          %p207 = pneg %p129
        $region26: #{decoder_forward.4} parent=11 // pred_check_branch
          %209 = sbr.rel (%p207) target = $region28
        $region27: #{decoder_forward.4} parent=11 // pred_region
          %s211 = ssub.s32 16, 16
          %212 = vsyncadd [#allocation10], %s211
          %s214 = sshll.u32 [#allocation11], 4
          %s215 = int_to_ptr.vmem [resolvable:$true] %s214
          %217 = dma.hbm_to_vmem [thread:$0]  %s4, 16, %s215, [#allocation10]
        $region28: #{decoder_forward.4} parent=11 // pred_fallthru
          _
      $region12: #{decoder_forward.4} parent=5 // pred_fallthru
        _
      %p218 = scmp.lt.s32.totalorder %s19, 2
      // Predicated region
      $region29: #{decoder_forward.4} parent=5 // pred_check
        %p219 = pneg %p218
      $region30: #{decoder_forward.4} parent=5 // pred_check_branch
        %221 = sbr.rel (%p219) target = $region32
      $region31: #{decoder_forward.4} parent=5 // pred_region
        // Predicated region
        $region33: #{decoder_forward.4} parent=31 // pred_check
          %p222 = pneg %p39
        $region34: #{decoder_forward.4} parent=31 // pred_check_branch
          %224 = sbr.rel (%p222) target = $region36
        $region35: #{decoder_forward.4} parent=31 // pred_region
          %s225 = sand.u32 %s29, 1
          %s226 = scalar_lea.sflag [#allocation4], %s225
          %s227 = sand.u32 %s29, 1
          %s228 = smul.addr %s227, 64
          %s229 = scalar_lea.vmem [#allocation3], %s228
          %s231 = ssub.s32 1024, 1024
          %232 = vsyncadd %s226, %s231
          %s233 = smul.addr %s19, 8
          %s234 = smul.addr %s233, 128
          %s235 = scalar_lea.hbm %s0, %s234
          %s236 = sshll.u32 %s229, 4
          %s237 = int_to_ptr.vmem [resolvable:$true] %s236
          %242 = dma.hbm_to_vmem [thread:$0]  %s235, 1024, %s237, %s226, 128, 128, 8
        $region36: #{decoder_forward.4} parent=31 // pred_fallthru
          _
      $region32: #{decoder_forward.4} parent=5 // pred_fallthru
        _
      %p243 = scmp.le.s32.totalorder 1, %s19
      %p244 = scmp.lt.s32.totalorder %s19, 3
      %p245 = pnand %p243, %p244
      %p246 = pneg %p245
      // Predicated region
      $region37: #{decoder_forward.4} parent=5 // pred_check
        _
      $region38: #{decoder_forward.4} parent=5 // pred_check_branch
        %248 = sbr.rel (%p245) target = $region40
      $region39: #{decoder_forward.4} parent=5 // pred_region
        %s249 = ssub.s32 %s19, 1
        %s250 = sand.u32 %s32, 1
        %s251 = scalar_lea.sflag [#allocation4], %s250
        %s252 = sand.u32 %s32, 1
        %s253 = smul.addr %s252, 64
        %s254 = scalar_lea.vmem [#allocation3], %s253
        // Predicated region
        $region41: #{decoder_forward.4} parent=39 // pred_check
          %p255 = pneg %p45
        $region42: #{decoder_forward.4} parent=39 // pred_check_branch
          %257 = sbr.rel (%p255) target = $region44
        $region43: #{decoder_forward.4} parent=39 // pred_region
          %258 = dma.done %s251, 1024
        $region44: #{decoder_forward.4} parent=39 // pred_fallthru
          _
        // Predicated region
        $region45: #{decoder_forward.4} parent=39 // pred_check
          %p259 = pneg %p66
        $region46: #{decoder_forward.4} parent=39 // pred_check_branch
          %261 = sbr.rel (%p259) target = $region48
        $region47: #{decoder_forward.4} parent=39 // pred_region
          %262 = dma.done [#allocation7], 2304
        $region48: #{decoder_forward.4} parent=39 // pred_fallthru
          _
        // Predicated region
        $region49: #{decoder_forward.4} parent=39 // pred_check
          %p263 = pneg %p87
        $region50: #{decoder_forward.4} parent=39 // pred_check_branch
          %265 = sbr.rel (%p263) target = $region52
        $region51: #{decoder_forward.4} parent=39 // pred_region
          %266 = dma.done [#allocation7], 16
        $region52: #{decoder_forward.4} parent=39 // pred_fallthru
          _
        // Predicated region
        $region53: #{decoder_forward.4} parent=39 // pred_check
          %p267 = pneg %p108
        $region54: #{decoder_forward.4} parent=39 // pred_check_branch
          %269 = sbr.rel (%p267) target = $region56
        $region55: #{decoder_forward.4} parent=39 // pred_region
          %270 = dma.done [#allocation10], 256
        $region56: #{decoder_forward.4} parent=39 // pred_fallthru
          _
        // Predicated region
        $region57: #{decoder_forward.4} parent=39 // pred_check
          %p271 = pneg %p129
        $region58: #{decoder_forward.4} parent=39 // pred_check_branch
          %273 = sbr.rel (%p271) target = $region60
        $region59: #{decoder_forward.4} parent=39 // pred_region
          %274 = dma.done [#allocation10], 16
        $region60: #{decoder_forward.4} parent=39 // pred_fallthru
          _
        %s275 = sand.u32 %s32, 1
        %s276 = scalar_lea.sflag [#allocation4], %s275
        %s277 = sand.u32 %s32, 1
        %s278 = smul.addr %s277, 64
        %s279 = scalar_lea.vmem [#allocation3], %s278
        %p280 = pneg %p45
        %p281 = pneg %p42
        %p282 = pneg %p66
        %p283 = pneg %p63
        %p284 = pneg %p87
        %p285 = pneg %p84
        %p286 = pneg %p108
        %p287 = pneg %p105
        %p288 = pneg %p129
        %p289 = pneg %p126
        %p290 = pneg %p155
        %p291 = pneg %p152
        %s292 = sand.u32 %s142, 1
        %s293 = scalar_lea.sflag [#allocation5], %s292
        %s294 = sand.u32 %s142, 1
        %s295 = smul.addr %s294, 64
        %s296 = scalar_lea.vmem [#allocation12], %s295
        %vm298 = vcmask 261120
        %299 = vst.msk [vmem:[#allocation2] sm:$0xff] %vm298, 0.0
        %vm300 = vcmask 254976
        %301 = vst.msk [vmem:[#allocation2 + $0x8] sm:$0x3] %vm300, 0.0
        %s302 = scalar_lea.vmem [#allocation2], 144
        %303 = vst.msk [vmem:[%s302] sm:$0xff] %vm298, 0.0
        %304 = vst.msk [vmem:[%s302 + $0x8] sm:$0x3] %vm300, 0.0
        %s305 = scalar_lea.vmem [#allocation2], 16
        %vm306 = vcmask 253952
        %307 = vst.msk [vmem:[%s305] sm:$0x1] %vm306, 0.0
        %308 = vst.msk [vmem:[%s305 + $0x10] sm:$0x1] %vm306, 0.0
        %309 = vst.msk [vmem:[%s305 + $0x20] sm:$0x1] %vm306, 0.0
        %310 = vst.msk [vmem:[%s305 + $0x30] sm:$0x1] %vm306, 0.0
        %311 = vst.msk [vmem:[%s305 + $0x40] sm:$0x1] %vm306, 0.0
        %312 = vst.msk [vmem:[%s305 + $0x50] sm:$0x1] %vm306, 0.0
        %313 = vst.msk [vmem:[%s305 + $0x60] sm:$0x1] %vm306, 0.0
        %314 = vst.msk [vmem:[%s305 + $0x70] sm:$0x1] %vm306, 0.0
        %315 = vst.msk [vmem:[%s305 + $0x9] sm:$0x1] %vm306, 0.0
        %316 = vst.msk [vmem:[%s305 + $0x19] sm:$0x1] %vm306, 0.0
        %317 = vst.msk [vmem:[%s305 + $0x29] sm:$0x1] %vm306, 0.0
        %318 = vst.msk [vmem:[%s305 + $0x39] sm:$0x1] %vm306, 0.0
        %319 = vst.msk [vmem:[%s305 + $0x49] sm:$0x1] %vm306, 0.0
        %320 = vst.msk [vmem:[%s305 + $0x59] sm:$0x1] %vm306, 0.0
        %321 = vst.msk [vmem:[%s305 + $0x69] sm:$0x1] %vm306, 0.0
        %322 = vst.msk [vmem:[%s305 + $0x79] sm:$0x1] %vm306, 0.0
        %v323 = vld [vmem:[%s254] sm:$0xff]
        %v324 = vld [vmem:[%s254 + $0x8] sm:$0xff]
        %v325 = vld [vmem:[%s254 + $0x10] sm:$0xff]
        %v326 = vld [vmem:[%s254 + $0x18] sm:$0xff]
        %v327 = vld [vmem:[%s254 + $0x20] sm:$0xff]
        %v328 = vld [vmem:[%s254 + $0x28] sm:$0xff]
        %v329 = vld [vmem:[%s254 + $0x30] sm:$0xff]
        %v330 = vld [vmem:[%s254 + $0x38] sm:$0xff]
        %v331 = vmul.f32 %v323, 0.70710677
        %v332 = vmul.f32 %v324, 0.70710677
        %v333 = vmul.f32 %v325, 0.70710677
        %v334 = vmul.f32 %v326, 0.70710677
        %v335 = vmul.f32 %v327, 0.70710677
        %v336 = vmul.f32 %v328, 0.70710677
        %v337 = vmul.f32 %v329, 0.70710677
        %v338 = vmul.f32 %v330, 0.70710677
        %v339 = vand.u32 2147483647, %v331
        %v340 = vand.u32 2147483647, %v332
        %v341 = vand.u32 2147483647, %v333
        %v342 = vand.u32 2147483647, %v334
        %v343 = vand.u32 2147483647, %v335
        %v344 = vand.u32 2147483647, %v336
        %v345 = vand.u32 2147483647, %v337
        %v346 = vand.u32 2147483647, %v338
        %v347 = vmul.f32 %v339, 0.3275911
        %v348 = vmul.f32 %v340, 0.3275911
        %v349 = vmul.f32 %v341, 0.3275911
        %v350 = vmul.f32 %v342, 0.3275911
        %v351 = vmul.f32 %v343, 0.3275911
        %v352 = vmul.f32 %v344, 0.3275911
        %v353 = vmul.f32 %v345, 0.3275911
        %v354 = vmul.f32 %v346, 0.3275911
        %v355 = vadd.f32 %v347, 1.0
        %v356 = vadd.f32 %v348, 1.0
        %v357 = vadd.f32 %v349, 1.0
        %v358 = vadd.f32 %v350, 1.0
        %v359 = vadd.f32 %v351, 1.0
        %v360 = vadd.f32 %v352, 1.0
        %v361 = vadd.f32 %v353, 1.0
        %v362 = vadd.f32 %v354, 1.0
        %v363 = vrcp.pop %v355
        %v364 = vrcp.pop %v356
        %v365 = vrcp.pop %v357
        %v366 = vrcp.pop %v358
        %v367 = vrcp.pop %v359
        %v368 = vrcp.pop %v360
        %v369 = vrcp.pop %v361
        %v370 = vrcp.pop %v362
        %v371 = vmul.f32 %v355, %v363
        %v372 = vmul.f32 %v356, %v364
        %v373 = vmul.f32 %v357, %v365
        %v374 = vmul.f32 %v358, %v366
        %v375 = vmul.f32 %v359, %v367
        %v376 = vmul.f32 %v360, %v368
        %v377 = vmul.f32 %v361, %v369
        %v378 = vmul.f32 %v362, %v370
        %v379 = vsub.f32 2.0, %v371
        %v380 = vsub.f32 2.0, %v372
        %v381 = vsub.f32 2.0, %v373
        %v382 = vsub.f32 2.0, %v374
        %v383 = vsub.f32 2.0, %v375
        %v384 = vsub.f32 2.0, %v376
        %v385 = vsub.f32 2.0, %v377
        %v386 = vsub.f32 2.0, %v378
        %v387 = vmul.f32 %v363, %v379
        %v388 = vmul.f32 %v364, %v380
        %v389 = vmul.f32 %v365, %v381
        %v390 = vmul.f32 %v366, %v382
        %v391 = vmul.f32 %v367, %v383
        %v392 = vmul.f32 %v368, %v384
        %v393 = vmul.f32 %v369, %v385
        %v394 = vmul.f32 %v370, %v386
        %v395 = vmul.f32 %v387, 1.0614054
        %v396 = vmul.f32 %v388, 1.0614054
        %v397 = vmul.f32 %v389, 1.0614054
        %v398 = vmul.f32 %v390, 1.0614054
        %v399 = vmul.f32 %v391, 1.0614054
        %v400 = vmul.f32 %v392, 1.0614054
        %v401 = vmul.f32 %v393, 1.0614054
        %v402 = vmul.f32 %v394, 1.0614054
        %v403 = vsub.f32 %v395, 1.4531521
        %v404 = vsub.f32 %v396, 1.4531521
        %v405 = vsub.f32 %v397, 1.4531521
        %v406 = vsub.f32 %v398, 1.4531521
        %v407 = vsub.f32 %v399, 1.4531521
        %v408 = vsub.f32 %v400, 1.4531521
        %v409 = vsub.f32 %v401, 1.4531521
        %v410 = vsub.f32 %v402, 1.4531521
        %v411 = vmul.f32 %v403, %v387
        %v412 = vmul.f32 %v404, %v388
        %v413 = vmul.f32 %v405, %v389
        %v414 = vmul.f32 %v406, %v390
        %v415 = vmul.f32 %v407, %v391
        %v416 = vmul.f32 %v408, %v392
        %v417 = vmul.f32 %v409, %v393
        %v418 = vmul.f32 %v410, %v394
        %v419 = vadd.f32 %v411, 1.4214138
        %v420 = vadd.f32 %v412, 1.4214138
        %v421 = vadd.f32 %v413, 1.4214138
        %v422 = vadd.f32 %v414, 1.4214138
        %v423 = vadd.f32 %v415, 1.4214138
        %v424 = vadd.f32 %v416, 1.4214138
        %v425 = vadd.f32 %v417, 1.4214138
        %v426 = vadd.f32 %v418, 1.4214138
        %v427 = vmul.f32 %v419, %v387
        %v428 = vmul.f32 %v420, %v388
        %v429 = vmul.f32 %v421, %v389
        %v430 = vmul.f32 %v422, %v390
        %v431 = vmul.f32 %v423, %v391
        %v432 = vmul.f32 %v424, %v392
        %v433 = vmul.f32 %v425, %v393
        %v434 = vmul.f32 %v426, %v394
        %v435 = vsub.f32 %v427, 0.28449672
        %v436 = vsub.f32 %v428, 0.28449672
        %v437 = vsub.f32 %v429, 0.28449672
        %v438 = vsub.f32 %v430, 0.28449672
        %v439 = vsub.f32 %v431, 0.28449672
        %v440 = vsub.f32 %v432, 0.28449672
        %v441 = vsub.f32 %v433, 0.28449672
        %v442 = vsub.f32 %v434, 0.28449672
        %v443 = vmul.f32 %v435, %v387
        %v444 = vmul.f32 %v436, %v388
        %v445 = vmul.f32 %v437, %v389
        %v446 = vmul.f32 %v438, %v390
        %v447 = vmul.f32 %v439, %v391
        %v448 = vmul.f32 %v440, %v392
        %v449 = vmul.f32 %v441, %v393
        %v450 = vmul.f32 %v442, %v394
        %v451 = vadd.f32 %v443, 0.2548296
        %v452 = vadd.f32 %v444, 0.2548296
        %v453 = vadd.f32 %v445, 0.2548296
        %v454 = vadd.f32 %v446, 0.2548296
        %v455 = vadd.f32 %v447, 0.2548296
        %v456 = vadd.f32 %v448, 0.2548296
        %v457 = vadd.f32 %v449, 0.2548296
        %v458 = vadd.f32 %v450, 0.2548296
        %v459 = vmul.f32 %v451, %v387
        %v460 = vmul.f32 %v452, %v388
        %v461 = vmul.f32 %v453, %v389
        %v462 = vmul.f32 %v454, %v390
        %v463 = vmul.f32 %v455, %v391
        %v464 = vmul.f32 %v456, %v392
        %v465 = vmul.f32 %v457, %v393
        %v466 = vmul.f32 %v458, %v394
        %v467 = vsub.f32 0.0, %v339
        %v468 = vsub.f32 0.0, %v340
        %v469 = vsub.f32 0.0, %v341
        %v470 = vsub.f32 0.0, %v342
        %v471 = vsub.f32 0.0, %v343
        %v472 = vsub.f32 0.0, %v344
        %v473 = vsub.f32 0.0, %v345
        %v474 = vsub.f32 0.0, %v346
        %v475 = vmul.f32 %v467, %v339
        %v476 = vmul.f32 %v468, %v340
        %v477 = vmul.f32 %v469, %v341
        %v478 = vmul.f32 %v470, %v342
        %v479 = vmul.f32 %v471, %v343
        %v480 = vmul.f32 %v472, %v344
        %v481 = vmul.f32 %v473, %v345
        %v482 = vmul.f32 %v474, %v346
        %v483 = vmul.f32 %v475, 1.442695
        %v484 = vpow.pop %v483
        %v485 = vmul.f32 %v476, 1.442695
        %v486 = vpow.pop %v485
        %v487 = vmul.f32 %v477, 1.442695
        %v488 = vpow.pop %v487
        %v489 = vmul.f32 %v478, 1.442695
        %v490 = vpow.pop %v489
        %v491 = vmul.f32 %v479, 1.442695
        %v492 = vpow.pop %v491
        %v493 = vmul.f32 %v480, 1.442695
        %v494 = vpow.pop %v493
        %v495 = vmul.f32 %v481, 1.442695
        %v496 = vpow.pop %v495
        %v497 = vmul.f32 %v482, 1.442695
        %v498 = vpow.pop %v497
        %v499 = vmul.f32 %v459, %v484
        %v500 = vmul.f32 %v460, %v486
        %v501 = vmul.f32 %v461, %v488
        %v502 = vmul.f32 %v462, %v490
        %v503 = vmul.f32 %v463, %v492
        %v504 = vmul.f32 %v464, %v494
        %v505 = vmul.f32 %v465, %v496
        %v506 = vmul.f32 %v466, %v498
        %v507 = vsub.f32 1.0, %v499
        %v508 = vsub.f32 1.0, %v500
        %v509 = vsub.f32 1.0, %v501
        %v510 = vsub.f32 1.0, %v502
        %v511 = vsub.f32 1.0, %v503
        %v512 = vsub.f32 1.0, %v504
        %v513 = vsub.f32 1.0, %v505
        %v514 = vsub.f32 1.0, %v506
        %vm515 = vcmp.lt.f32.partialorder %v331, 0.0
        %vm516 = vcmp.lt.f32.partialorder %v332, 0.0
        %vm517 = vcmp.lt.f32.partialorder %v333, 0.0
        %vm518 = vcmp.lt.f32.partialorder %v334, 0.0
        %vm519 = vcmp.lt.f32.partialorder %v335, 0.0
        %vm520 = vcmp.lt.f32.partialorder %v336, 0.0
        %vm521 = vcmp.lt.f32.partialorder %v337, 0.0
        %vm522 = vcmp.lt.f32.partialorder %v338, 0.0
        %v523 = vsub.f32 0.0, %v507
        %v524 = vsub.f32 0.0, %v508
        %v525 = vsub.f32 0.0, %v509
        %v526 = vsub.f32 0.0, %v510
        %v527 = vsub.f32 0.0, %v511
        %v528 = vsub.f32 0.0, %v512
        %v529 = vsub.f32 0.0, %v513
        %v530 = vsub.f32 0.0, %v514
        %v531 = vsel %vm515, %v523, %v507
        %v532 = vsel %vm516, %v524, %v508
        %v533 = vsel %vm517, %v525, %v509
        %v534 = vsel %vm518, %v526, %v510
        %v535 = vsel %vm519, %v527, %v511
        %v536 = vsel %vm520, %v528, %v512
        %v537 = vsel %vm521, %v529, %v513
        %v538 = vsel %vm522, %v530, %v514
        %v539 = vmul.f32 %v323, 0.5
        %v540 = vmul.f32 %v324, 0.5
        %v541 = vmul.f32 %v325, 0.5
        %v542 = vmul.f32 %v326, 0.5
        %v543 = vmul.f32 %v327, 0.5
        %v544 = vmul.f32 %v328, 0.5
        %v545 = vmul.f32 %v329, 0.5
        %v546 = vmul.f32 %v330, 0.5
        %v547 = vadd.f32 %v531, 1.0
        %v548 = vadd.f32 %v532, 1.0
        %v549 = vadd.f32 %v533, 1.0
        %v550 = vadd.f32 %v534, 1.0
        %v551 = vadd.f32 %v535, 1.0
        %v552 = vadd.f32 %v536, 1.0
        %v553 = vadd.f32 %v537, 1.0
        %v554 = vadd.f32 %v538, 1.0
        %v555 = vmul.f32 %v539, %v547
        %v556 = vmul.f32 %v540, %v548
        %v557 = vmul.f32 %v541, %v549
        %v558 = vmul.f32 %v542, %v550
        %v559 = vmul.f32 %v543, %v551
        %v560 = vmul.f32 %v544, %v552
        %v561 = vmul.f32 %v545, %v553
        %v562 = vmul.f32 %v546, %v554
        %563 = vst.msk [vmem:[%s305 + $0x1] sm:$0xff] %vm298, %v555
        %564 = vst.msk [vmem:[%s305 + $0x11] sm:$0xff] %vm298, %v556
        %565 = vst.msk [vmem:[%s305 + $0x21] sm:$0xff] %vm298, %v557
        %566 = vst.msk [vmem:[%s305 + $0x31] sm:$0xff] %vm298, %v558
        %567 = vst.msk [vmem:[%s305 + $0x41] sm:$0xff] %vm298, %v559
        %568 = vst.msk [vmem:[%s305 + $0x51] sm:$0xff] %vm298, %v560
        %569 = vst.msk [vmem:[%s305 + $0x61] sm:$0xff] %vm298, %v561
        %570 = vst.msk [vmem:[%s305 + $0x71] sm:$0xff] %vm298, %v562
        %v571 = vld [vmem:[#allocation2] sm:$0xff]
        %v572 = vld [vmem:[#allocation2 + $0x10] sm:$0xff]
        %v573 = vld [vmem:[#allocation2 + $0x20] sm:$0xff]
        %v574 = vld [vmem:[#allocation2 + $0x30] sm:$0xff]
        %v575 = vld [vmem:[#allocation2 + $0x40] sm:$0xff]
        %v576 = vld [vmem:[#allocation2 + $0x50] sm:$0xff]
        %v577 = vld [vmem:[#allocation2 + $0x60] sm:$0xff]
        %v578 = vld [vmem:[#allocation2 + $0x70] sm:$0xff]
        %v579 = vld [vmem:[#allocation6] sm:$0xf]
        %v580 = vld [vmem:[#allocation6 + $0x4] sm:$0xf]
        %v581 = vld [vmem:[#allocation6 + $0x8] sm:$0xf]
        %v582 = vld [vmem:[#allocation6 + $0xc] sm:$0xf]
        %v583 = vpack.c.bf16 %v572, %v571
        %v584 = vpack.c.bf16 %v574, %v573
        %v585 = vpack.c.bf16 %v576, %v575
        %v586 = vpack.c.bf16 %v578, %v577
        %v587 = vld [vmem:[#allocation2 + $0x1] sm:$0xff]
        %v588 = vld [vmem:[#allocation2 + $0x11] sm:$0xff]
        %v589 = vld [vmem:[#allocation2 + $0x21] sm:$0xff]
        %v590 = vld [vmem:[#allocation2 + $0x31] sm:$0xff]
        %v591 = vld [vmem:[#allocation2 + $0x41] sm:$0xff]
        %v592 = vld [vmem:[#allocation2 + $0x51] sm:$0xff]
        %v593 = vld [vmem:[#allocation2 + $0x61] sm:$0xff]
        %v594 = vld [vmem:[#allocation2 + $0x71] sm:$0xff]
        %v595 = vld [vmem:[#allocation6 + $0x10] sm:$0xf]
        %v596 = vld [vmem:[#allocation6 + $0x14] sm:$0xf]
        %v597 = vld [vmem:[#allocation6 + $0x18] sm:$0xf]
        %v598 = vld [vmem:[#allocation6 + $0x1c] sm:$0xf]
        %v599 = vpack.c.bf16 %v588, %v587
        %v600 = vpack.c.bf16 %v590, %v589
        %v601 = vpack.c.bf16 %v592, %v591
        %v602 = vpack.c.bf16 %v594, %v593
        %v607 = vunpack.c.l.b16 %v595
        %v608 = vunpack.c.l.b16 %v596
        %v609 = vunpack.c.l.b16 %v597
        %v610 = vunpack.c.l.b16 %v598
        %v611 = vpack.c.b16 %v608, %v607
        %v612 = vpack.c.b16 %v610, %v609
        %v616 = vsel %vm298, %v599, 0
        %v619 = vsel %vm298, %v600, 0
        %v622 = vsel %vm298, %v601, 0
        %v625 = vsel %vm298, %v602, 0
        %627 = vmatprep.subr.bf16.mxu0 0
        %628 = vmatpush1.bf16.msra.mxu0 %v611
        %629 = vmatprep.subr.bf16.mxu0 0
        %630 = vmatpush1.bf16.msra.mxu0 %v612
        %631 = vmatprep.subr.bf16.mxu0 0
        %632 = vmatpush1.bf16.msra.mxu0 0
        %633 = vmatprep.subr.bf16.mxu0 0
        %634 = vmatpush1.bf16.msra.mxu0 0
        %635 = vmatprep.subr.bf16.mxu0 0
        %636 = vmatpush1.bf16.msra.mxu0 0
        %637 = vmatprep.subr.bf16.mxu0 0
        %638 = vmatpush1.bf16.msra.mxu0 0
        %639 = vmatprep.subr.bf16.mxu0 0
        %640 = vmatpush1.bf16.msra.mxu0 0
        %641 = vmatprep.subr.bf16.mxu0 0
        %642 = vmatpush1.bf16.msra.mxu0 0
        %643 = vmatprep.subr.bf16.mxu0 0
        %644 = vmatpush1.bf16.msra.mxu0 0
        %645 = vmatprep.subr.bf16.mxu0 0
        %646 = vmatpush1.bf16.msra.mxu0 0
        %647 = vmatprep.subr.bf16.mxu0 0
        %648 = vmatpush1.bf16.msra.mxu0 0
        %649 = vmatprep.subr.bf16.mxu0 0
        %650 = vmatpush1.bf16.msra.mxu0 0
        %651 = vmatprep.subr.bf16.mxu0 0
        %652 = vmatpush1.bf16.msra.mxu0 0
        %653 = vmatprep.subr.bf16.mxu0 0
        %654 = vmatpush1.bf16.msra.mxu0 0
        %655 = vmatprep.subr.bf16.mxu0 0
        %656 = vmatpush1.bf16.msra.mxu0 0
        %657 = vmatprep.subr.bf16.mxu0 0
        %658 = vmatpush1.bf16.msra.mxu0 0
        %659 = vmatprep.mubr.bf16.mxu0 0
        %660 = vmatmul.mubr.bf16.gmra.mrb[0].mxu0 %v616
        %v661 = vpop.f32.mrb[0].mxu0
        %v662 = vadd.f32 0.0, %v661
        %v663 = vpop.f32.mrb[0].mxu0
        %v664 = vpop.f32.mrb[0].mxu0
        %v665 = vadd.f32 0.0, %v664
        %v666 = vpop.f32.mrb[0].mxu0
        %667 = vmatprep.mubr.bf16.mxu0 0
        %668 = vmatmul.mubr.bf16.gmra.mrb[0].mxu0 %v619
        %v669 = vpop.f32.mrb[0].mxu0
        %v670 = vadd.f32 0.0, %v669
        %v671 = vpop.f32.mrb[0].mxu0
        %v672 = vpop.f32.mrb[0].mxu0
        %v673 = vadd.f32 0.0, %v672
        %v674 = vpop.f32.mrb[0].mxu0
        %675 = vmatprep.mubr.bf16.mxu0 0
        %676 = vmatmul.mubr.bf16.gmra.mrb[0].mxu0 %v622
        %v677 = vpop.f32.mrb[0].mxu0
        %v678 = vadd.f32 0.0, %v677
        %v679 = vpop.f32.mrb[0].mxu0
        %v680 = vpop.f32.mrb[0].mxu0
        %v681 = vadd.f32 0.0, %v680
        %v682 = vpop.f32.mrb[0].mxu0
        %683 = vmatprep.mubr.bf16.mxu0 0
        %684 = vmatmul.mubr.bf16.gmra.mrb[0].mxu0 %v625
        %v685 = vpop.f32.mrb[0].mxu0
        %v686 = vadd.f32 0.0, %v685
        %v687 = vpop.f32.mrb[0].mxu0
        %v688 = vpop.f32.mrb[0].mxu0
        %v689 = vadd.f32 0.0, %v688
        %v690 = vpop.f32.mrb[0].mxu0
        %691 = vdwg.mxu0
        %v696 = vunpack.c.l.b16 %v579
        %v697 = vunpack.c.l.b16 %v580
        %v698 = vunpack.c.l.b16 %v581
        %v699 = vunpack.c.l.b16 %v582
        %v700 = vpack.c.b16 %v697, %v696
        %v701 = vpack.c.b16 %v699, %v698
        %v705 = vsel %vm298, %v583, 0
        %v708 = vsel %vm298, %v584, 0
        %v711 = vsel %vm298, %v585, 0
        %v714 = vsel %vm298, %v586, 0
        %716 = vmatprep.subr.bf16.mxu0 0
        %717 = vmatpush1.bf16.msra.mxu0 %v700
        %718 = vmatprep.subr.bf16.mxu0 0
        %719 = vmatpush1.bf16.msra.mxu0 %v701
        %720 = vmatprep.subr.bf16.mxu0 0
        %721 = vmatpush1.bf16.msra.mxu0 0
        %722 = vmatprep.subr.bf16.mxu0 0
        %723 = vmatpush1.bf16.msra.mxu0 0
        %724 = vmatprep.subr.bf16.mxu0 0
        %725 = vmatpush1.bf16.msra.mxu0 0
        %726 = vmatprep.subr.bf16.mxu0 0
        %727 = vmatpush1.bf16.msra.mxu0 0
        %728 = vmatprep.subr.bf16.mxu0 0
        %729 = vmatpush1.bf16.msra.mxu0 0
        %730 = vmatprep.subr.bf16.mxu0 0
        %731 = vmatpush1.bf16.msra.mxu0 0
        %732 = vmatprep.subr.bf16.mxu0 0
        %733 = vmatpush1.bf16.msra.mxu0 0
        %734 = vmatprep.subr.bf16.mxu0 0
        %735 = vmatpush1.bf16.msra.mxu0 0
        %736 = vmatprep.subr.bf16.mxu0 0
        %737 = vmatpush1.bf16.msra.mxu0 0
        %738 = vmatprep.subr.bf16.mxu0 0
        %739 = vmatpush1.bf16.msra.mxu0 0
        %740 = vmatprep.subr.bf16.mxu0 0
        %741 = vmatpush1.bf16.msra.mxu0 0
        %742 = vmatprep.subr.bf16.mxu0 0
        %743 = vmatpush1.bf16.msra.mxu0 0
        %744 = vmatprep.subr.bf16.mxu0 0
        %745 = vmatpush1.bf16.msra.mxu0 0
        %746 = vmatprep.subr.bf16.mxu0 0
        %747 = vmatpush1.bf16.msra.mxu0 0
        %748 = vmatprep.mubr.bf16.mxu0 0
        %749 = vmatmul.mubr.bf16.gmra.mrb[0].mxu0 %v705
        %v750 = vpop.f32.mrb[0].mxu0
        %v751 = vadd.f32 %v662, %v750
        %v752 = vpop.f32.mrb[0].mxu0
        %v753 = vpop.f32.mrb[0].mxu0
        %v754 = vadd.f32 %v665, %v753
        %v755 = vpop.f32.mrb[0].mxu0
        %756 = vmatprep.mubr.bf16.mxu0 0
        %757 = vmatmul.mubr.bf16.gmra.mrb[0].mxu0 %v708
        %v758 = vpop.f32.mrb[0].mxu0
        %v759 = vadd.f32 %v670, %v758
        %v760 = vpop.f32.mrb[0].mxu0
        %v761 = vpop.f32.mrb[0].mxu0
        %v762 = vadd.f32 %v673, %v761
        %v763 = vpop.f32.mrb[0].mxu0
        %764 = vmatprep.mubr.bf16.mxu0 0
        %765 = vmatmul.mubr.bf16.gmra.mrb[0].mxu0 %v711
        %v766 = vpop.f32.mrb[0].mxu0
        %v767 = vadd.f32 %v678, %v766
        %v768 = vpop.f32.mrb[0].mxu0
        %v769 = vpop.f32.mrb[0].mxu0
        %v770 = vadd.f32 %v681, %v769
        %v771 = vpop.f32.mrb[0].mxu0
        %772 = vmatprep.mubr.bf16.mxu0 0
        %773 = vmatmul.mubr.bf16.gmra.mrb[0].mxu0 %v714
        %v774 = vpop.f32.mrb[0].mxu0
        %v775 = vadd.f32 %v686, %v774
        %v776 = vpop.f32.mrb[0].mxu0
        %v777 = vpop.f32.mrb[0].mxu0
        %v778 = vadd.f32 %v689, %v777
        %v779 = vpop.f32.mrb[0].mxu0
        %780 = vdwg.mxu0
        %v781 = vld [vmem:[#allocation2 + $0x2] sm:$0xff]
        %v782 = vld [vmem:[#allocation2 + $0x12] sm:$0xff]
        %v783 = vld [vmem:[#allocation2 + $0x22] sm:$0xff]
        %v784 = vld [vmem:[#allocation2 + $0x32] sm:$0xff]
        %v785 = vld [vmem:[#allocation2 + $0x42] sm:$0xff]
        %v786 = vld [vmem:[#allocation2 + $0x52] sm:$0xff]
        %v787 = vld [vmem:[#allocation2 + $0x62] sm:$0xff]
        %v788 = vld [vmem:[#allocation2 + $0x72] sm:$0xff]
        %v789 = vld [vmem:[#allocation6 + $0x20] sm:$0xf]
        %v790 = vld [vmem:[#allocation6 + $0x24] sm:$0xf]
        %v791 = vld [vmem:[#allocation6 + $0x28] sm:$0xf]
        %v792 = vld [vmem:[#allocation6 + $0x2c] sm:$0xf]
        %v793 = vpack.c.bf16 %v782, %v781
        %v794 = vpack.c.bf16 %v784, %v783
        %v795 = vpack.c.bf16 %v786, %v785
        %v796 = vpack.c.bf16 %v788, %v787
        %v801 = vunpack.c.l.b16 %v789
        %v802 = vunpack.c.l.b16 %v790
        %v803 = vunpack.c.l.b16 %v791
        %v804 = vunpack.c.l.b16 %v792
        %v805 = vpack.c.b16 %v802, %v801
        %v806 = vpack.c.b16 %v804, %v803
        %v810 = vsel %vm298, %v793, 0
        %v813 = vsel %vm298, %v794, 0
        %v816 = vsel %vm298, %v795, 0
        %v819 = vsel %vm298, %v796, 0
        %821 = vmatprep.subr.bf16.mxu0 0
        %822 = vmatpush1.bf16.msra.mxu0 %v805
        %823 = vmatprep.subr.bf16.mxu0 0
        %824 = vmatpush1.bf16.msra.mxu0 %v806
        %825 = vmatprep.subr.bf16.mxu0 0
        %826 = vmatpush1.bf16.msra.mxu0 0
        %827 = vmatprep.subr.bf16.mxu0 0
        %828 = vmatpush1.bf16.msra.mxu0 0
        %829 = vmatprep.subr.bf16.mxu0 0
        %830 = vmatpush1.bf16.msra.mxu0 0
        %831 = vmatprep.subr.bf16.mxu0 0
        %832 = vmatpush1.bf16.msra.mxu0 0
        %833 = vmatprep.subr.bf16.mxu0 0
        %834 = vmatpush1.bf16.msra.mxu0 0
        %835 = vmatprep.subr.bf16.mxu0 0
        %836 = vmatpush1.bf16.msra.mxu0 0
        %837 = vmatprep.subr.bf16.mxu0 0
        %838 = vmatpush1.bf16.msra.mxu0 0
        %839 = vmatprep.subr.bf16.mxu0 0
        %840 = vmatpush1.bf16.msra.mxu0 0
        %841 = vmatprep.subr.bf16.mxu0 0
        %842 = vmatpush1.bf16.msra.mxu0 0
        %843 = vmatprep.subr.bf16.mxu0 0
        %844 = vmatpush1.bf16.msra.mxu0 0
        %845 = vmatprep.subr.bf16.mxu0 0
        %846 = vmatpush1.bf16.msra.mxu0 0
        %847 = vmatprep.subr.bf16.mxu0 0
        %848 = vmatpush1.bf16.msra.mxu0 0
        %849 = vmatprep.subr.bf16.mxu0 0
        %850 = vmatpush1.bf16.msra.mxu0 0
        %851 = vmatprep.subr.bf16.mxu0 0
        %852 = vmatpush1.bf16.msra.mxu0 0
        %853 = vmatprep.mubr.bf16.mxu0 0
        %854 = vmatmul.mubr.bf16.gmra.mrb[0].mxu0 %v810
        %v855 = vpop.f32.mrb[0].mxu0
        %v856 = vadd.f32 0.0, %v855
        %v857 = vpop.f32.mrb[0].mxu0
        %v858 = vpop.f32.mrb[0].mxu0
        %v859 = vadd.f32 0.0, %v858
        %v860 = vpop.f32.mrb[0].mxu0
        %861 = vmatprep.mubr.bf16.mxu0 0
        %862 = vmatmul.mubr.bf16.gmra.mrb[0].mxu0 %v813
        %v863 = vpop.f32.mrb[0].mxu0
        %v864 = vadd.f32 0.0, %v863
        %v865 = vpop.f32.mrb[0].mxu0
        %v866 = vpop.f32.mrb[0].mxu0
        %v867 = vadd.f32 0.0, %v866
        %v868 = vpop.f32.mrb[0].mxu0
        %869 = vmatprep.mubr.bf16.mxu0 0
        %870 = vmatmul.mubr.bf16.gmra.mrb[0].mxu0 %v816
        %v871 = vpop.f32.mrb[0].mxu0
        %v872 = vadd.f32 0.0, %v871
        %v873 = vpop.f32.mrb[0].mxu0
        %v874 = vpop.f32.mrb[0].mxu0
        %v875 = vadd.f32 0.0, %v874
        %v876 = vpop.f32.mrb[0].mxu0
        %877 = vmatprep.mubr.bf16.mxu0 0
        %878 = vmatmul.mubr.bf16.gmra.mrb[0].mxu0 %v819
        %v879 = vpop.f32.mrb[0].mxu0
        %v880 = vadd.f32 0.0, %v879
        %v881 = vpop.f32.mrb[0].mxu0
        %v882 = vpop.f32.mrb[0].mxu0
        %v883 = vadd.f32 0.0, %v882
        %v884 = vpop.f32.mrb[0].mxu0
        %885 = vdwg.mxu0
        %v886 = vadd.f32 %v751, %v856
        %v887 = vadd.f32 %v754, %v859
        %v888 = vadd.f32 %v759, %v864
        %v889 = vadd.f32 %v762, %v867
        %v890 = vadd.f32 %v767, %v872
        %v891 = vadd.f32 %v770, %v875
        %v892 = vadd.f32 %v775, %v880
        %v893 = vadd.f32 %v778, %v883
        %v894 = vld [vmem:[%s305] sm:$0xff]
        %v895 = vld [vmem:[%s305 + $0x10] sm:$0xff]
        %v896 = vld [vmem:[%s305 + $0x20] sm:$0xff]
        %v897 = vld [vmem:[%s305 + $0x30] sm:$0xff]
        %v898 = vld [vmem:[%s305 + $0x40] sm:$0xff]
        %v899 = vld [vmem:[%s305 + $0x50] sm:$0xff]
        %v900 = vld [vmem:[%s305 + $0x60] sm:$0xff]
        %v901 = vld [vmem:[%s305 + $0x70] sm:$0xff]
        %v902 = vld [vmem:[#allocation6 + $0x30] sm:$0xf]
        %v903 = vld [vmem:[#allocation6 + $0x34] sm:$0xf]
        %v904 = vld [vmem:[#allocation6 + $0x38] sm:$0xf]
        %v905 = vld [vmem:[#allocation6 + $0x3c] sm:$0xf]
        %v906 = vpack.c.bf16 %v895, %v894
        %v907 = vpack.c.bf16 %v897, %v896
        %v908 = vpack.c.bf16 %v899, %v898
        %v909 = vpack.c.bf16 %v901, %v900
        %v914 = vunpack.c.l.b16 %v902
        %v915 = vunpack.c.l.b16 %v903
        %v916 = vunpack.c.l.b16 %v904
        %v917 = vunpack.c.l.b16 %v905
        %v918 = vpack.c.b16 %v915, %v914
        %v919 = vpack.c.b16 %v917, %v916
        %v923 = vsel %vm298, %v906, 0
        %v926 = vsel %vm298, %v907, 0
        %v929 = vsel %vm298, %v908, 0
        %v932 = vsel %vm298, %v909, 0
        %934 = vmatprep.subr.bf16.mxu0 0
        %935 = vmatpush1.bf16.msra.mxu0 %v918
        %936 = vmatprep.subr.bf16.mxu0 0
        %937 = vmatpush1.bf16.msra.mxu0 %v919
        %938 = vmatprep.subr.bf16.mxu0 0
        %939 = vmatpush1.bf16.msra.mxu0 0
        %940 = vmatprep.subr.bf16.mxu0 0
        %941 = vmatpush1.bf16.msra.mxu0 0
        %942 = vmatprep.subr.bf16.mxu0 0
        %943 = vmatpush1.bf16.msra.mxu0 0
        %944 = vmatprep.subr.bf16.mxu0 0
        %945 = vmatpush1.bf16.msra.mxu0 0
        %946 = vmatprep.subr.bf16.mxu0 0
        %947 = vmatpush1.bf16.msra.mxu0 0
        %948 = vmatprep.subr.bf16.mxu0 0
        %949 = vmatpush1.bf16.msra.mxu0 0
        %950 = vmatprep.subr.bf16.mxu0 0
        %951 = vmatpush1.bf16.msra.mxu0 0
        %952 = vmatprep.subr.bf16.mxu0 0
        %953 = vmatpush1.bf16.msra.mxu0 0
        %954 = vmatprep.subr.bf16.mxu0 0
        %955 = vmatpush1.bf16.msra.mxu0 0
        %956 = vmatprep.subr.bf16.mxu0 0
        %957 = vmatpush1.bf16.msra.mxu0 0
        %958 = vmatprep.subr.bf16.mxu0 0
        %959 = vmatpush1.bf16.msra.mxu0 0
        %960 = vmatprep.subr.bf16.mxu0 0
        %961 = vmatpush1.bf16.msra.mxu0 0
        %962 = vmatprep.subr.bf16.mxu0 0
        %963 = vmatpush1.bf16.msra.mxu0 0
        %964 = vmatprep.subr.bf16.mxu0 0
        %965 = vmatpush1.bf16.msra.mxu0 0
        %966 = vmatprep.mubr.bf16.mxu0 0
        %967 = vmatmul.mubr.bf16.gmra.mrb[0].mxu0 %v923
        %v968 = vpop.f32.mrb[0].mxu0
        %v969 = vadd.f32 0.0, %v968
        %v970 = vpop.f32.mrb[0].mxu0
        %v971 = vpop.f32.mrb[0].mxu0
        %v972 = vadd.f32 0.0, %v971
        %v973 = vpop.f32.mrb[0].mxu0
        %974 = vmatprep.mubr.bf16.mxu0 0
        %975 = vmatmul.mubr.bf16.gmra.mrb[0].mxu0 %v926
        %v976 = vpop.f32.mrb[0].mxu0
        %v977 = vadd.f32 0.0, %v976
        %v978 = vpop.f32.mrb[0].mxu0
        %v979 = vpop.f32.mrb[0].mxu0
        %v980 = vadd.f32 0.0, %v979
        %v981 = vpop.f32.mrb[0].mxu0
        %982 = vmatprep.mubr.bf16.mxu0 0
        %983 = vmatmul.mubr.bf16.gmra.mrb[0].mxu0 %v929
        %v984 = vpop.f32.mrb[0].mxu0
        %v985 = vadd.f32 0.0, %v984
        %v986 = vpop.f32.mrb[0].mxu0
        %v987 = vpop.f32.mrb[0].mxu0
        %v988 = vadd.f32 0.0, %v987
        %v989 = vpop.f32.mrb[0].mxu0
        %990 = vmatprep.mubr.bf16.mxu0 0
        %991 = vmatmul.mubr.bf16.gmra.mrb[0].mxu0 %v932
        %v992 = vpop.f32.mrb[0].mxu0
        %v993 = vadd.f32 0.0, %v992
        %v994 = vpop.f32.mrb[0].mxu0
        %v995 = vpop.f32.mrb[0].mxu0
        %v996 = vadd.f32 0.0, %v995
        %v997 = vpop.f32.mrb[0].mxu0
        %998 = vdwg.mxu0
        %v999 = vadd.f32 %v886, %v969
        %v1000 = vadd.f32 %v887, %v972
        %v1001 = vadd.f32 %v888, %v977
        %v1002 = vadd.f32 %v889, %v980
        %v1003 = vadd.f32 %v890, %v985
        %v1004 = vadd.f32 %v891, %v988
        %v1005 = vadd.f32 %v892, %v993
        %v1006 = vadd.f32 %v893, %v996
        %v1007 = vld [vmem:[%s305 + $0x1] sm:$0xff]
        %v1008 = vld [vmem:[%s305 + $0x11] sm:$0xff]
        %v1009 = vld [vmem:[%s305 + $0x21] sm:$0xff]
        %v1010 = vld [vmem:[%s305 + $0x31] sm:$0xff]
        %v1011 = vld [vmem:[%s305 + $0x41] sm:$0xff]
        %v1012 = vld [vmem:[%s305 + $0x51] sm:$0xff]
        %v1013 = vld [vmem:[%s305 + $0x61] sm:$0xff]
        %v1014 = vld [vmem:[%s305 + $0x71] sm:$0xff]
        %v1015 = vld [vmem:[#allocation6 + $0x40] sm:$0xf]
        %v1016 = vld [vmem:[#allocation6 + $0x44] sm:$0xf]
        %v1017 = vld [vmem:[#allocation6 + $0x48] sm:$0xf]
        %v1018 = vld [vmem:[#allocation6 + $0x4c] sm:$0xf]
        %v1019 = vpack.c.bf16 %v1008, %v1007
        %v1020 = vpack.c.bf16 %v1010, %v1009
        %v1021 = vpack.c.bf16 %v1012, %v1011
        %v1022 = vpack.c.bf16 %v1014, %v1013
        %v1027 = vunpack.c.l.b16 %v1015
        %v1028 = vunpack.c.l.b16 %v1016
        %v1029 = vunpack.c.l.b16 %v1017
        %v1030 = vunpack.c.l.b16 %v1018
        %v1031 = vpack.c.b16 %v1028, %v1027
        %v1032 = vpack.c.b16 %v1030, %v1029
        %v1036 = vsel %vm298, %v1019, 0
        %v1039 = vsel %vm298, %v1020, 0
        %v1042 = vsel %vm298, %v1021, 0
        %v1045 = vsel %vm298, %v1022, 0
        %1047 = vmatprep.subr.bf16.mxu0 0
        %1048 = vmatpush1.bf16.msra.mxu0 %v1031
        %1049 = vmatprep.subr.bf16.mxu0 0
        %1050 = vmatpush1.bf16.msra.mxu0 %v1032
        %1051 = vmatprep.subr.bf16.mxu0 0
        %1052 = vmatpush1.bf16.msra.mxu0 0
        %1053 = vmatprep.subr.bf16.mxu0 0
        %1054 = vmatpush1.bf16.msra.mxu0 0
        %1055 = vmatprep.subr.bf16.mxu0 0
        %1056 = vmatpush1.bf16.msra.mxu0 0
        %1057 = vmatprep.subr.bf16.mxu0 0
        %1058 = vmatpush1.bf16.msra.mxu0 0
        %1059 = vmatprep.subr.bf16.mxu0 0
        %1060 = vmatpush1.bf16.msra.mxu0 0
        %1061 = vmatprep.subr.bf16.mxu0 0
        %1062 = vmatpush1.bf16.msra.mxu0 0
        %1063 = vmatprep.subr.bf16.mxu0 0
        %1064 = vmatpush1.bf16.msra.mxu0 0
        %1065 = vmatprep.subr.bf16.mxu0 0
        %1066 = vmatpush1.bf16.msra.mxu0 0
        %1067 = vmatprep.subr.bf16.mxu0 0
        %1068 = vmatpush1.bf16.msra.mxu0 0
        %1069 = vmatprep.subr.bf16.mxu0 0
        %1070 = vmatpush1.bf16.msra.mxu0 0
        %1071 = vmatprep.subr.bf16.mxu0 0
        %1072 = vmatpush1.bf16.msra.mxu0 0
        %1073 = vmatprep.subr.bf16.mxu0 0
        %1074 = vmatpush1.bf16.msra.mxu0 0
        %1075 = vmatprep.subr.bf16.mxu0 0
        %1076 = vmatpush1.bf16.msra.mxu0 0
        %1077 = vmatprep.subr.bf16.mxu0 0
        %1078 = vmatpush1.bf16.msra.mxu0 0
        %1079 = vmatprep.mubr.bf16.mxu0 0
        %1080 = vmatmul.mubr.bf16.gmra.mrb[0].mxu0 %v1036
        %v1081 = vpop.f32.mrb[0].mxu0
        %v1082 = vadd.f32 0.0, %v1081
        %v1083 = vpop.f32.mrb[0].mxu0
        %v1084 = vpop.f32.mrb[0].mxu0
        %v1085 = vadd.f32 0.0, %v1084
        %v1086 = vpop.f32.mrb[0].mxu0
        %1087 = vmatprep.mubr.bf16.mxu0 0
        %1088 = vmatmul.mubr.bf16.gmra.mrb[0].mxu0 %v1039
        %v1089 = vpop.f32.mrb[0].mxu0
        %v1090 = vadd.f32 0.0, %v1089
        %v1091 = vpop.f32.mrb[0].mxu0
        %v1092 = vpop.f32.mrb[0].mxu0
        %v1093 = vadd.f32 0.0, %v1092
        %v1094 = vpop.f32.mrb[0].mxu0
        %1095 = vmatprep.mubr.bf16.mxu0 0
        %1096 = vmatmul.mubr.bf16.gmra.mrb[0].mxu0 %v1042
        %v1097 = vpop.f32.mrb[0].mxu0
        %v1098 = vadd.f32 0.0, %v1097
        %v1099 = vpop.f32.mrb[0].mxu0
        %v1100 = vpop.f32.mrb[0].mxu0
        %v1101 = vadd.f32 0.0, %v1100
        %v1102 = vpop.f32.mrb[0].mxu0
        %1103 = vmatprep.mubr.bf16.mxu0 0
        %1104 = vmatmul.mubr.bf16.gmra.mrb[0].mxu0 %v1045
        %v1105 = vpop.f32.mrb[0].mxu0
        %v1106 = vadd.f32 0.0, %v1105
        %v1107 = vpop.f32.mrb[0].mxu0
        %v1108 = vpop.f32.mrb[0].mxu0
        %v1109 = vadd.f32 0.0, %v1108
        %v1110 = vpop.f32.mrb[0].mxu0
        %1111 = vdwg.mxu0
        %v1112 = vadd.f32 %v999, %v1082
        %v1113 = vadd.f32 %v1000, %v1085
        %v1114 = vadd.f32 %v1001, %v1090
        %v1115 = vadd.f32 %v1002, %v1093
        %v1116 = vadd.f32 %v1003, %v1098
        %v1117 = vadd.f32 %v1004, %v1101
        %v1118 = vadd.f32 %v1005, %v1106
        %v1119 = vadd.f32 %v1006, %v1109
        %v1120 = vld [vmem:[%s305 + $0x2] sm:$0xff]
        %v1121 = vld [vmem:[%s305 + $0x12] sm:$0xff]
        %v1122 = vld [vmem:[%s305 + $0x22] sm:$0xff]
        %v1123 = vld [vmem:[%s305 + $0x32] sm:$0xff]
        %v1124 = vld [vmem:[%s305 + $0x42] sm:$0xff]
        %v1125 = vld [vmem:[%s305 + $0x52] sm:$0xff]
        %v1126 = vld [vmem:[%s305 + $0x62] sm:$0xff]
        %v1127 = vld [vmem:[%s305 + $0x72] sm:$0xff]
        %v1128 = vld [vmem:[#allocation6 + $0x50] sm:$0xf]
        %v1129 = vld [vmem:[#allocation6 + $0x54] sm:$0xf]
        %v1130 = vld [vmem:[#allocation6 + $0x58] sm:$0xf]
        %v1131 = vld [vmem:[#allocation6 + $0x5c] sm:$0xf]
        %v1132 = vpack.c.bf16 %v1121, %v1120
        %v1133 = vpack.c.bf16 %v1123, %v1122
        %v1134 = vpack.c.bf16 %v1125, %v1124
        %v1135 = vpack.c.bf16 %v1127, %v1126
        %v1140 = vunpack.c.l.b16 %v1128
        %v1141 = vunpack.c.l.b16 %v1129
        %v1142 = vunpack.c.l.b16 %v1130
        %v1143 = vunpack.c.l.b16 %v1131
        %v1144 = vpack.c.b16 %v1141, %v1140
        %v1145 = vpack.c.b16 %v1143, %v1142
        %v1149 = vsel %vm298, %v1132, 0
        %v1152 = vsel %vm298, %v1133, 0
        %v1155 = vsel %vm298, %v1134, 0
        %v1158 = vsel %vm298, %v1135, 0
        %1160 = vmatprep.subr.bf16.mxu0 0
        %1161 = vmatpush1.bf16.msra.mxu0 %v1144
        %1162 = vmatprep.subr.bf16.mxu0 0
        %1163 = vmatpush1.bf16.msra.mxu0 %v1145
        %1164 = vmatprep.subr.bf16.mxu0 0
        %1165 = vmatpush1.bf16.msra.mxu0 0
        %1166 = vmatprep.subr.bf16.mxu0 0
        %1167 = vmatpush1.bf16.msra.mxu0 0
        %1168 = vmatprep.subr.bf16.mxu0 0
        %1169 = vmatpush1.bf16.msra.mxu0 0
        %1170 = vmatprep.subr.bf16.mxu0 0
        %1171 = vmatpush1.bf16.msra.mxu0 0
        %1172 = vmatprep.subr.bf16.mxu0 0
        %1173 = vmatpush1.bf16.msra.mxu0 0
        %1174 = vmatprep.subr.bf16.mxu0 0
        %1175 = vmatpush1.bf16.msra.mxu0 0
        %1176 = vmatprep.subr.bf16.mxu0 0
        %1177 = vmatpush1.bf16.msra.mxu0 0
        %1178 = vmatprep.subr.bf16.mxu0 0
        %1179 = vmatpush1.bf16.msra.mxu0 0
        %1180 = vmatprep.subr.bf16.mxu0 0
        %1181 = vmatpush1.bf16.msra.mxu0 0
        %1182 = vmatprep.subr.bf16.mxu0 0
        %1183 = vmatpush1.bf16.msra.mxu0 0
        %1184 = vmatprep.subr.bf16.mxu0 0
        %1185 = vmatpush1.bf16.msra.mxu0 0
        %1186 = vmatprep.subr.bf16.mxu0 0
        %1187 = vmatpush1.bf16.msra.mxu0 0
        %1188 = vmatprep.subr.bf16.mxu0 0
        %1189 = vmatpush1.bf16.msra.mxu0 0
        %1190 = vmatprep.subr.bf16.mxu0 0
        %1191 = vmatpush1.bf16.msra.mxu0 0
        %1192 = vmatprep.mubr.bf16.mxu0 0
        %1193 = vmatmul.mubr.bf16.gmra.mrb[0].mxu0 %v1149
        %v1194 = vpop.f32.mrb[0].mxu0
        %v1195 = vadd.f32 0.0, %v1194
        %v1196 = vpop.f32.mrb[0].mxu0
        %v1197 = vpop.f32.mrb[0].mxu0
        %v1198 = vadd.f32 0.0, %v1197
        %v1199 = vpop.f32.mrb[0].mxu0
        %1200 = vmatprep.mubr.bf16.mxu0 0
        %1201 = vmatmul.mubr.bf16.gmra.mrb[0].mxu0 %v1152
        %v1202 = vpop.f32.mrb[0].mxu0
        %v1203 = vadd.f32 0.0, %v1202
        %v1204 = vpop.f32.mrb[0].mxu0
        %v1205 = vpop.f32.mrb[0].mxu0
        %v1206 = vadd.f32 0.0, %v1205
        %v1207 = vpop.f32.mrb[0].mxu0
        %1208 = vmatprep.mubr.bf16.mxu0 0
        %1209 = vmatmul.mubr.bf16.gmra.mrb[0].mxu0 %v1155
        %v1210 = vpop.f32.mrb[0].mxu0
        %v1211 = vadd.f32 0.0, %v1210
        %v1212 = vpop.f32.mrb[0].mxu0
        %v1213 = vpop.f32.mrb[0].mxu0
        %v1214 = vadd.f32 0.0, %v1213
        %v1215 = vpop.f32.mrb[0].mxu0
        %1216 = vmatprep.mubr.bf16.mxu0 0
        %1217 = vmatmul.mubr.bf16.gmra.mrb[0].mxu0 %v1158
        %v1218 = vpop.f32.mrb[0].mxu0
        %v1219 = vadd.f32 0.0, %v1218
        %v1220 = vpop.f32.mrb[0].mxu0
        %v1221 = vpop.f32.mrb[0].mxu0
        %v1222 = vadd.f32 0.0, %v1221
        %v1223 = vpop.f32.mrb[0].mxu0
        %1224 = vdwg.mxu0
        %v1225 = vadd.f32 %v1112, %v1195
        %v1226 = vadd.f32 %v1113, %v1198
        %v1227 = vadd.f32 %v1114, %v1203
        %v1228 = vadd.f32 %v1115, %v1206
        %v1229 = vadd.f32 %v1116, %v1211
        %v1230 = vadd.f32 %v1117, %v1214
        %v1231 = vadd.f32 %v1118, %v1219
        %v1232 = vadd.f32 %v1119, %v1222
        %s1233 = scalar_lea.vmem [#allocation2], 32
        %v1234 = vld [vmem:[%s1233] sm:$0xff]
        %v1235 = vld [vmem:[%s1233 + $0x10] sm:$0xff]
        %v1236 = vld [vmem:[%s1233 + $0x20] sm:$0xff]
        %v1237 = vld [vmem:[%s1233 + $0x30] sm:$0xff]
        %v1238 = vld [vmem:[%s1233 + $0x40] sm:$0xff]
        %v1239 = vld [vmem:[%s1233 + $0x50] sm:$0xff]
        %v1240 = vld [vmem:[%s1233 + $0x60] sm:$0xff]
        %v1241 = vld [vmem:[%s1233 + $0x70] sm:$0xff]
        %v1242 = vld [vmem:[#allocation6 + $0x60] sm:$0xf]
        %v1243 = vld [vmem:[#allocation6 + $0x64] sm:$0xf]
        %v1244 = vld [vmem:[#allocation6 + $0x68] sm:$0xf]
        %v1245 = vld [vmem:[#allocation6 + $0x6c] sm:$0xf]
        %v1246 = vpack.c.bf16 %v1235, %v1234
        %v1247 = vpack.c.bf16 %v1237, %v1236
        %v1248 = vpack.c.bf16 %v1239, %v1238
        %v1249 = vpack.c.bf16 %v1241, %v1240
        %v1254 = vunpack.c.l.b16 %v1242
        %v1255 = vunpack.c.l.b16 %v1243
        %v1256 = vunpack.c.l.b16 %v1244
        %v1257 = vunpack.c.l.b16 %v1245
        %v1258 = vpack.c.b16 %v1255, %v1254
        %v1259 = vpack.c.b16 %v1257, %v1256
        %v1263 = vsel %vm298, %v1246, 0
        %v1266 = vsel %vm298, %v1247, 0
        %v1269 = vsel %vm298, %v1248, 0
        %v1272 = vsel %vm298, %v1249, 0
        %1274 = vmatprep.subr.bf16.mxu0 0
        %1275 = vmatpush1.bf16.msra.mxu0 %v1258
        %1276 = vmatprep.subr.bf16.mxu0 0
        %1277 = vmatpush1.bf16.msra.mxu0 %v1259
        %1278 = vmatprep.subr.bf16.mxu0 0
        %1279 = vmatpush1.bf16.msra.mxu0 0
        %1280 = vmatprep.subr.bf16.mxu0 0
        %1281 = vmatpush1.bf16.msra.mxu0 0
        %1282 = vmatprep.subr.bf16.mxu0 0
        %1283 = vmatpush1.bf16.msra.mxu0 0
        %1284 = vmatprep.subr.bf16.mxu0 0
        %1285 = vmatpush1.bf16.msra.mxu0 0
        %1286 = vmatprep.subr.bf16.mxu0 0
        %1287 = vmatpush1.bf16.msra.mxu0 0
        %1288 = vmatprep.subr.bf16.mxu0 0
        %1289 = vmatpush1.bf16.msra.mxu0 0
        %1290 = vmatprep.subr.bf16.mxu0 0
        %1291 = vmatpush1.bf16.msra.mxu0 0
        %1292 = vmatprep.subr.bf16.mxu0 0
        %1293 = vmatpush1.bf16.msra.mxu0 0
        %1294 = vmatprep.subr.bf16.mxu0 0
        %1295 = vmatpush1.bf16.msra.mxu0 0
        %1296 = vmatprep.subr.bf16.mxu0 0
        %1297 = vmatpush1.bf16.msra.mxu0 0
        %1298 = vmatprep.subr.bf16.mxu0 0
        %1299 = vmatpush1.bf16.msra.mxu0 0
        %1300 = vmatprep.subr.bf16.mxu0 0
        %1301 = vmatpush1.bf16.msra.mxu0 0
        %1302 = vmatprep.subr.bf16.mxu0 0
        %1303 = vmatpush1.bf16.msra.mxu0 0
        %1304 = vmatprep.subr.bf16.mxu0 0
        %1305 = vmatpush1.bf16.msra.mxu0 0
        %1306 = vmatprep.mubr.bf16.mxu0 0
        %1307 = vmatmul.mubr.bf16.gmra.mrb[0].mxu0 %v1263
        %v1308 = vpop.f32.mrb[0].mxu0
        %v1309 = vadd.f32 0.0, %v1308
        %v1310 = vpop.f32.mrb[0].mxu0
        %v1311 = vpop.f32.mrb[0].mxu0
        %v1312 = vadd.f32 0.0, %v1311
        %v1313 = vpop.f32.mrb[0].mxu0
        %1314 = vmatprep.mubr.bf16.mxu0 0
        %1315 = vmatmul.mubr.bf16.gmra.mrb[0].mxu0 %v1266
        %v1316 = vpop.f32.mrb[0].mxu0
        %v1317 = vadd.f32 0.0, %v1316
        %v1318 = vpop.f32.mrb[0].mxu0
        %v1319 = vpop.f32.mrb[0].mxu0
        %v1320 = vadd.f32 0.0, %v1319
        %v1321 = vpop.f32.mrb[0].mxu0
        %1322 = vmatprep.mubr.bf16.mxu0 0
        %1323 = vmatmul.mubr.bf16.gmra.mrb[0].mxu0 %v1269
        %v1324 = vpop.f32.mrb[0].mxu0
        %v1325 = vadd.f32 0.0, %v1324
        %v1326 = vpop.f32.mrb[0].mxu0
        %v1327 = vpop.f32.mrb[0].mxu0
        %v1328 = vadd.f32 0.0, %v1327
        %v1329 = vpop.f32.mrb[0].mxu0
        %1330 = vmatprep.mubr.bf16.mxu0 0
        %1331 = vmatmul.mubr.bf16.gmra.mrb[0].mxu0 %v1272
        %v1332 = vpop.f32.mrb[0].mxu0
        %v1333 = vadd.f32 0.0, %v1332
        %v1334 = vpop.f32.mrb[0].mxu0
        %v1335 = vpop.f32.mrb[0].mxu0
        %v1336 = vadd.f32 0.0, %v1335
        %v1337 = vpop.f32.mrb[0].mxu0
        %1338 = vdwg.mxu0
        %v1339 = vadd.f32 %v1225, %v1309
        %v1340 = vadd.f32 %v1226, %v1312
        %v1341 = vadd.f32 %v1227, %v1317
        %v1342 = vadd.f32 %v1228, %v1320
        %v1343 = vadd.f32 %v1229, %v1325
        %v1344 = vadd.f32 %v1230, %v1328
        %v1345 = vadd.f32 %v1231, %v1333
        %v1346 = vadd.f32 %v1232, %v1336
        %v1347 = vld [vmem:[%s1233 + $0x1] sm:$0xff]
        %v1348 = vld [vmem:[%s1233 + $0x11] sm:$0xff]
        %v1349 = vld [vmem:[%s1233 + $0x21] sm:$0xff]
        %v1350 = vld [vmem:[%s1233 + $0x31] sm:$0xff]
        %v1351 = vld [vmem:[%s1233 + $0x41] sm:$0xff]
        %v1352 = vld [vmem:[%s1233 + $0x51] sm:$0xff]
        %v1353 = vld [vmem:[%s1233 + $0x61] sm:$0xff]
        %v1354 = vld [vmem:[%s1233 + $0x71] sm:$0xff]
        %v1355 = vld [vmem:[#allocation6 + $0x70] sm:$0xf]
        %v1356 = vld [vmem:[#allocation6 + $0x74] sm:$0xf]
        %v1357 = vld [vmem:[#allocation6 + $0x78] sm:$0xf]
        %v1358 = vld [vmem:[#allocation6 + $0x7c] sm:$0xf]
        %v1359 = vpack.c.bf16 %v1348, %v1347
        %v1360 = vpack.c.bf16 %v1350, %v1349
        %v1361 = vpack.c.bf16 %v1352, %v1351
        %v1362 = vpack.c.bf16 %v1354, %v1353
        %v1367 = vunpack.c.l.b16 %v1355
        %v1368 = vunpack.c.l.b16 %v1356
        %v1369 = vunpack.c.l.b16 %v1357
        %v1370 = vunpack.c.l.b16 %v1358
        %v1371 = vpack.c.b16 %v1368, %v1367
        %v1372 = vpack.c.b16 %v1370, %v1369
        %v1376 = vsel %vm298, %v1359, 0
        %v1379 = vsel %vm298, %v1360, 0
        %v1382 = vsel %vm298, %v1361, 0
        %v1385 = vsel %vm298, %v1362, 0
        %1387 = vmatprep.subr.bf16.mxu0 0
        %1388 = vmatpush1.bf16.msra.mxu0 %v1371
        %1389 = vmatprep.subr.bf16.mxu0 0
        %1390 = vmatpush1.bf16.msra.mxu0 %v1372
        %1391 = vmatprep.subr.bf16.mxu0 0
        %1392 = vmatpush1.bf16.msra.mxu0 0
        %1393 = vmatprep.subr.bf16.mxu0 0
        %1394 = vmatpush1.bf16.msra.mxu0 0
        %1395 = vmatprep.subr.bf16.mxu0 0
        %1396 = vmatpush1.bf16.msra.mxu0 0
        %1397 = vmatprep.subr.bf16.mxu0 0
        %1398 = vmatpush1.bf16.msra.mxu0 0
        %1399 = vmatprep.subr.bf16.mxu0 0
        %1400 = vmatpush1.bf16.msra.mxu0 0
        %1401 = vmatprep.subr.bf16.mxu0 0
        %1402 = vmatpush1.bf16.msra.mxu0 0
        %1403 = vmatprep.subr.bf16.mxu0 0
        %1404 = vmatpush1.bf16.msra.mxu0 0
        %1405 = vmatprep.subr.bf16.mxu0 0
        %1406 = vmatpush1.bf16.msra.mxu0 0
        %1407 = vmatprep.subr.bf16.mxu0 0
        %1408 = vmatpush1.bf16.msra.mxu0 0
        %1409 = vmatprep.subr.bf16.mxu0 0
        %1410 = vmatpush1.bf16.msra.mxu0 0
        %1411 = vmatprep.subr.bf16.mxu0 0
        %1412 = vmatpush1.bf16.msra.mxu0 0
        %1413 = vmatprep.subr.bf16.mxu0 0
        %1414 = vmatpush1.bf16.msra.mxu0 0
        %1415 = vmatprep.subr.bf16.mxu0 0
        %1416 = vmatpush1.bf16.msra.mxu0 0
        %1417 = vmatprep.subr.bf16.mxu0 0
        %1418 = vmatpush1.bf16.msra.mxu0 0
        %1419 = vmatprep.mubr.bf16.mxu0 0
        %1420 = vmatmul.mubr.bf16.gmra.mrb[0].mxu0 %v1376
        %v1421 = vpop.f32.mrb[0].mxu0
        %v1422 = vadd.f32 0.0, %v1421
        %v1423 = vpop.f32.mrb[0].mxu0
        %v1424 = vpop.f32.mrb[0].mxu0
        %v1425 = vadd.f32 0.0, %v1424
        %v1426 = vpop.f32.mrb[0].mxu0
        %1427 = vmatprep.mubr.bf16.mxu0 0
        %1428 = vmatmul.mubr.bf16.gmra.mrb[0].mxu0 %v1379
        %v1429 = vpop.f32.mrb[0].mxu0
        %v1430 = vadd.f32 0.0, %v1429
        %v1431 = vpop.f32.mrb[0].mxu0
        %v1432 = vpop.f32.mrb[0].mxu0
        %v1433 = vadd.f32 0.0, %v1432
        %v1434 = vpop.f32.mrb[0].mxu0
        %1435 = vmatprep.mubr.bf16.mxu0 0
        %1436 = vmatmul.mubr.bf16.gmra.mrb[0].mxu0 %v1382
        %v1437 = vpop.f32.mrb[0].mxu0
        %v1438 = vadd.f32 0.0, %v1437
        %v1439 = vpop.f32.mrb[0].mxu0
        %v1440 = vpop.f32.mrb[0].mxu0
        %v1441 = vadd.f32 0.0, %v1440
        %v1442 = vpop.f32.mrb[0].mxu0
        %1443 = vmatprep.mubr.bf16.mxu0 0
        %1444 = vmatmul.mubr.bf16.gmra.mrb[0].mxu0 %v1385
        %v1445 = vpop.f32.mrb[0].mxu0
        %v1446 = vadd.f32 0.0, %v1445
        %v1447 = vpop.f32.mrb[0].mxu0
        %v1448 = vpop.f32.mrb[0].mxu0
        %v1449 = vadd.f32 0.0, %v1448
        %v1450 = vpop.f32.mrb[0].mxu0
        %1451 = vdwg.mxu0
        %v1452 = vadd.f32 %v1339, %v1422
        %v1453 = vadd.f32 %v1340, %v1425
        %v1454 = vadd.f32 %v1341, %v1430
        %v1455 = vadd.f32 %v1342, %v1433
        %v1456 = vadd.f32 %v1343, %v1438
        %v1457 = vadd.f32 %v1344, %v1441
        %v1458 = vadd.f32 %v1345, %v1446
        %v1459 = vadd.f32 %v1346, %v1449
        %v1460 = vld [vmem:[%s1233 + $0x2] sm:$0xff]
        %v1461 = vld [vmem:[%s1233 + $0x12] sm:$0xff]
        %v1462 = vld [vmem:[%s1233 + $0x22] sm:$0xff]
        %v1463 = vld [vmem:[%s1233 + $0x32] sm:$0xff]
        %v1464 = vld [vmem:[%s1233 + $0x42] sm:$0xff]
        %v1465 = vld [vmem:[%s1233 + $0x52] sm:$0xff]
        %v1466 = vld [vmem:[%s1233 + $0x62] sm:$0xff]
        %v1467 = vld [vmem:[%s1233 + $0x72] sm:$0xff]
        %v1468 = vld [vmem:[#allocation6 + $0x80] sm:$0xf]
        %v1469 = vld [vmem:[#allocation6 + $0x84] sm:$0xf]
        %v1470 = vld [vmem:[#allocation6 + $0x88] sm:$0xf]
        %v1471 = vld [vmem:[#allocation6 + $0x8c] sm:$0xf]
        %v1472 = vpack.c.bf16 %v1461, %v1460
        %v1473 = vpack.c.bf16 %v1463, %v1462
        %v1474 = vpack.c.bf16 %v1465, %v1464
        %v1475 = vpack.c.bf16 %v1467, %v1466
        %v1480 = vunpack.c.l.b16 %v1468
        %v1481 = vunpack.c.l.b16 %v1469
        %v1482 = vunpack.c.l.b16 %v1470
        %v1483 = vunpack.c.l.b16 %v1471
        %v1484 = vpack.c.b16 %v1481, %v1480
        %v1485 = vpack.c.b16 %v1483, %v1482
        %v1489 = vsel %vm298, %v1472, 0
        %v1492 = vsel %vm298, %v1473, 0
        %v1495 = vsel %vm298, %v1474, 0
        %v1498 = vsel %vm298, %v1475, 0
        %1500 = vmatprep.subr.bf16.mxu0 0
        %1501 = vmatpush1.bf16.msra.mxu0 %v1484
        %1502 = vmatprep.subr.bf16.mxu0 0
        %1503 = vmatpush1.bf16.msra.mxu0 %v1485
        %1504 = vmatprep.subr.bf16.mxu0 0
        %1505 = vmatpush1.bf16.msra.mxu0 0
        %1506 = vmatprep.subr.bf16.mxu0 0
        %1507 = vmatpush1.bf16.msra.mxu0 0
        %1508 = vmatprep.subr.bf16.mxu0 0
        %1509 = vmatpush1.bf16.msra.mxu0 0
        %1510 = vmatprep.subr.bf16.mxu0 0
        %1511 = vmatpush1.bf16.msra.mxu0 0
        %1512 = vmatprep.subr.bf16.mxu0 0
        %1513 = vmatpush1.bf16.msra.mxu0 0
        %1514 = vmatprep.subr.bf16.mxu0 0
        %1515 = vmatpush1.bf16.msra.mxu0 0
        %1516 = vmatprep.subr.bf16.mxu0 0
        %1517 = vmatpush1.bf16.msra.mxu0 0
        %1518 = vmatprep.subr.bf16.mxu0 0
        %1519 = vmatpush1.bf16.msra.mxu0 0
        %1520 = vmatprep.subr.bf16.mxu0 0
        %1521 = vmatpush1.bf16.msra.mxu0 0
        %1522 = vmatprep.subr.bf16.mxu0 0
        %1523 = vmatpush1.bf16.msra.mxu0 0
        %1524 = vmatprep.subr.bf16.mxu0 0
        %1525 = vmatpush1.bf16.msra.mxu0 0
        %1526 = vmatprep.subr.bf16.mxu0 0
        %1527 = vmatpush1.bf16.msra.mxu0 0
        %1528 = vmatprep.subr.bf16.mxu0 0
        %1529 = vmatpush1.bf16.msra.mxu0 0
        %1530 = vmatprep.subr.bf16.mxu0 0
        %1531 = vmatpush1.bf16.msra.mxu0 0
        %1532 = vmatprep.mubr.bf16.mxu0 0
        %1533 = vmatmul.mubr.bf16.gmra.mrb[0].mxu0 %v1489
        %v1534 = vpop.f32.mrb[0].mxu0
        %v1535 = vadd.f32 0.0, %v1534
        %v1536 = vpop.f32.mrb[0].mxu0
        %v1537 = vpop.f32.mrb[0].mxu0
        %v1538 = vadd.f32 0.0, %v1537
        %v1539 = vpop.f32.mrb[0].mxu0
        %1540 = vmatprep.mubr.bf16.mxu0 0
        %1541 = vmatmul.mubr.bf16.gmra.mrb[0].mxu0 %v1492
        %v1542 = vpop.f32.mrb[0].mxu0
        %v1543 = vadd.f32 0.0, %v1542
        %v1544 = vpop.f32.mrb[0].mxu0
        %v1545 = vpop.f32.mrb[0].mxu0
        %v1546 = vadd.f32 0.0, %v1545
        %v1547 = vpop.f32.mrb[0].mxu0
        %1548 = vmatprep.mubr.bf16.mxu0 0
        %1549 = vmatmul.mubr.bf16.gmra.mrb[0].mxu0 %v1495
        %v1550 = vpop.f32.mrb[0].mxu0
        %v1551 = vadd.f32 0.0, %v1550
        %v1552 = vpop.f32.mrb[0].mxu0
        %v1553 = vpop.f32.mrb[0].mxu0
        %v1554 = vadd.f32 0.0, %v1553
        %v1555 = vpop.f32.mrb[0].mxu0
        %1556 = vmatprep.mubr.bf16.mxu0 0
        %1557 = vmatmul.mubr.bf16.gmra.mrb[0].mxu0 %v1498
        %v1558 = vpop.f32.mrb[0].mxu0
        %v1559 = vadd.f32 0.0, %v1558
        %v1560 = vpop.f32.mrb[0].mxu0
        %v1561 = vpop.f32.mrb[0].mxu0
        %v1562 = vadd.f32 0.0, %v1561
        %v1563 = vpop.f32.mrb[0].mxu0
        %1564 = vdwg.mxu0
        %v1565 = vadd.f32 %v1452, %v1535
        %v1566 = vadd.f32 %v1453, %v1538
        %v1567 = vadd.f32 %v1454, %v1543
        %v1568 = vadd.f32 %v1455, %v1546
        %v1569 = vadd.f32 %v1456, %v1551
        %v1570 = vadd.f32 %v1457, %v1554
        %v1571 = vadd.f32 %v1458, %v1559
        %v1572 = vadd.f32 %v1459, %v1562
        %v1573 = vld [vmem:[#allocation8] sm:$0x1]
        %v1575 = vlaneseq
        %v1576 = vshrl.u32 %v1575, 7
        %v1577 = vsub.s32 0, %v1576
        %v1578 = vrot.slane %v1573, %v1577
        %v1580 = vadd.f32 %v1565, %v1578
        %v1581 = vadd.f32 %v1566, %v1578
        %v1582 = vadd.f32 %v1567, %v1578
        %v1583 = vadd.f32 %v1568, %v1578
        %v1584 = vadd.f32 %v1569, %v1578
        %v1585 = vadd.f32 %v1570, %v1578
        %v1586 = vadd.f32 %v1571, %v1578
        %v1587 = vadd.f32 %v1572, %v1578
        %v1588 = vmul.f32 %v1580, 0.70710677
        %v1589 = vmul.f32 %v1581, 0.70710677
        %v1590 = vmul.f32 %v1582, 0.70710677
        %v1591 = vmul.f32 %v1583, 0.70710677
        %v1592 = vmul.f32 %v1584, 0.70710677
        %v1593 = vmul.f32 %v1585, 0.70710677
        %v1594 = vmul.f32 %v1586, 0.70710677
        %v1595 = vmul.f32 %v1587, 0.70710677
        %v1596 = vand.u32 2147483647, %v1588
        %v1597 = vand.u32 2147483647, %v1589
        %v1598 = vand.u32 2147483647, %v1590
        %v1599 = vand.u32 2147483647, %v1591
        %v1600 = vand.u32 2147483647, %v1592
        %v1601 = vand.u32 2147483647, %v1593
        %v1602 = vand.u32 2147483647, %v1594
        %v1603 = vand.u32 2147483647, %v1595
        %v1604 = vmul.f32 %v1596, 0.3275911
        %v1605 = vmul.f32 %v1597, 0.3275911
        %v1606 = vmul.f32 %v1598, 0.3275911
        %v1607 = vmul.f32 %v1599, 0.3275911
        %v1608 = vmul.f32 %v1600, 0.3275911
        %v1609 = vmul.f32 %v1601, 0.3275911
        %v1610 = vmul.f32 %v1602, 0.3275911
        %v1611 = vmul.f32 %v1603, 0.3275911
        %v1612 = vadd.f32 %v1604, 1.0
        %v1613 = vadd.f32 %v1605, 1.0
        %v1614 = vadd.f32 %v1606, 1.0
        %v1615 = vadd.f32 %v1607, 1.0
        %v1616 = vadd.f32 %v1608, 1.0
        %v1617 = vadd.f32 %v1609, 1.0
        %v1618 = vadd.f32 %v1610, 1.0
        %v1619 = vadd.f32 %v1611, 1.0
        %v1620 = vrcp.pop %v1612
        %v1621 = vrcp.pop %v1613
        %v1622 = vrcp.pop %v1614
        %v1623 = vrcp.pop %v1615
        %v1624 = vrcp.pop %v1616
        %v1625 = vrcp.pop %v1617
        %v1626 = vrcp.pop %v1618
        %v1627 = vrcp.pop %v1619
        %v1628 = vmul.f32 %v1612, %v1620
        %v1629 = vmul.f32 %v1613, %v1621
        %v1630 = vmul.f32 %v1614, %v1622
        %v1631 = vmul.f32 %v1615, %v1623
        %v1632 = vmul.f32 %v1616, %v1624
        %v1633 = vmul.f32 %v1617, %v1625
        %v1634 = vmul.f32 %v1618, %v1626
        %v1635 = vmul.f32 %v1619, %v1627
        %v1636 = vsub.f32 2.0, %v1628
        %v1637 = vsub.f32 2.0, %v1629
        %v1638 = vsub.f32 2.0, %v1630
        %v1639 = vsub.f32 2.0, %v1631
        %v1640 = vsub.f32 2.0, %v1632
        %v1641 = vsub.f32 2.0, %v1633
        %v1642 = vsub.f32 2.0, %v1634
        %v1643 = vsub.f32 2.0, %v1635
        %v1644 = vmul.f32 %v1620, %v1636
        %v1645 = vmul.f32 %v1621, %v1637
        %v1646 = vmul.f32 %v1622, %v1638
        %v1647 = vmul.f32 %v1623, %v1639
        %v1648 = vmul.f32 %v1624, %v1640
        %v1649 = vmul.f32 %v1625, %v1641
        %v1650 = vmul.f32 %v1626, %v1642
        %v1651 = vmul.f32 %v1627, %v1643
        %v1652 = vmul.f32 %v1644, 1.0614054
        %v1653 = vmul.f32 %v1645, 1.0614054
        %v1654 = vmul.f32 %v1646, 1.0614054
        %v1655 = vmul.f32 %v1647, 1.0614054
        %v1656 = vmul.f32 %v1648, 1.0614054
        %v1657 = vmul.f32 %v1649, 1.0614054
        %v1658 = vmul.f32 %v1650, 1.0614054
        %v1659 = vmul.f32 %v1651, 1.0614054
        %v1660 = vsub.f32 %v1652, 1.4531521
        %v1661 = vsub.f32 %v1653, 1.4531521
        %v1662 = vsub.f32 %v1654, 1.4531521
        %v1663 = vsub.f32 %v1655, 1.4531521
        %v1664 = vsub.f32 %v1656, 1.4531521
        %v1665 = vsub.f32 %v1657, 1.4531521
        %v1666 = vsub.f32 %v1658, 1.4531521
        %v1667 = vsub.f32 %v1659, 1.4531521
        %v1668 = vmul.f32 %v1660, %v1644
        %v1669 = vmul.f32 %v1661, %v1645
        %v1670 = vmul.f32 %v1662, %v1646
        %v1671 = vmul.f32 %v1663, %v1647
        %v1672 = vmul.f32 %v1664, %v1648
        %v1673 = vmul.f32 %v1665, %v1649
        %v1674 = vmul.f32 %v1666, %v1650
        %v1675 = vmul.f32 %v1667, %v1651
        %v1676 = vadd.f32 %v1668, 1.4214138
        %v1677 = vadd.f32 %v1669, 1.4214138
        %v1678 = vadd.f32 %v1670, 1.4214138
        %v1679 = vadd.f32 %v1671, 1.4214138
        %v1680 = vadd.f32 %v1672, 1.4214138
        %v1681 = vadd.f32 %v1673, 1.4214138
        %v1682 = vadd.f32 %v1674, 1.4214138
        %v1683 = vadd.f32 %v1675, 1.4214138
        %v1684 = vmul.f32 %v1676, %v1644
        %v1685 = vmul.f32 %v1677, %v1645
        %v1686 = vmul.f32 %v1678, %v1646
        %v1687 = vmul.f32 %v1679, %v1647
        %v1688 = vmul.f32 %v1680, %v1648
        %v1689 = vmul.f32 %v1681, %v1649
        %v1690 = vmul.f32 %v1682, %v1650
        %v1691 = vmul.f32 %v1683, %v1651
        %v1692 = vsub.f32 %v1684, 0.28449672
        %v1693 = vsub.f32 %v1685, 0.28449672
        %v1694 = vsub.f32 %v1686, 0.28449672
        %v1695 = vsub.f32 %v1687, 0.28449672
        %v1696 = vsub.f32 %v1688, 0.28449672
        %v1697 = vsub.f32 %v1689, 0.28449672
        %v1698 = vsub.f32 %v1690, 0.28449672
        %v1699 = vsub.f32 %v1691, 0.28449672
        %v1700 = vmul.f32 %v1692, %v1644
        %v1701 = vmul.f32 %v1693, %v1645
        %v1702 = vmul.f32 %v1694, %v1646
        %v1703 = vmul.f32 %v1695, %v1647
        %v1704 = vmul.f32 %v1696, %v1648
        %v1705 = vmul.f32 %v1697, %v1649
        %v1706 = vmul.f32 %v1698, %v1650
        %v1707 = vmul.f32 %v1699, %v1651
        %v1708 = vadd.f32 %v1700, 0.2548296
        %v1709 = vadd.f32 %v1701, 0.2548296
        %v1710 = vadd.f32 %v1702, 0.2548296
        %v1711 = vadd.f32 %v1703, 0.2548296
        %v1712 = vadd.f32 %v1704, 0.2548296
        %v1713 = vadd.f32 %v1705, 0.2548296
        %v1714 = vadd.f32 %v1706, 0.2548296
        %v1715 = vadd.f32 %v1707, 0.2548296
        %v1716 = vmul.f32 %v1708, %v1644
        %v1717 = vmul.f32 %v1709, %v1645
        %v1718 = vmul.f32 %v1710, %v1646
        %v1719 = vmul.f32 %v1711, %v1647
        %v1720 = vmul.f32 %v1712, %v1648
        %v1721 = vmul.f32 %v1713, %v1649
        %v1722 = vmul.f32 %v1714, %v1650
        %v1723 = vmul.f32 %v1715, %v1651
        %v1724 = vsub.f32 0.0, %v1596
        %v1725 = vsub.f32 0.0, %v1597
        %v1726 = vsub.f32 0.0, %v1598
        %v1727 = vsub.f32 0.0, %v1599
        %v1728 = vsub.f32 0.0, %v1600
        %v1729 = vsub.f32 0.0, %v1601
        %v1730 = vsub.f32 0.0, %v1602
        %v1731 = vsub.f32 0.0, %v1603
        %v1732 = vmul.f32 %v1724, %v1596
        %v1733 = vmul.f32 %v1725, %v1597
        %v1734 = vmul.f32 %v1726, %v1598
        %v1735 = vmul.f32 %v1727, %v1599
        %v1736 = vmul.f32 %v1728, %v1600
        %v1737 = vmul.f32 %v1729, %v1601
        %v1738 = vmul.f32 %v1730, %v1602
        %v1739 = vmul.f32 %v1731, %v1603
        %v1740 = vmul.f32 %v1732, 1.442695
        %v1741 = vpow.pop %v1740
        %v1742 = vmul.f32 %v1733, 1.442695
        %v1743 = vpow.pop %v1742
        %v1744 = vmul.f32 %v1734, 1.442695
        %v1745 = vpow.pop %v1744
        %v1746 = vmul.f32 %v1735, 1.442695
        %v1747 = vpow.pop %v1746
        %v1748 = vmul.f32 %v1736, 1.442695
        %v1749 = vpow.pop %v1748
        %v1750 = vmul.f32 %v1737, 1.442695
        %v1751 = vpow.pop %v1750
        %v1752 = vmul.f32 %v1738, 1.442695
        %v1753 = vpow.pop %v1752
        %v1754 = vmul.f32 %v1739, 1.442695
        %v1755 = vpow.pop %v1754
        %v1756 = vmul.f32 %v1716, %v1741
        %v1757 = vmul.f32 %v1717, %v1743
        %v1758 = vmul.f32 %v1718, %v1745
        %v1759 = vmul.f32 %v1719, %v1747
        %v1760 = vmul.f32 %v1720, %v1749
        %v1761 = vmul.f32 %v1721, %v1751
        %v1762 = vmul.f32 %v1722, %v1753
        %v1763 = vmul.f32 %v1723, %v1755
        %v1764 = vsub.f32 1.0, %v1756
        %v1765 = vsub.f32 1.0, %v1757
        %v1766 = vsub.f32 1.0, %v1758
        %v1767 = vsub.f32 1.0, %v1759
        %v1768 = vsub.f32 1.0, %v1760
        %v1769 = vsub.f32 1.0, %v1761
        %v1770 = vsub.f32 1.0, %v1762
        %v1771 = vsub.f32 1.0, %v1763
        %vm1772 = vcmp.lt.f32.partialorder %v1588, 0.0
        %vm1773 = vcmp.lt.f32.partialorder %v1589, 0.0
        %vm1774 = vcmp.lt.f32.partialorder %v1590, 0.0
        %vm1775 = vcmp.lt.f32.partialorder %v1591, 0.0
        %vm1776 = vcmp.lt.f32.partialorder %v1592, 0.0
        %vm1777 = vcmp.lt.f32.partialorder %v1593, 0.0
        %vm1778 = vcmp.lt.f32.partialorder %v1594, 0.0
        %vm1779 = vcmp.lt.f32.partialorder %v1595, 0.0
        %v1780 = vsub.f32 0.0, %v1764
        %v1781 = vsub.f32 0.0, %v1765
        %v1782 = vsub.f32 0.0, %v1766
        %v1783 = vsub.f32 0.0, %v1767
        %v1784 = vsub.f32 0.0, %v1768
        %v1785 = vsub.f32 0.0, %v1769
        %v1786 = vsub.f32 0.0, %v1770
        %v1787 = vsub.f32 0.0, %v1771
        %v1788 = vsel %vm1772, %v1780, %v1764
        %v1789 = vsel %vm1773, %v1781, %v1765
        %v1790 = vsel %vm1774, %v1782, %v1766
        %v1791 = vsel %vm1775, %v1783, %v1767
        %v1792 = vsel %vm1776, %v1784, %v1768
        %v1793 = vsel %vm1777, %v1785, %v1769
        %v1794 = vsel %vm1778, %v1786, %v1770
        %v1795 = vsel %vm1779, %v1787, %v1771
        %v1796 = vmul.f32 %v1580, 0.5
        %v1797 = vmul.f32 %v1581, 0.5
        %v1798 = vmul.f32 %v1582, 0.5
        %v1799 = vmul.f32 %v1583, 0.5
        %v1800 = vmul.f32 %v1584, 0.5
        %v1801 = vmul.f32 %v1585, 0.5
        %v1802 = vmul.f32 %v1586, 0.5
        %v1803 = vmul.f32 %v1587, 0.5
        %v1804 = vadd.f32 %v1788, 1.0
        %v1805 = vadd.f32 %v1789, 1.0
        %v1806 = vadd.f32 %v1790, 1.0
        %v1807 = vadd.f32 %v1791, 1.0
        %v1808 = vadd.f32 %v1792, 1.0
        %v1809 = vadd.f32 %v1793, 1.0
        %v1810 = vadd.f32 %v1794, 1.0
        %v1811 = vadd.f32 %v1795, 1.0
        %v1812 = vmul.f32 %v1796, %v1804
        %v1813 = vmul.f32 %v1797, %v1805
        %v1814 = vmul.f32 %v1798, %v1806
        %v1815 = vmul.f32 %v1799, %v1807
        %v1816 = vmul.f32 %v1800, %v1808
        %v1817 = vmul.f32 %v1801, %v1809
        %v1818 = vmul.f32 %v1802, %v1810
        %v1819 = vmul.f32 %v1803, %v1811
        %v1820 = vpack.c.bf16 %v1813, %v1812
        %v1821 = vpack.c.bf16 %v1815, %v1814
        %v1822 = vpack.c.bf16 %v1817, %v1816
        %v1823 = vpack.c.bf16 %v1819, %v1818
        %v1824 = vld [vmem:[#allocation9] sm:$0xf]
        %v1825 = vld [vmem:[#allocation9 + $0x4] sm:$0xf]
        %v1826 = vld [vmem:[#allocation9 + $0x8] sm:$0xf]
        %v1827 = vld [vmem:[#allocation9 + $0xc] sm:$0xf]
        %v1828 = vld [vmem:[#allocation11] sm:$0x1]
        %v1830 = vlaneseq
        %v1831 = vshrl.u32 %v1830, 7
        %v1832 = vsub.s32 0, %v1831
        %v1833 = vrot.slane %v1828, %v1832
        %v1839 = vunpack.c.l.b16 %v1824
        %v1840 = vunpack.c.l.b16 %v1825
        %v1841 = vunpack.c.l.b16 %v1826
        %v1842 = vunpack.c.l.b16 %v1827
        %v1843 = vpack.c.b16 %v1840, %v1839
        %v1844 = vpack.c.b16 %v1842, %v1841
        %v1848 = vsel %vm298, %v1820, 0
        %v1851 = vsel %vm298, %v1821, 0
        %v1854 = vsel %vm298, %v1822, 0
        %v1857 = vsel %vm298, %v1823, 0
        %1859 = vmatprep.subr.bf16.mxu0 0
        %1860 = vmatpush1.bf16.msra.mxu0 %v1843
        %1861 = vmatprep.subr.bf16.mxu0 0
        %1862 = vmatpush1.bf16.msra.mxu0 %v1844
        %1863 = vmatprep.subr.bf16.mxu0 0
        %1864 = vmatpush1.bf16.msra.mxu0 0
        %1865 = vmatprep.subr.bf16.mxu0 0
        %1866 = vmatpush1.bf16.msra.mxu0 0
        %1867 = vmatprep.subr.bf16.mxu0 0
        %1868 = vmatpush1.bf16.msra.mxu0 0
        %1869 = vmatprep.subr.bf16.mxu0 0
        %1870 = vmatpush1.bf16.msra.mxu0 0
        %1871 = vmatprep.subr.bf16.mxu0 0
        %1872 = vmatpush1.bf16.msra.mxu0 0
        %1873 = vmatprep.subr.bf16.mxu0 0
        %1874 = vmatpush1.bf16.msra.mxu0 0
        %1875 = vmatprep.subr.bf16.mxu0 0
        %1876 = vmatpush1.bf16.msra.mxu0 0
        %1877 = vmatprep.subr.bf16.mxu0 0
        %1878 = vmatpush1.bf16.msra.mxu0 0
        %1879 = vmatprep.subr.bf16.mxu0 0
        %1880 = vmatpush1.bf16.msra.mxu0 0
        %1881 = vmatprep.subr.bf16.mxu0 0
        %1882 = vmatpush1.bf16.msra.mxu0 0
        %1883 = vmatprep.subr.bf16.mxu0 0
        %1884 = vmatpush1.bf16.msra.mxu0 0
        %1885 = vmatprep.subr.bf16.mxu0 0
        %1886 = vmatpush1.bf16.msra.mxu0 0
        %1887 = vmatprep.subr.bf16.mxu0 0
        %1888 = vmatpush1.bf16.msra.mxu0 0
        %1889 = vmatprep.subr.bf16.mxu0 0
        %1890 = vmatpush1.bf16.msra.mxu0 0
        %1891 = vmatprep.mubr.bf16.mxu0 0
        %1892 = vmatmul.mubr.bf16.gmra.mrb[0].mxu0 %v1848
        %v1893 = vpop.f32.mrb[0].mxu0
        %v1894 = vadd.f32 %v1833, %v1893
        %v1895 = vpop.f32.mrb[0].mxu0
        %v1896 = vpop.f32.mrb[0].mxu0
        %v1897 = vadd.f32 %v1833, %v1896
        %v1898 = vpop.f32.mrb[0].mxu0
        %1899 = vmatprep.mubr.bf16.mxu0 0
        %1900 = vmatmul.mubr.bf16.gmra.mrb[0].mxu0 %v1851
        %v1901 = vpop.f32.mrb[0].mxu0
        %v1902 = vadd.f32 %v1833, %v1901
        %v1903 = vpop.f32.mrb[0].mxu0
        %v1904 = vpop.f32.mrb[0].mxu0
        %v1905 = vadd.f32 %v1833, %v1904
        %v1906 = vpop.f32.mrb[0].mxu0
        %1907 = vmatprep.mubr.bf16.mxu0 0
        %1908 = vmatmul.mubr.bf16.gmra.mrb[0].mxu0 %v1854
        %v1909 = vpop.f32.mrb[0].mxu0
        %v1910 = vadd.f32 %v1833, %v1909
        %v1911 = vpop.f32.mrb[0].mxu0
        %v1912 = vpop.f32.mrb[0].mxu0
        %v1913 = vadd.f32 %v1833, %v1912
        %v1914 = vpop.f32.mrb[0].mxu0
        %1915 = vmatprep.mubr.bf16.mxu0 0
        %1916 = vmatmul.mubr.bf16.gmra.mrb[0].mxu0 %v1857
        %v1917 = vpop.f32.mrb[0].mxu0
        %v1918 = vadd.f32 %v1833, %v1917
        %v1919 = vpop.f32.mrb[0].mxu0
        %v1920 = vpop.f32.mrb[0].mxu0
        %v1921 = vadd.f32 %v1833, %v1920
        %v1922 = vpop.f32.mrb[0].mxu0
        %1923 = vdwg.mxu0
        %v1924 = vadd.f32 %v1894, %v323
        %v1925 = vadd.f32 %v1897, %v324
        %v1926 = vadd.f32 %v1902, %v325
        %v1927 = vadd.f32 %v1905, %v326
        %v1928 = vadd.f32 %v1910, %v327
        %v1929 = vadd.f32 %v1913, %v328
        %v1930 = vadd.f32 %v1918, %v329
        %v1931 = vadd.f32 %v1921, %v330
        %1932 = vst.msk [vmem:[%s296] sm:$0xff] %vm298, %v1924
        %1933 = vst.msk [vmem:[%s296 + $0x8] sm:$0xff] %vm298, %v1925
        %1934 = vst.msk [vmem:[%s296 + $0x10] sm:$0xff] %vm298, %v1926
        %1935 = vst.msk [vmem:[%s296 + $0x18] sm:$0xff] %vm298, %v1927
        %1936 = vst.msk [vmem:[%s296 + $0x20] sm:$0xff] %vm298, %v1928
        %1937 = vst.msk [vmem:[%s296 + $0x28] sm:$0xff] %vm298, %v1929
        %1938 = vst.msk [vmem:[%s296 + $0x30] sm:$0xff] %vm298, %v1930
        %1939 = vst.msk [vmem:[%s296 + $0x38] sm:$0xff] %vm298, %v1931
        %s1940 = sand.u32 %s142, 1
        %s1941 = scalar_lea.sflag [#allocation5], %s1940
        %s1942 = sand.u32 %s142, 1
        %s1943 = smul.addr %s1942, 64
        %s1944 = scalar_lea.vmem [#allocation12], %s1943
        // Predicated region
        $region61: #{decoder_forward.4} parent=39 // pred_check
          %p1945 = pneg %p152
        $region62: #{decoder_forward.4} parent=39 // pred_check_branch
          %1947 = sbr.rel (%p1945) target = $region64
        $region63: #{decoder_forward.4} parent=39 // pred_region
          %s1949 = ssub.s32 1024, 1024
          %1950 = vsyncadd %s1941, %s1949
          %s1951 = smul.addr %s24, 8
          %s1952 = smul.addr %s1951, 128
          %s1953 = scalar_lea.hbm %s5, %s1952
          %s1954 = sshll.u32 %s1944, 4
          %s1955 = int_to_ptr.vmem [resolvable:$true] %s1954
          %1960 = dma.vmem_to_hbm [thread:$0]  %s1955, 1024, %s1953, %s1941, 128, 128, 8
        $region64: #{decoder_forward.4} parent=39 // pred_fallthru
          _
      $region40: #{decoder_forward.4} parent=5 // pred_fallthru
        _
      %p1961 = scmp.le.s32.totalorder 2, %s19
      // Predicated region
      $region65: #{decoder_forward.4} parent=5 // pred_check
        %p1962 = pneg %p1961
      $region66: #{decoder_forward.4} parent=5 // pred_check_branch
        %1964 = sbr.rel (%p1962) target = $region68
      $region67: #{decoder_forward.4} parent=5 // pred_region
        %s1965 = ssub.s32 %s19, 2
        // Predicated region
        $region69: #{decoder_forward.4} parent=67 // pred_check
          %p1966 = pneg %p158
        $region70: #{decoder_forward.4} parent=67 // pred_check_branch
          %1968 = sbr.rel (%p1966) target = $region72
        $region71: #{decoder_forward.4} parent=67 // pred_region
          %s1969 = sand.u32 %s143, 1
          %s1970 = scalar_lea.sflag [#allocation5], %s1969
          %s1971 = sand.u32 %s143, 1
          %s1972 = smul.addr %s1971, 64
          %s1973 = scalar_lea.vmem [#allocation12], %s1972
          %1974 = dma.done %s1970, 1024
        $region72: #{decoder_forward.4} parent=67 // pred_fallthru
          _
      $region68: #{decoder_forward.4} parent=5 // pred_fallthru
        _
    $region6: #{decoder_forward.4} parent=1 // loop_footer
      %s23 = sadd.s32 1, %s19
    $region7: #{decoder_forward.4} parent=1 // loop_footer_branch
      %18 = sbr.rel target = $region3
    $region8: #{decoder_forward.4} parent=1 // loop_exit
      _
    %1975 = vsyncpa [#allocation4], 1
    %s1976 = scalar_lea.sflag [#allocation4], 1
    %1977 = vsyncpa %s1976, 1
    %1978 = vsyncpa [#allocation7], 1
    %1979 = vsyncpa [#allocation10], 1
    %1980 = vsyncpa [#allocation5], 1
    %s1981 = scalar_lea.sflag [#allocation5], 1
    %1982 = vsyncpa %s1981, 1

// kernel: decoder_forward.6
$region0: #{decoder_forward.6}
  #allocation0 [shape = 'u32[]', space=smem, size = 0x4, offset = 0x4, fixed_abs, tag = 'smem constant byte address 0x4 - core index']
  #allocation1 [shape = 'u32[144,128]{1,0:T(1,128)}', space=vmem, size = 0x12000, scoped, tag = 'internal scratch']
  #allocation2 [shape = 'f32[10,10,32]{2,1,0:T(8,128)}', space=vmem, size = 0x14000, scoped, tag = 'scratch operand']
  %s0 = inlined_call_operand.hbm [shape: f32[2,8,8,32], index: 0, kind: input, shape index: {}]
  %s1 = inlined_call_operand.hbm [shape: bf16[288,128], index: 1, kind: input, shape index: {}]
  %s2 = inlined_call_operand.hbm [shape: f32[1,128], index: 2, kind: input, shape index: {}]
  %s3 = inlined_call_operand.hbm [shape: f32[2,8,8,128], index: 3, kind: output, shape index: {}]
  %s4 = sld [smem:[#allocation0]]
  $region57: #{decoder_forward.6} parent=0
    _
  %s6 = ssub.s32 1, %s4
  %s7 = scalar_select 0, %s6, %s4
  $region1: #{decoder_forward.6} parent=0
    #allocation3 [shape = 'u8[65536]{0}', space=vmem, size = 0x10000, scoped, tag = 'input window, operand 0']
    #allocation4 [shape = 's32[2]{0}', space=sflag, size = 0x8, scoped, tag = 'scoped memory for decoder_forward.6']
    #allocation5 [shape = 's32[2]{0}', space=sflag, size = 0x8, scoped, tag = 'scoped memory for decoder_forward.6']
    #allocation6 [shape = 'u8[73728]{0}', space=vmem, size = 0x12000, scoped, tag = 'input window, operand 1, single buffered']
    #allocation7 [shape = 's32[1]{0}', space=sflag, size = 0x4, scoped, tag = 'scoped memory for decoder_forward.6']
    #allocation8 [shape = 'u8[512]{0}', space=vmem, size = 0x400, scoped, tag = 'input window, operand 2, single buffered']
    #allocation9 [shape = 'u8[65536]{0}', space=vmem, size = 0x10000, scoped, tag = 'output window, operand 0']
    %8 = vsyncpa [#allocation4], 0
    %s9 = scalar_lea.sflag [#allocation4], 1
    %10 = vsyncpa %s9, 0
    %11 = vsyncpa [#allocation7], 0
    %12 = vsyncpa [#allocation5], 0
    %s13 = scalar_lea.sflag [#allocation5], 1
    %14 = vsyncpa %s13, 0
    loop: start=0, step=1, limit=4
    $region2: #{decoder_forward.6} parent=1 // loop_pre_header
      _
    $region3: #{decoder_forward.6} parent=1 // loop_header
      %s16 = sphi 0, %s20
      %p17 = scmp.ge.s32.totalorder %s16, 4
      %s26 = sphi 0, %s28
      %s29 = sphi 0, %s26
      %s30 = sphi 0, %s29
      %s46 = sphi 0, %s30
      %s50 = sphi 0, %s50
      %s52 = sphi 0, %s50
      %s53 = sphi 0, %s52
      %s67 = sphi 0, %s53
      %s71 = sphi 0, %s71
      %s73 = sphi 0, %s71
      %s74 = sphi 0, %s73
      %s88 = sphi 0, %s74
      %s94 = sphi 0, %s96
      %s97 = sphi 0, %s94
      %s98 = sphi 0, %s97
      %s114 = sphi 0, %s98
    $region4: #{decoder_forward.6} parent=1 // loop_header_branch
      %19 = sbr.rel (%p17) target = $region8
    $region5: #{decoder_forward.6} parent=1 // loop_body
      %s21 = ssub.s32 %s16, 1
      %s22 = ssub.s32 %s16, 2
      %s23 = sadd.s32 %s16, 1
      %s24 = ssub.s32 %s16, %s23
      %p25 = scmp.eq.s32.totalorder %s24, 0
      %s27 = sadd.s32 %s26, 1
      %s28 = scalar_select %p25, %s26, %s27
      %p31 = pneg %p25
      %p32 = scmp.eq.s32.totalorder %s16, 1
      %p33 = por %p31, %p32
      %p34 = scmp.ne.s32.totalorder %s26, %s29
      %p35 = scmp.eq.s32.totalorder %s16, 0
      %p36 = por %p34, %p35
      %p37 = scmp.ne.s32.totalorder %s26, %s29
      %p38 = scmp.eq.s32.totalorder %s21, 1
      %p39 = por %p37, %p38
      %p40 = scmp.ne.s32.totalorder %s29, %s30
      %p41 = scmp.eq.s32.totalorder %s21, 0
      %p42 = por %p40, %p41
      %p43 = scmp.ne.s32.totalorder %s29, %s30
      %p44 = scmp.eq.s32.totalorder %s22, 1
      %p45 = por %p43, %p44
      %p47 = scmp.ne.s32.totalorder %s30, %s46
      %p48 = scmp.eq.s32.totalorder %s22, 0
      %p49 = por %p47, %p48
      %s51 = sadd.s32 %s50, 1
      %p54 = scmp.eq.s32.totalorder %s16, 1
      %p55 = scmp.ne.s32.totalorder %s50, %s52
      %p56 = scmp.eq.s32.totalorder %s16, 0
      %p57 = por %p55, %p56
      %p58 = scmp.ne.s32.totalorder %s50, %s52
      %p59 = scmp.eq.s32.totalorder %s21, 1
      %p60 = por %p58, %p59
      %p61 = scmp.ne.s32.totalorder %s52, %s53
      %p62 = scmp.eq.s32.totalorder %s21, 0
      %p63 = por %p61, %p62
      %p64 = scmp.ne.s32.totalorder %s52, %s53
      %p65 = scmp.eq.s32.totalorder %s22, 1
      %p66 = por %p64, %p65
      %p68 = scmp.ne.s32.totalorder %s53, %s67
      %p69 = scmp.eq.s32.totalorder %s22, 0
      %p70 = por %p68, %p69
      %s72 = sadd.s32 %s71, 1
      %p75 = scmp.eq.s32.totalorder %s16, 1
      %p76 = scmp.ne.s32.totalorder %s71, %s73
      %p77 = scmp.eq.s32.totalorder %s16, 0
      %p78 = por %p76, %p77
      %p79 = scmp.ne.s32.totalorder %s71, %s73
      %p80 = scmp.eq.s32.totalorder %s21, 1
      %p81 = por %p79, %p80
      %p82 = scmp.ne.s32.totalorder %s73, %s74
      %p83 = scmp.eq.s32.totalorder %s21, 0
      %p84 = por %p82, %p83
      %p85 = scmp.ne.s32.totalorder %s73, %s74
      %p86 = scmp.eq.s32.totalorder %s22, 1
      %p87 = por %p85, %p86
      %p89 = scmp.ne.s32.totalorder %s74, %s88
      %p90 = scmp.eq.s32.totalorder %s22, 0
      %p91 = por %p89, %p90
      %s92 = ssub.s32 %s16, %s23
      %p93 = scmp.eq.s32.totalorder %s92, 0
      %s95 = sadd.s32 %s94, 1
      %s96 = scalar_select %p93, %s94, %s95
      %p99 = pneg %p93
      %p100 = scmp.eq.s32.totalorder %s16, 1
      %p101 = por %p99, %p100
      %p102 = scmp.ne.s32.totalorder %s94, %s97
      %p103 = scmp.eq.s32.totalorder %s16, 0
      %p104 = por %p102, %p103
      %p105 = scmp.ne.s32.totalorder %s94, %s97
      %p106 = scmp.eq.s32.totalorder %s21, 1
      %p107 = por %p105, %p106
      %p108 = scmp.ne.s32.totalorder %s97, %s98
      %p109 = scmp.eq.s32.totalorder %s21, 0
      %p110 = por %p108, %p109
      %p111 = scmp.ne.s32.totalorder %s97, %s98
      %p112 = scmp.eq.s32.totalorder %s22, 1
      %p113 = por %p111, %p112
      %p115 = scmp.ne.s32.totalorder %s98, %s114
      %p116 = scmp.eq.s32.totalorder %s22, 0
      %p117 = por %p115, %p116
      %p118 = scmp.le.s32.totalorder 1, %s16
      %p119 = scmp.lt.s32.totalorder %s16, 3
      %p120 = pnand %p118, %p119
      %p121 = pneg %p120
      // Predicated region
      $region9: #{decoder_forward.6} parent=5 // pred_check
        _
      $region10: #{decoder_forward.6} parent=5 // pred_check_branch
        %123 = sbr.rel (%p120) target = $region12
      $region11: #{decoder_forward.6} parent=5 // pred_region
        %s124 = ssub.s32 %s16, 1
        // Predicated region
        $region13: #{decoder_forward.6} parent=11 // pred_check
          %p125 = pneg %p63
        $region14: #{decoder_forward.6} parent=11 // pred_check_branch
          %127 = sbr.rel (%p125) target = $region16
        $region15: #{decoder_forward.6} parent=11 // pred_region
          %s129 = ssub.s32 2304, 2304
          %130 = vsyncadd [#allocation7], %s129
          %s131 = sshll.u32 [#allocation6], 4
          %s132 = int_to_ptr.vmem [resolvable:$true] %s131
          %137 = dma.hbm_to_vmem [thread:$0]  %s1, 2304, %s132, [#allocation7], 64, 64, 4
        $region16: #{decoder_forward.6} parent=11 // pred_fallthru
          _
        // Predicated region
        $region17: #{decoder_forward.6} parent=11 // pred_check
          %p138 = pneg %p84
        $region18: #{decoder_forward.6} parent=11 // pred_check_branch
          %140 = sbr.rel (%p138) target = $region20
        $region19: #{decoder_forward.6} parent=11 // pred_region
          %s142 = ssub.s32 16, 16
          %143 = vsyncadd [#allocation7], %s142
          %s145 = sshll.u32 [#allocation8], 4
          %s146 = int_to_ptr.vmem [resolvable:$true] %s145
          %148 = dma.hbm_to_vmem [thread:$0]  %s2, 16, %s146, [#allocation7]
        $region20: #{decoder_forward.6} parent=11 // pred_fallthru
          _
      $region12: #{decoder_forward.6} parent=5 // pred_fallthru
        _
      %p149 = scmp.lt.s32.totalorder %s16, 2
      // Predicated region
      $region21: #{decoder_forward.6} parent=5 // pred_check
        %p150 = pneg %p149
      $region22: #{decoder_forward.6} parent=5 // pred_check_branch
        %152 = sbr.rel (%p150) target = $region24
      $region23: #{decoder_forward.6} parent=5 // pred_region
        // Predicated region
        $region25: #{decoder_forward.6} parent=23 // pred_check
          %p153 = pneg %p36
        $region26: #{decoder_forward.6} parent=23 // pred_check_branch
          %155 = sbr.rel (%p153) target = $region28
        $region27: #{decoder_forward.6} parent=23 // pred_region
          %s156 = sand.u32 %s26, 1
          %s157 = scalar_lea.sflag [#allocation4], %s156
          %s158 = sand.u32 %s26, 1
          %s159 = smul.addr %s158, 64
          %s160 = scalar_lea.vmem [#allocation3], %s159
          %s162 = ssub.s32 1024, 1024
          %163 = vsyncadd %s157, %s162
          %s164 = smul.addr %s16, 8
          %s165 = smul.addr %s164, 128
          %s166 = scalar_lea.hbm %s0, %s165
          %s167 = sshll.u32 %s160, 4
          %s168 = int_to_ptr.vmem [resolvable:$true] %s167
          %173 = dma.hbm_to_vmem [thread:$0]  %s166, 1024, %s168, %s157, 128, 128, 8
        $region28: #{decoder_forward.6} parent=23 // pred_fallthru
          _
      $region24: #{decoder_forward.6} parent=5 // pred_fallthru
        _
      %p174 = scmp.le.s32.totalorder 1, %s16
      %p175 = scmp.lt.s32.totalorder %s16, 3
      %p176 = pnand %p174, %p175
      %p177 = pneg %p176
      // Predicated region
      $region29: #{decoder_forward.6} parent=5 // pred_check
        _
      $region30: #{decoder_forward.6} parent=5 // pred_check_branch
        %179 = sbr.rel (%p176) target = $region32
      $region31: #{decoder_forward.6} parent=5 // pred_region
        %s180 = ssub.s32 %s16, 1
        %s181 = sand.u32 %s29, 1
        %s182 = scalar_lea.sflag [#allocation4], %s181
        %s183 = sand.u32 %s29, 1
        %s184 = smul.addr %s183, 64
        %s185 = scalar_lea.vmem [#allocation3], %s184
        // Predicated region
        $region33: #{decoder_forward.6} parent=31 // pred_check
          %p186 = pneg %p42
        $region34: #{decoder_forward.6} parent=31 // pred_check_branch
          %188 = sbr.rel (%p186) target = $region36
        $region35: #{decoder_forward.6} parent=31 // pred_region
          %189 = dma.done %s182, 1024
        $region36: #{decoder_forward.6} parent=31 // pred_fallthru
          _
        // Predicated region
        $region37: #{decoder_forward.6} parent=31 // pred_check
          %p190 = pneg %p63
        $region38: #{decoder_forward.6} parent=31 // pred_check_branch
          %192 = sbr.rel (%p190) target = $region40
        $region39: #{decoder_forward.6} parent=31 // pred_region
          %193 = dma.done [#allocation7], 2304
        $region40: #{decoder_forward.6} parent=31 // pred_fallthru
          _
        // Predicated region
        $region41: #{decoder_forward.6} parent=31 // pred_check
          %p194 = pneg %p84
        $region42: #{decoder_forward.6} parent=31 // pred_check_branch
          %196 = sbr.rel (%p194) target = $region44
        $region43: #{decoder_forward.6} parent=31 // pred_region
          %197 = dma.done [#allocation7], 16
        $region44: #{decoder_forward.6} parent=31 // pred_fallthru
          _
        %s198 = sand.u32 %s29, 1
        %s199 = scalar_lea.sflag [#allocation4], %s198
        %s200 = sand.u32 %s29, 1
        %s201 = smul.addr %s200, 64
        %s202 = scalar_lea.vmem [#allocation3], %s201
        %p203 = pneg %p42
        %p204 = pneg %p39
        %p205 = pneg %p63
        %p206 = pneg %p60
        %p207 = pneg %p84
        %p208 = pneg %p81
        %p209 = pneg %p110
        %p210 = pneg %p107
        %s211 = sand.u32 %s97, 1
        %s212 = scalar_lea.sflag [#allocation5], %s211
        %s213 = sand.u32 %s97, 1
        %s214 = smul.addr %s213, 64
        %s215 = scalar_lea.vmem [#allocation9], %s214
        %vm217 = vcmask 261120
        %218 = vst.msk [vmem:[#allocation2] sm:$0xff] %vm217, 0.0
        %vm219 = vcmask 254976
        %220 = vst.msk [vmem:[#allocation2 + $0x8] sm:$0x3] %vm219, 0.0
        %s221 = scalar_lea.vmem [#allocation2], 144
        %222 = vst.msk [vmem:[%s221] sm:$0xff] %vm217, 0.0
        %223 = vst.msk [vmem:[%s221 + $0x8] sm:$0x3] %vm219, 0.0
        %s224 = scalar_lea.vmem [#allocation2], 16
        %vm225 = vcmask 253952
        %226 = vst.msk [vmem:[%s224] sm:$0x1] %vm225, 0.0
        %227 = vst.msk [vmem:[%s224 + $0x10] sm:$0x1] %vm225, 0.0
        %228 = vst.msk [vmem:[%s224 + $0x20] sm:$0x1] %vm225, 0.0
        %229 = vst.msk [vmem:[%s224 + $0x30] sm:$0x1] %vm225, 0.0
        %230 = vst.msk [vmem:[%s224 + $0x40] sm:$0x1] %vm225, 0.0
        %231 = vst.msk [vmem:[%s224 + $0x50] sm:$0x1] %vm225, 0.0
        %232 = vst.msk [vmem:[%s224 + $0x60] sm:$0x1] %vm225, 0.0
        %233 = vst.msk [vmem:[%s224 + $0x70] sm:$0x1] %vm225, 0.0
        %234 = vst.msk [vmem:[%s224 + $0x9] sm:$0x1] %vm225, 0.0
        %235 = vst.msk [vmem:[%s224 + $0x19] sm:$0x1] %vm225, 0.0
        %236 = vst.msk [vmem:[%s224 + $0x29] sm:$0x1] %vm225, 0.0
        %237 = vst.msk [vmem:[%s224 + $0x39] sm:$0x1] %vm225, 0.0
        %238 = vst.msk [vmem:[%s224 + $0x49] sm:$0x1] %vm225, 0.0
        %239 = vst.msk [vmem:[%s224 + $0x59] sm:$0x1] %vm225, 0.0
        %240 = vst.msk [vmem:[%s224 + $0x69] sm:$0x1] %vm225, 0.0
        %241 = vst.msk [vmem:[%s224 + $0x79] sm:$0x1] %vm225, 0.0
        %v242 = vld [vmem:[%s185] sm:$0xff]
        %v243 = vld [vmem:[%s185 + $0x8] sm:$0xff]
        %v244 = vld [vmem:[%s185 + $0x10] sm:$0xff]
        %v245 = vld [vmem:[%s185 + $0x18] sm:$0xff]
        %v246 = vld [vmem:[%s185 + $0x20] sm:$0xff]
        %v247 = vld [vmem:[%s185 + $0x28] sm:$0xff]
        %v248 = vld [vmem:[%s185 + $0x30] sm:$0xff]
        %v249 = vld [vmem:[%s185 + $0x38] sm:$0xff]
        %250 = vst.msk [vmem:[%s224 + $0x1] sm:$0xff] %vm217, %v242
        %251 = vst.msk [vmem:[%s224 + $0x11] sm:$0xff] %vm217, %v243
        %252 = vst.msk [vmem:[%s224 + $0x21] sm:$0xff] %vm217, %v244
        %253 = vst.msk [vmem:[%s224 + $0x31] sm:$0xff] %vm217, %v245
        %254 = vst.msk [vmem:[%s224 + $0x41] sm:$0xff] %vm217, %v246
        %255 = vst.msk [vmem:[%s224 + $0x51] sm:$0xff] %vm217, %v247
        %256 = vst.msk [vmem:[%s224 + $0x61] sm:$0xff] %vm217, %v248
        %257 = vst.msk [vmem:[%s224 + $0x71] sm:$0xff] %vm217, %v249
        %v258 = vld [vmem:[#allocation2] sm:$0xff]
        %v259 = vld [vmem:[#allocation2 + $0x10] sm:$0xff]
        %v260 = vld [vmem:[#allocation2 + $0x20] sm:$0xff]
        %v261 = vld [vmem:[#allocation2 + $0x30] sm:$0xff]
        %v262 = vld [vmem:[#allocation2 + $0x40] sm:$0xff]
        %v263 = vld [vmem:[#allocation2 + $0x50] sm:$0xff]
        %v264 = vld [vmem:[#allocation2 + $0x60] sm:$0xff]
        %v265 = vld [vmem:[#allocation2 + $0x70] sm:$0xff]
        %v266 = vld [vmem:[#allocation6] sm:$0xf]
        %v267 = vld [vmem:[#allocation6 + $0x4] sm:$0xf]
        %v268 = vld [vmem:[#allocation6 + $0x8] sm:$0xf]
        %v269 = vld [vmem:[#allocation6 + $0xc] sm:$0xf]
        %v270 = vpack.c.bf16 %v259, %v258
        %v271 = vpack.c.bf16 %v261, %v260
        %v272 = vpack.c.bf16 %v263, %v262
        %v273 = vpack.c.bf16 %v265, %v264
        %v274 = vld [vmem:[#allocation2 + $0x1] sm:$0xff]
        %v275 = vld [vmem:[#allocation2 + $0x11] sm:$0xff]
        %v276 = vld [vmem:[#allocation2 + $0x21] sm:$0xff]
        %v277 = vld [vmem:[#allocation2 + $0x31] sm:$0xff]
        %v278 = vld [vmem:[#allocation2 + $0x41] sm:$0xff]
        %v279 = vld [vmem:[#allocation2 + $0x51] sm:$0xff]
        %v280 = vld [vmem:[#allocation2 + $0x61] sm:$0xff]
        %v281 = vld [vmem:[#allocation2 + $0x71] sm:$0xff]
        %v282 = vld [vmem:[#allocation6 + $0x10] sm:$0xf]
        %v283 = vld [vmem:[#allocation6 + $0x14] sm:$0xf]
        %v284 = vld [vmem:[#allocation6 + $0x18] sm:$0xf]
        %v285 = vld [vmem:[#allocation6 + $0x1c] sm:$0xf]
        %v286 = vpack.c.bf16 %v275, %v274
        %v287 = vpack.c.bf16 %v277, %v276
        %v288 = vpack.c.bf16 %v279, %v278
        %v289 = vpack.c.bf16 %v281, %v280
        %v294 = vunpack.c.l.b16 %v282
        %v295 = vunpack.c.l.b16 %v283
        %v296 = vunpack.c.l.b16 %v284
        %v297 = vunpack.c.l.b16 %v285
        %v298 = vpack.c.b16 %v295, %v294
        %v299 = vpack.c.b16 %v297, %v296
        %v303 = vsel %vm217, %v286, 0
        %v306 = vsel %vm217, %v287, 0
        %v309 = vsel %vm217, %v288, 0
        %v312 = vsel %vm217, %v289, 0
        %314 = vmatprep.subr.bf16.mxu0 0
        %315 = vmatpush1.bf16.msra.mxu0 %v298
        %316 = vmatprep.subr.bf16.mxu0 0
        %317 = vmatpush1.bf16.msra.mxu0 %v299
        %318 = vmatprep.subr.bf16.mxu0 0
        %319 = vmatpush1.bf16.msra.mxu0 0
        %320 = vmatprep.subr.bf16.mxu0 0
        %321 = vmatpush1.bf16.msra.mxu0 0
        %322 = vmatprep.subr.bf16.mxu0 0
        %323 = vmatpush1.bf16.msra.mxu0 0
        %324 = vmatprep.subr.bf16.mxu0 0
        %325 = vmatpush1.bf16.msra.mxu0 0
        %326 = vmatprep.subr.bf16.mxu0 0
        %327 = vmatpush1.bf16.msra.mxu0 0
        %328 = vmatprep.subr.bf16.mxu0 0
        %329 = vmatpush1.bf16.msra.mxu0 0
        %330 = vmatprep.subr.bf16.mxu0 0
        %331 = vmatpush1.bf16.msra.mxu0 0
        %332 = vmatprep.subr.bf16.mxu0 0
        %333 = vmatpush1.bf16.msra.mxu0 0
        %334 = vmatprep.subr.bf16.mxu0 0
        %335 = vmatpush1.bf16.msra.mxu0 0
        %336 = vmatprep.subr.bf16.mxu0 0
        %337 = vmatpush1.bf16.msra.mxu0 0
        %338 = vmatprep.subr.bf16.mxu0 0
        %339 = vmatpush1.bf16.msra.mxu0 0
        %340 = vmatprep.subr.bf16.mxu0 0
        %341 = vmatpush1.bf16.msra.mxu0 0
        %342 = vmatprep.subr.bf16.mxu0 0
        %343 = vmatpush1.bf16.msra.mxu0 0
        %344 = vmatprep.subr.bf16.mxu0 0
        %345 = vmatpush1.bf16.msra.mxu0 0
        %346 = vmatprep.mubr.bf16.mxu0 0
        %347 = vmatmul.mubr.bf16.gmra.mrb[0].mxu0 %v303
        %v348 = vpop.f32.mrb[0].mxu0
        %v349 = vadd.f32 0.0, %v348
        %v350 = vpop.f32.mrb[0].mxu0
        %v351 = vpop.f32.mrb[0].mxu0
        %v352 = vadd.f32 0.0, %v351
        %v353 = vpop.f32.mrb[0].mxu0
        %354 = vmatprep.mubr.bf16.mxu0 0
        %355 = vmatmul.mubr.bf16.gmra.mrb[0].mxu0 %v306
        %v356 = vpop.f32.mrb[0].mxu0
        %v357 = vadd.f32 0.0, %v356
        %v358 = vpop.f32.mrb[0].mxu0
        %v359 = vpop.f32.mrb[0].mxu0
        %v360 = vadd.f32 0.0, %v359
        %v361 = vpop.f32.mrb[0].mxu0
        %362 = vmatprep.mubr.bf16.mxu0 0
        %363 = vmatmul.mubr.bf16.gmra.mrb[0].mxu0 %v309
        %v364 = vpop.f32.mrb[0].mxu0
        %v365 = vadd.f32 0.0, %v364
        %v366 = vpop.f32.mrb[0].mxu0
        %v367 = vpop.f32.mrb[0].mxu0
        %v368 = vadd.f32 0.0, %v367
        %v369 = vpop.f32.mrb[0].mxu0
        %370 = vmatprep.mubr.bf16.mxu0 0
        %371 = vmatmul.mubr.bf16.gmra.mrb[0].mxu0 %v312
        %v372 = vpop.f32.mrb[0].mxu0
        %v373 = vadd.f32 0.0, %v372
        %v374 = vpop.f32.mrb[0].mxu0
        %v375 = vpop.f32.mrb[0].mxu0
        %v376 = vadd.f32 0.0, %v375
        %v377 = vpop.f32.mrb[0].mxu0
        %378 = vdwg.mxu0
        %v383 = vunpack.c.l.b16 %v266
        %v384 = vunpack.c.l.b16 %v267
        %v385 = vunpack.c.l.b16 %v268
        %v386 = vunpack.c.l.b16 %v269
        %v387 = vpack.c.b16 %v384, %v383
        %v388 = vpack.c.b16 %v386, %v385
        %v392 = vsel %vm217, %v270, 0
        %v395 = vsel %vm217, %v271, 0
        %v398 = vsel %vm217, %v272, 0
        %v401 = vsel %vm217, %v273, 0
        %403 = vmatprep.subr.bf16.mxu0 0
        %404 = vmatpush1.bf16.msra.mxu0 %v387
        %405 = vmatprep.subr.bf16.mxu0 0
        %406 = vmatpush1.bf16.msra.mxu0 %v388
        %407 = vmatprep.subr.bf16.mxu0 0
        %408 = vmatpush1.bf16.msra.mxu0 0
        %409 = vmatprep.subr.bf16.mxu0 0
        %410 = vmatpush1.bf16.msra.mxu0 0
        %411 = vmatprep.subr.bf16.mxu0 0
        %412 = vmatpush1.bf16.msra.mxu0 0
        %413 = vmatprep.subr.bf16.mxu0 0
        %414 = vmatpush1.bf16.msra.mxu0 0
        %415 = vmatprep.subr.bf16.mxu0 0
        %416 = vmatpush1.bf16.msra.mxu0 0
        %417 = vmatprep.subr.bf16.mxu0 0
        %418 = vmatpush1.bf16.msra.mxu0 0
        %419 = vmatprep.subr.bf16.mxu0 0
        %420 = vmatpush1.bf16.msra.mxu0 0
        %421 = vmatprep.subr.bf16.mxu0 0
        %422 = vmatpush1.bf16.msra.mxu0 0
        %423 = vmatprep.subr.bf16.mxu0 0
        %424 = vmatpush1.bf16.msra.mxu0 0
        %425 = vmatprep.subr.bf16.mxu0 0
        %426 = vmatpush1.bf16.msra.mxu0 0
        %427 = vmatprep.subr.bf16.mxu0 0
        %428 = vmatpush1.bf16.msra.mxu0 0
        %429 = vmatprep.subr.bf16.mxu0 0
        %430 = vmatpush1.bf16.msra.mxu0 0
        %431 = vmatprep.subr.bf16.mxu0 0
        %432 = vmatpush1.bf16.msra.mxu0 0
        %433 = vmatprep.subr.bf16.mxu0 0
        %434 = vmatpush1.bf16.msra.mxu0 0
        %435 = vmatprep.mubr.bf16.mxu0 0
        %436 = vmatmul.mubr.bf16.gmra.mrb[0].mxu0 %v392
        %v437 = vpop.f32.mrb[0].mxu0
        %v438 = vadd.f32 %v349, %v437
        %v439 = vpop.f32.mrb[0].mxu0
        %v440 = vpop.f32.mrb[0].mxu0
        %v441 = vadd.f32 %v352, %v440
        %v442 = vpop.f32.mrb[0].mxu0
        %443 = vmatprep.mubr.bf16.mxu0 0
        %444 = vmatmul.mubr.bf16.gmra.mrb[0].mxu0 %v395
        %v445 = vpop.f32.mrb[0].mxu0
        %v446 = vadd.f32 %v357, %v445
        %v447 = vpop.f32.mrb[0].mxu0
        %v448 = vpop.f32.mrb[0].mxu0
        %v449 = vadd.f32 %v360, %v448
        %v450 = vpop.f32.mrb[0].mxu0
        %451 = vmatprep.mubr.bf16.mxu0 0
        %452 = vmatmul.mubr.bf16.gmra.mrb[0].mxu0 %v398
        %v453 = vpop.f32.mrb[0].mxu0
        %v454 = vadd.f32 %v365, %v453
        %v455 = vpop.f32.mrb[0].mxu0
        %v456 = vpop.f32.mrb[0].mxu0
        %v457 = vadd.f32 %v368, %v456
        %v458 = vpop.f32.mrb[0].mxu0
        %459 = vmatprep.mubr.bf16.mxu0 0
        %460 = vmatmul.mubr.bf16.gmra.mrb[0].mxu0 %v401
        %v461 = vpop.f32.mrb[0].mxu0
        %v462 = vadd.f32 %v373, %v461
        %v463 = vpop.f32.mrb[0].mxu0
        %v464 = vpop.f32.mrb[0].mxu0
        %v465 = vadd.f32 %v376, %v464
        %v466 = vpop.f32.mrb[0].mxu0
        %467 = vdwg.mxu0
        %v468 = vld [vmem:[#allocation2 + $0x2] sm:$0xff]
        %v469 = vld [vmem:[#allocation2 + $0x12] sm:$0xff]
        %v470 = vld [vmem:[#allocation2 + $0x22] sm:$0xff]
        %v471 = vld [vmem:[#allocation2 + $0x32] sm:$0xff]
        %v472 = vld [vmem:[#allocation2 + $0x42] sm:$0xff]
        %v473 = vld [vmem:[#allocation2 + $0x52] sm:$0xff]
        %v474 = vld [vmem:[#allocation2 + $0x62] sm:$0xff]
        %v475 = vld [vmem:[#allocation2 + $0x72] sm:$0xff]
        %v476 = vld [vmem:[#allocation6 + $0x20] sm:$0xf]
        %v477 = vld [vmem:[#allocation6 + $0x24] sm:$0xf]
        %v478 = vld [vmem:[#allocation6 + $0x28] sm:$0xf]
        %v479 = vld [vmem:[#allocation6 + $0x2c] sm:$0xf]
        %v480 = vpack.c.bf16 %v469, %v468
        %v481 = vpack.c.bf16 %v471, %v470
        %v482 = vpack.c.bf16 %v473, %v472
        %v483 = vpack.c.bf16 %v475, %v474
        %v488 = vunpack.c.l.b16 %v476
        %v489 = vunpack.c.l.b16 %v477
        %v490 = vunpack.c.l.b16 %v478
        %v491 = vunpack.c.l.b16 %v479
        %v492 = vpack.c.b16 %v489, %v488
        %v493 = vpack.c.b16 %v491, %v490
        %v497 = vsel %vm217, %v480, 0
        %v500 = vsel %vm217, %v481, 0
        %v503 = vsel %vm217, %v482, 0
        %v506 = vsel %vm217, %v483, 0
        %508 = vmatprep.subr.bf16.mxu0 0
        %509 = vmatpush1.bf16.msra.mxu0 %v492
        %510 = vmatprep.subr.bf16.mxu0 0
        %511 = vmatpush1.bf16.msra.mxu0 %v493
        %512 = vmatprep.subr.bf16.mxu0 0
        %513 = vmatpush1.bf16.msra.mxu0 0
        %514 = vmatprep.subr.bf16.mxu0 0
        %515 = vmatpush1.bf16.msra.mxu0 0
        %516 = vmatprep.subr.bf16.mxu0 0
        %517 = vmatpush1.bf16.msra.mxu0 0
        %518 = vmatprep.subr.bf16.mxu0 0
        %519 = vmatpush1.bf16.msra.mxu0 0
        %520 = vmatprep.subr.bf16.mxu0 0
        %521 = vmatpush1.bf16.msra.mxu0 0
        %522 = vmatprep.subr.bf16.mxu0 0
        %523 = vmatpush1.bf16.msra.mxu0 0
        %524 = vmatprep.subr.bf16.mxu0 0
        %525 = vmatpush1.bf16.msra.mxu0 0
        %526 = vmatprep.subr.bf16.mxu0 0
        %527 = vmatpush1.bf16.msra.mxu0 0
        %528 = vmatprep.subr.bf16.mxu0 0
        %529 = vmatpush1.bf16.msra.mxu0 0
        %530 = vmatprep.subr.bf16.mxu0 0
        %531 = vmatpush1.bf16.msra.mxu0 0
        %532 = vmatprep.subr.bf16.mxu0 0
        %533 = vmatpush1.bf16.msra.mxu0 0
        %534 = vmatprep.subr.bf16.mxu0 0
        %535 = vmatpush1.bf16.msra.mxu0 0
        %536 = vmatprep.subr.bf16.mxu0 0
        %537 = vmatpush1.bf16.msra.mxu0 0
        %538 = vmatprep.subr.bf16.mxu0 0
        %539 = vmatpush1.bf16.msra.mxu0 0
        %540 = vmatprep.mubr.bf16.mxu0 0
        %541 = vmatmul.mubr.bf16.gmra.mrb[0].mxu0 %v497
        %v542 = vpop.f32.mrb[0].mxu0
        %v543 = vadd.f32 0.0, %v542
        %v544 = vpop.f32.mrb[0].mxu0
        %v545 = vpop.f32.mrb[0].mxu0
        %v546 = vadd.f32 0.0, %v545
        %v547 = vpop.f32.mrb[0].mxu0
        %548 = vmatprep.mubr.bf16.mxu0 0
        %549 = vmatmul.mubr.bf16.gmra.mrb[0].mxu0 %v500
        %v550 = vpop.f32.mrb[0].mxu0
        %v551 = vadd.f32 0.0, %v550
        %v552 = vpop.f32.mrb[0].mxu0
        %v553 = vpop.f32.mrb[0].mxu0
        %v554 = vadd.f32 0.0, %v553
        %v555 = vpop.f32.mrb[0].mxu0
        %556 = vmatprep.mubr.bf16.mxu0 0
        %557 = vmatmul.mubr.bf16.gmra.mrb[0].mxu0 %v503
        %v558 = vpop.f32.mrb[0].mxu0
        %v559 = vadd.f32 0.0, %v558
        %v560 = vpop.f32.mrb[0].mxu0
        %v561 = vpop.f32.mrb[0].mxu0
        %v562 = vadd.f32 0.0, %v561
        %v563 = vpop.f32.mrb[0].mxu0
        %564 = vmatprep.mubr.bf16.mxu0 0
        %565 = vmatmul.mubr.bf16.gmra.mrb[0].mxu0 %v506
        %v566 = vpop.f32.mrb[0].mxu0
        %v567 = vadd.f32 0.0, %v566
        %v568 = vpop.f32.mrb[0].mxu0
        %v569 = vpop.f32.mrb[0].mxu0
        %v570 = vadd.f32 0.0, %v569
        %v571 = vpop.f32.mrb[0].mxu0
        %572 = vdwg.mxu0
        %v573 = vadd.f32 %v438, %v543
        %v574 = vadd.f32 %v441, %v546
        %v575 = vadd.f32 %v446, %v551
        %v576 = vadd.f32 %v449, %v554
        %v577 = vadd.f32 %v454, %v559
        %v578 = vadd.f32 %v457, %v562
        %v579 = vadd.f32 %v462, %v567
        %v580 = vadd.f32 %v465, %v570
        %v581 = vld [vmem:[%s224] sm:$0xff]
        %v582 = vld [vmem:[%s224 + $0x10] sm:$0xff]
        %v583 = vld [vmem:[%s224 + $0x20] sm:$0xff]
        %v584 = vld [vmem:[%s224 + $0x30] sm:$0xff]
        %v585 = vld [vmem:[%s224 + $0x40] sm:$0xff]
        %v586 = vld [vmem:[%s224 + $0x50] sm:$0xff]
        %v587 = vld [vmem:[%s224 + $0x60] sm:$0xff]
        %v588 = vld [vmem:[%s224 + $0x70] sm:$0xff]
        %v589 = vld [vmem:[#allocation6 + $0x30] sm:$0xf]
        %v590 = vld [vmem:[#allocation6 + $0x34] sm:$0xf]
        %v591 = vld [vmem:[#allocation6 + $0x38] sm:$0xf]
        %v592 = vld [vmem:[#allocation6 + $0x3c] sm:$0xf]
        %v593 = vpack.c.bf16 %v582, %v581
        %v594 = vpack.c.bf16 %v584, %v583
        %v595 = vpack.c.bf16 %v586, %v585
        %v596 = vpack.c.bf16 %v588, %v587
        %v601 = vunpack.c.l.b16 %v589
        %v602 = vunpack.c.l.b16 %v590
        %v603 = vunpack.c.l.b16 %v591
        %v604 = vunpack.c.l.b16 %v592
        %v605 = vpack.c.b16 %v602, %v601
        %v606 = vpack.c.b16 %v604, %v603
        %v610 = vsel %vm217, %v593, 0
        %v613 = vsel %vm217, %v594, 0
        %v616 = vsel %vm217, %v595, 0
        %v619 = vsel %vm217, %v596, 0
        %621 = vmatprep.subr.bf16.mxu0 0
        %622 = vmatpush1.bf16.msra.mxu0 %v605
        %623 = vmatprep.subr.bf16.mxu0 0
        %624 = vmatpush1.bf16.msra.mxu0 %v606
        %625 = vmatprep.subr.bf16.mxu0 0
        %626 = vmatpush1.bf16.msra.mxu0 0
        %627 = vmatprep.subr.bf16.mxu0 0
        %628 = vmatpush1.bf16.msra.mxu0 0
        %629 = vmatprep.subr.bf16.mxu0 0
        %630 = vmatpush1.bf16.msra.mxu0 0
        %631 = vmatprep.subr.bf16.mxu0 0
        %632 = vmatpush1.bf16.msra.mxu0 0
        %633 = vmatprep.subr.bf16.mxu0 0
        %634 = vmatpush1.bf16.msra.mxu0 0
        %635 = vmatprep.subr.bf16.mxu0 0
        %636 = vmatpush1.bf16.msra.mxu0 0
        %637 = vmatprep.subr.bf16.mxu0 0
        %638 = vmatpush1.bf16.msra.mxu0 0
        %639 = vmatprep.subr.bf16.mxu0 0
        %640 = vmatpush1.bf16.msra.mxu0 0
        %641 = vmatprep.subr.bf16.mxu0 0
        %642 = vmatpush1.bf16.msra.mxu0 0
        %643 = vmatprep.subr.bf16.mxu0 0
        %644 = vmatpush1.bf16.msra.mxu0 0
        %645 = vmatprep.subr.bf16.mxu0 0
        %646 = vmatpush1.bf16.msra.mxu0 0
        %647 = vmatprep.subr.bf16.mxu0 0
        %648 = vmatpush1.bf16.msra.mxu0 0
        %649 = vmatprep.subr.bf16.mxu0 0
        %650 = vmatpush1.bf16.msra.mxu0 0
        %651 = vmatprep.subr.bf16.mxu0 0
        %652 = vmatpush1.bf16.msra.mxu0 0
        %653 = vmatprep.mubr.bf16.mxu0 0
        %654 = vmatmul.mubr.bf16.gmra.mrb[0].mxu0 %v610
        %v655 = vpop.f32.mrb[0].mxu0
        %v656 = vadd.f32 0.0, %v655
        %v657 = vpop.f32.mrb[0].mxu0
        %v658 = vpop.f32.mrb[0].mxu0
        %v659 = vadd.f32 0.0, %v658
        %v660 = vpop.f32.mrb[0].mxu0
        %661 = vmatprep.mubr.bf16.mxu0 0
        %662 = vmatmul.mubr.bf16.gmra.mrb[0].mxu0 %v613
        %v663 = vpop.f32.mrb[0].mxu0
        %v664 = vadd.f32 0.0, %v663
        %v665 = vpop.f32.mrb[0].mxu0
        %v666 = vpop.f32.mrb[0].mxu0
        %v667 = vadd.f32 0.0, %v666
        %v668 = vpop.f32.mrb[0].mxu0
        %669 = vmatprep.mubr.bf16.mxu0 0
        %670 = vmatmul.mubr.bf16.gmra.mrb[0].mxu0 %v616
        %v671 = vpop.f32.mrb[0].mxu0
        %v672 = vadd.f32 0.0, %v671
        %v673 = vpop.f32.mrb[0].mxu0
        %v674 = vpop.f32.mrb[0].mxu0
        %v675 = vadd.f32 0.0, %v674
        %v676 = vpop.f32.mrb[0].mxu0
        %677 = vmatprep.mubr.bf16.mxu0 0
        %678 = vmatmul.mubr.bf16.gmra.mrb[0].mxu0 %v619
        %v679 = vpop.f32.mrb[0].mxu0
        %v680 = vadd.f32 0.0, %v679
        %v681 = vpop.f32.mrb[0].mxu0
        %v682 = vpop.f32.mrb[0].mxu0
        %v683 = vadd.f32 0.0, %v682
        %v684 = vpop.f32.mrb[0].mxu0
        %685 = vdwg.mxu0
        %v686 = vadd.f32 %v573, %v656
        %v687 = vadd.f32 %v574, %v659
        %v688 = vadd.f32 %v575, %v664
        %v689 = vadd.f32 %v576, %v667
        %v690 = vadd.f32 %v577, %v672
        %v691 = vadd.f32 %v578, %v675
        %v692 = vadd.f32 %v579, %v680
        %v693 = vadd.f32 %v580, %v683
        %v694 = vld [vmem:[%s224 + $0x1] sm:$0xff]
        %v695 = vld [vmem:[%s224 + $0x11] sm:$0xff]
        %v696 = vld [vmem:[%s224 + $0x21] sm:$0xff]
        %v697 = vld [vmem:[%s224 + $0x31] sm:$0xff]
        %v698 = vld [vmem:[%s224 + $0x41] sm:$0xff]
        %v699 = vld [vmem:[%s224 + $0x51] sm:$0xff]
        %v700 = vld [vmem:[%s224 + $0x61] sm:$0xff]
        %v701 = vld [vmem:[%s224 + $0x71] sm:$0xff]
        %v702 = vld [vmem:[#allocation6 + $0x40] sm:$0xf]
        %v703 = vld [vmem:[#allocation6 + $0x44] sm:$0xf]
        %v704 = vld [vmem:[#allocation6 + $0x48] sm:$0xf]
        %v705 = vld [vmem:[#allocation6 + $0x4c] sm:$0xf]
        %v706 = vpack.c.bf16 %v695, %v694
        %v707 = vpack.c.bf16 %v697, %v696
        %v708 = vpack.c.bf16 %v699, %v698
        %v709 = vpack.c.bf16 %v701, %v700
        %v714 = vunpack.c.l.b16 %v702
        %v715 = vunpack.c.l.b16 %v703
        %v716 = vunpack.c.l.b16 %v704
        %v717 = vunpack.c.l.b16 %v705
        %v718 = vpack.c.b16 %v715, %v714
        %v719 = vpack.c.b16 %v717, %v716
        %v723 = vsel %vm217, %v706, 0
        %v726 = vsel %vm217, %v707, 0
        %v729 = vsel %vm217, %v708, 0
        %v732 = vsel %vm217, %v709, 0
        %734 = vmatprep.subr.bf16.mxu0 0
        %735 = vmatpush1.bf16.msra.mxu0 %v718
        %736 = vmatprep.subr.bf16.mxu0 0
        %737 = vmatpush1.bf16.msra.mxu0 %v719
        %738 = vmatprep.subr.bf16.mxu0 0
        %739 = vmatpush1.bf16.msra.mxu0 0
        %740 = vmatprep.subr.bf16.mxu0 0
        %741 = vmatpush1.bf16.msra.mxu0 0
        %742 = vmatprep.subr.bf16.mxu0 0
        %743 = vmatpush1.bf16.msra.mxu0 0
        %744 = vmatprep.subr.bf16.mxu0 0
        %745 = vmatpush1.bf16.msra.mxu0 0
        %746 = vmatprep.subr.bf16.mxu0 0
        %747 = vmatpush1.bf16.msra.mxu0 0
        %748 = vmatprep.subr.bf16.mxu0 0
        %749 = vmatpush1.bf16.msra.mxu0 0
        %750 = vmatprep.subr.bf16.mxu0 0
        %751 = vmatpush1.bf16.msra.mxu0 0
        %752 = vmatprep.subr.bf16.mxu0 0
        %753 = vmatpush1.bf16.msra.mxu0 0
        %754 = vmatprep.subr.bf16.mxu0 0
        %755 = vmatpush1.bf16.msra.mxu0 0
        %756 = vmatprep.subr.bf16.mxu0 0
        %757 = vmatpush1.bf16.msra.mxu0 0
        %758 = vmatprep.subr.bf16.mxu0 0
        %759 = vmatpush1.bf16.msra.mxu0 0
        %760 = vmatprep.subr.bf16.mxu0 0
        %761 = vmatpush1.bf16.msra.mxu0 0
        %762 = vmatprep.subr.bf16.mxu0 0
        %763 = vmatpush1.bf16.msra.mxu0 0
        %764 = vmatprep.subr.bf16.mxu0 0
        %765 = vmatpush1.bf16.msra.mxu0 0
        %766 = vmatprep.mubr.bf16.mxu0 0
        %767 = vmatmul.mubr.bf16.gmra.mrb[0].mxu0 %v723
        %v768 = vpop.f32.mrb[0].mxu0
        %v769 = vadd.f32 0.0, %v768
        %v770 = vpop.f32.mrb[0].mxu0
        %v771 = vpop.f32.mrb[0].mxu0
        %v772 = vadd.f32 0.0, %v771
        %v773 = vpop.f32.mrb[0].mxu0
        %774 = vmatprep.mubr.bf16.mxu0 0
        %775 = vmatmul.mubr.bf16.gmra.mrb[0].mxu0 %v726
        %v776 = vpop.f32.mrb[0].mxu0
        %v777 = vadd.f32 0.0, %v776
        %v778 = vpop.f32.mrb[0].mxu0
        %v779 = vpop.f32.mrb[0].mxu0
        %v780 = vadd.f32 0.0, %v779
        %v781 = vpop.f32.mrb[0].mxu0
        %782 = vmatprep.mubr.bf16.mxu0 0
        %783 = vmatmul.mubr.bf16.gmra.mrb[0].mxu0 %v729
        %v784 = vpop.f32.mrb[0].mxu0
        %v785 = vadd.f32 0.0, %v784
        %v786 = vpop.f32.mrb[0].mxu0
        %v787 = vpop.f32.mrb[0].mxu0
        %v788 = vadd.f32 0.0, %v787
        %v789 = vpop.f32.mrb[0].mxu0
        %790 = vmatprep.mubr.bf16.mxu0 0
        %791 = vmatmul.mubr.bf16.gmra.mrb[0].mxu0 %v732
        %v792 = vpop.f32.mrb[0].mxu0
        %v793 = vadd.f32 0.0, %v792
        %v794 = vpop.f32.mrb[0].mxu0
        %v795 = vpop.f32.mrb[0].mxu0
        %v796 = vadd.f32 0.0, %v795
        %v797 = vpop.f32.mrb[0].mxu0
        %798 = vdwg.mxu0
        %v799 = vadd.f32 %v686, %v769
        %v800 = vadd.f32 %v687, %v772
        %v801 = vadd.f32 %v688, %v777
        %v802 = vadd.f32 %v689, %v780
        %v803 = vadd.f32 %v690, %v785
        %v804 = vadd.f32 %v691, %v788
        %v805 = vadd.f32 %v692, %v793
        %v806 = vadd.f32 %v693, %v796
        %v807 = vld [vmem:[%s224 + $0x2] sm:$0xff]
        %v808 = vld [vmem:[%s224 + $0x12] sm:$0xff]
        %v809 = vld [vmem:[%s224 + $0x22] sm:$0xff]
        %v810 = vld [vmem:[%s224 + $0x32] sm:$0xff]
        %v811 = vld [vmem:[%s224 + $0x42] sm:$0xff]
        %v812 = vld [vmem:[%s224 + $0x52] sm:$0xff]
        %v813 = vld [vmem:[%s224 + $0x62] sm:$0xff]
        %v814 = vld [vmem:[%s224 + $0x72] sm:$0xff]
        %v815 = vld [vmem:[#allocation6 + $0x50] sm:$0xf]
        %v816 = vld [vmem:[#allocation6 + $0x54] sm:$0xf]
        %v817 = vld [vmem:[#allocation6 + $0x58] sm:$0xf]
        %v818 = vld [vmem:[#allocation6 + $0x5c] sm:$0xf]
        %v819 = vpack.c.bf16 %v808, %v807
        %v820 = vpack.c.bf16 %v810, %v809
        %v821 = vpack.c.bf16 %v812, %v811
        %v822 = vpack.c.bf16 %v814, %v813
        %v827 = vunpack.c.l.b16 %v815
        %v828 = vunpack.c.l.b16 %v816
        %v829 = vunpack.c.l.b16 %v817
        %v830 = vunpack.c.l.b16 %v818
        %v831 = vpack.c.b16 %v828, %v827
        %v832 = vpack.c.b16 %v830, %v829
        %v836 = vsel %vm217, %v819, 0
        %v839 = vsel %vm217, %v820, 0
        %v842 = vsel %vm217, %v821, 0
        %v845 = vsel %vm217, %v822, 0
        %847 = vmatprep.subr.bf16.mxu0 0
        %848 = vmatpush1.bf16.msra.mxu0 %v831
        %849 = vmatprep.subr.bf16.mxu0 0
        %850 = vmatpush1.bf16.msra.mxu0 %v832
        %851 = vmatprep.subr.bf16.mxu0 0
        %852 = vmatpush1.bf16.msra.mxu0 0
        %853 = vmatprep.subr.bf16.mxu0 0
        %854 = vmatpush1.bf16.msra.mxu0 0
        %855 = vmatprep.subr.bf16.mxu0 0
        %856 = vmatpush1.bf16.msra.mxu0 0
        %857 = vmatprep.subr.bf16.mxu0 0
        %858 = vmatpush1.bf16.msra.mxu0 0
        %859 = vmatprep.subr.bf16.mxu0 0
        %860 = vmatpush1.bf16.msra.mxu0 0
        %861 = vmatprep.subr.bf16.mxu0 0
        %862 = vmatpush1.bf16.msra.mxu0 0
        %863 = vmatprep.subr.bf16.mxu0 0
        %864 = vmatpush1.bf16.msra.mxu0 0
        %865 = vmatprep.subr.bf16.mxu0 0
        %866 = vmatpush1.bf16.msra.mxu0 0
        %867 = vmatprep.subr.bf16.mxu0 0
        %868 = vmatpush1.bf16.msra.mxu0 0
        %869 = vmatprep.subr.bf16.mxu0 0
        %870 = vmatpush1.bf16.msra.mxu0 0
        %871 = vmatprep.subr.bf16.mxu0 0
        %872 = vmatpush1.bf16.msra.mxu0 0
        %873 = vmatprep.subr.bf16.mxu0 0
        %874 = vmatpush1.bf16.msra.mxu0 0
        %875 = vmatprep.subr.bf16.mxu0 0
        %876 = vmatpush1.bf16.msra.mxu0 0
        %877 = vmatprep.subr.bf16.mxu0 0
        %878 = vmatpush1.bf16.msra.mxu0 0
        %879 = vmatprep.mubr.bf16.mxu0 0
        %880 = vmatmul.mubr.bf16.gmra.mrb[0].mxu0 %v836
        %v881 = vpop.f32.mrb[0].mxu0
        %v882 = vadd.f32 0.0, %v881
        %v883 = vpop.f32.mrb[0].mxu0
        %v884 = vpop.f32.mrb[0].mxu0
        %v885 = vadd.f32 0.0, %v884
        %v886 = vpop.f32.mrb[0].mxu0
        %887 = vmatprep.mubr.bf16.mxu0 0
        %888 = vmatmul.mubr.bf16.gmra.mrb[0].mxu0 %v839
        %v889 = vpop.f32.mrb[0].mxu0
        %v890 = vadd.f32 0.0, %v889
        %v891 = vpop.f32.mrb[0].mxu0
        %v892 = vpop.f32.mrb[0].mxu0
        %v893 = vadd.f32 0.0, %v892
        %v894 = vpop.f32.mrb[0].mxu0
        %895 = vmatprep.mubr.bf16.mxu0 0
        %896 = vmatmul.mubr.bf16.gmra.mrb[0].mxu0 %v842
        %v897 = vpop.f32.mrb[0].mxu0
        %v898 = vadd.f32 0.0, %v897
        %v899 = vpop.f32.mrb[0].mxu0
        %v900 = vpop.f32.mrb[0].mxu0
        %v901 = vadd.f32 0.0, %v900
        %v902 = vpop.f32.mrb[0].mxu0
        %903 = vmatprep.mubr.bf16.mxu0 0
        %904 = vmatmul.mubr.bf16.gmra.mrb[0].mxu0 %v845
        %v905 = vpop.f32.mrb[0].mxu0
        %v906 = vadd.f32 0.0, %v905
        %v907 = vpop.f32.mrb[0].mxu0
        %v908 = vpop.f32.mrb[0].mxu0
        %v909 = vadd.f32 0.0, %v908
        %v910 = vpop.f32.mrb[0].mxu0
        %911 = vdwg.mxu0
        %v912 = vadd.f32 %v799, %v882
        %v913 = vadd.f32 %v800, %v885
        %v914 = vadd.f32 %v801, %v890
        %v915 = vadd.f32 %v802, %v893
        %v916 = vadd.f32 %v803, %v898
        %v917 = vadd.f32 %v804, %v901
        %v918 = vadd.f32 %v805, %v906
        %v919 = vadd.f32 %v806, %v909
        %s920 = scalar_lea.vmem [#allocation2], 32
        %v921 = vld [vmem:[%s920] sm:$0xff]
        %v922 = vld [vmem:[%s920 + $0x10] sm:$0xff]
        %v923 = vld [vmem:[%s920 + $0x20] sm:$0xff]
        %v924 = vld [vmem:[%s920 + $0x30] sm:$0xff]
        %v925 = vld [vmem:[%s920 + $0x40] sm:$0xff]
        %v926 = vld [vmem:[%s920 + $0x50] sm:$0xff]
        %v927 = vld [vmem:[%s920 + $0x60] sm:$0xff]
        %v928 = vld [vmem:[%s920 + $0x70] sm:$0xff]
        %v929 = vld [vmem:[#allocation6 + $0x60] sm:$0xf]
        %v930 = vld [vmem:[#allocation6 + $0x64] sm:$0xf]
        %v931 = vld [vmem:[#allocation6 + $0x68] sm:$0xf]
        %v932 = vld [vmem:[#allocation6 + $0x6c] sm:$0xf]
        %v933 = vpack.c.bf16 %v922, %v921
        %v934 = vpack.c.bf16 %v924, %v923
        %v935 = vpack.c.bf16 %v926, %v925
        %v936 = vpack.c.bf16 %v928, %v927
        %v941 = vunpack.c.l.b16 %v929
        %v942 = vunpack.c.l.b16 %v930
        %v943 = vunpack.c.l.b16 %v931
        %v944 = vunpack.c.l.b16 %v932
        %v945 = vpack.c.b16 %v942, %v941
        %v946 = vpack.c.b16 %v944, %v943
        %v950 = vsel %vm217, %v933, 0
        %v953 = vsel %vm217, %v934, 0
        %v956 = vsel %vm217, %v935, 0
        %v959 = vsel %vm217, %v936, 0
        %961 = vmatprep.subr.bf16.mxu0 0
        %962 = vmatpush1.bf16.msra.mxu0 %v945
        %963 = vmatprep.subr.bf16.mxu0 0
        %964 = vmatpush1.bf16.msra.mxu0 %v946
        %965 = vmatprep.subr.bf16.mxu0 0
        %966 = vmatpush1.bf16.msra.mxu0 0
        %967 = vmatprep.subr.bf16.mxu0 0
        %968 = vmatpush1.bf16.msra.mxu0 0
        %969 = vmatprep.subr.bf16.mxu0 0
        %970 = vmatpush1.bf16.msra.mxu0 0
        %971 = vmatprep.subr.bf16.mxu0 0
        %972 = vmatpush1.bf16.msra.mxu0 0
        %973 = vmatprep.subr.bf16.mxu0 0
        %974 = vmatpush1.bf16.msra.mxu0 0
        %975 = vmatprep.subr.bf16.mxu0 0
        %976 = vmatpush1.bf16.msra.mxu0 0
        %977 = vmatprep.subr.bf16.mxu0 0
        %978 = vmatpush1.bf16.msra.mxu0 0
        %979 = vmatprep.subr.bf16.mxu0 0
        %980 = vmatpush1.bf16.msra.mxu0 0
        %981 = vmatprep.subr.bf16.mxu0 0
        %982 = vmatpush1.bf16.msra.mxu0 0
        %983 = vmatprep.subr.bf16.mxu0 0
        %984 = vmatpush1.bf16.msra.mxu0 0
        %985 = vmatprep.subr.bf16.mxu0 0
        %986 = vmatpush1.bf16.msra.mxu0 0
        %987 = vmatprep.subr.bf16.mxu0 0
        %988 = vmatpush1.bf16.msra.mxu0 0
        %989 = vmatprep.subr.bf16.mxu0 0
        %990 = vmatpush1.bf16.msra.mxu0 0
        %991 = vmatprep.subr.bf16.mxu0 0
        %992 = vmatpush1.bf16.msra.mxu0 0
        %993 = vmatprep.mubr.bf16.mxu0 0
        %994 = vmatmul.mubr.bf16.gmra.mrb[0].mxu0 %v950
        %v995 = vpop.f32.mrb[0].mxu0
        %v996 = vadd.f32 0.0, %v995
        %v997 = vpop.f32.mrb[0].mxu0
        %v998 = vpop.f32.mrb[0].mxu0
        %v999 = vadd.f32 0.0, %v998
        %v1000 = vpop.f32.mrb[0].mxu0
        %1001 = vmatprep.mubr.bf16.mxu0 0
        %1002 = vmatmul.mubr.bf16.gmra.mrb[0].mxu0 %v953
        %v1003 = vpop.f32.mrb[0].mxu0
        %v1004 = vadd.f32 0.0, %v1003
        %v1005 = vpop.f32.mrb[0].mxu0
        %v1006 = vpop.f32.mrb[0].mxu0
        %v1007 = vadd.f32 0.0, %v1006
        %v1008 = vpop.f32.mrb[0].mxu0
        %1009 = vmatprep.mubr.bf16.mxu0 0
        %1010 = vmatmul.mubr.bf16.gmra.mrb[0].mxu0 %v956
        %v1011 = vpop.f32.mrb[0].mxu0
        %v1012 = vadd.f32 0.0, %v1011
        %v1013 = vpop.f32.mrb[0].mxu0
        %v1014 = vpop.f32.mrb[0].mxu0
        %v1015 = vadd.f32 0.0, %v1014
        %v1016 = vpop.f32.mrb[0].mxu0
        %1017 = vmatprep.mubr.bf16.mxu0 0
        %1018 = vmatmul.mubr.bf16.gmra.mrb[0].mxu0 %v959
        %v1019 = vpop.f32.mrb[0].mxu0
        %v1020 = vadd.f32 0.0, %v1019
        %v1021 = vpop.f32.mrb[0].mxu0
        %v1022 = vpop.f32.mrb[0].mxu0
        %v1023 = vadd.f32 0.0, %v1022
        %v1024 = vpop.f32.mrb[0].mxu0
        %1025 = vdwg.mxu0
        %v1026 = vadd.f32 %v912, %v996
        %v1027 = vadd.f32 %v913, %v999
        %v1028 = vadd.f32 %v914, %v1004
        %v1029 = vadd.f32 %v915, %v1007
        %v1030 = vadd.f32 %v916, %v1012
        %v1031 = vadd.f32 %v917, %v1015
        %v1032 = vadd.f32 %v918, %v1020
        %v1033 = vadd.f32 %v919, %v1023
        %v1034 = vld [vmem:[%s920 + $0x1] sm:$0xff]
        %v1035 = vld [vmem:[%s920 + $0x11] sm:$0xff]
        %v1036 = vld [vmem:[%s920 + $0x21] sm:$0xff]
        %v1037 = vld [vmem:[%s920 + $0x31] sm:$0xff]
        %v1038 = vld [vmem:[%s920 + $0x41] sm:$0xff]
        %v1039 = vld [vmem:[%s920 + $0x51] sm:$0xff]
        %v1040 = vld [vmem:[%s920 + $0x61] sm:$0xff]
        %v1041 = vld [vmem:[%s920 + $0x71] sm:$0xff]
        %v1042 = vld [vmem:[#allocation6 + $0x70] sm:$0xf]
        %v1043 = vld [vmem:[#allocation6 + $0x74] sm:$0xf]
        %v1044 = vld [vmem:[#allocation6 + $0x78] sm:$0xf]
        %v1045 = vld [vmem:[#allocation6 + $0x7c] sm:$0xf]
        %v1046 = vpack.c.bf16 %v1035, %v1034
        %v1047 = vpack.c.bf16 %v1037, %v1036
        %v1048 = vpack.c.bf16 %v1039, %v1038
        %v1049 = vpack.c.bf16 %v1041, %v1040
        %v1054 = vunpack.c.l.b16 %v1042
        %v1055 = vunpack.c.l.b16 %v1043
        %v1056 = vunpack.c.l.b16 %v1044
        %v1057 = vunpack.c.l.b16 %v1045
        %v1058 = vpack.c.b16 %v1055, %v1054
        %v1059 = vpack.c.b16 %v1057, %v1056
        %v1063 = vsel %vm217, %v1046, 0
        %v1066 = vsel %vm217, %v1047, 0
        %v1069 = vsel %vm217, %v1048, 0
        %v1072 = vsel %vm217, %v1049, 0
        %1074 = vmatprep.subr.bf16.mxu0 0
        %1075 = vmatpush1.bf16.msra.mxu0 %v1058
        %1076 = vmatprep.subr.bf16.mxu0 0
        %1077 = vmatpush1.bf16.msra.mxu0 %v1059
        %1078 = vmatprep.subr.bf16.mxu0 0
        %1079 = vmatpush1.bf16.msra.mxu0 0
        %1080 = vmatprep.subr.bf16.mxu0 0
        %1081 = vmatpush1.bf16.msra.mxu0 0
        %1082 = vmatprep.subr.bf16.mxu0 0
        %1083 = vmatpush1.bf16.msra.mxu0 0
        %1084 = vmatprep.subr.bf16.mxu0 0
        %1085 = vmatpush1.bf16.msra.mxu0 0
        %1086 = vmatprep.subr.bf16.mxu0 0
        %1087 = vmatpush1.bf16.msra.mxu0 0
        %1088 = vmatprep.subr.bf16.mxu0 0
        %1089 = vmatpush1.bf16.msra.mxu0 0
        %1090 = vmatprep.subr.bf16.mxu0 0
        %1091 = vmatpush1.bf16.msra.mxu0 0
        %1092 = vmatprep.subr.bf16.mxu0 0
        %1093 = vmatpush1.bf16.msra.mxu0 0
        %1094 = vmatprep.subr.bf16.mxu0 0
        %1095 = vmatpush1.bf16.msra.mxu0 0
        %1096 = vmatprep.subr.bf16.mxu0 0
        %1097 = vmatpush1.bf16.msra.mxu0 0
        %1098 = vmatprep.subr.bf16.mxu0 0
        %1099 = vmatpush1.bf16.msra.mxu0 0
        %1100 = vmatprep.subr.bf16.mxu0 0
        %1101 = vmatpush1.bf16.msra.mxu0 0
        %1102 = vmatprep.subr.bf16.mxu0 0
        %1103 = vmatpush1.bf16.msra.mxu0 0
        %1104 = vmatprep.subr.bf16.mxu0 0
        %1105 = vmatpush1.bf16.msra.mxu0 0
        %1106 = vmatprep.mubr.bf16.mxu0 0
        %1107 = vmatmul.mubr.bf16.gmra.mrb[0].mxu0 %v1063
        %v1108 = vpop.f32.mrb[0].mxu0
        %v1109 = vadd.f32 0.0, %v1108
        %v1110 = vpop.f32.mrb[0].mxu0
        %v1111 = vpop.f32.mrb[0].mxu0
        %v1112 = vadd.f32 0.0, %v1111
        %v1113 = vpop.f32.mrb[0].mxu0
        %1114 = vmatprep.mubr.bf16.mxu0 0
        %1115 = vmatmul.mubr.bf16.gmra.mrb[0].mxu0 %v1066
        %v1116 = vpop.f32.mrb[0].mxu0
        %v1117 = vadd.f32 0.0, %v1116
        %v1118 = vpop.f32.mrb[0].mxu0
        %v1119 = vpop.f32.mrb[0].mxu0
        %v1120 = vadd.f32 0.0, %v1119
        %v1121 = vpop.f32.mrb[0].mxu0
        %1122 = vmatprep.mubr.bf16.mxu0 0
        %1123 = vmatmul.mubr.bf16.gmra.mrb[0].mxu0 %v1069
        %v1124 = vpop.f32.mrb[0].mxu0
        %v1125 = vadd.f32 0.0, %v1124
        %v1126 = vpop.f32.mrb[0].mxu0
        %v1127 = vpop.f32.mrb[0].mxu0
        %v1128 = vadd.f32 0.0, %v1127
        %v1129 = vpop.f32.mrb[0].mxu0
        %1130 = vmatprep.mubr.bf16.mxu0 0
        %1131 = vmatmul.mubr.bf16.gmra.mrb[0].mxu0 %v1072
        %v1132 = vpop.f32.mrb[0].mxu0
        %v1133 = vadd.f32 0.0, %v1132
        %v1134 = vpop.f32.mrb[0].mxu0
        %v1135 = vpop.f32.mrb[0].mxu0
        %v1136 = vadd.f32 0.0, %v1135
        %v1137 = vpop.f32.mrb[0].mxu0
        %1138 = vdwg.mxu0
        %v1139 = vadd.f32 %v1026, %v1109
        %v1140 = vadd.f32 %v1027, %v1112
        %v1141 = vadd.f32 %v1028, %v1117
        %v1142 = vadd.f32 %v1029, %v1120
        %v1143 = vadd.f32 %v1030, %v1125
        %v1144 = vadd.f32 %v1031, %v1128
        %v1145 = vadd.f32 %v1032, %v1133
        %v1146 = vadd.f32 %v1033, %v1136
        %v1147 = vld [vmem:[%s920 + $0x2] sm:$0xff]
        %v1148 = vld [vmem:[%s920 + $0x12] sm:$0xff]
        %v1149 = vld [vmem:[%s920 + $0x22] sm:$0xff]
        %v1150 = vld [vmem:[%s920 + $0x32] sm:$0xff]
        %v1151 = vld [vmem:[%s920 + $0x42] sm:$0xff]
        %v1152 = vld [vmem:[%s920 + $0x52] sm:$0xff]
        %v1153 = vld [vmem:[%s920 + $0x62] sm:$0xff]
        %v1154 = vld [vmem:[%s920 + $0x72] sm:$0xff]
        %v1155 = vld [vmem:[#allocation6 + $0x80] sm:$0xf]
        %v1156 = vld [vmem:[#allocation6 + $0x84] sm:$0xf]
        %v1157 = vld [vmem:[#allocation6 + $0x88] sm:$0xf]
        %v1158 = vld [vmem:[#allocation6 + $0x8c] sm:$0xf]
        %v1159 = vpack.c.bf16 %v1148, %v1147
        %v1160 = vpack.c.bf16 %v1150, %v1149
        %v1161 = vpack.c.bf16 %v1152, %v1151
        %v1162 = vpack.c.bf16 %v1154, %v1153
        %v1167 = vunpack.c.l.b16 %v1155
        %v1168 = vunpack.c.l.b16 %v1156
        %v1169 = vunpack.c.l.b16 %v1157
        %v1170 = vunpack.c.l.b16 %v1158
        %v1171 = vpack.c.b16 %v1168, %v1167
        %v1172 = vpack.c.b16 %v1170, %v1169
        %v1176 = vsel %vm217, %v1159, 0
        %v1179 = vsel %vm217, %v1160, 0
        %v1182 = vsel %vm217, %v1161, 0
        %v1185 = vsel %vm217, %v1162, 0
        %1187 = vmatprep.subr.bf16.mxu0 0
        %1188 = vmatpush1.bf16.msra.mxu0 %v1171
        %1189 = vmatprep.subr.bf16.mxu0 0
        %1190 = vmatpush1.bf16.msra.mxu0 %v1172
        %1191 = vmatprep.subr.bf16.mxu0 0
        %1192 = vmatpush1.bf16.msra.mxu0 0
        %1193 = vmatprep.subr.bf16.mxu0 0
        %1194 = vmatpush1.bf16.msra.mxu0 0
        %1195 = vmatprep.subr.bf16.mxu0 0
        %1196 = vmatpush1.bf16.msra.mxu0 0
        %1197 = vmatprep.subr.bf16.mxu0 0
        %1198 = vmatpush1.bf16.msra.mxu0 0
        %1199 = vmatprep.subr.bf16.mxu0 0
        %1200 = vmatpush1.bf16.msra.mxu0 0
        %1201 = vmatprep.subr.bf16.mxu0 0
        %1202 = vmatpush1.bf16.msra.mxu0 0
        %1203 = vmatprep.subr.bf16.mxu0 0
        %1204 = vmatpush1.bf16.msra.mxu0 0
        %1205 = vmatprep.subr.bf16.mxu0 0
        %1206 = vmatpush1.bf16.msra.mxu0 0
        %1207 = vmatprep.subr.bf16.mxu0 0
        %1208 = vmatpush1.bf16.msra.mxu0 0
        %1209 = vmatprep.subr.bf16.mxu0 0
        %1210 = vmatpush1.bf16.msra.mxu0 0
        %1211 = vmatprep.subr.bf16.mxu0 0
        %1212 = vmatpush1.bf16.msra.mxu0 0
        %1213 = vmatprep.subr.bf16.mxu0 0
        %1214 = vmatpush1.bf16.msra.mxu0 0
        %1215 = vmatprep.subr.bf16.mxu0 0
        %1216 = vmatpush1.bf16.msra.mxu0 0
        %1217 = vmatprep.subr.bf16.mxu0 0
        %1218 = vmatpush1.bf16.msra.mxu0 0
        %1219 = vmatprep.mubr.bf16.mxu0 0
        %1220 = vmatmul.mubr.bf16.gmra.mrb[0].mxu0 %v1176
        %v1221 = vpop.f32.mrb[0].mxu0
        %v1222 = vadd.f32 0.0, %v1221
        %v1223 = vpop.f32.mrb[0].mxu0
        %v1224 = vpop.f32.mrb[0].mxu0
        %v1225 = vadd.f32 0.0, %v1224
        %v1226 = vpop.f32.mrb[0].mxu0
        %1227 = vmatprep.mubr.bf16.mxu0 0
        %1228 = vmatmul.mubr.bf16.gmra.mrb[0].mxu0 %v1179
        %v1229 = vpop.f32.mrb[0].mxu0
        %v1230 = vadd.f32 0.0, %v1229
        %v1231 = vpop.f32.mrb[0].mxu0
        %v1232 = vpop.f32.mrb[0].mxu0
        %v1233 = vadd.f32 0.0, %v1232
        %v1234 = vpop.f32.mrb[0].mxu0
        %1235 = vmatprep.mubr.bf16.mxu0 0
        %1236 = vmatmul.mubr.bf16.gmra.mrb[0].mxu0 %v1182
        %v1237 = vpop.f32.mrb[0].mxu0
        %v1238 = vadd.f32 0.0, %v1237
        %v1239 = vpop.f32.mrb[0].mxu0
        %v1240 = vpop.f32.mrb[0].mxu0
        %v1241 = vadd.f32 0.0, %v1240
        %v1242 = vpop.f32.mrb[0].mxu0
        %1243 = vmatprep.mubr.bf16.mxu0 0
        %1244 = vmatmul.mubr.bf16.gmra.mrb[0].mxu0 %v1185
        %v1245 = vpop.f32.mrb[0].mxu0
        %v1246 = vadd.f32 0.0, %v1245
        %v1247 = vpop.f32.mrb[0].mxu0
        %v1248 = vpop.f32.mrb[0].mxu0
        %v1249 = vadd.f32 0.0, %v1248
        %v1250 = vpop.f32.mrb[0].mxu0
        %1251 = vdwg.mxu0
        %v1252 = vadd.f32 %v1139, %v1222
        %v1253 = vadd.f32 %v1140, %v1225
        %v1254 = vadd.f32 %v1141, %v1230
        %v1255 = vadd.f32 %v1142, %v1233
        %v1256 = vadd.f32 %v1143, %v1238
        %v1257 = vadd.f32 %v1144, %v1241
        %v1258 = vadd.f32 %v1145, %v1246
        %v1259 = vadd.f32 %v1146, %v1249
        %v1260 = vld [vmem:[#allocation8] sm:$0x1]
        %v1262 = vlaneseq
        %v1263 = vshrl.u32 %v1262, 7
        %v1264 = vsub.s32 0, %v1263
        %v1265 = vrot.slane %v1260, %v1264
        %v1267 = vadd.f32 %v1252, %v1265
        %v1268 = vadd.f32 %v1253, %v1265
        %v1269 = vadd.f32 %v1254, %v1265
        %v1270 = vadd.f32 %v1255, %v1265
        %v1271 = vadd.f32 %v1256, %v1265
        %v1272 = vadd.f32 %v1257, %v1265
        %v1273 = vadd.f32 %v1258, %v1265
        %v1274 = vadd.f32 %v1259, %v1265
        %v1275 = vmul.f32 %v1267, 0.70710677
        %v1276 = vmul.f32 %v1268, 0.70710677
        %v1277 = vmul.f32 %v1269, 0.70710677
        %v1278 = vmul.f32 %v1270, 0.70710677
        %v1279 = vmul.f32 %v1271, 0.70710677
        %v1280 = vmul.f32 %v1272, 0.70710677
        %v1281 = vmul.f32 %v1273, 0.70710677
        %v1282 = vmul.f32 %v1274, 0.70710677
        %v1283 = vand.u32 2147483647, %v1275
        %v1284 = vand.u32 2147483647, %v1276
        %v1285 = vand.u32 2147483647, %v1277
        %v1286 = vand.u32 2147483647, %v1278
        %v1287 = vand.u32 2147483647, %v1279
        %v1288 = vand.u32 2147483647, %v1280
        %v1289 = vand.u32 2147483647, %v1281
        %v1290 = vand.u32 2147483647, %v1282
        %v1291 = vmul.f32 %v1283, 0.3275911
        %v1292 = vmul.f32 %v1284, 0.3275911
        %v1293 = vmul.f32 %v1285, 0.3275911
        %v1294 = vmul.f32 %v1286, 0.3275911
        %v1295 = vmul.f32 %v1287, 0.3275911
        %v1296 = vmul.f32 %v1288, 0.3275911
        %v1297 = vmul.f32 %v1289, 0.3275911
        %v1298 = vmul.f32 %v1290, 0.3275911
        %v1299 = vadd.f32 %v1291, 1.0
        %v1300 = vadd.f32 %v1292, 1.0
        %v1301 = vadd.f32 %v1293, 1.0
        %v1302 = vadd.f32 %v1294, 1.0
        %v1303 = vadd.f32 %v1295, 1.0
        %v1304 = vadd.f32 %v1296, 1.0
        %v1305 = vadd.f32 %v1297, 1.0
        %v1306 = vadd.f32 %v1298, 1.0
        %v1307 = vrcp.pop %v1299
        %v1308 = vrcp.pop %v1300
        %v1309 = vrcp.pop %v1301
        %v1310 = vrcp.pop %v1302
        %v1311 = vrcp.pop %v1303
        %v1312 = vrcp.pop %v1304
        %v1313 = vrcp.pop %v1305
        %v1314 = vrcp.pop %v1306
        %v1315 = vmul.f32 %v1299, %v1307
        %v1316 = vmul.f32 %v1300, %v1308
        %v1317 = vmul.f32 %v1301, %v1309
        %v1318 = vmul.f32 %v1302, %v1310
        %v1319 = vmul.f32 %v1303, %v1311
        %v1320 = vmul.f32 %v1304, %v1312
        %v1321 = vmul.f32 %v1305, %v1313
        %v1322 = vmul.f32 %v1306, %v1314
        %v1323 = vsub.f32 2.0, %v1315
        %v1324 = vsub.f32 2.0, %v1316
        %v1325 = vsub.f32 2.0, %v1317
        %v1326 = vsub.f32 2.0, %v1318
        %v1327 = vsub.f32 2.0, %v1319
        %v1328 = vsub.f32 2.0, %v1320
        %v1329 = vsub.f32 2.0, %v1321
        %v1330 = vsub.f32 2.0, %v1322
        %v1331 = vmul.f32 %v1307, %v1323
        %v1332 = vmul.f32 %v1308, %v1324
        %v1333 = vmul.f32 %v1309, %v1325
        %v1334 = vmul.f32 %v1310, %v1326
        %v1335 = vmul.f32 %v1311, %v1327
        %v1336 = vmul.f32 %v1312, %v1328
        %v1337 = vmul.f32 %v1313, %v1329
        %v1338 = vmul.f32 %v1314, %v1330
        %v1339 = vmul.f32 %v1331, 1.0614054
        %v1340 = vmul.f32 %v1332, 1.0614054
        %v1341 = vmul.f32 %v1333, 1.0614054
        %v1342 = vmul.f32 %v1334, 1.0614054
        %v1343 = vmul.f32 %v1335, 1.0614054
        %v1344 = vmul.f32 %v1336, 1.0614054
        %v1345 = vmul.f32 %v1337, 1.0614054
        %v1346 = vmul.f32 %v1338, 1.0614054
        %v1347 = vsub.f32 %v1339, 1.4531521
        %v1348 = vsub.f32 %v1340, 1.4531521
        %v1349 = vsub.f32 %v1341, 1.4531521
        %v1350 = vsub.f32 %v1342, 1.4531521
        %v1351 = vsub.f32 %v1343, 1.4531521
        %v1352 = vsub.f32 %v1344, 1.4531521
        %v1353 = vsub.f32 %v1345, 1.4531521
        %v1354 = vsub.f32 %v1346, 1.4531521
        %v1355 = vmul.f32 %v1347, %v1331
        %v1356 = vmul.f32 %v1348, %v1332
        %v1357 = vmul.f32 %v1349, %v1333
        %v1358 = vmul.f32 %v1350, %v1334
        %v1359 = vmul.f32 %v1351, %v1335
        %v1360 = vmul.f32 %v1352, %v1336
        %v1361 = vmul.f32 %v1353, %v1337
        %v1362 = vmul.f32 %v1354, %v1338
        %v1363 = vadd.f32 %v1355, 1.4214138
        %v1364 = vadd.f32 %v1356, 1.4214138
        %v1365 = vadd.f32 %v1357, 1.4214138
        %v1366 = vadd.f32 %v1358, 1.4214138
        %v1367 = vadd.f32 %v1359, 1.4214138
        %v1368 = vadd.f32 %v1360, 1.4214138
        %v1369 = vadd.f32 %v1361, 1.4214138
        %v1370 = vadd.f32 %v1362, 1.4214138
        %v1371 = vmul.f32 %v1363, %v1331
        %v1372 = vmul.f32 %v1364, %v1332
        %v1373 = vmul.f32 %v1365, %v1333
        %v1374 = vmul.f32 %v1366, %v1334
        %v1375 = vmul.f32 %v1367, %v1335
        %v1376 = vmul.f32 %v1368, %v1336
        %v1377 = vmul.f32 %v1369, %v1337
        %v1378 = vmul.f32 %v1370, %v1338
        %v1379 = vsub.f32 %v1371, 0.28449672
        %v1380 = vsub.f32 %v1372, 0.28449672
        %v1381 = vsub.f32 %v1373, 0.28449672
        %v1382 = vsub.f32 %v1374, 0.28449672
        %v1383 = vsub.f32 %v1375, 0.28449672
        %v1384 = vsub.f32 %v1376, 0.28449672
        %v1385 = vsub.f32 %v1377, 0.28449672
        %v1386 = vsub.f32 %v1378, 0.28449672
        %v1387 = vmul.f32 %v1379, %v1331
        %v1388 = vmul.f32 %v1380, %v1332
        %v1389 = vmul.f32 %v1381, %v1333
        %v1390 = vmul.f32 %v1382, %v1334
        %v1391 = vmul.f32 %v1383, %v1335
        %v1392 = vmul.f32 %v1384, %v1336
        %v1393 = vmul.f32 %v1385, %v1337
        %v1394 = vmul.f32 %v1386, %v1338
        %v1395 = vadd.f32 %v1387, 0.2548296
        %v1396 = vadd.f32 %v1388, 0.2548296
        %v1397 = vadd.f32 %v1389, 0.2548296
        %v1398 = vadd.f32 %v1390, 0.2548296
        %v1399 = vadd.f32 %v1391, 0.2548296
        %v1400 = vadd.f32 %v1392, 0.2548296
        %v1401 = vadd.f32 %v1393, 0.2548296
        %v1402 = vadd.f32 %v1394, 0.2548296
        %v1403 = vmul.f32 %v1395, %v1331
        %v1404 = vmul.f32 %v1396, %v1332
        %v1405 = vmul.f32 %v1397, %v1333
        %v1406 = vmul.f32 %v1398, %v1334
        %v1407 = vmul.f32 %v1399, %v1335
        %v1408 = vmul.f32 %v1400, %v1336
        %v1409 = vmul.f32 %v1401, %v1337
        %v1410 = vmul.f32 %v1402, %v1338
        %v1411 = vsub.f32 0.0, %v1283
        %v1412 = vsub.f32 0.0, %v1284
        %v1413 = vsub.f32 0.0, %v1285
        %v1414 = vsub.f32 0.0, %v1286
        %v1415 = vsub.f32 0.0, %v1287
        %v1416 = vsub.f32 0.0, %v1288
        %v1417 = vsub.f32 0.0, %v1289
        %v1418 = vsub.f32 0.0, %v1290
        %v1419 = vmul.f32 %v1411, %v1283
        %v1420 = vmul.f32 %v1412, %v1284
        %v1421 = vmul.f32 %v1413, %v1285
        %v1422 = vmul.f32 %v1414, %v1286
        %v1423 = vmul.f32 %v1415, %v1287
        %v1424 = vmul.f32 %v1416, %v1288
        %v1425 = vmul.f32 %v1417, %v1289
        %v1426 = vmul.f32 %v1418, %v1290
        %v1427 = vmul.f32 %v1419, 1.442695
        %v1428 = vpow.pop %v1427
        %v1429 = vmul.f32 %v1420, 1.442695
        %v1430 = vpow.pop %v1429
        %v1431 = vmul.f32 %v1421, 1.442695
        %v1432 = vpow.pop %v1431
        %v1433 = vmul.f32 %v1422, 1.442695
        %v1434 = vpow.pop %v1433
        %v1435 = vmul.f32 %v1423, 1.442695
        %v1436 = vpow.pop %v1435
        %v1437 = vmul.f32 %v1424, 1.442695
        %v1438 = vpow.pop %v1437
        %v1439 = vmul.f32 %v1425, 1.442695
        %v1440 = vpow.pop %v1439
        %v1441 = vmul.f32 %v1426, 1.442695
        %v1442 = vpow.pop %v1441
        %v1443 = vmul.f32 %v1403, %v1428
        %v1444 = vmul.f32 %v1404, %v1430
        %v1445 = vmul.f32 %v1405, %v1432
        %v1446 = vmul.f32 %v1406, %v1434
        %v1447 = vmul.f32 %v1407, %v1436
        %v1448 = vmul.f32 %v1408, %v1438
        %v1449 = vmul.f32 %v1409, %v1440
        %v1450 = vmul.f32 %v1410, %v1442
        %v1451 = vsub.f32 1.0, %v1443
        %v1452 = vsub.f32 1.0, %v1444
        %v1453 = vsub.f32 1.0, %v1445
        %v1454 = vsub.f32 1.0, %v1446
        %v1455 = vsub.f32 1.0, %v1447
        %v1456 = vsub.f32 1.0, %v1448
        %v1457 = vsub.f32 1.0, %v1449
        %v1458 = vsub.f32 1.0, %v1450
        %vm1459 = vcmp.lt.f32.partialorder %v1275, 0.0
        %vm1460 = vcmp.lt.f32.partialorder %v1276, 0.0
        %vm1461 = vcmp.lt.f32.partialorder %v1277, 0.0
        %vm1462 = vcmp.lt.f32.partialorder %v1278, 0.0
        %vm1463 = vcmp.lt.f32.partialorder %v1279, 0.0
        %vm1464 = vcmp.lt.f32.partialorder %v1280, 0.0
        %vm1465 = vcmp.lt.f32.partialorder %v1281, 0.0
        %vm1466 = vcmp.lt.f32.partialorder %v1282, 0.0
        %v1467 = vsub.f32 0.0, %v1451
        %v1468 = vsub.f32 0.0, %v1452
        %v1469 = vsub.f32 0.0, %v1453
        %v1470 = vsub.f32 0.0, %v1454
        %v1471 = vsub.f32 0.0, %v1455
        %v1472 = vsub.f32 0.0, %v1456
        %v1473 = vsub.f32 0.0, %v1457
        %v1474 = vsub.f32 0.0, %v1458
        %v1475 = vsel %vm1459, %v1467, %v1451
        %v1476 = vsel %vm1460, %v1468, %v1452
        %v1477 = vsel %vm1461, %v1469, %v1453
        %v1478 = vsel %vm1462, %v1470, %v1454
        %v1479 = vsel %vm1463, %v1471, %v1455
        %v1480 = vsel %vm1464, %v1472, %v1456
        %v1481 = vsel %vm1465, %v1473, %v1457
        %v1482 = vsel %vm1466, %v1474, %v1458
        %v1483 = vmul.f32 %v1267, 0.5
        %v1484 = vmul.f32 %v1268, 0.5
        %v1485 = vmul.f32 %v1269, 0.5
        %v1486 = vmul.f32 %v1270, 0.5
        %v1487 = vmul.f32 %v1271, 0.5
        %v1488 = vmul.f32 %v1272, 0.5
        %v1489 = vmul.f32 %v1273, 0.5
        %v1490 = vmul.f32 %v1274, 0.5
        %v1491 = vadd.f32 %v1475, 1.0
        %v1492 = vadd.f32 %v1476, 1.0
        %v1493 = vadd.f32 %v1477, 1.0
        %v1494 = vadd.f32 %v1478, 1.0
        %v1495 = vadd.f32 %v1479, 1.0
        %v1496 = vadd.f32 %v1480, 1.0
        %v1497 = vadd.f32 %v1481, 1.0
        %v1498 = vadd.f32 %v1482, 1.0
        %v1499 = vmul.f32 %v1483, %v1491
        %v1500 = vmul.f32 %v1484, %v1492
        %v1501 = vmul.f32 %v1485, %v1493
        %v1502 = vmul.f32 %v1486, %v1494
        %v1503 = vmul.f32 %v1487, %v1495
        %v1504 = vmul.f32 %v1488, %v1496
        %v1505 = vmul.f32 %v1489, %v1497
        %v1506 = vmul.f32 %v1490, %v1498
        %1507 = vst [vmem:[%s215] sm:$0xff] %v1499
        %1508 = vst [vmem:[%s215 + $0x8] sm:$0xff] %v1500
        %1509 = vst [vmem:[%s215 + $0x10] sm:$0xff] %v1501
        %1510 = vst [vmem:[%s215 + $0x18] sm:$0xff] %v1502
        %1511 = vst [vmem:[%s215 + $0x20] sm:$0xff] %v1503
        %1512 = vst [vmem:[%s215 + $0x28] sm:$0xff] %v1504
        %1513 = vst [vmem:[%s215 + $0x30] sm:$0xff] %v1505
        %1514 = vst [vmem:[%s215 + $0x38] sm:$0xff] %v1506
        %s1515 = sand.u32 %s97, 1
        %s1516 = scalar_lea.sflag [#allocation5], %s1515
        %s1517 = sand.u32 %s97, 1
        %s1518 = smul.addr %s1517, 64
        %s1519 = scalar_lea.vmem [#allocation9], %s1518
        // Predicated region
        $region45: #{decoder_forward.6} parent=31 // pred_check
          %p1520 = pneg %p107
        $region46: #{decoder_forward.6} parent=31 // pred_check_branch
          %1522 = sbr.rel (%p1520) target = $region48
        $region47: #{decoder_forward.6} parent=31 // pred_region
          %s1524 = ssub.s32 1024, 1024
          %1525 = vsyncadd %s1516, %s1524
          %s1526 = smul.addr %s21, 8
          %s1527 = smul.addr %s1526, 128
          %s1528 = scalar_lea.hbm %s3, %s1527
          %s1529 = sshll.u32 %s1519, 4
          %s1530 = int_to_ptr.vmem [resolvable:$true] %s1529
          %1535 = dma.vmem_to_hbm [thread:$0]  %s1530, 1024, %s1528, %s1516, 128, 128, 8
        $region48: #{decoder_forward.6} parent=31 // pred_fallthru
          _
      $region32: #{decoder_forward.6} parent=5 // pred_fallthru
        _
      %p1536 = scmp.le.s32.totalorder 2, %s16
      // Predicated region
      $region49: #{decoder_forward.6} parent=5 // pred_check
        %p1537 = pneg %p1536
      $region50: #{decoder_forward.6} parent=5 // pred_check_branch
        %1539 = sbr.rel (%p1537) target = $region52
      $region51: #{decoder_forward.6} parent=5 // pred_region
        %s1540 = ssub.s32 %s16, 2
        // Predicated region
        $region53: #{decoder_forward.6} parent=51 // pred_check
          %p1541 = pneg %p113
        $region54: #{decoder_forward.6} parent=51 // pred_check_branch
          %1543 = sbr.rel (%p1541) target = $region56
        $region55: #{decoder_forward.6} parent=51 // pred_region
          %s1544 = sand.u32 %s98, 1
          %s1545 = scalar_lea.sflag [#allocation5], %s1544
          %s1546 = sand.u32 %s98, 1
          %s1547 = smul.addr %s1546, 64
          %s1548 = scalar_lea.vmem [#allocation9], %s1547
          %1549 = dma.done %s1545, 1024
        $region56: #{decoder_forward.6} parent=51 // pred_fallthru
          _
      $region52: #{decoder_forward.6} parent=5 // pred_fallthru
        _
    $region6: #{decoder_forward.6} parent=1 // loop_footer
      %s20 = sadd.s32 1, %s16
    $region7: #{decoder_forward.6} parent=1 // loop_footer_branch
      %15 = sbr.rel target = $region3
    $region8: #{decoder_forward.6} parent=1 // loop_exit
      _
    %1550 = vsyncpa [#allocation4], 1
    %s1551 = scalar_lea.sflag [#allocation4], 1
    %1552 = vsyncpa %s1551, 1
    %1553 = vsyncpa [#allocation7], 1
    %1554 = vsyncpa [#allocation5], 1
    %s1555 = scalar_lea.sflag [#allocation5], 1
    %1556 = vsyncpa %s1555, 1

// kernel: decoder_forward.7
$region0: #{decoder_forward.7}
  #allocation0 [shape = 'u32[]', space=smem, size = 0x4, offset = 0x4, fixed_abs, tag = 'smem constant byte address 0x4 - core index']
  #allocation1 [shape = 'u32[144,128]{1,0:T(1,128)}', space=vmem, size = 0x12000, scoped, tag = 'internal scratch']
  #allocation2 [shape = 'f32[18,18,32]{2,1,0:T(8,128)}', space=vmem, size = 0x36000, scoped, tag = 'scratch operand']
  %s0 = inlined_call_operand.hbm [shape: f32[2,16,16,32], index: 0, kind: input, shape index: {}]
  %s1 = inlined_call_operand.hbm [shape: bf16[288,12], index: 1, kind: input, shape index: {}]
  %s2 = inlined_call_operand.hbm [shape: f32[1,12], index: 2, kind: input, shape index: {}]
  %s3 = inlined_call_operand.hbm [shape: f32[2,16,16,12], index: 3, kind: output, shape index: {}]
  %s4 = sld [smem:[#allocation0]]
  $region57: #{decoder_forward.7} parent=0
    _
  %s6 = ssub.s32 1, %s4
  %s7 = scalar_select 0, %s6, %s4
  $region1: #{decoder_forward.7} parent=0
    #allocation3 [shape = 'u8[262144]{0}', space=vmem, size = 0x40000, scoped, tag = 'input window, operand 0']
    #allocation4 [shape = 's32[2]{0}', space=sflag, size = 0x8, scoped, tag = 'scoped memory for decoder_forward.7']
    #allocation5 [shape = 's32[2]{0}', space=sflag, size = 0x8, scoped, tag = 'scoped memory for decoder_forward.7']
    #allocation6 [shape = 'u8[73728]{0}', space=vmem, size = 0x12000, scoped, tag = 'input window, operand 1, single buffered']
    #allocation7 [shape = 's32[1]{0}', space=sflag, size = 0x4, scoped, tag = 'scoped memory for decoder_forward.7']
    #allocation8 [shape = 'u8[512]{0}', space=vmem, size = 0x400, scoped, tag = 'input window, operand 2, single buffered']
    #allocation9 [shape = 'u8[262144]{0}', space=vmem, size = 0x40000, scoped, tag = 'output window, operand 0']
    %8 = vsyncpa [#allocation4], 0
    %s9 = scalar_lea.sflag [#allocation4], 1
    %10 = vsyncpa %s9, 0
    %11 = vsyncpa [#allocation7], 0
    %12 = vsyncpa [#allocation5], 0
    %s13 = scalar_lea.sflag [#allocation5], 1
    %14 = vsyncpa %s13, 0
    loop: start=0, step=1, limit=4
    $region2: #{decoder_forward.7} parent=1 // loop_pre_header
      _
    $region3: #{decoder_forward.7} parent=1 // loop_header
      %s16 = sphi 0, %s20
      %p17 = scmp.ge.s32.totalorder %s16, 4
      %s26 = sphi 0, %s28
      %s29 = sphi 0, %s26
      %s30 = sphi 0, %s29
      %s46 = sphi 0, %s30
      %s50 = sphi 0, %s50
      %s52 = sphi 0, %s50
      %s53 = sphi 0, %s52
      %s67 = sphi 0, %s53
      %s71 = sphi 0, %s71
      %s73 = sphi 0, %s71
      %s74 = sphi 0, %s73
      %s88 = sphi 0, %s74
      %s94 = sphi 0, %s96
      %s97 = sphi 0, %s94
      %s98 = sphi 0, %s97
      %s114 = sphi 0, %s98
    $region4: #{decoder_forward.7} parent=1 // loop_header_branch
      %19 = sbr.rel (%p17) target = $region8
    $region5: #{decoder_forward.7} parent=1 // loop_body
      %s21 = ssub.s32 %s16, 1
      %s22 = ssub.s32 %s16, 2
      %s23 = sadd.s32 %s16, 1
      %s24 = ssub.s32 %s16, %s23
      %p25 = scmp.eq.s32.totalorder %s24, 0
      %s27 = sadd.s32 %s26, 1
      %s28 = scalar_select %p25, %s26, %s27
      %p31 = pneg %p25
      %p32 = scmp.eq.s32.totalorder %s16, 1
      %p33 = por %p31, %p32
      %p34 = scmp.ne.s32.totalorder %s26, %s29
      %p35 = scmp.eq.s32.totalorder %s16, 0
      %p36 = por %p34, %p35
      %p37 = scmp.ne.s32.totalorder %s26, %s29
      %p38 = scmp.eq.s32.totalorder %s21, 1
      %p39 = por %p37, %p38
      %p40 = scmp.ne.s32.totalorder %s29, %s30
      %p41 = scmp.eq.s32.totalorder %s21, 0
      %p42 = por %p40, %p41
      %p43 = scmp.ne.s32.totalorder %s29, %s30
      %p44 = scmp.eq.s32.totalorder %s22, 1
      %p45 = por %p43, %p44
      %p47 = scmp.ne.s32.totalorder %s30, %s46
      %p48 = scmp.eq.s32.totalorder %s22, 0
      %p49 = por %p47, %p48
      %s51 = sadd.s32 %s50, 1
      %p54 = scmp.eq.s32.totalorder %s16, 1
      %p55 = scmp.ne.s32.totalorder %s50, %s52
      %p56 = scmp.eq.s32.totalorder %s16, 0
      %p57 = por %p55, %p56
      %p58 = scmp.ne.s32.totalorder %s50, %s52
      %p59 = scmp.eq.s32.totalorder %s21, 1
      %p60 = por %p58, %p59
      %p61 = scmp.ne.s32.totalorder %s52, %s53
      %p62 = scmp.eq.s32.totalorder %s21, 0
      %p63 = por %p61, %p62
      %p64 = scmp.ne.s32.totalorder %s52, %s53
      %p65 = scmp.eq.s32.totalorder %s22, 1
      %p66 = por %p64, %p65
      %p68 = scmp.ne.s32.totalorder %s53, %s67
      %p69 = scmp.eq.s32.totalorder %s22, 0
      %p70 = por %p68, %p69
      %s72 = sadd.s32 %s71, 1
      %p75 = scmp.eq.s32.totalorder %s16, 1
      %p76 = scmp.ne.s32.totalorder %s71, %s73
      %p77 = scmp.eq.s32.totalorder %s16, 0
      %p78 = por %p76, %p77
      %p79 = scmp.ne.s32.totalorder %s71, %s73
      %p80 = scmp.eq.s32.totalorder %s21, 1
      %p81 = por %p79, %p80
      %p82 = scmp.ne.s32.totalorder %s73, %s74
      %p83 = scmp.eq.s32.totalorder %s21, 0
      %p84 = por %p82, %p83
      %p85 = scmp.ne.s32.totalorder %s73, %s74
      %p86 = scmp.eq.s32.totalorder %s22, 1
      %p87 = por %p85, %p86
      %p89 = scmp.ne.s32.totalorder %s74, %s88
      %p90 = scmp.eq.s32.totalorder %s22, 0
      %p91 = por %p89, %p90
      %s92 = ssub.s32 %s16, %s23
      %p93 = scmp.eq.s32.totalorder %s92, 0
      %s95 = sadd.s32 %s94, 1
      %s96 = scalar_select %p93, %s94, %s95
      %p99 = pneg %p93
      %p100 = scmp.eq.s32.totalorder %s16, 1
      %p101 = por %p99, %p100
      %p102 = scmp.ne.s32.totalorder %s94, %s97
      %p103 = scmp.eq.s32.totalorder %s16, 0
      %p104 = por %p102, %p103
      %p105 = scmp.ne.s32.totalorder %s94, %s97
      %p106 = scmp.eq.s32.totalorder %s21, 1
      %p107 = por %p105, %p106
      %p108 = scmp.ne.s32.totalorder %s97, %s98
      %p109 = scmp.eq.s32.totalorder %s21, 0
      %p110 = por %p108, %p109
      %p111 = scmp.ne.s32.totalorder %s97, %s98
      %p112 = scmp.eq.s32.totalorder %s22, 1
      %p113 = por %p111, %p112
      %p115 = scmp.ne.s32.totalorder %s98, %s114
      %p116 = scmp.eq.s32.totalorder %s22, 0
      %p117 = por %p115, %p116
      %p118 = scmp.le.s32.totalorder 1, %s16
      %p119 = scmp.lt.s32.totalorder %s16, 3
      %p120 = pnand %p118, %p119
      %p121 = pneg %p120
      // Predicated region
      $region9: #{decoder_forward.7} parent=5 // pred_check
        _
      $region10: #{decoder_forward.7} parent=5 // pred_check_branch
        %123 = sbr.rel (%p120) target = $region12
      $region11: #{decoder_forward.7} parent=5 // pred_region
        %s124 = ssub.s32 %s16, 1
        // Predicated region
        $region13: #{decoder_forward.7} parent=11 // pred_check
          %p125 = pneg %p63
        $region14: #{decoder_forward.7} parent=11 // pred_check_branch
          %127 = sbr.rel (%p125) target = $region16
        $region15: #{decoder_forward.7} parent=11 // pred_region
          %s129 = ssub.s32 2304, 2304
          %130 = vsyncadd [#allocation7], %s129
          %s131 = sshll.u32 [#allocation6], 4
          %s132 = int_to_ptr.vmem [resolvable:$true] %s131
          %137 = dma.hbm_to_vmem [thread:$0]  %s1, 2304, %s132, [#allocation7], 64, 64, 4
        $region16: #{decoder_forward.7} parent=11 // pred_fallthru
          _
        // Predicated region
        $region17: #{decoder_forward.7} parent=11 // pred_check
          %p138 = pneg %p84
        $region18: #{decoder_forward.7} parent=11 // pred_check_branch
          %140 = sbr.rel (%p138) target = $region20
        $region19: #{decoder_forward.7} parent=11 // pred_region
          %s142 = ssub.s32 16, 16
          %143 = vsyncadd [#allocation7], %s142
          %s145 = sshll.u32 [#allocation8], 4
          %s146 = int_to_ptr.vmem [resolvable:$true] %s145
          %148 = dma.hbm_to_vmem [thread:$0]  %s2, 16, %s146, [#allocation7]
        $region20: #{decoder_forward.7} parent=11 // pred_fallthru
          _
      $region12: #{decoder_forward.7} parent=5 // pred_fallthru
        _
      %p149 = scmp.lt.s32.totalorder %s16, 2
      // Predicated region
      $region21: #{decoder_forward.7} parent=5 // pred_check
        %p150 = pneg %p149
      $region22: #{decoder_forward.7} parent=5 // pred_check_branch
        %152 = sbr.rel (%p150) target = $region24
      $region23: #{decoder_forward.7} parent=5 // pred_region
        // Predicated region
        $region25: #{decoder_forward.7} parent=23 // pred_check
          %p153 = pneg %p36
        $region26: #{decoder_forward.7} parent=23 // pred_check_branch
          %155 = sbr.rel (%p153) target = $region28
        $region27: #{decoder_forward.7} parent=23 // pred_region
          %s156 = sand.u32 %s26, 1
          %s157 = scalar_lea.sflag [#allocation4], %s156
          %s158 = sand.u32 %s26, 1
          %s159 = smul.addr %s158, 256
          %s160 = scalar_lea.vmem [#allocation3], %s159
          %s162 = ssub.s32 4096, 4096
          %163 = vsyncadd %s157, %s162
          %s164 = smul.addr %s16, 32
          %s165 = smul.addr %s164, 128
          %s166 = scalar_lea.hbm %s0, %s165
          %s167 = sshll.u32 %s160, 4
          %s168 = int_to_ptr.vmem [resolvable:$true] %s167
          %173 = dma.hbm_to_vmem [thread:$0]  %s166, 4096, %s168, %s157, 128, 128, 8
        $region28: #{decoder_forward.7} parent=23 // pred_fallthru
          _
      $region24: #{decoder_forward.7} parent=5 // pred_fallthru
        _
      %p174 = scmp.le.s32.totalorder 1, %s16
      %p175 = scmp.lt.s32.totalorder %s16, 3
      %p176 = pnand %p174, %p175
      %p177 = pneg %p176
      // Predicated region
      $region29: #{decoder_forward.7} parent=5 // pred_check
        _
      $region30: #{decoder_forward.7} parent=5 // pred_check_branch
        %179 = sbr.rel (%p176) target = $region32
      $region31: #{decoder_forward.7} parent=5 // pred_region
        %s180 = ssub.s32 %s16, 1
        %s181 = sand.u32 %s29, 1
        %s182 = scalar_lea.sflag [#allocation4], %s181
        %s183 = sand.u32 %s29, 1
        %s184 = smul.addr %s183, 256
        %s185 = scalar_lea.vmem [#allocation3], %s184
        // Predicated region
        $region33: #{decoder_forward.7} parent=31 // pred_check
          %p186 = pneg %p42
        $region34: #{decoder_forward.7} parent=31 // pred_check_branch
          %188 = sbr.rel (%p186) target = $region36
        $region35: #{decoder_forward.7} parent=31 // pred_region
          %189 = dma.done %s182, 4096
        $region36: #{decoder_forward.7} parent=31 // pred_fallthru
          _
        // Predicated region
        $region37: #{decoder_forward.7} parent=31 // pred_check
          %p190 = pneg %p63
        $region38: #{decoder_forward.7} parent=31 // pred_check_branch
          %192 = sbr.rel (%p190) target = $region40
        $region39: #{decoder_forward.7} parent=31 // pred_region
          %193 = dma.done [#allocation7], 2304
        $region40: #{decoder_forward.7} parent=31 // pred_fallthru
          _
        // Predicated region
        $region41: #{decoder_forward.7} parent=31 // pred_check
          %p194 = pneg %p84
        $region42: #{decoder_forward.7} parent=31 // pred_check_branch
          %196 = sbr.rel (%p194) target = $region44
        $region43: #{decoder_forward.7} parent=31 // pred_region
          %197 = dma.done [#allocation7], 16
        $region44: #{decoder_forward.7} parent=31 // pred_fallthru
          _
        %s198 = sand.u32 %s29, 1
        %s199 = scalar_lea.sflag [#allocation4], %s198
        %s200 = sand.u32 %s29, 1
        %s201 = smul.addr %s200, 256
        %s202 = scalar_lea.vmem [#allocation3], %s201
        %p203 = pneg %p42
        %p204 = pneg %p39
        %p205 = pneg %p63
        %p206 = pneg %p60
        %p207 = pneg %p84
        %p208 = pneg %p81
        %p209 = pneg %p110
        %p210 = pneg %p107
        %s211 = sand.u32 %s97, 1
        %s212 = scalar_lea.sflag [#allocation5], %s211
        %s213 = sand.u32 %s97, 1
        %s214 = smul.addr %s213, 256
        %s215 = scalar_lea.vmem [#allocation9], %s214
        %vm217 = vcmask 261120
        %218 = vst.msk [vmem:[#allocation2] sm:$0xff] %vm217, 0.0
        %219 = vst.msk [vmem:[#allocation2 + $0x8] sm:$0xff] %vm217, 0.0
        %vm220 = vcmask 254976
        %221 = vst.msk [vmem:[#allocation2 + $0x10] sm:$0x3] %vm220, 0.0
        %s222 = scalar_lea.vmem [#allocation2], 408
        %223 = vst.msk [vmem:[%s222] sm:$0xff] %vm217, 0.0
        %224 = vst.msk [vmem:[%s222 + $0x8] sm:$0xff] %vm217, 0.0
        %225 = vst.msk [vmem:[%s222 + $0x10] sm:$0x3] %vm220, 0.0
        %s226 = scalar_lea.vmem [#allocation2], 24
        %vm227 = vcmask 253952
        %228 = vst.msk [vmem:[%s226] sm:$0x1] %vm227, 0.0
        %229 = vst.msk [vmem:[%s226 + $0x18] sm:$0x1] %vm227, 0.0
        %230 = vst.msk [vmem:[%s226 + $0x30] sm:$0x1] %vm227, 0.0
        %231 = vst.msk [vmem:[%s226 + $0x48] sm:$0x1] %vm227, 0.0
        %232 = vst.msk [vmem:[%s226 + $0x60] sm:$0x1] %vm227, 0.0
        %233 = vst.msk [vmem:[%s226 + $0x78] sm:$0x1] %vm227, 0.0
        %234 = vst.msk [vmem:[%s226 + $0x90] sm:$0x1] %vm227, 0.0
        %235 = vst.msk [vmem:[%s226 + $0xa8] sm:$0x1] %vm227, 0.0
        %236 = vst.msk [vmem:[%s226 + $0xc0] sm:$0x1] %vm227, 0.0
        %237 = vst.msk [vmem:[%s226 + $0xd8] sm:$0x1] %vm227, 0.0
        %238 = vst.msk [vmem:[%s226 + $0xf0] sm:$0x1] %vm227, 0.0
        %239 = vst.msk [vmem:[%s226 + $0x108] sm:$0x1] %vm227, 0.0
        %240 = vst.msk [vmem:[%s226 + $0x120] sm:$0x1] %vm227, 0.0
        %241 = vst.msk [vmem:[%s226 + $0x138] sm:$0x1] %vm227, 0.0
        %242 = vst.msk [vmem:[%s226 + $0x150] sm:$0x1] %vm227, 0.0
        %243 = vst.msk [vmem:[%s226 + $0x168] sm:$0x1] %vm227, 0.0
        %244 = vst.msk [vmem:[%s226 + $0x11] sm:$0x1] %vm227, 0.0
        %245 = vst.msk [vmem:[%s226 + $0x29] sm:$0x1] %vm227, 0.0
        %246 = vst.msk [vmem:[%s226 + $0x41] sm:$0x1] %vm227, 0.0
        %247 = vst.msk [vmem:[%s226 + $0x59] sm:$0x1] %vm227, 0.0
        %248 = vst.msk [vmem:[%s226 + $0x71] sm:$0x1] %vm227, 0.0
        %249 = vst.msk [vmem:[%s226 + $0x89] sm:$0x1] %vm227, 0.0
        %250 = vst.msk [vmem:[%s226 + $0xa1] sm:$0x1] %vm227, 0.0
        %251 = vst.msk [vmem:[%s226 + $0xb9] sm:$0x1] %vm227, 0.0
        %252 = vst.msk [vmem:[%s226 + $0xd1] sm:$0x1] %vm227, 0.0
        %253 = vst.msk [vmem:[%s226 + $0xe9] sm:$0x1] %vm227, 0.0
        %254 = vst.msk [vmem:[%s226 + $0x101] sm:$0x1] %vm227, 0.0
        %255 = vst.msk [vmem:[%s226 + $0x119] sm:$0x1] %vm227, 0.0
        %256 = vst.msk [vmem:[%s226 + $0x131] sm:$0x1] %vm227, 0.0
        %257 = vst.msk [vmem:[%s226 + $0x149] sm:$0x1] %vm227, 0.0
        %258 = vst.msk [vmem:[%s226 + $0x161] sm:$0x1] %vm227, 0.0
        %259 = vst.msk [vmem:[%s226 + $0x179] sm:$0x1] %vm227, 0.0
        %v260 = vld [vmem:[%s185] sm:$0xff]
        %v261 = vld [vmem:[%s185 + $0x8] sm:$0xff]
        %v262 = vld [vmem:[%s185 + $0x10] sm:$0xff]
        %v263 = vld [vmem:[%s185 + $0x18] sm:$0xff]
        %v264 = vld [vmem:[%s185 + $0x20] sm:$0xff]
        %v265 = vld [vmem:[%s185 + $0x28] sm:$0xff]
        %v266 = vld [vmem:[%s185 + $0x30] sm:$0xff]
        %v267 = vld [vmem:[%s185 + $0x38] sm:$0xff]
        %v268 = vld [vmem:[%s185 + $0x40] sm:$0xff]
        %v269 = vld [vmem:[%s185 + $0x48] sm:$0xff]
        %v270 = vld [vmem:[%s185 + $0x50] sm:$0xff]
        %v271 = vld [vmem:[%s185 + $0x58] sm:$0xff]
        %v272 = vld [vmem:[%s185 + $0x60] sm:$0xff]
        %v273 = vld [vmem:[%s185 + $0x68] sm:$0xff]
        %v274 = vld [vmem:[%s185 + $0x70] sm:$0xff]
        %v275 = vld [vmem:[%s185 + $0x78] sm:$0xff]
        %v276 = vld [vmem:[%s185 + $0x80] sm:$0xff]
        %v277 = vld [vmem:[%s185 + $0x88] sm:$0xff]
        %v278 = vld [vmem:[%s185 + $0x90] sm:$0xff]
        %v279 = vld [vmem:[%s185 + $0x98] sm:$0xff]
        %v280 = vld [vmem:[%s185 + $0xa0] sm:$0xff]
        %v281 = vld [vmem:[%s185 + $0xa8] sm:$0xff]
        %v282 = vld [vmem:[%s185 + $0xb0] sm:$0xff]
        %v283 = vld [vmem:[%s185 + $0xb8] sm:$0xff]
        %v284 = vld [vmem:[%s185 + $0xc0] sm:$0xff]
        %v285 = vld [vmem:[%s185 + $0xc8] sm:$0xff]
        %v286 = vld [vmem:[%s185 + $0xd0] sm:$0xff]
        %v287 = vld [vmem:[%s185 + $0xd8] sm:$0xff]
        %v288 = vld [vmem:[%s185 + $0xe0] sm:$0xff]
        %v289 = vld [vmem:[%s185 + $0xe8] sm:$0xff]
        %v290 = vld [vmem:[%s185 + $0xf0] sm:$0xff]
        %v291 = vld [vmem:[%s185 + $0xf8] sm:$0xff]
        %292 = vst.msk [vmem:[%s226 + $0x1] sm:$0xff] %vm217, %v260
        %293 = vst.msk [vmem:[%s226 + $0x9] sm:$0xff] %vm217, %v261
        %294 = vst.msk [vmem:[%s226 + $0x19] sm:$0xff] %vm217, %v262
        %295 = vst.msk [vmem:[%s226 + $0x21] sm:$0xff] %vm217, %v263
        %296 = vst.msk [vmem:[%s226 + $0x31] sm:$0xff] %vm217, %v264
        %297 = vst.msk [vmem:[%s226 + $0x39] sm:$0xff] %vm217, %v265
        %298 = vst.msk [vmem:[%s226 + $0x49] sm:$0xff] %vm217, %v266
        %299 = vst.msk [vmem:[%s226 + $0x51] sm:$0xff] %vm217, %v267
        %300 = vst.msk [vmem:[%s226 + $0x61] sm:$0xff] %vm217, %v268
        %301 = vst.msk [vmem:[%s226 + $0x69] sm:$0xff] %vm217, %v269
        %302 = vst.msk [vmem:[%s226 + $0x79] sm:$0xff] %vm217, %v270
        %303 = vst.msk [vmem:[%s226 + $0x81] sm:$0xff] %vm217, %v271
        %304 = vst.msk [vmem:[%s226 + $0x91] sm:$0xff] %vm217, %v272
        %305 = vst.msk [vmem:[%s226 + $0x99] sm:$0xff] %vm217, %v273
        %306 = vst.msk [vmem:[%s226 + $0xa9] sm:$0xff] %vm217, %v274
        %307 = vst.msk [vmem:[%s226 + $0xb1] sm:$0xff] %vm217, %v275
        %308 = vst.msk [vmem:[%s226 + $0xc1] sm:$0xff] %vm217, %v276
        %309 = vst.msk [vmem:[%s226 + $0xc9] sm:$0xff] %vm217, %v277
        %310 = vst.msk [vmem:[%s226 + $0xd9] sm:$0xff] %vm217, %v278
        %311 = vst.msk [vmem:[%s226 + $0xe1] sm:$0xff] %vm217, %v279
        %312 = vst.msk [vmem:[%s226 + $0xf1] sm:$0xff] %vm217, %v280
        %313 = vst.msk [vmem:[%s226 + $0xf9] sm:$0xff] %vm217, %v281
        %314 = vst.msk [vmem:[%s226 + $0x109] sm:$0xff] %vm217, %v282
        %315 = vst.msk [vmem:[%s226 + $0x111] sm:$0xff] %vm217, %v283
        %316 = vst.msk [vmem:[%s226 + $0x121] sm:$0xff] %vm217, %v284
        %317 = vst.msk [vmem:[%s226 + $0x129] sm:$0xff] %vm217, %v285
        %318 = vst.msk [vmem:[%s226 + $0x139] sm:$0xff] %vm217, %v286
        %319 = vst.msk [vmem:[%s226 + $0x141] sm:$0xff] %vm217, %v287
        %320 = vst.msk [vmem:[%s226 + $0x151] sm:$0xff] %vm217, %v288
        %321 = vst.msk [vmem:[%s226 + $0x159] sm:$0xff] %vm217, %v289
        %322 = vst.msk [vmem:[%s226 + $0x169] sm:$0xff] %vm217, %v290
        %323 = vst.msk [vmem:[%s226 + $0x171] sm:$0xff] %vm217, %v291
        %v324 = vld [vmem:[#allocation2] sm:$0xff]
        %v325 = vld [vmem:[#allocation2 + $0x8] sm:$0xff]
        %v326 = vld [vmem:[#allocation2 + $0x18] sm:$0xff]
        %v327 = vld [vmem:[#allocation2 + $0x20] sm:$0xff]
        %v328 = vld [vmem:[#allocation2 + $0x30] sm:$0xff]
        %v329 = vld [vmem:[#allocation2 + $0x38] sm:$0xff]
        %v330 = vld [vmem:[#allocation2 + $0x48] sm:$0xff]
        %v331 = vld [vmem:[#allocation2 + $0x50] sm:$0xff]
        %v332 = vld [vmem:[#allocation2 + $0x60] sm:$0xff]
        %v333 = vld [vmem:[#allocation2 + $0x68] sm:$0xff]
        %v334 = vld [vmem:[#allocation2 + $0x78] sm:$0xff]
        %v335 = vld [vmem:[#allocation2 + $0x80] sm:$0xff]
        %v336 = vld [vmem:[#allocation2 + $0x90] sm:$0xff]
        %v337 = vld [vmem:[#allocation2 + $0x98] sm:$0xff]
        %v338 = vld [vmem:[#allocation2 + $0xa8] sm:$0xff]
        %v339 = vld [vmem:[#allocation2 + $0xb0] sm:$0xff]
        %v340 = vld [vmem:[#allocation2 + $0xc0] sm:$0xff]
        %v341 = vld [vmem:[#allocation2 + $0xc8] sm:$0xff]
        %v342 = vld [vmem:[#allocation2 + $0xd8] sm:$0xff]
        %v343 = vld [vmem:[#allocation2 + $0xe0] sm:$0xff]
        %v344 = vld [vmem:[#allocation2 + $0xf0] sm:$0xff]
        %v345 = vld [vmem:[#allocation2 + $0xf8] sm:$0xff]
        %v346 = vld [vmem:[#allocation2 + $0x108] sm:$0xff]
        %v347 = vld [vmem:[#allocation2 + $0x110] sm:$0xff]
        %v348 = vld [vmem:[#allocation2 + $0x120] sm:$0xff]
        %v349 = vld [vmem:[#allocation2 + $0x128] sm:$0xff]
        %v350 = vld [vmem:[#allocation2 + $0x138] sm:$0xff]
        %v351 = vld [vmem:[#allocation2 + $0x140] sm:$0xff]
        %v352 = vld [vmem:[#allocation2 + $0x150] sm:$0xff]
        %v353 = vld [vmem:[#allocation2 + $0x158] sm:$0xff]
        %v354 = vld [vmem:[#allocation2 + $0x168] sm:$0xff]
        %v355 = vld [vmem:[#allocation2 + $0x170] sm:$0xff]
        %v356 = vld [vmem:[#allocation6] sm:$0xf]
        %v357 = vld [vmem:[#allocation6 + $0x4] sm:$0xf]
        %v358 = vld [vmem:[#allocation6 + $0x8] sm:$0xf]
        %v359 = vld [vmem:[#allocation6 + $0xc] sm:$0xf]
        %v360 = vpack.c.bf16 %v325, %v324
        %v361 = vpack.c.bf16 %v327, %v326
        %v362 = vpack.c.bf16 %v329, %v328
        %v363 = vpack.c.bf16 %v331, %v330
        %v364 = vpack.c.bf16 %v333, %v332
        %v365 = vpack.c.bf16 %v335, %v334
        %v366 = vpack.c.bf16 %v337, %v336
        %v367 = vpack.c.bf16 %v339, %v338
        %v368 = vpack.c.bf16 %v341, %v340
        %v369 = vpack.c.bf16 %v343, %v342
        %v370 = vpack.c.bf16 %v345, %v344
        %v371 = vpack.c.bf16 %v347, %v346
        %v372 = vpack.c.bf16 %v349, %v348
        %v373 = vpack.c.bf16 %v351, %v350
        %v374 = vpack.c.bf16 %v353, %v352
        %v375 = vpack.c.bf16 %v355, %v354
        %v376 = vld [vmem:[#allocation2 + $0x1] sm:$0xff]
        %v377 = vld [vmem:[#allocation2 + $0x9] sm:$0xff]
        %v378 = vld [vmem:[#allocation2 + $0x19] sm:$0xff]
        %v379 = vld [vmem:[#allocation2 + $0x21] sm:$0xff]
        %v380 = vld [vmem:[#allocation2 + $0x31] sm:$0xff]
        %v381 = vld [vmem:[#allocation2 + $0x39] sm:$0xff]
        %v382 = vld [vmem:[#allocation2 + $0x49] sm:$0xff]
        %v383 = vld [vmem:[#allocation2 + $0x51] sm:$0xff]
        %v384 = vld [vmem:[#allocation2 + $0x61] sm:$0xff]
        %v385 = vld [vmem:[#allocation2 + $0x69] sm:$0xff]
        %v386 = vld [vmem:[#allocation2 + $0x79] sm:$0xff]
        %v387 = vld [vmem:[#allocation2 + $0x81] sm:$0xff]
        %v388 = vld [vmem:[#allocation2 + $0x91] sm:$0xff]
        %v389 = vld [vmem:[#allocation2 + $0x99] sm:$0xff]
        %v390 = vld [vmem:[#allocation2 + $0xa9] sm:$0xff]
        %v391 = vld [vmem:[#allocation2 + $0xb1] sm:$0xff]
        %v392 = vld [vmem:[#allocation2 + $0xc1] sm:$0xff]
        %v393 = vld [vmem:[#allocation2 + $0xc9] sm:$0xff]
        %v394 = vld [vmem:[#allocation2 + $0xd9] sm:$0xff]
        %v395 = vld [vmem:[#allocation2 + $0xe1] sm:$0xff]
        %v396 = vld [vmem:[#allocation2 + $0xf1] sm:$0xff]
        %v397 = vld [vmem:[#allocation2 + $0xf9] sm:$0xff]
        %v398 = vld [vmem:[#allocation2 + $0x109] sm:$0xff]
        %v399 = vld [vmem:[#allocation2 + $0x111] sm:$0xff]
        %v400 = vld [vmem:[#allocation2 + $0x121] sm:$0xff]
        %v401 = vld [vmem:[#allocation2 + $0x129] sm:$0xff]
        %v402 = vld [vmem:[#allocation2 + $0x139] sm:$0xff]
        %v403 = vld [vmem:[#allocation2 + $0x141] sm:$0xff]
        %v404 = vld [vmem:[#allocation2 + $0x151] sm:$0xff]
        %v405 = vld [vmem:[#allocation2 + $0x159] sm:$0xff]
        %v406 = vld [vmem:[#allocation2 + $0x169] sm:$0xff]
        %v407 = vld [vmem:[#allocation2 + $0x171] sm:$0xff]
        %v408 = vld [vmem:[#allocation6 + $0x10] sm:$0xf]
        %v409 = vld [vmem:[#allocation6 + $0x14] sm:$0xf]
        %v410 = vld [vmem:[#allocation6 + $0x18] sm:$0xf]
        %v411 = vld [vmem:[#allocation6 + $0x1c] sm:$0xf]
        %v412 = vpack.c.bf16 %v377, %v376
        %v413 = vpack.c.bf16 %v379, %v378
        %v414 = vpack.c.bf16 %v381, %v380
        %v415 = vpack.c.bf16 %v383, %v382
        %v416 = vpack.c.bf16 %v385, %v384
        %v417 = vpack.c.bf16 %v387, %v386
        %v418 = vpack.c.bf16 %v389, %v388
        %v419 = vpack.c.bf16 %v391, %v390
        %v420 = vpack.c.bf16 %v393, %v392
        %v421 = vpack.c.bf16 %v395, %v394
        %v422 = vpack.c.bf16 %v397, %v396
        %v423 = vpack.c.bf16 %v399, %v398
        %v424 = vpack.c.bf16 %v401, %v400
        %v425 = vpack.c.bf16 %v403, %v402
        %v426 = vpack.c.bf16 %v405, %v404
        %v427 = vpack.c.bf16 %v407, %v406
        %v432 = vunpack.c.l.b16 %v408
        %v433 = vunpack.c.l.b16 %v409
        %v434 = vunpack.c.l.b16 %v410
        %v435 = vunpack.c.l.b16 %v411
        %v436 = vpack.c.b16 %v433, %v432
        %v437 = vpack.c.b16 %v435, %v434
        %v441 = vsel %vm217, %v412, 0
        %v444 = vsel %vm217, %v413, 0
        %v447 = vsel %vm217, %v414, 0
        %v450 = vsel %vm217, %v415, 0
        %v453 = vsel %vm217, %v416, 0
        %v456 = vsel %vm217, %v417, 0
        %v459 = vsel %vm217, %v418, 0
        %v462 = vsel %vm217, %v419, 0
        %v465 = vsel %vm217, %v420, 0
        %v468 = vsel %vm217, %v421, 0
        %v471 = vsel %vm217, %v422, 0
        %v474 = vsel %vm217, %v423, 0
        %v477 = vsel %vm217, %v424, 0
        %v480 = vsel %vm217, %v425, 0
        %v483 = vsel %vm217, %v426, 0
        %v486 = vsel %vm217, %v427, 0
        %488 = vmatprep.subr.bf16.mxu0 0
        %489 = vmatpush1.bf16.msra.mxu0 %v436
        %490 = vmatprep.subr.bf16.mxu0 0
        %491 = vmatpush1.bf16.msra.mxu0 %v437
        %492 = vmatprep.subr.bf16.mxu0 0
        %493 = vmatpush1.bf16.msra.mxu0 0
        %494 = vmatprep.subr.bf16.mxu0 0
        %495 = vmatpush1.bf16.msra.mxu0 0
        %496 = vmatprep.subr.bf16.mxu0 0
        %497 = vmatpush1.bf16.msra.mxu0 0
        %498 = vmatprep.subr.bf16.mxu0 0
        %499 = vmatpush1.bf16.msra.mxu0 0
        %500 = vmatprep.subr.bf16.mxu0 0
        %501 = vmatpush1.bf16.msra.mxu0 0
        %502 = vmatprep.subr.bf16.mxu0 0
        %503 = vmatpush1.bf16.msra.mxu0 0
        %504 = vmatprep.subr.bf16.mxu0 0
        %505 = vmatpush1.bf16.msra.mxu0 0
        %506 = vmatprep.subr.bf16.mxu0 0
        %507 = vmatpush1.bf16.msra.mxu0 0
        %508 = vmatprep.subr.bf16.mxu0 0
        %509 = vmatpush1.bf16.msra.mxu0 0
        %510 = vmatprep.subr.bf16.mxu0 0
        %511 = vmatpush1.bf16.msra.mxu0 0
        %512 = vmatprep.subr.bf16.mxu0 0
        %513 = vmatpush1.bf16.msra.mxu0 0
        %514 = vmatprep.subr.bf16.mxu0 0
        %515 = vmatpush1.bf16.msra.mxu0 0
        %516 = vmatprep.subr.bf16.mxu0 0
        %517 = vmatpush1.bf16.msra.mxu0 0
        %518 = vmatprep.subr.bf16.mxu0 0
        %519 = vmatpush1.bf16.msra.mxu0 0
        %520 = vmatprep.mubr.bf16.mxu0 0
        %521 = vmatmul.mubr.bf16.gmra.mrb[0].mxu0 %v441
        %v522 = vpop.f32.mrb[0].mxu0
        %v523 = vadd.f32 0.0, %v522
        %v524 = vpop.f32.mrb[0].mxu0
        %v525 = vpop.f32.mrb[0].mxu0
        %v526 = vadd.f32 0.0, %v525
        %v527 = vpop.f32.mrb[0].mxu0
        %528 = vmatprep.mubr.bf16.mxu0 0
        %529 = vmatmul.mubr.bf16.gmra.mrb[0].mxu0 %v444
        %v530 = vpop.f32.mrb[0].mxu0
        %v531 = vadd.f32 0.0, %v530
        %v532 = vpop.f32.mrb[0].mxu0
        %v533 = vpop.f32.mrb[0].mxu0
        %v534 = vadd.f32 0.0, %v533
        %v535 = vpop.f32.mrb[0].mxu0
        %536 = vmatprep.mubr.bf16.mxu0 0
        %537 = vmatmul.mubr.bf16.gmra.mrb[0].mxu0 %v447
        %v538 = vpop.f32.mrb[0].mxu0
        %v539 = vadd.f32 0.0, %v538
        %v540 = vpop.f32.mrb[0].mxu0
        %v541 = vpop.f32.mrb[0].mxu0
        %v542 = vadd.f32 0.0, %v541
        %v543 = vpop.f32.mrb[0].mxu0
        %544 = vmatprep.mubr.bf16.mxu0 0
        %545 = vmatmul.mubr.bf16.gmra.mrb[0].mxu0 %v450
        %v546 = vpop.f32.mrb[0].mxu0
        %v547 = vadd.f32 0.0, %v546
        %v548 = vpop.f32.mrb[0].mxu0
        %v549 = vpop.f32.mrb[0].mxu0
        %v550 = vadd.f32 0.0, %v549
        %v551 = vpop.f32.mrb[0].mxu0
        %552 = vmatprep.mubr.bf16.mxu0 0
        %553 = vmatmul.mubr.bf16.gmra.mrb[0].mxu0 %v453
        %v554 = vpop.f32.mrb[0].mxu0
        %v555 = vadd.f32 0.0, %v554
        %v556 = vpop.f32.mrb[0].mxu0
        %v557 = vpop.f32.mrb[0].mxu0
        %v558 = vadd.f32 0.0, %v557
        %v559 = vpop.f32.mrb[0].mxu0
        %560 = vmatprep.mubr.bf16.mxu0 0
        %561 = vmatmul.mubr.bf16.gmra.mrb[0].mxu0 %v456
        %v562 = vpop.f32.mrb[0].mxu0
        %v563 = vadd.f32 0.0, %v562
        %v564 = vpop.f32.mrb[0].mxu0
        %v565 = vpop.f32.mrb[0].mxu0
        %v566 = vadd.f32 0.0, %v565
        %v567 = vpop.f32.mrb[0].mxu0
        %568 = vmatprep.mubr.bf16.mxu0 0
        %569 = vmatmul.mubr.bf16.gmra.mrb[0].mxu0 %v459
        %v570 = vpop.f32.mrb[0].mxu0
        %v571 = vadd.f32 0.0, %v570
        %v572 = vpop.f32.mrb[0].mxu0
        %v573 = vpop.f32.mrb[0].mxu0
        %v574 = vadd.f32 0.0, %v573
        %v575 = vpop.f32.mrb[0].mxu0
        %576 = vmatprep.mubr.bf16.mxu0 0
        %577 = vmatmul.mubr.bf16.gmra.mrb[0].mxu0 %v462
        %v578 = vpop.f32.mrb[0].mxu0
        %v579 = vadd.f32 0.0, %v578
        %v580 = vpop.f32.mrb[0].mxu0
        %v581 = vpop.f32.mrb[0].mxu0
        %v582 = vadd.f32 0.0, %v581
        %v583 = vpop.f32.mrb[0].mxu0
        %584 = vmatprep.mubr.bf16.mxu0 0
        %585 = vmatmul.mubr.bf16.gmra.mrb[0].mxu0 %v465
        %v586 = vpop.f32.mrb[0].mxu0
        %v587 = vadd.f32 0.0, %v586
        %v588 = vpop.f32.mrb[0].mxu0
        %v589 = vpop.f32.mrb[0].mxu0
        %v590 = vadd.f32 0.0, %v589
        %v591 = vpop.f32.mrb[0].mxu0
        %592 = vmatprep.mubr.bf16.mxu0 0
        %593 = vmatmul.mubr.bf16.gmra.mrb[0].mxu0 %v468
        %v594 = vpop.f32.mrb[0].mxu0
        %v595 = vadd.f32 0.0, %v594
        %v596 = vpop.f32.mrb[0].mxu0
        %v597 = vpop.f32.mrb[0].mxu0
        %v598 = vadd.f32 0.0, %v597
        %v599 = vpop.f32.mrb[0].mxu0
        %600 = vmatprep.mubr.bf16.mxu0 0
        %601 = vmatmul.mubr.bf16.gmra.mrb[0].mxu0 %v471
        %v602 = vpop.f32.mrb[0].mxu0
        %v603 = vadd.f32 0.0, %v602
        %v604 = vpop.f32.mrb[0].mxu0
        %v605 = vpop.f32.mrb[0].mxu0
        %v606 = vadd.f32 0.0, %v605
        %v607 = vpop.f32.mrb[0].mxu0
        %608 = vmatprep.mubr.bf16.mxu0 0
        %609 = vmatmul.mubr.bf16.gmra.mrb[0].mxu0 %v474
        %v610 = vpop.f32.mrb[0].mxu0
        %v611 = vadd.f32 0.0, %v610
        %v612 = vpop.f32.mrb[0].mxu0
        %v613 = vpop.f32.mrb[0].mxu0
        %v614 = vadd.f32 0.0, %v613
        %v615 = vpop.f32.mrb[0].mxu0
        %616 = vmatprep.mubr.bf16.mxu0 0
        %617 = vmatmul.mubr.bf16.gmra.mrb[0].mxu0 %v477
        %v618 = vpop.f32.mrb[0].mxu0
        %v619 = vadd.f32 0.0, %v618
        %v620 = vpop.f32.mrb[0].mxu0
        %v621 = vpop.f32.mrb[0].mxu0
        %v622 = vadd.f32 0.0, %v621
        %v623 = vpop.f32.mrb[0].mxu0
        %624 = vmatprep.mubr.bf16.mxu0 0
        %625 = vmatmul.mubr.bf16.gmra.mrb[0].mxu0 %v480
        %v626 = vpop.f32.mrb[0].mxu0
        %v627 = vadd.f32 0.0, %v626
        %v628 = vpop.f32.mrb[0].mxu0
        %v629 = vpop.f32.mrb[0].mxu0
        %v630 = vadd.f32 0.0, %v629
        %v631 = vpop.f32.mrb[0].mxu0
        %632 = vmatprep.mubr.bf16.mxu0 0
        %633 = vmatmul.mubr.bf16.gmra.mrb[0].mxu0 %v483
        %v634 = vpop.f32.mrb[0].mxu0
        %v635 = vadd.f32 0.0, %v634
        %v636 = vpop.f32.mrb[0].mxu0
        %v637 = vpop.f32.mrb[0].mxu0
        %v638 = vadd.f32 0.0, %v637
        %v639 = vpop.f32.mrb[0].mxu0
        %640 = vmatprep.mubr.bf16.mxu0 0
        %641 = vmatmul.mubr.bf16.gmra.mrb[0].mxu0 %v486
        %v642 = vpop.f32.mrb[0].mxu0
        %v643 = vadd.f32 0.0, %v642
        %v644 = vpop.f32.mrb[0].mxu0
        %v645 = vpop.f32.mrb[0].mxu0
        %v646 = vadd.f32 0.0, %v645
        %v647 = vpop.f32.mrb[0].mxu0
        %648 = vdwg.mxu0
        %v653 = vunpack.c.l.b16 %v356
        %v654 = vunpack.c.l.b16 %v357
        %v655 = vunpack.c.l.b16 %v358
        %v656 = vunpack.c.l.b16 %v359
        %v657 = vpack.c.b16 %v654, %v653
        %v658 = vpack.c.b16 %v656, %v655
        %v662 = vsel %vm217, %v360, 0
        %v665 = vsel %vm217, %v361, 0
        %v668 = vsel %vm217, %v362, 0
        %v671 = vsel %vm217, %v363, 0
        %v674 = vsel %vm217, %v364, 0
        %v677 = vsel %vm217, %v365, 0
        %v680 = vsel %vm217, %v366, 0
        %v683 = vsel %vm217, %v367, 0
        %v686 = vsel %vm217, %v368, 0
        %v689 = vsel %vm217, %v369, 0
        %v692 = vsel %vm217, %v370, 0
        %v695 = vsel %vm217, %v371, 0
        %v698 = vsel %vm217, %v372, 0
        %v701 = vsel %vm217, %v373, 0
        %v704 = vsel %vm217, %v374, 0
        %v707 = vsel %vm217, %v375, 0
        %709 = vmatprep.subr.bf16.mxu0 0
        %710 = vmatpush1.bf16.msra.mxu0 %v657
        %711 = vmatprep.subr.bf16.mxu0 0
        %712 = vmatpush1.bf16.msra.mxu0 %v658
        %713 = vmatprep.subr.bf16.mxu0 0
        %714 = vmatpush1.bf16.msra.mxu0 0
        %715 = vmatprep.subr.bf16.mxu0 0
        %716 = vmatpush1.bf16.msra.mxu0 0
        %717 = vmatprep.subr.bf16.mxu0 0
        %718 = vmatpush1.bf16.msra.mxu0 0
        %719 = vmatprep.subr.bf16.mxu0 0
        %720 = vmatpush1.bf16.msra.mxu0 0
        %721 = vmatprep.subr.bf16.mxu0 0
        %722 = vmatpush1.bf16.msra.mxu0 0
        %723 = vmatprep.subr.bf16.mxu0 0
        %724 = vmatpush1.bf16.msra.mxu0 0
        %725 = vmatprep.subr.bf16.mxu0 0
        %726 = vmatpush1.bf16.msra.mxu0 0
        %727 = vmatprep.subr.bf16.mxu0 0
        %728 = vmatpush1.bf16.msra.mxu0 0
        %729 = vmatprep.subr.bf16.mxu0 0
        %730 = vmatpush1.bf16.msra.mxu0 0
        %731 = vmatprep.subr.bf16.mxu0 0
        %732 = vmatpush1.bf16.msra.mxu0 0
        %733 = vmatprep.subr.bf16.mxu0 0
        %734 = vmatpush1.bf16.msra.mxu0 0
        %735 = vmatprep.subr.bf16.mxu0 0
        %736 = vmatpush1.bf16.msra.mxu0 0
        %737 = vmatprep.subr.bf16.mxu0 0
        %738 = vmatpush1.bf16.msra.mxu0 0
        %739 = vmatprep.subr.bf16.mxu0 0
        %740 = vmatpush1.bf16.msra.mxu0 0
        %741 = vmatprep.mubr.bf16.mxu0 0
        %742 = vmatmul.mubr.bf16.gmra.mrb[0].mxu0 %v662
        %v743 = vpop.f32.mrb[0].mxu0
        %v744 = vadd.f32 %v523, %v743
        %v745 = vpop.f32.mrb[0].mxu0
        %v746 = vpop.f32.mrb[0].mxu0
        %v747 = vadd.f32 %v526, %v746
        %v748 = vpop.f32.mrb[0].mxu0
        %749 = vmatprep.mubr.bf16.mxu0 0
        %750 = vmatmul.mubr.bf16.gmra.mrb[0].mxu0 %v665
        %v751 = vpop.f32.mrb[0].mxu0
        %v752 = vadd.f32 %v531, %v751
        %v753 = vpop.f32.mrb[0].mxu0
        %v754 = vpop.f32.mrb[0].mxu0
        %v755 = vadd.f32 %v534, %v754
        %v756 = vpop.f32.mrb[0].mxu0
        %757 = vmatprep.mubr.bf16.mxu0 0
        %758 = vmatmul.mubr.bf16.gmra.mrb[0].mxu0 %v668
        %v759 = vpop.f32.mrb[0].mxu0
        %v760 = vadd.f32 %v539, %v759
        %v761 = vpop.f32.mrb[0].mxu0
        %v762 = vpop.f32.mrb[0].mxu0
        %v763 = vadd.f32 %v542, %v762
        %v764 = vpop.f32.mrb[0].mxu0
        %765 = vmatprep.mubr.bf16.mxu0 0
        %766 = vmatmul.mubr.bf16.gmra.mrb[0].mxu0 %v671
        %v767 = vpop.f32.mrb[0].mxu0
        %v768 = vadd.f32 %v547, %v767
        %v769 = vpop.f32.mrb[0].mxu0
        %v770 = vpop.f32.mrb[0].mxu0
        %v771 = vadd.f32 %v550, %v770
        %v772 = vpop.f32.mrb[0].mxu0
        %773 = vmatprep.mubr.bf16.mxu0 0
        %774 = vmatmul.mubr.bf16.gmra.mrb[0].mxu0 %v674
        %v775 = vpop.f32.mrb[0].mxu0
        %v776 = vadd.f32 %v555, %v775
        %v777 = vpop.f32.mrb[0].mxu0
        %v778 = vpop.f32.mrb[0].mxu0
        %v779 = vadd.f32 %v558, %v778
        %v780 = vpop.f32.mrb[0].mxu0
        %781 = vmatprep.mubr.bf16.mxu0 0
        %782 = vmatmul.mubr.bf16.gmra.mrb[0].mxu0 %v677
        %v783 = vpop.f32.mrb[0].mxu0
        %v784 = vadd.f32 %v563, %v783
        %v785 = vpop.f32.mrb[0].mxu0
        %v786 = vpop.f32.mrb[0].mxu0
        %v787 = vadd.f32 %v566, %v786
        %v788 = vpop.f32.mrb[0].mxu0
        %789 = vmatprep.mubr.bf16.mxu0 0
        %790 = vmatmul.mubr.bf16.gmra.mrb[0].mxu0 %v680
        %v791 = vpop.f32.mrb[0].mxu0
        %v792 = vadd.f32 %v571, %v791
        %v793 = vpop.f32.mrb[0].mxu0
        %v794 = vpop.f32.mrb[0].mxu0
        %v795 = vadd.f32 %v574, %v794
        %v796 = vpop.f32.mrb[0].mxu0
        %797 = vmatprep.mubr.bf16.mxu0 0
        %798 = vmatmul.mubr.bf16.gmra.mrb[0].mxu0 %v683
        %v799 = vpop.f32.mrb[0].mxu0
        %v800 = vadd.f32 %v579, %v799
        %v801 = vpop.f32.mrb[0].mxu0
        %v802 = vpop.f32.mrb[0].mxu0
        %v803 = vadd.f32 %v582, %v802
        %v804 = vpop.f32.mrb[0].mxu0
        %805 = vmatprep.mubr.bf16.mxu0 0
        %806 = vmatmul.mubr.bf16.gmra.mrb[0].mxu0 %v686
        %v807 = vpop.f32.mrb[0].mxu0
        %v808 = vadd.f32 %v587, %v807
        %v809 = vpop.f32.mrb[0].mxu0
        %v810 = vpop.f32.mrb[0].mxu0
        %v811 = vadd.f32 %v590, %v810
        %v812 = vpop.f32.mrb[0].mxu0
        %813 = vmatprep.mubr.bf16.mxu0 0
        %814 = vmatmul.mubr.bf16.gmra.mrb[0].mxu0 %v689
        %v815 = vpop.f32.mrb[0].mxu0
        %v816 = vadd.f32 %v595, %v815
        %v817 = vpop.f32.mrb[0].mxu0
        %v818 = vpop.f32.mrb[0].mxu0
        %v819 = vadd.f32 %v598, %v818
        %v820 = vpop.f32.mrb[0].mxu0
        %821 = vmatprep.mubr.bf16.mxu0 0
        %822 = vmatmul.mubr.bf16.gmra.mrb[0].mxu0 %v692
        %v823 = vpop.f32.mrb[0].mxu0
        %v824 = vadd.f32 %v603, %v823
        %v825 = vpop.f32.mrb[0].mxu0
        %v826 = vpop.f32.mrb[0].mxu0
        %v827 = vadd.f32 %v606, %v826
        %v828 = vpop.f32.mrb[0].mxu0
        %829 = vmatprep.mubr.bf16.mxu0 0
        %830 = vmatmul.mubr.bf16.gmra.mrb[0].mxu0 %v695
        %v831 = vpop.f32.mrb[0].mxu0
        %v832 = vadd.f32 %v611, %v831
        %v833 = vpop.f32.mrb[0].mxu0
        %v834 = vpop.f32.mrb[0].mxu0
        %v835 = vadd.f32 %v614, %v834
        %v836 = vpop.f32.mrb[0].mxu0
        %837 = vmatprep.mubr.bf16.mxu0 0
        %838 = vmatmul.mubr.bf16.gmra.mrb[0].mxu0 %v698
        %v839 = vpop.f32.mrb[0].mxu0
        %v840 = vadd.f32 %v619, %v839
        %v841 = vpop.f32.mrb[0].mxu0
        %v842 = vpop.f32.mrb[0].mxu0
        %v843 = vadd.f32 %v622, %v842
        %v844 = vpop.f32.mrb[0].mxu0
        %845 = vmatprep.mubr.bf16.mxu0 0
        %846 = vmatmul.mubr.bf16.gmra.mrb[0].mxu0 %v701
        %v847 = vpop.f32.mrb[0].mxu0
        %v848 = vadd.f32 %v627, %v847
        %v849 = vpop.f32.mrb[0].mxu0
        %v850 = vpop.f32.mrb[0].mxu0
        %v851 = vadd.f32 %v630, %v850
        %v852 = vpop.f32.mrb[0].mxu0
        %853 = vmatprep.mubr.bf16.mxu0 0
        %854 = vmatmul.mubr.bf16.gmra.mrb[0].mxu0 %v704
        %v855 = vpop.f32.mrb[0].mxu0
        %v856 = vadd.f32 %v635, %v855
        %v857 = vpop.f32.mrb[0].mxu0
        %v858 = vpop.f32.mrb[0].mxu0
        %v859 = vadd.f32 %v638, %v858
        %v860 = vpop.f32.mrb[0].mxu0
        %861 = vmatprep.mubr.bf16.mxu0 0
        %862 = vmatmul.mubr.bf16.gmra.mrb[0].mxu0 %v707
        %v863 = vpop.f32.mrb[0].mxu0
        %v864 = vadd.f32 %v643, %v863
        %v865 = vpop.f32.mrb[0].mxu0
        %v866 = vpop.f32.mrb[0].mxu0
        %v867 = vadd.f32 %v646, %v866
        %v868 = vpop.f32.mrb[0].mxu0
        %869 = vdwg.mxu0
        %v870 = vld [vmem:[#allocation2 + $0x2] sm:$0xff]
        %v871 = vld [vmem:[#allocation2 + $0xa] sm:$0xff]
        %v872 = vld [vmem:[#allocation2 + $0x1a] sm:$0xff]
        %v873 = vld [vmem:[#allocation2 + $0x22] sm:$0xff]
        %v874 = vld [vmem:[#allocation2 + $0x32] sm:$0xff]
        %v875 = vld [vmem:[#allocation2 + $0x3a] sm:$0xff]
        %v876 = vld [vmem:[#allocation2 + $0x4a] sm:$0xff]
        %v877 = vld [vmem:[#allocation2 + $0x52] sm:$0xff]
        %v878 = vld [vmem:[#allocation2 + $0x62] sm:$0xff]
        %v879 = vld [vmem:[#allocation2 + $0x6a] sm:$0xff]
        %v880 = vld [vmem:[#allocation2 + $0x7a] sm:$0xff]
        %v881 = vld [vmem:[#allocation2 + $0x82] sm:$0xff]
        %v882 = vld [vmem:[#allocation2 + $0x92] sm:$0xff]
        %v883 = vld [vmem:[#allocation2 + $0x9a] sm:$0xff]
        %v884 = vld [vmem:[#allocation2 + $0xaa] sm:$0xff]
        %v885 = vld [vmem:[#allocation2 + $0xb2] sm:$0xff]
        %v886 = vld [vmem:[#allocation2 + $0xc2] sm:$0xff]
        %v887 = vld [vmem:[#allocation2 + $0xca] sm:$0xff]
        %v888 = vld [vmem:[#allocation2 + $0xda] sm:$0xff]
        %v889 = vld [vmem:[#allocation2 + $0xe2] sm:$0xff]
        %v890 = vld [vmem:[#allocation2 + $0xf2] sm:$0xff]
        %v891 = vld [vmem:[#allocation2 + $0xfa] sm:$0xff]
        %v892 = vld [vmem:[#allocation2 + $0x10a] sm:$0xff]
        %v893 = vld [vmem:[#allocation2 + $0x112] sm:$0xff]
        %v894 = vld [vmem:[#allocation2 + $0x122] sm:$0xff]
        %v895 = vld [vmem:[#allocation2 + $0x12a] sm:$0xff]
        %v896 = vld [vmem:[#allocation2 + $0x13a] sm:$0xff]
        %v897 = vld [vmem:[#allocation2 + $0x142] sm:$0xff]
        %v898 = vld [vmem:[#allocation2 + $0x152] sm:$0xff]
        %v899 = vld [vmem:[#allocation2 + $0x15a] sm:$0xff]
        %v900 = vld [vmem:[#allocation2 + $0x16a] sm:$0xff]
        %v901 = vld [vmem:[#allocation2 + $0x172] sm:$0xff]
        %v902 = vld [vmem:[#allocation6 + $0x20] sm:$0xf]
        %v903 = vld [vmem:[#allocation6 + $0x24] sm:$0xf]
        %v904 = vld [vmem:[#allocation6 + $0x28] sm:$0xf]
        %v905 = vld [vmem:[#allocation6 + $0x2c] sm:$0xf]
        %v906 = vpack.c.bf16 %v871, %v870
        %v907 = vpack.c.bf16 %v873, %v872
        %v908 = vpack.c.bf16 %v875, %v874
        %v909 = vpack.c.bf16 %v877, %v876
        %v910 = vpack.c.bf16 %v879, %v878
        %v911 = vpack.c.bf16 %v881, %v880
        %v912 = vpack.c.bf16 %v883, %v882
        %v913 = vpack.c.bf16 %v885, %v884
        %v914 = vpack.c.bf16 %v887, %v886
        %v915 = vpack.c.bf16 %v889, %v888
        %v916 = vpack.c.bf16 %v891, %v890
        %v917 = vpack.c.bf16 %v893, %v892
        %v918 = vpack.c.bf16 %v895, %v894
        %v919 = vpack.c.bf16 %v897, %v896
        %v920 = vpack.c.bf16 %v899, %v898
        %v921 = vpack.c.bf16 %v901, %v900
        %v926 = vunpack.c.l.b16 %v902
        %v927 = vunpack.c.l.b16 %v903
        %v928 = vunpack.c.l.b16 %v904
        %v929 = vunpack.c.l.b16 %v905
        %v930 = vpack.c.b16 %v927, %v926
        %v931 = vpack.c.b16 %v929, %v928
        %v935 = vsel %vm217, %v906, 0
        %v938 = vsel %vm217, %v907, 0
        %v941 = vsel %vm217, %v908, 0
        %v944 = vsel %vm217, %v909, 0
        %v947 = vsel %vm217, %v910, 0
        %v950 = vsel %vm217, %v911, 0
        %v953 = vsel %vm217, %v912, 0
        %v956 = vsel %vm217, %v913, 0
        %v959 = vsel %vm217, %v914, 0
        %v962 = vsel %vm217, %v915, 0
        %v965 = vsel %vm217, %v916, 0
        %v968 = vsel %vm217, %v917, 0
        %v971 = vsel %vm217, %v918, 0
        %v974 = vsel %vm217, %v919, 0
        %v977 = vsel %vm217, %v920, 0
        %v980 = vsel %vm217, %v921, 0
        %982 = vmatprep.subr.bf16.mxu0 0
        %983 = vmatpush1.bf16.msra.mxu0 %v930
        %984 = vmatprep.subr.bf16.mxu0 0
        %985 = vmatpush1.bf16.msra.mxu0 %v931
        %986 = vmatprep.subr.bf16.mxu0 0
        %987 = vmatpush1.bf16.msra.mxu0 0
        %988 = vmatprep.subr.bf16.mxu0 0
        %989 = vmatpush1.bf16.msra.mxu0 0
        %990 = vmatprep.subr.bf16.mxu0 0
        %991 = vmatpush1.bf16.msra.mxu0 0
        %992 = vmatprep.subr.bf16.mxu0 0
        %993 = vmatpush1.bf16.msra.mxu0 0
        %994 = vmatprep.subr.bf16.mxu0 0
        %995 = vmatpush1.bf16.msra.mxu0 0
        %996 = vmatprep.subr.bf16.mxu0 0
        %997 = vmatpush1.bf16.msra.mxu0 0
        %998 = vmatprep.subr.bf16.mxu0 0
        %999 = vmatpush1.bf16.msra.mxu0 0
        %1000 = vmatprep.subr.bf16.mxu0 0
        %1001 = vmatpush1.bf16.msra.mxu0 0
        %1002 = vmatprep.subr.bf16.mxu0 0
        %1003 = vmatpush1.bf16.msra.mxu0 0
        %1004 = vmatprep.subr.bf16.mxu0 0
        %1005 = vmatpush1.bf16.msra.mxu0 0
        %1006 = vmatprep.subr.bf16.mxu0 0
        %1007 = vmatpush1.bf16.msra.mxu0 0
        %1008 = vmatprep.subr.bf16.mxu0 0
        %1009 = vmatpush1.bf16.msra.mxu0 0
        %1010 = vmatprep.subr.bf16.mxu0 0
        %1011 = vmatpush1.bf16.msra.mxu0 0
        %1012 = vmatprep.subr.bf16.mxu0 0
        %1013 = vmatpush1.bf16.msra.mxu0 0
        %1014 = vmatprep.mubr.bf16.mxu0 0
        %1015 = vmatmul.mubr.bf16.gmra.mrb[0].mxu0 %v935
        %v1016 = vpop.f32.mrb[0].mxu0
        %v1017 = vadd.f32 0.0, %v1016
        %v1018 = vpop.f32.mrb[0].mxu0
        %v1019 = vpop.f32.mrb[0].mxu0
        %v1020 = vadd.f32 0.0, %v1019
        %v1021 = vpop.f32.mrb[0].mxu0
        %1022 = vmatprep.mubr.bf16.mxu0 0
        %1023 = vmatmul.mubr.bf16.gmra.mrb[0].mxu0 %v938
        %v1024 = vpop.f32.mrb[0].mxu0
        %v1025 = vadd.f32 0.0, %v1024
        %v1026 = vpop.f32.mrb[0].mxu0
        %v1027 = vpop.f32.mrb[0].mxu0
        %v1028 = vadd.f32 0.0, %v1027
        %v1029 = vpop.f32.mrb[0].mxu0
        %1030 = vmatprep.mubr.bf16.mxu0 0
        %1031 = vmatmul.mubr.bf16.gmra.mrb[0].mxu0 %v941
        %v1032 = vpop.f32.mrb[0].mxu0
        %v1033 = vadd.f32 0.0, %v1032
        %v1034 = vpop.f32.mrb[0].mxu0
        %v1035 = vpop.f32.mrb[0].mxu0
        %v1036 = vadd.f32 0.0, %v1035
        %v1037 = vpop.f32.mrb[0].mxu0
        %1038 = vmatprep.mubr.bf16.mxu0 0
        %1039 = vmatmul.mubr.bf16.gmra.mrb[0].mxu0 %v944
        %v1040 = vpop.f32.mrb[0].mxu0
        %v1041 = vadd.f32 0.0, %v1040
        %v1042 = vpop.f32.mrb[0].mxu0
        %v1043 = vpop.f32.mrb[0].mxu0
        %v1044 = vadd.f32 0.0, %v1043
        %v1045 = vpop.f32.mrb[0].mxu0
        %1046 = vmatprep.mubr.bf16.mxu0 0
        %1047 = vmatmul.mubr.bf16.gmra.mrb[0].mxu0 %v947
        %v1048 = vpop.f32.mrb[0].mxu0
        %v1049 = vadd.f32 0.0, %v1048
        %v1050 = vpop.f32.mrb[0].mxu0
        %v1051 = vpop.f32.mrb[0].mxu0
        %v1052 = vadd.f32 0.0, %v1051
        %v1053 = vpop.f32.mrb[0].mxu0
        %1054 = vmatprep.mubr.bf16.mxu0 0
        %1055 = vmatmul.mubr.bf16.gmra.mrb[0].mxu0 %v950
        %v1056 = vpop.f32.mrb[0].mxu0
        %v1057 = vadd.f32 0.0, %v1056
        %v1058 = vpop.f32.mrb[0].mxu0
        %v1059 = vpop.f32.mrb[0].mxu0
        %v1060 = vadd.f32 0.0, %v1059
        %v1061 = vpop.f32.mrb[0].mxu0
        %1062 = vmatprep.mubr.bf16.mxu0 0
        %1063 = vmatmul.mubr.bf16.gmra.mrb[0].mxu0 %v953
        %v1064 = vpop.f32.mrb[0].mxu0
        %v1065 = vadd.f32 0.0, %v1064
        %v1066 = vpop.f32.mrb[0].mxu0
        %v1067 = vpop.f32.mrb[0].mxu0
        %v1068 = vadd.f32 0.0, %v1067
        %v1069 = vpop.f32.mrb[0].mxu0
        %1070 = vmatprep.mubr.bf16.mxu0 0
        %1071 = vmatmul.mubr.bf16.gmra.mrb[0].mxu0 %v956
        %v1072 = vpop.f32.mrb[0].mxu0
        %v1073 = vadd.f32 0.0, %v1072
        %v1074 = vpop.f32.mrb[0].mxu0
        %v1075 = vpop.f32.mrb[0].mxu0
        %v1076 = vadd.f32 0.0, %v1075
        %v1077 = vpop.f32.mrb[0].mxu0
        %1078 = vmatprep.mubr.bf16.mxu0 0
        %1079 = vmatmul.mubr.bf16.gmra.mrb[0].mxu0 %v959
        %v1080 = vpop.f32.mrb[0].mxu0
        %v1081 = vadd.f32 0.0, %v1080
        %v1082 = vpop.f32.mrb[0].mxu0
        %v1083 = vpop.f32.mrb[0].mxu0
        %v1084 = vadd.f32 0.0, %v1083
        %v1085 = vpop.f32.mrb[0].mxu0
        %1086 = vmatprep.mubr.bf16.mxu0 0
        %1087 = vmatmul.mubr.bf16.gmra.mrb[0].mxu0 %v962
        %v1088 = vpop.f32.mrb[0].mxu0
        %v1089 = vadd.f32 0.0, %v1088
        %v1090 = vpop.f32.mrb[0].mxu0
        %v1091 = vpop.f32.mrb[0].mxu0
        %v1092 = vadd.f32 0.0, %v1091
        %v1093 = vpop.f32.mrb[0].mxu0
        %1094 = vmatprep.mubr.bf16.mxu0 0
        %1095 = vmatmul.mubr.bf16.gmra.mrb[0].mxu0 %v965
        %v1096 = vpop.f32.mrb[0].mxu0
        %v1097 = vadd.f32 0.0, %v1096
        %v1098 = vpop.f32.mrb[0].mxu0
        %v1099 = vpop.f32.mrb[0].mxu0
        %v1100 = vadd.f32 0.0, %v1099
        %v1101 = vpop.f32.mrb[0].mxu0
        %1102 = vmatprep.mubr.bf16.mxu0 0
        %1103 = vmatmul.mubr.bf16.gmra.mrb[0].mxu0 %v968
        %v1104 = vpop.f32.mrb[0].mxu0
        %v1105 = vadd.f32 0.0, %v1104
        %v1106 = vpop.f32.mrb[0].mxu0
        %v1107 = vpop.f32.mrb[0].mxu0
        %v1108 = vadd.f32 0.0, %v1107
        %v1109 = vpop.f32.mrb[0].mxu0
        %1110 = vmatprep.mubr.bf16.mxu0 0
        %1111 = vmatmul.mubr.bf16.gmra.mrb[0].mxu0 %v971
        %v1112 = vpop.f32.mrb[0].mxu0
        %v1113 = vadd.f32 0.0, %v1112
        %v1114 = vpop.f32.mrb[0].mxu0
        %v1115 = vpop.f32.mrb[0].mxu0
        %v1116 = vadd.f32 0.0, %v1115
        %v1117 = vpop.f32.mrb[0].mxu0
        %1118 = vmatprep.mubr.bf16.mxu0 0
        %1119 = vmatmul.mubr.bf16.gmra.mrb[0].mxu0 %v974
        %v1120 = vpop.f32.mrb[0].mxu0
        %v1121 = vadd.f32 0.0, %v1120
        %v1122 = vpop.f32.mrb[0].mxu0
        %v1123 = vpop.f32.mrb[0].mxu0
        %v1124 = vadd.f32 0.0, %v1123
        %v1125 = vpop.f32.mrb[0].mxu0
        %1126 = vmatprep.mubr.bf16.mxu0 0
        %1127 = vmatmul.mubr.bf16.gmra.mrb[0].mxu0 %v977
        %v1128 = vpop.f32.mrb[0].mxu0
        %v1129 = vadd.f32 0.0, %v1128
        %v1130 = vpop.f32.mrb[0].mxu0
        %v1131 = vpop.f32.mrb[0].mxu0
        %v1132 = vadd.f32 0.0, %v1131
        %v1133 = vpop.f32.mrb[0].mxu0
        %1134 = vmatprep.mubr.bf16.mxu0 0
        %1135 = vmatmul.mubr.bf16.gmra.mrb[0].mxu0 %v980
        %v1136 = vpop.f32.mrb[0].mxu0
        %v1137 = vadd.f32 0.0, %v1136
        %v1138 = vpop.f32.mrb[0].mxu0
        %v1139 = vpop.f32.mrb[0].mxu0
        %v1140 = vadd.f32 0.0, %v1139
        %v1141 = vpop.f32.mrb[0].mxu0
        %1142 = vdwg.mxu0
        %v1143 = vadd.f32 %v744, %v1017
        %v1144 = vadd.f32 %v747, %v1020
        %v1145 = vadd.f32 %v752, %v1025
        %v1146 = vadd.f32 %v755, %v1028
        %v1147 = vadd.f32 %v760, %v1033
        %v1148 = vadd.f32 %v763, %v1036
        %v1149 = vadd.f32 %v768, %v1041
        %v1150 = vadd.f32 %v771, %v1044
        %v1151 = vadd.f32 %v776, %v1049
        %v1152 = vadd.f32 %v779, %v1052
        %v1153 = vadd.f32 %v784, %v1057
        %v1154 = vadd.f32 %v787, %v1060
        %v1155 = vadd.f32 %v792, %v1065
        %v1156 = vadd.f32 %v795, %v1068
        %v1157 = vadd.f32 %v800, %v1073
        %v1158 = vadd.f32 %v803, %v1076
        %v1159 = vadd.f32 %v808, %v1081
        %v1160 = vadd.f32 %v811, %v1084
        %v1161 = vadd.f32 %v816, %v1089
        %v1162 = vadd.f32 %v819, %v1092
        %v1163 = vadd.f32 %v824, %v1097
        %v1164 = vadd.f32 %v827, %v1100
        %v1165 = vadd.f32 %v832, %v1105
        %v1166 = vadd.f32 %v835, %v1108
        %v1167 = vadd.f32 %v840, %v1113
        %v1168 = vadd.f32 %v843, %v1116
        %v1169 = vadd.f32 %v848, %v1121
        %v1170 = vadd.f32 %v851, %v1124
        %v1171 = vadd.f32 %v856, %v1129
        %v1172 = vadd.f32 %v859, %v1132
        %v1173 = vadd.f32 %v864, %v1137
        %v1174 = vadd.f32 %v867, %v1140
        %v1175 = vld [vmem:[%s226] sm:$0xff]
        %v1176 = vld [vmem:[%s226 + $0x8] sm:$0xff]
        %v1177 = vld [vmem:[%s226 + $0x18] sm:$0xff]
        %v1178 = vld [vmem:[%s226 + $0x20] sm:$0xff]
        %v1179 = vld [vmem:[%s226 + $0x30] sm:$0xff]
        %v1180 = vld [vmem:[%s226 + $0x38] sm:$0xff]
        %v1181 = vld [vmem:[%s226 + $0x48] sm:$0xff]
        %v1182 = vld [vmem:[%s226 + $0x50] sm:$0xff]
        %v1183 = vld [vmem:[%s226 + $0x60] sm:$0xff]
        %v1184 = vld [vmem:[%s226 + $0x68] sm:$0xff]
        %v1185 = vld [vmem:[%s226 + $0x78] sm:$0xff]
        %v1186 = vld [vmem:[%s226 + $0x80] sm:$0xff]
        %v1187 = vld [vmem:[%s226 + $0x90] sm:$0xff]
        %v1188 = vld [vmem:[%s226 + $0x98] sm:$0xff]
        %v1189 = vld [vmem:[%s226 + $0xa8] sm:$0xff]
        %v1190 = vld [vmem:[%s226 + $0xb0] sm:$0xff]
        %v1191 = vld [vmem:[%s226 + $0xc0] sm:$0xff]
        %v1192 = vld [vmem:[%s226 + $0xc8] sm:$0xff]
        %v1193 = vld [vmem:[%s226 + $0xd8] sm:$0xff]
        %v1194 = vld [vmem:[%s226 + $0xe0] sm:$0xff]
        %v1195 = vld [vmem:[%s226 + $0xf0] sm:$0xff]
        %v1196 = vld [vmem:[%s226 + $0xf8] sm:$0xff]
        %v1197 = vld [vmem:[%s226 + $0x108] sm:$0xff]
        %v1198 = vld [vmem:[%s226 + $0x110] sm:$0xff]
        %v1199 = vld [vmem:[%s226 + $0x120] sm:$0xff]
        %v1200 = vld [vmem:[%s226 + $0x128] sm:$0xff]
        %v1201 = vld [vmem:[%s226 + $0x138] sm:$0xff]
        %v1202 = vld [vmem:[%s226 + $0x140] sm:$0xff]
        %v1203 = vld [vmem:[%s226 + $0x150] sm:$0xff]
        %v1204 = vld [vmem:[%s226 + $0x158] sm:$0xff]
        %v1205 = vld [vmem:[%s226 + $0x168] sm:$0xff]
        %v1206 = vld [vmem:[%s226 + $0x170] sm:$0xff]
        %v1207 = vld [vmem:[#allocation6 + $0x30] sm:$0xf]
        %v1208 = vld [vmem:[#allocation6 + $0x34] sm:$0xf]
        %v1209 = vld [vmem:[#allocation6 + $0x38] sm:$0xf]
        %v1210 = vld [vmem:[#allocation6 + $0x3c] sm:$0xf]
        %v1211 = vpack.c.bf16 %v1176, %v1175
        %v1212 = vpack.c.bf16 %v1178, %v1177
        %v1213 = vpack.c.bf16 %v1180, %v1179
        %v1214 = vpack.c.bf16 %v1182, %v1181
        %v1215 = vpack.c.bf16 %v1184, %v1183
        %v1216 = vpack.c.bf16 %v1186, %v1185
        %v1217 = vpack.c.bf16 %v1188, %v1187
        %v1218 = vpack.c.bf16 %v1190, %v1189
        %v1219 = vpack.c.bf16 %v1192, %v1191
        %v1220 = vpack.c.bf16 %v1194, %v1193
        %v1221 = vpack.c.bf16 %v1196, %v1195
        %v1222 = vpack.c.bf16 %v1198, %v1197
        %v1223 = vpack.c.bf16 %v1200, %v1199
        %v1224 = vpack.c.bf16 %v1202, %v1201
        %v1225 = vpack.c.bf16 %v1204, %v1203
        %v1226 = vpack.c.bf16 %v1206, %v1205
        %v1231 = vunpack.c.l.b16 %v1207
        %v1232 = vunpack.c.l.b16 %v1208
        %v1233 = vunpack.c.l.b16 %v1209
        %v1234 = vunpack.c.l.b16 %v1210
        %v1235 = vpack.c.b16 %v1232, %v1231
        %v1236 = vpack.c.b16 %v1234, %v1233
        %v1240 = vsel %vm217, %v1211, 0
        %v1243 = vsel %vm217, %v1212, 0
        %v1246 = vsel %vm217, %v1213, 0
        %v1249 = vsel %vm217, %v1214, 0
        %v1252 = vsel %vm217, %v1215, 0
        %v1255 = vsel %vm217, %v1216, 0
        %v1258 = vsel %vm217, %v1217, 0
        %v1261 = vsel %vm217, %v1218, 0
        %v1264 = vsel %vm217, %v1219, 0
        %v1267 = vsel %vm217, %v1220, 0
        %v1270 = vsel %vm217, %v1221, 0
        %v1273 = vsel %vm217, %v1222, 0
        %v1276 = vsel %vm217, %v1223, 0
        %v1279 = vsel %vm217, %v1224, 0
        %v1282 = vsel %vm217, %v1225, 0
        %v1285 = vsel %vm217, %v1226, 0
        %1287 = vmatprep.subr.bf16.mxu0 0
        %1288 = vmatpush1.bf16.msra.mxu0 %v1235
        %1289 = vmatprep.subr.bf16.mxu0 0
        %1290 = vmatpush1.bf16.msra.mxu0 %v1236
        %1291 = vmatprep.subr.bf16.mxu0 0
        %1292 = vmatpush1.bf16.msra.mxu0 0
        %1293 = vmatprep.subr.bf16.mxu0 0
        %1294 = vmatpush1.bf16.msra.mxu0 0
        %1295 = vmatprep.subr.bf16.mxu0 0
        %1296 = vmatpush1.bf16.msra.mxu0 0
        %1297 = vmatprep.subr.bf16.mxu0 0
        %1298 = vmatpush1.bf16.msra.mxu0 0
        %1299 = vmatprep.subr.bf16.mxu0 0
        %1300 = vmatpush1.bf16.msra.mxu0 0
        %1301 = vmatprep.subr.bf16.mxu0 0
        %1302 = vmatpush1.bf16.msra.mxu0 0
        %1303 = vmatprep.subr.bf16.mxu0 0
        %1304 = vmatpush1.bf16.msra.mxu0 0
        %1305 = vmatprep.subr.bf16.mxu0 0
        %1306 = vmatpush1.bf16.msra.mxu0 0
        %1307 = vmatprep.subr.bf16.mxu0 0
        %1308 = vmatpush1.bf16.msra.mxu0 0
        %1309 = vmatprep.subr.bf16.mxu0 0
        %1310 = vmatpush1.bf16.msra.mxu0 0
        %1311 = vmatprep.subr.bf16.mxu0 0
        %1312 = vmatpush1.bf16.msra.mxu0 0
        %1313 = vmatprep.subr.bf16.mxu0 0
        %1314 = vmatpush1.bf16.msra.mxu0 0
        %1315 = vmatprep.subr.bf16.mxu0 0
        %1316 = vmatpush1.bf16.msra.mxu0 0
        %1317 = vmatprep.subr.bf16.mxu0 0
        %1318 = vmatpush1.bf16.msra.mxu0 0
        %1319 = vmatprep.mubr.bf16.mxu0 0
        %1320 = vmatmul.mubr.bf16.gmra.mrb[0].mxu0 %v1240
        %v1321 = vpop.f32.mrb[0].mxu0
        %v1322 = vadd.f32 0.0, %v1321
        %v1323 = vpop.f32.mrb[0].mxu0
        %v1324 = vpop.f32.mrb[0].mxu0
        %v1325 = vadd.f32 0.0, %v1324
        %v1326 = vpop.f32.mrb[0].mxu0
        %1327 = vmatprep.mubr.bf16.mxu0 0
        %1328 = vmatmul.mubr.bf16.gmra.mrb[0].mxu0 %v1243
        %v1329 = vpop.f32.mrb[0].mxu0
        %v1330 = vadd.f32 0.0, %v1329
        %v1331 = vpop.f32.mrb[0].mxu0
        %v1332 = vpop.f32.mrb[0].mxu0
        %v1333 = vadd.f32 0.0, %v1332
        %v1334 = vpop.f32.mrb[0].mxu0
        %1335 = vmatprep.mubr.bf16.mxu0 0
        %1336 = vmatmul.mubr.bf16.gmra.mrb[0].mxu0 %v1246
        %v1337 = vpop.f32.mrb[0].mxu0
        %v1338 = vadd.f32 0.0, %v1337
        %v1339 = vpop.f32.mrb[0].mxu0
        %v1340 = vpop.f32.mrb[0].mxu0
        %v1341 = vadd.f32 0.0, %v1340
        %v1342 = vpop.f32.mrb[0].mxu0
        %1343 = vmatprep.mubr.bf16.mxu0 0
        %1344 = vmatmul.mubr.bf16.gmra.mrb[0].mxu0 %v1249
        %v1345 = vpop.f32.mrb[0].mxu0
        %v1346 = vadd.f32 0.0, %v1345
        %v1347 = vpop.f32.mrb[0].mxu0
        %v1348 = vpop.f32.mrb[0].mxu0
        %v1349 = vadd.f32 0.0, %v1348
        %v1350 = vpop.f32.mrb[0].mxu0
        %1351 = vmatprep.mubr.bf16.mxu0 0
        %1352 = vmatmul.mubr.bf16.gmra.mrb[0].mxu0 %v1252
        %v1353 = vpop.f32.mrb[0].mxu0
        %v1354 = vadd.f32 0.0, %v1353
        %v1355 = vpop.f32.mrb[0].mxu0
        %v1356 = vpop.f32.mrb[0].mxu0
        %v1357 = vadd.f32 0.0, %v1356
        %v1358 = vpop.f32.mrb[0].mxu0
        %1359 = vmatprep.mubr.bf16.mxu0 0
        %1360 = vmatmul.mubr.bf16.gmra.mrb[0].mxu0 %v1255
        %v1361 = vpop.f32.mrb[0].mxu0
        %v1362 = vadd.f32 0.0, %v1361
        %v1363 = vpop.f32.mrb[0].mxu0
        %v1364 = vpop.f32.mrb[0].mxu0
        %v1365 = vadd.f32 0.0, %v1364
        %v1366 = vpop.f32.mrb[0].mxu0
        %1367 = vmatprep.mubr.bf16.mxu0 0
        %1368 = vmatmul.mubr.bf16.gmra.mrb[0].mxu0 %v1258
        %v1369 = vpop.f32.mrb[0].mxu0
        %v1370 = vadd.f32 0.0, %v1369
        %v1371 = vpop.f32.mrb[0].mxu0
        %v1372 = vpop.f32.mrb[0].mxu0
        %v1373 = vadd.f32 0.0, %v1372
        %v1374 = vpop.f32.mrb[0].mxu0
        %1375 = vmatprep.mubr.bf16.mxu0 0
        %1376 = vmatmul.mubr.bf16.gmra.mrb[0].mxu0 %v1261
        %v1377 = vpop.f32.mrb[0].mxu0
        %v1378 = vadd.f32 0.0, %v1377
        %v1379 = vpop.f32.mrb[0].mxu0
        %v1380 = vpop.f32.mrb[0].mxu0
        %v1381 = vadd.f32 0.0, %v1380
        %v1382 = vpop.f32.mrb[0].mxu0
        %1383 = vmatprep.mubr.bf16.mxu0 0
        %1384 = vmatmul.mubr.bf16.gmra.mrb[0].mxu0 %v1264
        %v1385 = vpop.f32.mrb[0].mxu0
        %v1386 = vadd.f32 0.0, %v1385
        %v1387 = vpop.f32.mrb[0].mxu0
        %v1388 = vpop.f32.mrb[0].mxu0
        %v1389 = vadd.f32 0.0, %v1388
        %v1390 = vpop.f32.mrb[0].mxu0
        %1391 = vmatprep.mubr.bf16.mxu0 0
        %1392 = vmatmul.mubr.bf16.gmra.mrb[0].mxu0 %v1267
        %v1393 = vpop.f32.mrb[0].mxu0
        %v1394 = vadd.f32 0.0, %v1393
        %v1395 = vpop.f32.mrb[0].mxu0
        %v1396 = vpop.f32.mrb[0].mxu0
        %v1397 = vadd.f32 0.0, %v1396
        %v1398 = vpop.f32.mrb[0].mxu0
        %1399 = vmatprep.mubr.bf16.mxu0 0
        %1400 = vmatmul.mubr.bf16.gmra.mrb[0].mxu0 %v1270
        %v1401 = vpop.f32.mrb[0].mxu0
        %v1402 = vadd.f32 0.0, %v1401
        %v1403 = vpop.f32.mrb[0].mxu0
        %v1404 = vpop.f32.mrb[0].mxu0
        %v1405 = vadd.f32 0.0, %v1404
        %v1406 = vpop.f32.mrb[0].mxu0
        %1407 = vmatprep.mubr.bf16.mxu0 0
        %1408 = vmatmul.mubr.bf16.gmra.mrb[0].mxu0 %v1273
        %v1409 = vpop.f32.mrb[0].mxu0
        %v1410 = vadd.f32 0.0, %v1409
        %v1411 = vpop.f32.mrb[0].mxu0
        %v1412 = vpop.f32.mrb[0].mxu0
        %v1413 = vadd.f32 0.0, %v1412
        %v1414 = vpop.f32.mrb[0].mxu0
        %1415 = vmatprep.mubr.bf16.mxu0 0
        %1416 = vmatmul.mubr.bf16.gmra.mrb[0].mxu0 %v1276
        %v1417 = vpop.f32.mrb[0].mxu0
        %v1418 = vadd.f32 0.0, %v1417
        %v1419 = vpop.f32.mrb[0].mxu0
        %v1420 = vpop.f32.mrb[0].mxu0
        %v1421 = vadd.f32 0.0, %v1420
        %v1422 = vpop.f32.mrb[0].mxu0
        %1423 = vmatprep.mubr.bf16.mxu0 0
        %1424 = vmatmul.mubr.bf16.gmra.mrb[0].mxu0 %v1279
        %v1425 = vpop.f32.mrb[0].mxu0
        %v1426 = vadd.f32 0.0, %v1425
        %v1427 = vpop.f32.mrb[0].mxu0
        %v1428 = vpop.f32.mrb[0].mxu0
        %v1429 = vadd.f32 0.0, %v1428
        %v1430 = vpop.f32.mrb[0].mxu0
        %1431 = vmatprep.mubr.bf16.mxu0 0
        %1432 = vmatmul.mubr.bf16.gmra.mrb[0].mxu0 %v1282
        %v1433 = vpop.f32.mrb[0].mxu0
        %v1434 = vadd.f32 0.0, %v1433
        %v1435 = vpop.f32.mrb[0].mxu0
        %v1436 = vpop.f32.mrb[0].mxu0
        %v1437 = vadd.f32 0.0, %v1436
        %v1438 = vpop.f32.mrb[0].mxu0
        %1439 = vmatprep.mubr.bf16.mxu0 0
        %1440 = vmatmul.mubr.bf16.gmra.mrb[0].mxu0 %v1285
        %v1441 = vpop.f32.mrb[0].mxu0
        %v1442 = vadd.f32 0.0, %v1441
        %v1443 = vpop.f32.mrb[0].mxu0
        %v1444 = vpop.f32.mrb[0].mxu0
        %v1445 = vadd.f32 0.0, %v1444
        %v1446 = vpop.f32.mrb[0].mxu0
        %1447 = vdwg.mxu0
        %v1448 = vadd.f32 %v1143, %v1322
        %v1449 = vadd.f32 %v1144, %v1325
        %v1450 = vadd.f32 %v1145, %v1330
        %v1451 = vadd.f32 %v1146, %v1333
        %v1452 = vadd.f32 %v1147, %v1338
        %v1453 = vadd.f32 %v1148, %v1341
        %v1454 = vadd.f32 %v1149, %v1346
        %v1455 = vadd.f32 %v1150, %v1349
        %v1456 = vadd.f32 %v1151, %v1354
        %v1457 = vadd.f32 %v1152, %v1357
        %v1458 = vadd.f32 %v1153, %v1362
        %v1459 = vadd.f32 %v1154, %v1365
        %v1460 = vadd.f32 %v1155, %v1370
        %v1461 = vadd.f32 %v1156, %v1373
        %v1462 = vadd.f32 %v1157, %v1378
        %v1463 = vadd.f32 %v1158, %v1381
        %v1464 = vadd.f32 %v1159, %v1386
        %v1465 = vadd.f32 %v1160, %v1389
        %v1466 = vadd.f32 %v1161, %v1394
        %v1467 = vadd.f32 %v1162, %v1397
        %v1468 = vadd.f32 %v1163, %v1402
        %v1469 = vadd.f32 %v1164, %v1405
        %v1470 = vadd.f32 %v1165, %v1410
        %v1471 = vadd.f32 %v1166, %v1413
        %v1472 = vadd.f32 %v1167, %v1418
        %v1473 = vadd.f32 %v1168, %v1421
        %v1474 = vadd.f32 %v1169, %v1426
        %v1475 = vadd.f32 %v1170, %v1429
        %v1476 = vadd.f32 %v1171, %v1434
        %v1477 = vadd.f32 %v1172, %v1437
        %v1478 = vadd.f32 %v1173, %v1442
        %v1479 = vadd.f32 %v1174, %v1445
        %v1480 = vld [vmem:[%s226 + $0x1] sm:$0xff]
        %v1481 = vld [vmem:[%s226 + $0x9] sm:$0xff]
        %v1482 = vld [vmem:[%s226 + $0x19] sm:$0xff]
        %v1483 = vld [vmem:[%s226 + $0x21] sm:$0xff]
        %v1484 = vld [vmem:[%s226 + $0x31] sm:$0xff]
        %v1485 = vld [vmem:[%s226 + $0x39] sm:$0xff]
        %v1486 = vld [vmem:[%s226 + $0x49] sm:$0xff]
        %v1487 = vld [vmem:[%s226 + $0x51] sm:$0xff]
        %v1488 = vld [vmem:[%s226 + $0x61] sm:$0xff]
        %v1489 = vld [vmem:[%s226 + $0x69] sm:$0xff]
        %v1490 = vld [vmem:[%s226 + $0x79] sm:$0xff]
        %v1491 = vld [vmem:[%s226 + $0x81] sm:$0xff]
        %v1492 = vld [vmem:[%s226 + $0x91] sm:$0xff]
        %v1493 = vld [vmem:[%s226 + $0x99] sm:$0xff]
        %v1494 = vld [vmem:[%s226 + $0xa9] sm:$0xff]
        %v1495 = vld [vmem:[%s226 + $0xb1] sm:$0xff]
        %v1496 = vld [vmem:[%s226 + $0xc1] sm:$0xff]
        %v1497 = vld [vmem:[%s226 + $0xc9] sm:$0xff]
        %v1498 = vld [vmem:[%s226 + $0xd9] sm:$0xff]
        %v1499 = vld [vmem:[%s226 + $0xe1] sm:$0xff]
        %v1500 = vld [vmem:[%s226 + $0xf1] sm:$0xff]
        %v1501 = vld [vmem:[%s226 + $0xf9] sm:$0xff]
        %v1502 = vld [vmem:[%s226 + $0x109] sm:$0xff]
        %v1503 = vld [vmem:[%s226 + $0x111] sm:$0xff]
        %v1504 = vld [vmem:[%s226 + $0x121] sm:$0xff]
        %v1505 = vld [vmem:[%s226 + $0x129] sm:$0xff]
        %v1506 = vld [vmem:[%s226 + $0x139] sm:$0xff]
        %v1507 = vld [vmem:[%s226 + $0x141] sm:$0xff]
        %v1508 = vld [vmem:[%s226 + $0x151] sm:$0xff]
        %v1509 = vld [vmem:[%s226 + $0x159] sm:$0xff]
        %v1510 = vld [vmem:[%s226 + $0x169] sm:$0xff]
        %v1511 = vld [vmem:[%s226 + $0x171] sm:$0xff]
        %v1512 = vld [vmem:[#allocation6 + $0x40] sm:$0xf]
        %v1513 = vld [vmem:[#allocation6 + $0x44] sm:$0xf]
        %v1514 = vld [vmem:[#allocation6 + $0x48] sm:$0xf]
        %v1515 = vld [vmem:[#allocation6 + $0x4c] sm:$0xf]
        %v1516 = vpack.c.bf16 %v1481, %v1480
        %v1517 = vpack.c.bf16 %v1483, %v1482
        %v1518 = vpack.c.bf16 %v1485, %v1484
        %v1519 = vpack.c.bf16 %v1487, %v1486
        %v1520 = vpack.c.bf16 %v1489, %v1488
        %v1521 = vpack.c.bf16 %v1491, %v1490
        %v1522 = vpack.c.bf16 %v1493, %v1492
        %v1523 = vpack.c.bf16 %v1495, %v1494
        %v1524 = vpack.c.bf16 %v1497, %v1496
        %v1525 = vpack.c.bf16 %v1499, %v1498
        %v1526 = vpack.c.bf16 %v1501, %v1500
        %v1527 = vpack.c.bf16 %v1503, %v1502
        %v1528 = vpack.c.bf16 %v1505, %v1504
        %v1529 = vpack.c.bf16 %v1507, %v1506
        %v1530 = vpack.c.bf16 %v1509, %v1508
        %v1531 = vpack.c.bf16 %v1511, %v1510
        %v1536 = vunpack.c.l.b16 %v1512
        %v1537 = vunpack.c.l.b16 %v1513
        %v1538 = vunpack.c.l.b16 %v1514
        %v1539 = vunpack.c.l.b16 %v1515
        %v1540 = vpack.c.b16 %v1537, %v1536
        %v1541 = vpack.c.b16 %v1539, %v1538
        %v1545 = vsel %vm217, %v1516, 0
        %v1548 = vsel %vm217, %v1517, 0
        %v1551 = vsel %vm217, %v1518, 0
        %v1554 = vsel %vm217, %v1519, 0
        %v1557 = vsel %vm217, %v1520, 0
        %v1560 = vsel %vm217, %v1521, 0
        %v1563 = vsel %vm217, %v1522, 0
        %v1566 = vsel %vm217, %v1523, 0
        %v1569 = vsel %vm217, %v1524, 0
        %v1572 = vsel %vm217, %v1525, 0
        %v1575 = vsel %vm217, %v1526, 0
        %v1578 = vsel %vm217, %v1527, 0
        %v1581 = vsel %vm217, %v1528, 0
        %v1584 = vsel %vm217, %v1529, 0
        %v1587 = vsel %vm217, %v1530, 0
        %v1590 = vsel %vm217, %v1531, 0
        %1592 = vmatprep.subr.bf16.mxu0 0
        %1593 = vmatpush1.bf16.msra.mxu0 %v1540
        %1594 = vmatprep.subr.bf16.mxu0 0
        %1595 = vmatpush1.bf16.msra.mxu0 %v1541
        %1596 = vmatprep.subr.bf16.mxu0 0
        %1597 = vmatpush1.bf16.msra.mxu0 0
        %1598 = vmatprep.subr.bf16.mxu0 0
        %1599 = vmatpush1.bf16.msra.mxu0 0
        %1600 = vmatprep.subr.bf16.mxu0 0
        %1601 = vmatpush1.bf16.msra.mxu0 0
        %1602 = vmatprep.subr.bf16.mxu0 0
        %1603 = vmatpush1.bf16.msra.mxu0 0
        %1604 = vmatprep.subr.bf16.mxu0 0
        %1605 = vmatpush1.bf16.msra.mxu0 0
        %1606 = vmatprep.subr.bf16.mxu0 0
        %1607 = vmatpush1.bf16.msra.mxu0 0
        %1608 = vmatprep.subr.bf16.mxu0 0
        %1609 = vmatpush1.bf16.msra.mxu0 0
        %1610 = vmatprep.subr.bf16.mxu0 0
        %1611 = vmatpush1.bf16.msra.mxu0 0
        %1612 = vmatprep.subr.bf16.mxu0 0
        %1613 = vmatpush1.bf16.msra.mxu0 0
        %1614 = vmatprep.subr.bf16.mxu0 0
        %1615 = vmatpush1.bf16.msra.mxu0 0
        %1616 = vmatprep.subr.bf16.mxu0 0
        %1617 = vmatpush1.bf16.msra.mxu0 0
        %1618 = vmatprep.subr.bf16.mxu0 0
        %1619 = vmatpush1.bf16.msra.mxu0 0
        %1620 = vmatprep.subr.bf16.mxu0 0
        %1621 = vmatpush1.bf16.msra.mxu0 0
        %1622 = vmatprep.subr.bf16.mxu0 0
        %1623 = vmatpush1.bf16.msra.mxu0 0
        %1624 = vmatprep.mubr.bf16.mxu0 0
        %1625 = vmatmul.mubr.bf16.gmra.mrb[0].mxu0 %v1545
        %v1626 = vpop.f32.mrb[0].mxu0
        %v1627 = vadd.f32 0.0, %v1626
        %v1628 = vpop.f32.mrb[0].mxu0
        %v1629 = vpop.f32.mrb[0].mxu0
        %v1630 = vadd.f32 0.0, %v1629
        %v1631 = vpop.f32.mrb[0].mxu0
        %1632 = vmatprep.mubr.bf16.mxu0 0
        %1633 = vmatmul.mubr.bf16.gmra.mrb[0].mxu0 %v1548
        %v1634 = vpop.f32.mrb[0].mxu0
        %v1635 = vadd.f32 0.0, %v1634
        %v1636 = vpop.f32.mrb[0].mxu0
        %v1637 = vpop.f32.mrb[0].mxu0
        %v1638 = vadd.f32 0.0, %v1637
        %v1639 = vpop.f32.mrb[0].mxu0
        %1640 = vmatprep.mubr.bf16.mxu0 0
        %1641 = vmatmul.mubr.bf16.gmra.mrb[0].mxu0 %v1551
        %v1642 = vpop.f32.mrb[0].mxu0
        %v1643 = vadd.f32 0.0, %v1642
        %v1644 = vpop.f32.mrb[0].mxu0
        %v1645 = vpop.f32.mrb[0].mxu0
        %v1646 = vadd.f32 0.0, %v1645
        %v1647 = vpop.f32.mrb[0].mxu0
        %1648 = vmatprep.mubr.bf16.mxu0 0
        %1649 = vmatmul.mubr.bf16.gmra.mrb[0].mxu0 %v1554
        %v1650 = vpop.f32.mrb[0].mxu0
        %v1651 = vadd.f32 0.0, %v1650
        %v1652 = vpop.f32.mrb[0].mxu0
        %v1653 = vpop.f32.mrb[0].mxu0
        %v1654 = vadd.f32 0.0, %v1653
        %v1655 = vpop.f32.mrb[0].mxu0
        %1656 = vmatprep.mubr.bf16.mxu0 0
        %1657 = vmatmul.mubr.bf16.gmra.mrb[0].mxu0 %v1557
        %v1658 = vpop.f32.mrb[0].mxu0
        %v1659 = vadd.f32 0.0, %v1658
        %v1660 = vpop.f32.mrb[0].mxu0
        %v1661 = vpop.f32.mrb[0].mxu0
        %v1662 = vadd.f32 0.0, %v1661
        %v1663 = vpop.f32.mrb[0].mxu0
        %1664 = vmatprep.mubr.bf16.mxu0 0
        %1665 = vmatmul.mubr.bf16.gmra.mrb[0].mxu0 %v1560
        %v1666 = vpop.f32.mrb[0].mxu0
        %v1667 = vadd.f32 0.0, %v1666
        %v1668 = vpop.f32.mrb[0].mxu0
        %v1669 = vpop.f32.mrb[0].mxu0
        %v1670 = vadd.f32 0.0, %v1669
        %v1671 = vpop.f32.mrb[0].mxu0
        %1672 = vmatprep.mubr.bf16.mxu0 0
        %1673 = vmatmul.mubr.bf16.gmra.mrb[0].mxu0 %v1563
        %v1674 = vpop.f32.mrb[0].mxu0
        %v1675 = vadd.f32 0.0, %v1674
        %v1676 = vpop.f32.mrb[0].mxu0
        %v1677 = vpop.f32.mrb[0].mxu0
        %v1678 = vadd.f32 0.0, %v1677
        %v1679 = vpop.f32.mrb[0].mxu0
        %1680 = vmatprep.mubr.bf16.mxu0 0
        %1681 = vmatmul.mubr.bf16.gmra.mrb[0].mxu0 %v1566
        %v1682 = vpop.f32.mrb[0].mxu0
        %v1683 = vadd.f32 0.0, %v1682
        %v1684 = vpop.f32.mrb[0].mxu0
        %v1685 = vpop.f32.mrb[0].mxu0
        %v1686 = vadd.f32 0.0, %v1685
        %v1687 = vpop.f32.mrb[0].mxu0
        %1688 = vmatprep.mubr.bf16.mxu0 0
        %1689 = vmatmul.mubr.bf16.gmra.mrb[0].mxu0 %v1569
        %v1690 = vpop.f32.mrb[0].mxu0
        %v1691 = vadd.f32 0.0, %v1690
        %v1692 = vpop.f32.mrb[0].mxu0
        %v1693 = vpop.f32.mrb[0].mxu0
        %v1694 = vadd.f32 0.0, %v1693
        %v1695 = vpop.f32.mrb[0].mxu0
        %1696 = vmatprep.mubr.bf16.mxu0 0
        %1697 = vmatmul.mubr.bf16.gmra.mrb[0].mxu0 %v1572
        %v1698 = vpop.f32.mrb[0].mxu0
        %v1699 = vadd.f32 0.0, %v1698
        %v1700 = vpop.f32.mrb[0].mxu0
        %v1701 = vpop.f32.mrb[0].mxu0
        %v1702 = vadd.f32 0.0, %v1701
        %v1703 = vpop.f32.mrb[0].mxu0
        %1704 = vmatprep.mubr.bf16.mxu0 0
        %1705 = vmatmul.mubr.bf16.gmra.mrb[0].mxu0 %v1575
        %v1706 = vpop.f32.mrb[0].mxu0
        %v1707 = vadd.f32 0.0, %v1706
        %v1708 = vpop.f32.mrb[0].mxu0
        %v1709 = vpop.f32.mrb[0].mxu0
        %v1710 = vadd.f32 0.0, %v1709
        %v1711 = vpop.f32.mrb[0].mxu0
        %1712 = vmatprep.mubr.bf16.mxu0 0
        %1713 = vmatmul.mubr.bf16.gmra.mrb[0].mxu0 %v1578
        %v1714 = vpop.f32.mrb[0].mxu0
        %v1715 = vadd.f32 0.0, %v1714
        %v1716 = vpop.f32.mrb[0].mxu0
        %v1717 = vpop.f32.mrb[0].mxu0
        %v1718 = vadd.f32 0.0, %v1717
        %v1719 = vpop.f32.mrb[0].mxu0
        %1720 = vmatprep.mubr.bf16.mxu0 0
        %1721 = vmatmul.mubr.bf16.gmra.mrb[0].mxu0 %v1581
        %v1722 = vpop.f32.mrb[0].mxu0
        %v1723 = vadd.f32 0.0, %v1722
        %v1724 = vpop.f32.mrb[0].mxu0
        %v1725 = vpop.f32.mrb[0].mxu0
        %v1726 = vadd.f32 0.0, %v1725
        %v1727 = vpop.f32.mrb[0].mxu0
        %1728 = vmatprep.mubr.bf16.mxu0 0
        %1729 = vmatmul.mubr.bf16.gmra.mrb[0].mxu0 %v1584
        %v1730 = vpop.f32.mrb[0].mxu0
        %v1731 = vadd.f32 0.0, %v1730
        %v1732 = vpop.f32.mrb[0].mxu0
        %v1733 = vpop.f32.mrb[0].mxu0
        %v1734 = vadd.f32 0.0, %v1733
        %v1735 = vpop.f32.mrb[0].mxu0
        %1736 = vmatprep.mubr.bf16.mxu0 0
        %1737 = vmatmul.mubr.bf16.gmra.mrb[0].mxu0 %v1587
        %v1738 = vpop.f32.mrb[0].mxu0
        %v1739 = vadd.f32 0.0, %v1738
        %v1740 = vpop.f32.mrb[0].mxu0
        %v1741 = vpop.f32.mrb[0].mxu0
        %v1742 = vadd.f32 0.0, %v1741
        %v1743 = vpop.f32.mrb[0].mxu0
        %1744 = vmatprep.mubr.bf16.mxu0 0
        %1745 = vmatmul.mubr.bf16.gmra.mrb[0].mxu0 %v1590
        %v1746 = vpop.f32.mrb[0].mxu0
        %v1747 = vadd.f32 0.0, %v1746
        %v1748 = vpop.f32.mrb[0].mxu0
        %v1749 = vpop.f32.mrb[0].mxu0
        %v1750 = vadd.f32 0.0, %v1749
        %v1751 = vpop.f32.mrb[0].mxu0
        %1752 = vdwg.mxu0
        %v1753 = vadd.f32 %v1448, %v1627
        %v1754 = vadd.f32 %v1449, %v1630
        %v1755 = vadd.f32 %v1450, %v1635
        %v1756 = vadd.f32 %v1451, %v1638
        %v1757 = vadd.f32 %v1452, %v1643
        %v1758 = vadd.f32 %v1453, %v1646
        %v1759 = vadd.f32 %v1454, %v1651
        %v1760 = vadd.f32 %v1455, %v1654
        %v1761 = vadd.f32 %v1456, %v1659
        %v1762 = vadd.f32 %v1457, %v1662
        %v1763 = vadd.f32 %v1458, %v1667
        %v1764 = vadd.f32 %v1459, %v1670
        %v1765 = vadd.f32 %v1460, %v1675
        %v1766 = vadd.f32 %v1461, %v1678
        %v1767 = vadd.f32 %v1462, %v1683
        %v1768 = vadd.f32 %v1463, %v1686
        %v1769 = vadd.f32 %v1464, %v1691
        %v1770 = vadd.f32 %v1465, %v1694
        %v1771 = vadd.f32 %v1466, %v1699
        %v1772 = vadd.f32 %v1467, %v1702
        %v1773 = vadd.f32 %v1468, %v1707
        %v1774 = vadd.f32 %v1469, %v1710
        %v1775 = vadd.f32 %v1470, %v1715
        %v1776 = vadd.f32 %v1471, %v1718
        %v1777 = vadd.f32 %v1472, %v1723
        %v1778 = vadd.f32 %v1473, %v1726
        %v1779 = vadd.f32 %v1474, %v1731
        %v1780 = vadd.f32 %v1475, %v1734
        %v1781 = vadd.f32 %v1476, %v1739
        %v1782 = vadd.f32 %v1477, %v1742
        %v1783 = vadd.f32 %v1478, %v1747
        %v1784 = vadd.f32 %v1479, %v1750
        %v1785 = vld [vmem:[%s226 + $0x2] sm:$0xff]
        %v1786 = vld [vmem:[%s226 + $0xa] sm:$0xff]
        %v1787 = vld [vmem:[%s226 + $0x1a] sm:$0xff]
        %v1788 = vld [vmem:[%s226 + $0x22] sm:$0xff]
        %v1789 = vld [vmem:[%s226 + $0x32] sm:$0xff]
        %v1790 = vld [vmem:[%s226 + $0x3a] sm:$0xff]
        %v1791 = vld [vmem:[%s226 + $0x4a] sm:$0xff]
        %v1792 = vld [vmem:[%s226 + $0x52] sm:$0xff]
        %v1793 = vld [vmem:[%s226 + $0x62] sm:$0xff]
        %v1794 = vld [vmem:[%s226 + $0x6a] sm:$0xff]
        %v1795 = vld [vmem:[%s226 + $0x7a] sm:$0xff]
        %v1796 = vld [vmem:[%s226 + $0x82] sm:$0xff]
        %v1797 = vld [vmem:[%s226 + $0x92] sm:$0xff]
        %v1798 = vld [vmem:[%s226 + $0x9a] sm:$0xff]
        %v1799 = vld [vmem:[%s226 + $0xaa] sm:$0xff]
        %v1800 = vld [vmem:[%s226 + $0xb2] sm:$0xff]
        %v1801 = vld [vmem:[%s226 + $0xc2] sm:$0xff]
        %v1802 = vld [vmem:[%s226 + $0xca] sm:$0xff]
        %v1803 = vld [vmem:[%s226 + $0xda] sm:$0xff]
        %v1804 = vld [vmem:[%s226 + $0xe2] sm:$0xff]
        %v1805 = vld [vmem:[%s226 + $0xf2] sm:$0xff]
        %v1806 = vld [vmem:[%s226 + $0xfa] sm:$0xff]
        %v1807 = vld [vmem:[%s226 + $0x10a] sm:$0xff]
        %v1808 = vld [vmem:[%s226 + $0x112] sm:$0xff]
        %v1809 = vld [vmem:[%s226 + $0x122] sm:$0xff]
        %v1810 = vld [vmem:[%s226 + $0x12a] sm:$0xff]
        %v1811 = vld [vmem:[%s226 + $0x13a] sm:$0xff]
        %v1812 = vld [vmem:[%s226 + $0x142] sm:$0xff]
        %v1813 = vld [vmem:[%s226 + $0x152] sm:$0xff]
        %v1814 = vld [vmem:[%s226 + $0x15a] sm:$0xff]
        %v1815 = vld [vmem:[%s226 + $0x16a] sm:$0xff]
        %v1816 = vld [vmem:[%s226 + $0x172] sm:$0xff]
        %v1817 = vld [vmem:[#allocation6 + $0x50] sm:$0xf]
        %v1818 = vld [vmem:[#allocation6 + $0x54] sm:$0xf]
        %v1819 = vld [vmem:[#allocation6 + $0x58] sm:$0xf]
        %v1820 = vld [vmem:[#allocation6 + $0x5c] sm:$0xf]
        %v1821 = vpack.c.bf16 %v1786, %v1785
        %v1822 = vpack.c.bf16 %v1788, %v1787
        %v1823 = vpack.c.bf16 %v1790, %v1789
        %v1824 = vpack.c.bf16 %v1792, %v1791
        %v1825 = vpack.c.bf16 %v1794, %v1793
        %v1826 = vpack.c.bf16 %v1796, %v1795
        %v1827 = vpack.c.bf16 %v1798, %v1797
        %v1828 = vpack.c.bf16 %v1800, %v1799
        %v1829 = vpack.c.bf16 %v1802, %v1801
        %v1830 = vpack.c.bf16 %v1804, %v1803
        %v1831 = vpack.c.bf16 %v1806, %v1805
        %v1832 = vpack.c.bf16 %v1808, %v1807
        %v1833 = vpack.c.bf16 %v1810, %v1809
        %v1834 = vpack.c.bf16 %v1812, %v1811
        %v1835 = vpack.c.bf16 %v1814, %v1813
        %v1836 = vpack.c.bf16 %v1816, %v1815
        %v1841 = vunpack.c.l.b16 %v1817
        %v1842 = vunpack.c.l.b16 %v1818
        %v1843 = vunpack.c.l.b16 %v1819
        %v1844 = vunpack.c.l.b16 %v1820
        %v1845 = vpack.c.b16 %v1842, %v1841
        %v1846 = vpack.c.b16 %v1844, %v1843
        %v1850 = vsel %vm217, %v1821, 0
        %v1853 = vsel %vm217, %v1822, 0
        %v1856 = vsel %vm217, %v1823, 0
        %v1859 = vsel %vm217, %v1824, 0
        %v1862 = vsel %vm217, %v1825, 0
        %v1865 = vsel %vm217, %v1826, 0
        %v1868 = vsel %vm217, %v1827, 0
        %v1871 = vsel %vm217, %v1828, 0
        %v1874 = vsel %vm217, %v1829, 0
        %v1877 = vsel %vm217, %v1830, 0
        %v1880 = vsel %vm217, %v1831, 0
        %v1883 = vsel %vm217, %v1832, 0
        %v1886 = vsel %vm217, %v1833, 0
        %v1889 = vsel %vm217, %v1834, 0
        %v1892 = vsel %vm217, %v1835, 0
        %v1895 = vsel %vm217, %v1836, 0
        %1897 = vmatprep.subr.bf16.mxu0 0
        %1898 = vmatpush1.bf16.msra.mxu0 %v1845
        %1899 = vmatprep.subr.bf16.mxu0 0
        %1900 = vmatpush1.bf16.msra.mxu0 %v1846
        %1901 = vmatprep.subr.bf16.mxu0 0
        %1902 = vmatpush1.bf16.msra.mxu0 0
        %1903 = vmatprep.subr.bf16.mxu0 0
        %1904 = vmatpush1.bf16.msra.mxu0 0
        %1905 = vmatprep.subr.bf16.mxu0 0
        %1906 = vmatpush1.bf16.msra.mxu0 0
        %1907 = vmatprep.subr.bf16.mxu0 0
        %1908 = vmatpush1.bf16.msra.mxu0 0
        %1909 = vmatprep.subr.bf16.mxu0 0
        %1910 = vmatpush1.bf16.msra.mxu0 0
        %1911 = vmatprep.subr.bf16.mxu0 0
        %1912 = vmatpush1.bf16.msra.mxu0 0
        %1913 = vmatprep.subr.bf16.mxu0 0
        %1914 = vmatpush1.bf16.msra.mxu0 0
        %1915 = vmatprep.subr.bf16.mxu0 0
        %1916 = vmatpush1.bf16.msra.mxu0 0
        %1917 = vmatprep.subr.bf16.mxu0 0
        %1918 = vmatpush1.bf16.msra.mxu0 0
        %1919 = vmatprep.subr.bf16.mxu0 0
        %1920 = vmatpush1.bf16.msra.mxu0 0
        %1921 = vmatprep.subr.bf16.mxu0 0
        %1922 = vmatpush1.bf16.msra.mxu0 0
        %1923 = vmatprep.subr.bf16.mxu0 0
        %1924 = vmatpush1.bf16.msra.mxu0 0
        %1925 = vmatprep.subr.bf16.mxu0 0
        %1926 = vmatpush1.bf16.msra.mxu0 0
        %1927 = vmatprep.subr.bf16.mxu0 0
        %1928 = vmatpush1.bf16.msra.mxu0 0
        %1929 = vmatprep.mubr.bf16.mxu0 0
        %1930 = vmatmul.mubr.bf16.gmra.mrb[0].mxu0 %v1850
        %v1931 = vpop.f32.mrb[0].mxu0
        %v1932 = vadd.f32 0.0, %v1931
        %v1933 = vpop.f32.mrb[0].mxu0
        %v1934 = vpop.f32.mrb[0].mxu0
        %v1935 = vadd.f32 0.0, %v1934
        %v1936 = vpop.f32.mrb[0].mxu0
        %1937 = vmatprep.mubr.bf16.mxu0 0
        %1938 = vmatmul.mubr.bf16.gmra.mrb[0].mxu0 %v1853
        %v1939 = vpop.f32.mrb[0].mxu0
        %v1940 = vadd.f32 0.0, %v1939
        %v1941 = vpop.f32.mrb[0].mxu0
        %v1942 = vpop.f32.mrb[0].mxu0
        %v1943 = vadd.f32 0.0, %v1942
        %v1944 = vpop.f32.mrb[0].mxu0
        %1945 = vmatprep.mubr.bf16.mxu0 0
        %1946 = vmatmul.mubr.bf16.gmra.mrb[0].mxu0 %v1856
        %v1947 = vpop.f32.mrb[0].mxu0
        %v1948 = vadd.f32 0.0, %v1947
        %v1949 = vpop.f32.mrb[0].mxu0
        %v1950 = vpop.f32.mrb[0].mxu0
        %v1951 = vadd.f32 0.0, %v1950
        %v1952 = vpop.f32.mrb[0].mxu0
        %1953 = vmatprep.mubr.bf16.mxu0 0
        %1954 = vmatmul.mubr.bf16.gmra.mrb[0].mxu0 %v1859
        %v1955 = vpop.f32.mrb[0].mxu0
        %v1956 = vadd.f32 0.0, %v1955
        %v1957 = vpop.f32.mrb[0].mxu0
        %v1958 = vpop.f32.mrb[0].mxu0
        %v1959 = vadd.f32 0.0, %v1958
        %v1960 = vpop.f32.mrb[0].mxu0
        %1961 = vmatprep.mubr.bf16.mxu0 0
        %1962 = vmatmul.mubr.bf16.gmra.mrb[0].mxu0 %v1862
        %v1963 = vpop.f32.mrb[0].mxu0
        %v1964 = vadd.f32 0.0, %v1963
        %v1965 = vpop.f32.mrb[0].mxu0
        %v1966 = vpop.f32.mrb[0].mxu0
        %v1967 = vadd.f32 0.0, %v1966
        %v1968 = vpop.f32.mrb[0].mxu0
        %1969 = vmatprep.mubr.bf16.mxu0 0
        %1970 = vmatmul.mubr.bf16.gmra.mrb[0].mxu0 %v1865
        %v1971 = vpop.f32.mrb[0].mxu0
        %v1972 = vadd.f32 0.0, %v1971
        %v1973 = vpop.f32.mrb[0].mxu0
        %v1974 = vpop.f32.mrb[0].mxu0
        %v1975 = vadd.f32 0.0, %v1974
        %v1976 = vpop.f32.mrb[0].mxu0
        %1977 = vmatprep.mubr.bf16.mxu0 0
        %1978 = vmatmul.mubr.bf16.gmra.mrb[0].mxu0 %v1868
        %v1979 = vpop.f32.mrb[0].mxu0
        %v1980 = vadd.f32 0.0, %v1979
        %v1981 = vpop.f32.mrb[0].mxu0
        %v1982 = vpop.f32.mrb[0].mxu0
        %v1983 = vadd.f32 0.0, %v1982
        %v1984 = vpop.f32.mrb[0].mxu0
        %1985 = vmatprep.mubr.bf16.mxu0 0
        %1986 = vmatmul.mubr.bf16.gmra.mrb[0].mxu0 %v1871
        %v1987 = vpop.f32.mrb[0].mxu0
        %v1988 = vadd.f32 0.0, %v1987
        %v1989 = vpop.f32.mrb[0].mxu0
        %v1990 = vpop.f32.mrb[0].mxu0
        %v1991 = vadd.f32 0.0, %v1990
        %v1992 = vpop.f32.mrb[0].mxu0
        %1993 = vmatprep.mubr.bf16.mxu0 0
        %1994 = vmatmul.mubr.bf16.gmra.mrb[0].mxu0 %v1874
        %v1995 = vpop.f32.mrb[0].mxu0
        %v1996 = vadd.f32 0.0, %v1995
        %v1997 = vpop.f32.mrb[0].mxu0
        %v1998 = vpop.f32.mrb[0].mxu0
        %v1999 = vadd.f32 0.0, %v1998
        %v2000 = vpop.f32.mrb[0].mxu0
        %2001 = vmatprep.mubr.bf16.mxu0 0
        %2002 = vmatmul.mubr.bf16.gmra.mrb[0].mxu0 %v1877
        %v2003 = vpop.f32.mrb[0].mxu0
        %v2004 = vadd.f32 0.0, %v2003
        %v2005 = vpop.f32.mrb[0].mxu0
        %v2006 = vpop.f32.mrb[0].mxu0
        %v2007 = vadd.f32 0.0, %v2006
        %v2008 = vpop.f32.mrb[0].mxu0
        %2009 = vmatprep.mubr.bf16.mxu0 0
        %2010 = vmatmul.mubr.bf16.gmra.mrb[0].mxu0 %v1880
        %v2011 = vpop.f32.mrb[0].mxu0
        %v2012 = vadd.f32 0.0, %v2011
        %v2013 = vpop.f32.mrb[0].mxu0
        %v2014 = vpop.f32.mrb[0].mxu0
        %v2015 = vadd.f32 0.0, %v2014
        %v2016 = vpop.f32.mrb[0].mxu0
        %2017 = vmatprep.mubr.bf16.mxu0 0
        %2018 = vmatmul.mubr.bf16.gmra.mrb[0].mxu0 %v1883
        %v2019 = vpop.f32.mrb[0].mxu0
        %v2020 = vadd.f32 0.0, %v2019
        %v2021 = vpop.f32.mrb[0].mxu0
        %v2022 = vpop.f32.mrb[0].mxu0
        %v2023 = vadd.f32 0.0, %v2022
        %v2024 = vpop.f32.mrb[0].mxu0
        %2025 = vmatprep.mubr.bf16.mxu0 0
        %2026 = vmatmul.mubr.bf16.gmra.mrb[0].mxu0 %v1886
        %v2027 = vpop.f32.mrb[0].mxu0
        %v2028 = vadd.f32 0.0, %v2027
        %v2029 = vpop.f32.mrb[0].mxu0
        %v2030 = vpop.f32.mrb[0].mxu0
        %v2031 = vadd.f32 0.0, %v2030
        %v2032 = vpop.f32.mrb[0].mxu0
        %2033 = vmatprep.mubr.bf16.mxu0 0
        %2034 = vmatmul.mubr.bf16.gmra.mrb[0].mxu0 %v1889
        %v2035 = vpop.f32.mrb[0].mxu0
        %v2036 = vadd.f32 0.0, %v2035
        %v2037 = vpop.f32.mrb[0].mxu0
        %v2038 = vpop.f32.mrb[0].mxu0
        %v2039 = vadd.f32 0.0, %v2038
        %v2040 = vpop.f32.mrb[0].mxu0
        %2041 = vmatprep.mubr.bf16.mxu0 0
        %2042 = vmatmul.mubr.bf16.gmra.mrb[0].mxu0 %v1892
        %v2043 = vpop.f32.mrb[0].mxu0
        %v2044 = vadd.f32 0.0, %v2043
        %v2045 = vpop.f32.mrb[0].mxu0
        %v2046 = vpop.f32.mrb[0].mxu0
        %v2047 = vadd.f32 0.0, %v2046
        %v2048 = vpop.f32.mrb[0].mxu0
        %2049 = vmatprep.mubr.bf16.mxu0 0
        %2050 = vmatmul.mubr.bf16.gmra.mrb[0].mxu0 %v1895
        %v2051 = vpop.f32.mrb[0].mxu0
        %v2052 = vadd.f32 0.0, %v2051
        %v2053 = vpop.f32.mrb[0].mxu0
        %v2054 = vpop.f32.mrb[0].mxu0
        %v2055 = vadd.f32 0.0, %v2054
        %v2056 = vpop.f32.mrb[0].mxu0
        %2057 = vdwg.mxu0
        %v2058 = vadd.f32 %v1753, %v1932
        %v2059 = vadd.f32 %v1754, %v1935
        %v2060 = vadd.f32 %v1755, %v1940
        %v2061 = vadd.f32 %v1756, %v1943
        %v2062 = vadd.f32 %v1757, %v1948
        %v2063 = vadd.f32 %v1758, %v1951
        %v2064 = vadd.f32 %v1759, %v1956
        %v2065 = vadd.f32 %v1760, %v1959
        %v2066 = vadd.f32 %v1761, %v1964
        %v2067 = vadd.f32 %v1762, %v1967
        %v2068 = vadd.f32 %v1763, %v1972
        %v2069 = vadd.f32 %v1764, %v1975
        %v2070 = vadd.f32 %v1765, %v1980
        %v2071 = vadd.f32 %v1766, %v1983
        %v2072 = vadd.f32 %v1767, %v1988
        %v2073 = vadd.f32 %v1768, %v1991
        %v2074 = vadd.f32 %v1769, %v1996
        %v2075 = vadd.f32 %v1770, %v1999
        %v2076 = vadd.f32 %v1771, %v2004
        %v2077 = vadd.f32 %v1772, %v2007
        %v2078 = vadd.f32 %v1773, %v2012
        %v2079 = vadd.f32 %v1774, %v2015
        %v2080 = vadd.f32 %v1775, %v2020
        %v2081 = vadd.f32 %v1776, %v2023
        %v2082 = vadd.f32 %v1777, %v2028
        %v2083 = vadd.f32 %v1778, %v2031
        %v2084 = vadd.f32 %v1779, %v2036
        %v2085 = vadd.f32 %v1780, %v2039
        %v2086 = vadd.f32 %v1781, %v2044
        %v2087 = vadd.f32 %v1782, %v2047
        %v2088 = vadd.f32 %v1783, %v2052
        %v2089 = vadd.f32 %v1784, %v2055
        %s2090 = scalar_lea.vmem [#allocation2], 48
        %v2091 = vld [vmem:[%s2090] sm:$0xff]
        %v2092 = vld [vmem:[%s2090 + $0x8] sm:$0xff]
        %v2093 = vld [vmem:[%s2090 + $0x18] sm:$0xff]
        %v2094 = vld [vmem:[%s2090 + $0x20] sm:$0xff]
        %v2095 = vld [vmem:[%s2090 + $0x30] sm:$0xff]
        %v2096 = vld [vmem:[%s2090 + $0x38] sm:$0xff]
        %v2097 = vld [vmem:[%s2090 + $0x48] sm:$0xff]
        %v2098 = vld [vmem:[%s2090 + $0x50] sm:$0xff]
        %v2099 = vld [vmem:[%s2090 + $0x60] sm:$0xff]
        %v2100 = vld [vmem:[%s2090 + $0x68] sm:$0xff]
        %v2101 = vld [vmem:[%s2090 + $0x78] sm:$0xff]
        %v2102 = vld [vmem:[%s2090 + $0x80] sm:$0xff]
        %v2103 = vld [vmem:[%s2090 + $0x90] sm:$0xff]
        %v2104 = vld [vmem:[%s2090 + $0x98] sm:$0xff]
        %v2105 = vld [vmem:[%s2090 + $0xa8] sm:$0xff]
        %v2106 = vld [vmem:[%s2090 + $0xb0] sm:$0xff]
        %v2107 = vld [vmem:[%s2090 + $0xc0] sm:$0xff]
        %v2108 = vld [vmem:[%s2090 + $0xc8] sm:$0xff]
        %v2109 = vld [vmem:[%s2090 + $0xd8] sm:$0xff]
        %v2110 = vld [vmem:[%s2090 + $0xe0] sm:$0xff]
        %v2111 = vld [vmem:[%s2090 + $0xf0] sm:$0xff]
        %v2112 = vld [vmem:[%s2090 + $0xf8] sm:$0xff]
        %v2113 = vld [vmem:[%s2090 + $0x108] sm:$0xff]
        %v2114 = vld [vmem:[%s2090 + $0x110] sm:$0xff]
        %v2115 = vld [vmem:[%s2090 + $0x120] sm:$0xff]
        %v2116 = vld [vmem:[%s2090 + $0x128] sm:$0xff]
        %v2117 = vld [vmem:[%s2090 + $0x138] sm:$0xff]
        %v2118 = vld [vmem:[%s2090 + $0x140] sm:$0xff]
        %v2119 = vld [vmem:[%s2090 + $0x150] sm:$0xff]
        %v2120 = vld [vmem:[%s2090 + $0x158] sm:$0xff]
        %v2121 = vld [vmem:[%s2090 + $0x168] sm:$0xff]
        %v2122 = vld [vmem:[%s2090 + $0x170] sm:$0xff]
        %v2123 = vld [vmem:[#allocation6 + $0x60] sm:$0xf]
        %v2124 = vld [vmem:[#allocation6 + $0x64] sm:$0xf]
        %v2125 = vld [vmem:[#allocation6 + $0x68] sm:$0xf]
        %v2126 = vld [vmem:[#allocation6 + $0x6c] sm:$0xf]
        %v2127 = vpack.c.bf16 %v2092, %v2091
        %v2128 = vpack.c.bf16 %v2094, %v2093
        %v2129 = vpack.c.bf16 %v2096, %v2095
        %v2130 = vpack.c.bf16 %v2098, %v2097
        %v2131 = vpack.c.bf16 %v2100, %v2099
        %v2132 = vpack.c.bf16 %v2102, %v2101
        %v2133 = vpack.c.bf16 %v2104, %v2103
        %v2134 = vpack.c.bf16 %v2106, %v2105
        %v2135 = vpack.c.bf16 %v2108, %v2107
        %v2136 = vpack.c.bf16 %v2110, %v2109
        %v2137 = vpack.c.bf16 %v2112, %v2111
        %v2138 = vpack.c.bf16 %v2114, %v2113
        %v2139 = vpack.c.bf16 %v2116, %v2115
        %v2140 = vpack.c.bf16 %v2118, %v2117
        %v2141 = vpack.c.bf16 %v2120, %v2119
        %v2142 = vpack.c.bf16 %v2122, %v2121
        %v2147 = vunpack.c.l.b16 %v2123
        %v2148 = vunpack.c.l.b16 %v2124
        %v2149 = vunpack.c.l.b16 %v2125
        %v2150 = vunpack.c.l.b16 %v2126
        %v2151 = vpack.c.b16 %v2148, %v2147
        %v2152 = vpack.c.b16 %v2150, %v2149
        %v2156 = vsel %vm217, %v2127, 0
        %v2159 = vsel %vm217, %v2128, 0
        %v2162 = vsel %vm217, %v2129, 0
        %v2165 = vsel %vm217, %v2130, 0
        %v2168 = vsel %vm217, %v2131, 0
        %v2171 = vsel %vm217, %v2132, 0
        %v2174 = vsel %vm217, %v2133, 0
        %v2177 = vsel %vm217, %v2134, 0
        %v2180 = vsel %vm217, %v2135, 0
        %v2183 = vsel %vm217, %v2136, 0
        %v2186 = vsel %vm217, %v2137, 0
        %v2189 = vsel %vm217, %v2138, 0
        %v2192 = vsel %vm217, %v2139, 0
        %v2195 = vsel %vm217, %v2140, 0
        %v2198 = vsel %vm217, %v2141, 0
        %v2201 = vsel %vm217, %v2142, 0
        %2203 = vmatprep.subr.bf16.mxu0 0
        %2204 = vmatpush1.bf16.msra.mxu0 %v2151
        %2205 = vmatprep.subr.bf16.mxu0 0
        %2206 = vmatpush1.bf16.msra.mxu0 %v2152
        %2207 = vmatprep.subr.bf16.mxu0 0
        %2208 = vmatpush1.bf16.msra.mxu0 0
        %2209 = vmatprep.subr.bf16.mxu0 0
        %2210 = vmatpush1.bf16.msra.mxu0 0
        %2211 = vmatprep.subr.bf16.mxu0 0
        %2212 = vmatpush1.bf16.msra.mxu0 0
        %2213 = vmatprep.subr.bf16.mxu0 0
        %2214 = vmatpush1.bf16.msra.mxu0 0
        %2215 = vmatprep.subr.bf16.mxu0 0
        %2216 = vmatpush1.bf16.msra.mxu0 0
        %2217 = vmatprep.subr.bf16.mxu0 0
        %2218 = vmatpush1.bf16.msra.mxu0 0
        %2219 = vmatprep.subr.bf16.mxu0 0
        %2220 = vmatpush1.bf16.msra.mxu0 0
        %2221 = vmatprep.subr.bf16.mxu0 0
        %2222 = vmatpush1.bf16.msra.mxu0 0
        %2223 = vmatprep.subr.bf16.mxu0 0
        %2224 = vmatpush1.bf16.msra.mxu0 0
        %2225 = vmatprep.subr.bf16.mxu0 0
        %2226 = vmatpush1.bf16.msra.mxu0 0
        %2227 = vmatprep.subr.bf16.mxu0 0
        %2228 = vmatpush1.bf16.msra.mxu0 0
        %2229 = vmatprep.subr.bf16.mxu0 0
        %2230 = vmatpush1.bf16.msra.mxu0 0
        %2231 = vmatprep.subr.bf16.mxu0 0
        %2232 = vmatpush1.bf16.msra.mxu0 0
        %2233 = vmatprep.subr.bf16.mxu0 0
        %2234 = vmatpush1.bf16.msra.mxu0 0
        %2235 = vmatprep.mubr.bf16.mxu0 0
        %2236 = vmatmul.mubr.bf16.gmra.mrb[0].mxu0 %v2156
        %v2237 = vpop.f32.mrb[0].mxu0
        %v2238 = vadd.f32 0.0, %v2237
        %v2239 = vpop.f32.mrb[0].mxu0
        %v2240 = vpop.f32.mrb[0].mxu0
        %v2241 = vadd.f32 0.0, %v2240
        %v2242 = vpop.f32.mrb[0].mxu0
        %2243 = vmatprep.mubr.bf16.mxu0 0
        %2244 = vmatmul.mubr.bf16.gmra.mrb[0].mxu0 %v2159
        %v2245 = vpop.f32.mrb[0].mxu0
        %v2246 = vadd.f32 0.0, %v2245
        %v2247 = vpop.f32.mrb[0].mxu0
        %v2248 = vpop.f32.mrb[0].mxu0
        %v2249 = vadd.f32 0.0, %v2248
        %v2250 = vpop.f32.mrb[0].mxu0
        %2251 = vmatprep.mubr.bf16.mxu0 0
        %2252 = vmatmul.mubr.bf16.gmra.mrb[0].mxu0 %v2162
        %v2253 = vpop.f32.mrb[0].mxu0
        %v2254 = vadd.f32 0.0, %v2253
        %v2255 = vpop.f32.mrb[0].mxu0
        %v2256 = vpop.f32.mrb[0].mxu0
        %v2257 = vadd.f32 0.0, %v2256
        %v2258 = vpop.f32.mrb[0].mxu0
        %2259 = vmatprep.mubr.bf16.mxu0 0
        %2260 = vmatmul.mubr.bf16.gmra.mrb[0].mxu0 %v2165
        %v2261 = vpop.f32.mrb[0].mxu0
        %v2262 = vadd.f32 0.0, %v2261
        %v2263 = vpop.f32.mrb[0].mxu0
        %v2264 = vpop.f32.mrb[0].mxu0
        %v2265 = vadd.f32 0.0, %v2264
        %v2266 = vpop.f32.mrb[0].mxu0
        %2267 = vmatprep.mubr.bf16.mxu0 0
        %2268 = vmatmul.mubr.bf16.gmra.mrb[0].mxu0 %v2168
        %v2269 = vpop.f32.mrb[0].mxu0
        %v2270 = vadd.f32 0.0, %v2269
        %v2271 = vpop.f32.mrb[0].mxu0
        %v2272 = vpop.f32.mrb[0].mxu0
        %v2273 = vadd.f32 0.0, %v2272
        %v2274 = vpop.f32.mrb[0].mxu0
        %2275 = vmatprep.mubr.bf16.mxu0 0
        %2276 = vmatmul.mubr.bf16.gmra.mrb[0].mxu0 %v2171
        %v2277 = vpop.f32.mrb[0].mxu0
        %v2278 = vadd.f32 0.0, %v2277
        %v2279 = vpop.f32.mrb[0].mxu0
        %v2280 = vpop.f32.mrb[0].mxu0
        %v2281 = vadd.f32 0.0, %v2280
        %v2282 = vpop.f32.mrb[0].mxu0
        %2283 = vmatprep.mubr.bf16.mxu0 0
        %2284 = vmatmul.mubr.bf16.gmra.mrb[0].mxu0 %v2174
        %v2285 = vpop.f32.mrb[0].mxu0
        %v2286 = vadd.f32 0.0, %v2285
        %v2287 = vpop.f32.mrb[0].mxu0
        %v2288 = vpop.f32.mrb[0].mxu0
        %v2289 = vadd.f32 0.0, %v2288
        %v2290 = vpop.f32.mrb[0].mxu0
        %2291 = vmatprep.mubr.bf16.mxu0 0
        %2292 = vmatmul.mubr.bf16.gmra.mrb[0].mxu0 %v2177
        %v2293 = vpop.f32.mrb[0].mxu0
        %v2294 = vadd.f32 0.0, %v2293
        %v2295 = vpop.f32.mrb[0].mxu0
        %v2296 = vpop.f32.mrb[0].mxu0
        %v2297 = vadd.f32 0.0, %v2296
        %v2298 = vpop.f32.mrb[0].mxu0
        %2299 = vmatprep.mubr.bf16.mxu0 0
        %2300 = vmatmul.mubr.bf16.gmra.mrb[0].mxu0 %v2180
        %v2301 = vpop.f32.mrb[0].mxu0
        %v2302 = vadd.f32 0.0, %v2301
        %v2303 = vpop.f32.mrb[0].mxu0
        %v2304 = vpop.f32.mrb[0].mxu0
        %v2305 = vadd.f32 0.0, %v2304
        %v2306 = vpop.f32.mrb[0].mxu0
        %2307 = vmatprep.mubr.bf16.mxu0 0
        %2308 = vmatmul.mubr.bf16.gmra.mrb[0].mxu0 %v2183
        %v2309 = vpop.f32.mrb[0].mxu0
        %v2310 = vadd.f32 0.0, %v2309
        %v2311 = vpop.f32.mrb[0].mxu0
        %v2312 = vpop.f32.mrb[0].mxu0
        %v2313 = vadd.f32 0.0, %v2312
        %v2314 = vpop.f32.mrb[0].mxu0
        %2315 = vmatprep.mubr.bf16.mxu0 0
        %2316 = vmatmul.mubr.bf16.gmra.mrb[0].mxu0 %v2186
        %v2317 = vpop.f32.mrb[0].mxu0
        %v2318 = vadd.f32 0.0, %v2317
        %v2319 = vpop.f32.mrb[0].mxu0
        %v2320 = vpop.f32.mrb[0].mxu0
        %v2321 = vadd.f32 0.0, %v2320
        %v2322 = vpop.f32.mrb[0].mxu0
        %2323 = vmatprep.mubr.bf16.mxu0 0
        %2324 = vmatmul.mubr.bf16.gmra.mrb[0].mxu0 %v2189
        %v2325 = vpop.f32.mrb[0].mxu0
        %v2326 = vadd.f32 0.0, %v2325
        %v2327 = vpop.f32.mrb[0].mxu0
        %v2328 = vpop.f32.mrb[0].mxu0
        %v2329 = vadd.f32 0.0, %v2328
        %v2330 = vpop.f32.mrb[0].mxu0
        %2331 = vmatprep.mubr.bf16.mxu0 0
        %2332 = vmatmul.mubr.bf16.gmra.mrb[0].mxu0 %v2192
        %v2333 = vpop.f32.mrb[0].mxu0
        %v2334 = vadd.f32 0.0, %v2333
        %v2335 = vpop.f32.mrb[0].mxu0
        %v2336 = vpop.f32.mrb[0].mxu0
        %v2337 = vadd.f32 0.0, %v2336
        %v2338 = vpop.f32.mrb[0].mxu0
        %2339 = vmatprep.mubr.bf16.mxu0 0
        %2340 = vmatmul.mubr.bf16.gmra.mrb[0].mxu0 %v2195
        %v2341 = vpop.f32.mrb[0].mxu0
        %v2342 = vadd.f32 0.0, %v2341
        %v2343 = vpop.f32.mrb[0].mxu0
        %v2344 = vpop.f32.mrb[0].mxu0
        %v2345 = vadd.f32 0.0, %v2344
        %v2346 = vpop.f32.mrb[0].mxu0
        %2347 = vmatprep.mubr.bf16.mxu0 0
        %2348 = vmatmul.mubr.bf16.gmra.mrb[0].mxu0 %v2198
        %v2349 = vpop.f32.mrb[0].mxu0
        %v2350 = vadd.f32 0.0, %v2349
        %v2351 = vpop.f32.mrb[0].mxu0
        %v2352 = vpop.f32.mrb[0].mxu0
        %v2353 = vadd.f32 0.0, %v2352
        %v2354 = vpop.f32.mrb[0].mxu0
        %2355 = vmatprep.mubr.bf16.mxu0 0
        %2356 = vmatmul.mubr.bf16.gmra.mrb[0].mxu0 %v2201
        %v2357 = vpop.f32.mrb[0].mxu0
        %v2358 = vadd.f32 0.0, %v2357
        %v2359 = vpop.f32.mrb[0].mxu0
        %v2360 = vpop.f32.mrb[0].mxu0
        %v2361 = vadd.f32 0.0, %v2360
        %v2362 = vpop.f32.mrb[0].mxu0
        %2363 = vdwg.mxu0
        %v2364 = vadd.f32 %v2058, %v2238
        %v2365 = vadd.f32 %v2059, %v2241
        %v2366 = vadd.f32 %v2060, %v2246
        %v2367 = vadd.f32 %v2061, %v2249
        %v2368 = vadd.f32 %v2062, %v2254
        %v2369 = vadd.f32 %v2063, %v2257
        %v2370 = vadd.f32 %v2064, %v2262
        %v2371 = vadd.f32 %v2065, %v2265
        %v2372 = vadd.f32 %v2066, %v2270
        %v2373 = vadd.f32 %v2067, %v2273
        %v2374 = vadd.f32 %v2068, %v2278
        %v2375 = vadd.f32 %v2069, %v2281
        %v2376 = vadd.f32 %v2070, %v2286
        %v2377 = vadd.f32 %v2071, %v2289
        %v2378 = vadd.f32 %v2072, %v2294
        %v2379 = vadd.f32 %v2073, %v2297
        %v2380 = vadd.f32 %v2074, %v2302
        %v2381 = vadd.f32 %v2075, %v2305
        %v2382 = vadd.f32 %v2076, %v2310
        %v2383 = vadd.f32 %v2077, %v2313
        %v2384 = vadd.f32 %v2078, %v2318
        %v2385 = vadd.f32 %v2079, %v2321
        %v2386 = vadd.f32 %v2080, %v2326
        %v2387 = vadd.f32 %v2081, %v2329
        %v2388 = vadd.f32 %v2082, %v2334
        %v2389 = vadd.f32 %v2083, %v2337
        %v2390 = vadd.f32 %v2084, %v2342
        %v2391 = vadd.f32 %v2085, %v2345
        %v2392 = vadd.f32 %v2086, %v2350
        %v2393 = vadd.f32 %v2087, %v2353
        %v2394 = vadd.f32 %v2088, %v2358
        %v2395 = vadd.f32 %v2089, %v2361
        %v2396 = vld [vmem:[%s2090 + $0x1] sm:$0xff]
        %v2397 = vld [vmem:[%s2090 + $0x9] sm:$0xff]
        %v2398 = vld [vmem:[%s2090 + $0x19] sm:$0xff]
        %v2399 = vld [vmem:[%s2090 + $0x21] sm:$0xff]
        %v2400 = vld [vmem:[%s2090 + $0x31] sm:$0xff]
        %v2401 = vld [vmem:[%s2090 + $0x39] sm:$0xff]
        %v2402 = vld [vmem:[%s2090 + $0x49] sm:$0xff]
        %v2403 = vld [vmem:[%s2090 + $0x51] sm:$0xff]
        %v2404 = vld [vmem:[%s2090 + $0x61] sm:$0xff]
        %v2405 = vld [vmem:[%s2090 + $0x69] sm:$0xff]
        %v2406 = vld [vmem:[%s2090 + $0x79] sm:$0xff]
        %v2407 = vld [vmem:[%s2090 + $0x81] sm:$0xff]
        %v2408 = vld [vmem:[%s2090 + $0x91] sm:$0xff]
        %v2409 = vld [vmem:[%s2090 + $0x99] sm:$0xff]
        %v2410 = vld [vmem:[%s2090 + $0xa9] sm:$0xff]
        %v2411 = vld [vmem:[%s2090 + $0xb1] sm:$0xff]
        %v2412 = vld [vmem:[%s2090 + $0xc1] sm:$0xff]
        %v2413 = vld [vmem:[%s2090 + $0xc9] sm:$0xff]
        %v2414 = vld [vmem:[%s2090 + $0xd9] sm:$0xff]
        %v2415 = vld [vmem:[%s2090 + $0xe1] sm:$0xff]
        %v2416 = vld [vmem:[%s2090 + $0xf1] sm:$0xff]
        %v2417 = vld [vmem:[%s2090 + $0xf9] sm:$0xff]
        %v2418 = vld [vmem:[%s2090 + $0x109] sm:$0xff]
        %v2419 = vld [vmem:[%s2090 + $0x111] sm:$0xff]
        %v2420 = vld [vmem:[%s2090 + $0x121] sm:$0xff]
        %v2421 = vld [vmem:[%s2090 + $0x129] sm:$0xff]
        %v2422 = vld [vmem:[%s2090 + $0x139] sm:$0xff]
        %v2423 = vld [vmem:[%s2090 + $0x141] sm:$0xff]
        %v2424 = vld [vmem:[%s2090 + $0x151] sm:$0xff]
        %v2425 = vld [vmem:[%s2090 + $0x159] sm:$0xff]
        %v2426 = vld [vmem:[%s2090 + $0x169] sm:$0xff]
        %v2427 = vld [vmem:[%s2090 + $0x171] sm:$0xff]
        %v2428 = vld [vmem:[#allocation6 + $0x70] sm:$0xf]
        %v2429 = vld [vmem:[#allocation6 + $0x74] sm:$0xf]
        %v2430 = vld [vmem:[#allocation6 + $0x78] sm:$0xf]
        %v2431 = vld [vmem:[#allocation6 + $0x7c] sm:$0xf]
        %v2432 = vpack.c.bf16 %v2397, %v2396
        %v2433 = vpack.c.bf16 %v2399, %v2398
        %v2434 = vpack.c.bf16 %v2401, %v2400
        %v2435 = vpack.c.bf16 %v2403, %v2402
        %v2436 = vpack.c.bf16 %v2405, %v2404
        %v2437 = vpack.c.bf16 %v2407, %v2406
        %v2438 = vpack.c.bf16 %v2409, %v2408
        %v2439 = vpack.c.bf16 %v2411, %v2410
        %v2440 = vpack.c.bf16 %v2413, %v2412
        %v2441 = vpack.c.bf16 %v2415, %v2414
        %v2442 = vpack.c.bf16 %v2417, %v2416
        %v2443 = vpack.c.bf16 %v2419, %v2418
        %v2444 = vpack.c.bf16 %v2421, %v2420
        %v2445 = vpack.c.bf16 %v2423, %v2422
        %v2446 = vpack.c.bf16 %v2425, %v2424
        %v2447 = vpack.c.bf16 %v2427, %v2426
        %v2452 = vunpack.c.l.b16 %v2428
        %v2453 = vunpack.c.l.b16 %v2429
        %v2454 = vunpack.c.l.b16 %v2430
        %v2455 = vunpack.c.l.b16 %v2431
        %v2456 = vpack.c.b16 %v2453, %v2452
        %v2457 = vpack.c.b16 %v2455, %v2454
        %v2461 = vsel %vm217, %v2432, 0
        %v2464 = vsel %vm217, %v2433, 0
        %v2467 = vsel %vm217, %v2434, 0
        %v2470 = vsel %vm217, %v2435, 0
        %v2473 = vsel %vm217, %v2436, 0
        %v2476 = vsel %vm217, %v2437, 0
        %v2479 = vsel %vm217, %v2438, 0
        %v2482 = vsel %vm217, %v2439, 0
        %v2485 = vsel %vm217, %v2440, 0
        %v2488 = vsel %vm217, %v2441, 0
        %v2491 = vsel %vm217, %v2442, 0
        %v2494 = vsel %vm217, %v2443, 0
        %v2497 = vsel %vm217, %v2444, 0
        %v2500 = vsel %vm217, %v2445, 0
        %v2503 = vsel %vm217, %v2446, 0
        %v2506 = vsel %vm217, %v2447, 0
        %2508 = vmatprep.subr.bf16.mxu0 0
        %2509 = vmatpush1.bf16.msra.mxu0 %v2456
        %2510 = vmatprep.subr.bf16.mxu0 0
        %2511 = vmatpush1.bf16.msra.mxu0 %v2457
        %2512 = vmatprep.subr.bf16.mxu0 0
        %2513 = vmatpush1.bf16.msra.mxu0 0
        %2514 = vmatprep.subr.bf16.mxu0 0
        %2515 = vmatpush1.bf16.msra.mxu0 0
        %2516 = vmatprep.subr.bf16.mxu0 0
        %2517 = vmatpush1.bf16.msra.mxu0 0
        %2518 = vmatprep.subr.bf16.mxu0 0
        %2519 = vmatpush1.bf16.msra.mxu0 0
        %2520 = vmatprep.subr.bf16.mxu0 0
        %2521 = vmatpush1.bf16.msra.mxu0 0
        %2522 = vmatprep.subr.bf16.mxu0 0
        %2523 = vmatpush1.bf16.msra.mxu0 0
        %2524 = vmatprep.subr.bf16.mxu0 0
        %2525 = vmatpush1.bf16.msra.mxu0 0
        %2526 = vmatprep.subr.bf16.mxu0 0
        %2527 = vmatpush1.bf16.msra.mxu0 0
        %2528 = vmatprep.subr.bf16.mxu0 0
        %2529 = vmatpush1.bf16.msra.mxu0 0
        %2530 = vmatprep.subr.bf16.mxu0 0
        %2531 = vmatpush1.bf16.msra.mxu0 0
        %2532 = vmatprep.subr.bf16.mxu0 0
        %2533 = vmatpush1.bf16.msra.mxu0 0
        %2534 = vmatprep.subr.bf16.mxu0 0
        %2535 = vmatpush1.bf16.msra.mxu0 0
        %2536 = vmatprep.subr.bf16.mxu0 0
        %2537 = vmatpush1.bf16.msra.mxu0 0
        %2538 = vmatprep.subr.bf16.mxu0 0
        %2539 = vmatpush1.bf16.msra.mxu0 0
        %2540 = vmatprep.mubr.bf16.mxu0 0
        %2541 = vmatmul.mubr.bf16.gmra.mrb[0].mxu0 %v2461
        %v2542 = vpop.f32.mrb[0].mxu0
        %v2543 = vadd.f32 0.0, %v2542
        %v2544 = vpop.f32.mrb[0].mxu0
        %v2545 = vpop.f32.mrb[0].mxu0
        %v2546 = vadd.f32 0.0, %v2545
        %v2547 = vpop.f32.mrb[0].mxu0
        %2548 = vmatprep.mubr.bf16.mxu0 0
        %2549 = vmatmul.mubr.bf16.gmra.mrb[0].mxu0 %v2464
        %v2550 = vpop.f32.mrb[0].mxu0
        %v2551 = vadd.f32 0.0, %v2550
        %v2552 = vpop.f32.mrb[0].mxu0
        %v2553 = vpop.f32.mrb[0].mxu0
        %v2554 = vadd.f32 0.0, %v2553
        %v2555 = vpop.f32.mrb[0].mxu0
        %2556 = vmatprep.mubr.bf16.mxu0 0
        %2557 = vmatmul.mubr.bf16.gmra.mrb[0].mxu0 %v2467
        %v2558 = vpop.f32.mrb[0].mxu0
        %v2559 = vadd.f32 0.0, %v2558
        %v2560 = vpop.f32.mrb[0].mxu0
        %v2561 = vpop.f32.mrb[0].mxu0
        %v2562 = vadd.f32 0.0, %v2561
        %v2563 = vpop.f32.mrb[0].mxu0
        %2564 = vmatprep.mubr.bf16.mxu0 0
        %2565 = vmatmul.mubr.bf16.gmra.mrb[0].mxu0 %v2470
        %v2566 = vpop.f32.mrb[0].mxu0
        %v2567 = vadd.f32 0.0, %v2566
        %v2568 = vpop.f32.mrb[0].mxu0
        %v2569 = vpop.f32.mrb[0].mxu0
        %v2570 = vadd.f32 0.0, %v2569
        %v2571 = vpop.f32.mrb[0].mxu0
        %2572 = vmatprep.mubr.bf16.mxu0 0
        %2573 = vmatmul.mubr.bf16.gmra.mrb[0].mxu0 %v2473
        %v2574 = vpop.f32.mrb[0].mxu0
        %v2575 = vadd.f32 0.0, %v2574
        %v2576 = vpop.f32.mrb[0].mxu0
        %v2577 = vpop.f32.mrb[0].mxu0
        %v2578 = vadd.f32 0.0, %v2577
        %v2579 = vpop.f32.mrb[0].mxu0
        %2580 = vmatprep.mubr.bf16.mxu0 0
        %2581 = vmatmul.mubr.bf16.gmra.mrb[0].mxu0 %v2476
        %v2582 = vpop.f32.mrb[0].mxu0
        %v2583 = vadd.f32 0.0, %v2582
        %v2584 = vpop.f32.mrb[0].mxu0
        %v2585 = vpop.f32.mrb[0].mxu0
        %v2586 = vadd.f32 0.0, %v2585
        %v2587 = vpop.f32.mrb[0].mxu0
        %2588 = vmatprep.mubr.bf16.mxu0 0
        %2589 = vmatmul.mubr.bf16.gmra.mrb[0].mxu0 %v2479
        %v2590 = vpop.f32.mrb[0].mxu0
        %v2591 = vadd.f32 0.0, %v2590
        %v2592 = vpop.f32.mrb[0].mxu0
        %v2593 = vpop.f32.mrb[0].mxu0
        %v2594 = vadd.f32 0.0, %v2593
        %v2595 = vpop.f32.mrb[0].mxu0
        %2596 = vmatprep.mubr.bf16.mxu0 0
        %2597 = vmatmul.mubr.bf16.gmra.mrb[0].mxu0 %v2482
        %v2598 = vpop.f32.mrb[0].mxu0
        %v2599 = vadd.f32 0.0, %v2598
        %v2600 = vpop.f32.mrb[0].mxu0
        %v2601 = vpop.f32.mrb[0].mxu0
        %v2602 = vadd.f32 0.0, %v2601
        %v2603 = vpop.f32.mrb[0].mxu0
        %2604 = vmatprep.mubr.bf16.mxu0 0
        %2605 = vmatmul.mubr.bf16.gmra.mrb[0].mxu0 %v2485
        %v2606 = vpop.f32.mrb[0].mxu0
        %v2607 = vadd.f32 0.0, %v2606
        %v2608 = vpop.f32.mrb[0].mxu0
        %v2609 = vpop.f32.mrb[0].mxu0
        %v2610 = vadd.f32 0.0, %v2609
        %v2611 = vpop.f32.mrb[0].mxu0
        %2612 = vmatprep.mubr.bf16.mxu0 0
        %2613 = vmatmul.mubr.bf16.gmra.mrb[0].mxu0 %v2488
        %v2614 = vpop.f32.mrb[0].mxu0
        %v2615 = vadd.f32 0.0, %v2614
        %v2616 = vpop.f32.mrb[0].mxu0
        %v2617 = vpop.f32.mrb[0].mxu0
        %v2618 = vadd.f32 0.0, %v2617
        %v2619 = vpop.f32.mrb[0].mxu0
        %2620 = vmatprep.mubr.bf16.mxu0 0
        %2621 = vmatmul.mubr.bf16.gmra.mrb[0].mxu0 %v2491
        %v2622 = vpop.f32.mrb[0].mxu0
        %v2623 = vadd.f32 0.0, %v2622
        %v2624 = vpop.f32.mrb[0].mxu0
        %v2625 = vpop.f32.mrb[0].mxu0
        %v2626 = vadd.f32 0.0, %v2625
        %v2627 = vpop.f32.mrb[0].mxu0
        %2628 = vmatprep.mubr.bf16.mxu0 0
        %2629 = vmatmul.mubr.bf16.gmra.mrb[0].mxu0 %v2494
        %v2630 = vpop.f32.mrb[0].mxu0
        %v2631 = vadd.f32 0.0, %v2630
        %v2632 = vpop.f32.mrb[0].mxu0
        %v2633 = vpop.f32.mrb[0].mxu0
        %v2634 = vadd.f32 0.0, %v2633
        %v2635 = vpop.f32.mrb[0].mxu0
        %2636 = vmatprep.mubr.bf16.mxu0 0
        %2637 = vmatmul.mubr.bf16.gmra.mrb[0].mxu0 %v2497
        %v2638 = vpop.f32.mrb[0].mxu0
        %v2639 = vadd.f32 0.0, %v2638
        %v2640 = vpop.f32.mrb[0].mxu0
        %v2641 = vpop.f32.mrb[0].mxu0
        %v2642 = vadd.f32 0.0, %v2641
        %v2643 = vpop.f32.mrb[0].mxu0
        %2644 = vmatprep.mubr.bf16.mxu0 0
        %2645 = vmatmul.mubr.bf16.gmra.mrb[0].mxu0 %v2500
        %v2646 = vpop.f32.mrb[0].mxu0
        %v2647 = vadd.f32 0.0, %v2646
        %v2648 = vpop.f32.mrb[0].mxu0
        %v2649 = vpop.f32.mrb[0].mxu0
        %v2650 = vadd.f32 0.0, %v2649
        %v2651 = vpop.f32.mrb[0].mxu0
        %2652 = vmatprep.mubr.bf16.mxu0 0
        %2653 = vmatmul.mubr.bf16.gmra.mrb[0].mxu0 %v2503
        %v2654 = vpop.f32.mrb[0].mxu0
        %v2655 = vadd.f32 0.0, %v2654
        %v2656 = vpop.f32.mrb[0].mxu0
        %v2657 = vpop.f32.mrb[0].mxu0
        %v2658 = vadd.f32 0.0, %v2657
        %v2659 = vpop.f32.mrb[0].mxu0
        %2660 = vmatprep.mubr.bf16.mxu0 0
        %2661 = vmatmul.mubr.bf16.gmra.mrb[0].mxu0 %v2506
        %v2662 = vpop.f32.mrb[0].mxu0
        %v2663 = vadd.f32 0.0, %v2662
        %v2664 = vpop.f32.mrb[0].mxu0
        %v2665 = vpop.f32.mrb[0].mxu0
        %v2666 = vadd.f32 0.0, %v2665
        %v2667 = vpop.f32.mrb[0].mxu0
        %2668 = vdwg.mxu0
        %v2669 = vadd.f32 %v2364, %v2543
        %v2670 = vadd.f32 %v2365, %v2546
        %v2671 = vadd.f32 %v2366, %v2551
        %v2672 = vadd.f32 %v2367, %v2554
        %v2673 = vadd.f32 %v2368, %v2559
        %v2674 = vadd.f32 %v2369, %v2562
        %v2675 = vadd.f32 %v2370, %v2567
        %v2676 = vadd.f32 %v2371, %v2570
        %v2677 = vadd.f32 %v2372, %v2575
        %v2678 = vadd.f32 %v2373, %v2578
        %v2679 = vadd.f32 %v2374, %v2583
        %v2680 = vadd.f32 %v2375, %v2586
        %v2681 = vadd.f32 %v2376, %v2591
        %v2682 = vadd.f32 %v2377, %v2594
        %v2683 = vadd.f32 %v2378, %v2599
        %v2684 = vadd.f32 %v2379, %v2602
        %v2685 = vadd.f32 %v2380, %v2607
        %v2686 = vadd.f32 %v2381, %v2610
        %v2687 = vadd.f32 %v2382, %v2615
        %v2688 = vadd.f32 %v2383, %v2618
        %v2689 = vadd.f32 %v2384, %v2623
        %v2690 = vadd.f32 %v2385, %v2626
        %v2691 = vadd.f32 %v2386, %v2631
        %v2692 = vadd.f32 %v2387, %v2634
        %v2693 = vadd.f32 %v2388, %v2639
        %v2694 = vadd.f32 %v2389, %v2642
        %v2695 = vadd.f32 %v2390, %v2647
        %v2696 = vadd.f32 %v2391, %v2650
        %v2697 = vadd.f32 %v2392, %v2655
        %v2698 = vadd.f32 %v2393, %v2658
        %v2699 = vadd.f32 %v2394, %v2663
        %v2700 = vadd.f32 %v2395, %v2666
        %v2701 = vld [vmem:[%s2090 + $0x2] sm:$0xff]
        %v2702 = vld [vmem:[%s2090 + $0xa] sm:$0xff]
        %v2703 = vld [vmem:[%s2090 + $0x1a] sm:$0xff]
        %v2704 = vld [vmem:[%s2090 + $0x22] sm:$0xff]
        %v2705 = vld [vmem:[%s2090 + $0x32] sm:$0xff]
        %v2706 = vld [vmem:[%s2090 + $0x3a] sm:$0xff]
        %v2707 = vld [vmem:[%s2090 + $0x4a] sm:$0xff]
        %v2708 = vld [vmem:[%s2090 + $0x52] sm:$0xff]
        %v2709 = vld [vmem:[%s2090 + $0x62] sm:$0xff]
        %v2710 = vld [vmem:[%s2090 + $0x6a] sm:$0xff]
        %v2711 = vld [vmem:[%s2090 + $0x7a] sm:$0xff]
        %v2712 = vld [vmem:[%s2090 + $0x82] sm:$0xff]
        %v2713 = vld [vmem:[%s2090 + $0x92] sm:$0xff]
        %v2714 = vld [vmem:[%s2090 + $0x9a] sm:$0xff]
        %v2715 = vld [vmem:[%s2090 + $0xaa] sm:$0xff]
        %v2716 = vld [vmem:[%s2090 + $0xb2] sm:$0xff]
        %v2717 = vld [vmem:[%s2090 + $0xc2] sm:$0xff]
        %v2718 = vld [vmem:[%s2090 + $0xca] sm:$0xff]
        %v2719 = vld [vmem:[%s2090 + $0xda] sm:$0xff]
        %v2720 = vld [vmem:[%s2090 + $0xe2] sm:$0xff]
        %v2721 = vld [vmem:[%s2090 + $0xf2] sm:$0xff]
        %v2722 = vld [vmem:[%s2090 + $0xfa] sm:$0xff]
        %v2723 = vld [vmem:[%s2090 + $0x10a] sm:$0xff]
        %v2724 = vld [vmem:[%s2090 + $0x112] sm:$0xff]
        %v2725 = vld [vmem:[%s2090 + $0x122] sm:$0xff]
        %v2726 = vld [vmem:[%s2090 + $0x12a] sm:$0xff]
        %v2727 = vld [vmem:[%s2090 + $0x13a] sm:$0xff]
        %v2728 = vld [vmem:[%s2090 + $0x142] sm:$0xff]
        %v2729 = vld [vmem:[%s2090 + $0x152] sm:$0xff]
        %v2730 = vld [vmem:[%s2090 + $0x15a] sm:$0xff]
        %v2731 = vld [vmem:[%s2090 + $0x16a] sm:$0xff]
        %v2732 = vld [vmem:[%s2090 + $0x172] sm:$0xff]
        %v2733 = vld [vmem:[#allocation6 + $0x80] sm:$0xf]
        %v2734 = vld [vmem:[#allocation6 + $0x84] sm:$0xf]
        %v2735 = vld [vmem:[#allocation6 + $0x88] sm:$0xf]
        %v2736 = vld [vmem:[#allocation6 + $0x8c] sm:$0xf]
        %v2737 = vpack.c.bf16 %v2702, %v2701
        %v2738 = vpack.c.bf16 %v2704, %v2703
        %v2739 = vpack.c.bf16 %v2706, %v2705
        %v2740 = vpack.c.bf16 %v2708, %v2707
        %v2741 = vpack.c.bf16 %v2710, %v2709
        %v2742 = vpack.c.bf16 %v2712, %v2711
        %v2743 = vpack.c.bf16 %v2714, %v2713
        %v2744 = vpack.c.bf16 %v2716, %v2715
        %v2745 = vpack.c.bf16 %v2718, %v2717
        %v2746 = vpack.c.bf16 %v2720, %v2719
        %v2747 = vpack.c.bf16 %v2722, %v2721
        %v2748 = vpack.c.bf16 %v2724, %v2723
        %v2749 = vpack.c.bf16 %v2726, %v2725
        %v2750 = vpack.c.bf16 %v2728, %v2727
        %v2751 = vpack.c.bf16 %v2730, %v2729
        %v2752 = vpack.c.bf16 %v2732, %v2731
        %v2757 = vunpack.c.l.b16 %v2733
        %v2758 = vunpack.c.l.b16 %v2734
        %v2759 = vunpack.c.l.b16 %v2735
        %v2760 = vunpack.c.l.b16 %v2736
        %v2761 = vpack.c.b16 %v2758, %v2757
        %v2762 = vpack.c.b16 %v2760, %v2759
        %v2766 = vsel %vm217, %v2737, 0
        %v2769 = vsel %vm217, %v2738, 0
        %v2772 = vsel %vm217, %v2739, 0
        %v2775 = vsel %vm217, %v2740, 0
        %v2778 = vsel %vm217, %v2741, 0
        %v2781 = vsel %vm217, %v2742, 0
        %v2784 = vsel %vm217, %v2743, 0
        %v2787 = vsel %vm217, %v2744, 0
        %v2790 = vsel %vm217, %v2745, 0
        %v2793 = vsel %vm217, %v2746, 0
        %v2796 = vsel %vm217, %v2747, 0
        %v2799 = vsel %vm217, %v2748, 0
        %v2802 = vsel %vm217, %v2749, 0
        %v2805 = vsel %vm217, %v2750, 0
        %v2808 = vsel %vm217, %v2751, 0
        %v2811 = vsel %vm217, %v2752, 0
        %2813 = vmatprep.subr.bf16.mxu0 0
        %2814 = vmatpush1.bf16.msra.mxu0 %v2761
        %2815 = vmatprep.subr.bf16.mxu0 0
        %2816 = vmatpush1.bf16.msra.mxu0 %v2762
        %2817 = vmatprep.subr.bf16.mxu0 0
        %2818 = vmatpush1.bf16.msra.mxu0 0
        %2819 = vmatprep.subr.bf16.mxu0 0
        %2820 = vmatpush1.bf16.msra.mxu0 0
        %2821 = vmatprep.subr.bf16.mxu0 0
        %2822 = vmatpush1.bf16.msra.mxu0 0
        %2823 = vmatprep.subr.bf16.mxu0 0
        %2824 = vmatpush1.bf16.msra.mxu0 0
        %2825 = vmatprep.subr.bf16.mxu0 0
        %2826 = vmatpush1.bf16.msra.mxu0 0
        %2827 = vmatprep.subr.bf16.mxu0 0
        %2828 = vmatpush1.bf16.msra.mxu0 0
        %2829 = vmatprep.subr.bf16.mxu0 0
        %2830 = vmatpush1.bf16.msra.mxu0 0
        %2831 = vmatprep.subr.bf16.mxu0 0
        %2832 = vmatpush1.bf16.msra.mxu0 0
        %2833 = vmatprep.subr.bf16.mxu0 0
        %2834 = vmatpush1.bf16.msra.mxu0 0
        %2835 = vmatprep.subr.bf16.mxu0 0
        %2836 = vmatpush1.bf16.msra.mxu0 0
        %2837 = vmatprep.subr.bf16.mxu0 0
        %2838 = vmatpush1.bf16.msra.mxu0 0
        %2839 = vmatprep.subr.bf16.mxu0 0
        %2840 = vmatpush1.bf16.msra.mxu0 0
        %2841 = vmatprep.subr.bf16.mxu0 0
        %2842 = vmatpush1.bf16.msra.mxu0 0
        %2843 = vmatprep.subr.bf16.mxu0 0
        %2844 = vmatpush1.bf16.msra.mxu0 0
        %2845 = vmatprep.mubr.bf16.mxu0 0
        %2846 = vmatmul.mubr.bf16.gmra.mrb[0].mxu0 %v2766
        %v2847 = vpop.f32.mrb[0].mxu0
        %v2848 = vadd.f32 0.0, %v2847
        %v2849 = vpop.f32.mrb[0].mxu0
        %v2850 = vpop.f32.mrb[0].mxu0
        %v2851 = vadd.f32 0.0, %v2850
        %v2852 = vpop.f32.mrb[0].mxu0
        %2853 = vmatprep.mubr.bf16.mxu0 0
        %2854 = vmatmul.mubr.bf16.gmra.mrb[0].mxu0 %v2769
        %v2855 = vpop.f32.mrb[0].mxu0
        %v2856 = vadd.f32 0.0, %v2855
        %v2857 = vpop.f32.mrb[0].mxu0
        %v2858 = vpop.f32.mrb[0].mxu0
        %v2859 = vadd.f32 0.0, %v2858
        %v2860 = vpop.f32.mrb[0].mxu0
        %2861 = vmatprep.mubr.bf16.mxu0 0
        %2862 = vmatmul.mubr.bf16.gmra.mrb[0].mxu0 %v2772
        %v2863 = vpop.f32.mrb[0].mxu0
        %v2864 = vadd.f32 0.0, %v2863
        %v2865 = vpop.f32.mrb[0].mxu0
        %v2866 = vpop.f32.mrb[0].mxu0
        %v2867 = vadd.f32 0.0, %v2866
        %v2868 = vpop.f32.mrb[0].mxu0
        %2869 = vmatprep.mubr.bf16.mxu0 0
        %2870 = vmatmul.mubr.bf16.gmra.mrb[0].mxu0 %v2775
        %v2871 = vpop.f32.mrb[0].mxu0
        %v2872 = vadd.f32 0.0, %v2871
        %v2873 = vpop.f32.mrb[0].mxu0
        %v2874 = vpop.f32.mrb[0].mxu0
        %v2875 = vadd.f32 0.0, %v2874
        %v2876 = vpop.f32.mrb[0].mxu0
        %2877 = vmatprep.mubr.bf16.mxu0 0
        %2878 = vmatmul.mubr.bf16.gmra.mrb[0].mxu0 %v2778
        %v2879 = vpop.f32.mrb[0].mxu0
        %v2880 = vadd.f32 0.0, %v2879
        %v2881 = vpop.f32.mrb[0].mxu0
        %v2882 = vpop.f32.mrb[0].mxu0
        %v2883 = vadd.f32 0.0, %v2882
        %v2884 = vpop.f32.mrb[0].mxu0
        %2885 = vmatprep.mubr.bf16.mxu0 0
        %2886 = vmatmul.mubr.bf16.gmra.mrb[0].mxu0 %v2781
        %v2887 = vpop.f32.mrb[0].mxu0
        %v2888 = vadd.f32 0.0, %v2887
        %v2889 = vpop.f32.mrb[0].mxu0
        %v2890 = vpop.f32.mrb[0].mxu0
        %v2891 = vadd.f32 0.0, %v2890
        %v2892 = vpop.f32.mrb[0].mxu0
        %2893 = vmatprep.mubr.bf16.mxu0 0
        %2894 = vmatmul.mubr.bf16.gmra.mrb[0].mxu0 %v2784
        %v2895 = vpop.f32.mrb[0].mxu0
        %v2896 = vadd.f32 0.0, %v2895
        %v2897 = vpop.f32.mrb[0].mxu0
        %v2898 = vpop.f32.mrb[0].mxu0
        %v2899 = vadd.f32 0.0, %v2898
        %v2900 = vpop.f32.mrb[0].mxu0
        %2901 = vmatprep.mubr.bf16.mxu0 0
        %2902 = vmatmul.mubr.bf16.gmra.mrb[0].mxu0 %v2787
        %v2903 = vpop.f32.mrb[0].mxu0
        %v2904 = vadd.f32 0.0, %v2903
        %v2905 = vpop.f32.mrb[0].mxu0
        %v2906 = vpop.f32.mrb[0].mxu0
        %v2907 = vadd.f32 0.0, %v2906
        %v2908 = vpop.f32.mrb[0].mxu0
        %2909 = vmatprep.mubr.bf16.mxu0 0
        %2910 = vmatmul.mubr.bf16.gmra.mrb[0].mxu0 %v2790
        %v2911 = vpop.f32.mrb[0].mxu0
        %v2912 = vadd.f32 0.0, %v2911
        %v2913 = vpop.f32.mrb[0].mxu0
        %v2914 = vpop.f32.mrb[0].mxu0
        %v2915 = vadd.f32 0.0, %v2914
        %v2916 = vpop.f32.mrb[0].mxu0
        %2917 = vmatprep.mubr.bf16.mxu0 0
        %2918 = vmatmul.mubr.bf16.gmra.mrb[0].mxu0 %v2793
        %v2919 = vpop.f32.mrb[0].mxu0
        %v2920 = vadd.f32 0.0, %v2919
        %v2921 = vpop.f32.mrb[0].mxu0
        %v2922 = vpop.f32.mrb[0].mxu0
        %v2923 = vadd.f32 0.0, %v2922
        %v2924 = vpop.f32.mrb[0].mxu0
        %2925 = vmatprep.mubr.bf16.mxu0 0
        %2926 = vmatmul.mubr.bf16.gmra.mrb[0].mxu0 %v2796
        %v2927 = vpop.f32.mrb[0].mxu0
        %v2928 = vadd.f32 0.0, %v2927
        %v2929 = vpop.f32.mrb[0].mxu0
        %v2930 = vpop.f32.mrb[0].mxu0
        %v2931 = vadd.f32 0.0, %v2930
        %v2932 = vpop.f32.mrb[0].mxu0
        %2933 = vmatprep.mubr.bf16.mxu0 0
        %2934 = vmatmul.mubr.bf16.gmra.mrb[0].mxu0 %v2799
        %v2935 = vpop.f32.mrb[0].mxu0
        %v2936 = vadd.f32 0.0, %v2935
        %v2937 = vpop.f32.mrb[0].mxu0
        %v2938 = vpop.f32.mrb[0].mxu0
        %v2939 = vadd.f32 0.0, %v2938
        %v2940 = vpop.f32.mrb[0].mxu0
        %2941 = vmatprep.mubr.bf16.mxu0 0
        %2942 = vmatmul.mubr.bf16.gmra.mrb[0].mxu0 %v2802
        %v2943 = vpop.f32.mrb[0].mxu0
        %v2944 = vadd.f32 0.0, %v2943
        %v2945 = vpop.f32.mrb[0].mxu0
        %v2946 = vpop.f32.mrb[0].mxu0
        %v2947 = vadd.f32 0.0, %v2946
        %v2948 = vpop.f32.mrb[0].mxu0
        %2949 = vmatprep.mubr.bf16.mxu0 0
        %2950 = vmatmul.mubr.bf16.gmra.mrb[0].mxu0 %v2805
        %v2951 = vpop.f32.mrb[0].mxu0
        %v2952 = vadd.f32 0.0, %v2951
        %v2953 = vpop.f32.mrb[0].mxu0
        %v2954 = vpop.f32.mrb[0].mxu0
        %v2955 = vadd.f32 0.0, %v2954
        %v2956 = vpop.f32.mrb[0].mxu0
        %2957 = vmatprep.mubr.bf16.mxu0 0
        %2958 = vmatmul.mubr.bf16.gmra.mrb[0].mxu0 %v2808
        %v2959 = vpop.f32.mrb[0].mxu0
        %v2960 = vadd.f32 0.0, %v2959
        %v2961 = vpop.f32.mrb[0].mxu0
        %v2962 = vpop.f32.mrb[0].mxu0
        %v2963 = vadd.f32 0.0, %v2962
        %v2964 = vpop.f32.mrb[0].mxu0
        %2965 = vmatprep.mubr.bf16.mxu0 0
        %2966 = vmatmul.mubr.bf16.gmra.mrb[0].mxu0 %v2811
        %v2967 = vpop.f32.mrb[0].mxu0
        %v2968 = vadd.f32 0.0, %v2967
        %v2969 = vpop.f32.mrb[0].mxu0
        %v2970 = vpop.f32.mrb[0].mxu0
        %v2971 = vadd.f32 0.0, %v2970
        %v2972 = vpop.f32.mrb[0].mxu0
        %2973 = vdwg.mxu0
        %v2974 = vadd.f32 %v2669, %v2848
        %v2975 = vadd.f32 %v2670, %v2851
        %v2976 = vadd.f32 %v2671, %v2856
        %v2977 = vadd.f32 %v2672, %v2859
        %v2978 = vadd.f32 %v2673, %v2864
        %v2979 = vadd.f32 %v2674, %v2867
        %v2980 = vadd.f32 %v2675, %v2872
        %v2981 = vadd.f32 %v2676, %v2875
        %v2982 = vadd.f32 %v2677, %v2880
        %v2983 = vadd.f32 %v2678, %v2883
        %v2984 = vadd.f32 %v2679, %v2888
        %v2985 = vadd.f32 %v2680, %v2891
        %v2986 = vadd.f32 %v2681, %v2896
        %v2987 = vadd.f32 %v2682, %v2899
        %v2988 = vadd.f32 %v2683, %v2904
        %v2989 = vadd.f32 %v2684, %v2907
        %v2990 = vadd.f32 %v2685, %v2912
        %v2991 = vadd.f32 %v2686, %v2915
        %v2992 = vadd.f32 %v2687, %v2920
        %v2993 = vadd.f32 %v2688, %v2923
        %v2994 = vadd.f32 %v2689, %v2928
        %v2995 = vadd.f32 %v2690, %v2931
        %v2996 = vadd.f32 %v2691, %v2936
        %v2997 = vadd.f32 %v2692, %v2939
        %v2998 = vadd.f32 %v2693, %v2944
        %v2999 = vadd.f32 %v2694, %v2947
        %v3000 = vadd.f32 %v2695, %v2952
        %v3001 = vadd.f32 %v2696, %v2955
        %v3002 = vadd.f32 %v2697, %v2960
        %v3003 = vadd.f32 %v2698, %v2963
        %v3004 = vadd.f32 %v2699, %v2968
        %v3005 = vadd.f32 %v2700, %v2971
        %v3006 = vld [vmem:[#allocation8] sm:$0x1]
        %v3008 = vlaneseq
        %v3009 = vshrl.u32 %v3008, 7
        %v3010 = vsub.s32 0, %v3009
        %v3011 = vrot.slane %v3006, %v3010
        %v3013 = vadd.f32 %v2974, %v3011
        %v3014 = vadd.f32 %v2975, %v3011
        %v3015 = vadd.f32 %v2976, %v3011
        %v3016 = vadd.f32 %v2977, %v3011
        %v3017 = vadd.f32 %v2978, %v3011
        %v3018 = vadd.f32 %v2979, %v3011
        %v3019 = vadd.f32 %v2980, %v3011
        %v3020 = vadd.f32 %v2981, %v3011
        %v3021 = vadd.f32 %v2982, %v3011
        %v3022 = vadd.f32 %v2983, %v3011
        %v3023 = vadd.f32 %v2984, %v3011
        %v3024 = vadd.f32 %v2985, %v3011
        %v3025 = vadd.f32 %v2986, %v3011
        %v3026 = vadd.f32 %v2987, %v3011
        %v3027 = vadd.f32 %v2988, %v3011
        %v3028 = vadd.f32 %v2989, %v3011
        %v3029 = vadd.f32 %v2990, %v3011
        %v3030 = vadd.f32 %v2991, %v3011
        %v3031 = vadd.f32 %v2992, %v3011
        %v3032 = vadd.f32 %v2993, %v3011
        %v3033 = vadd.f32 %v2994, %v3011
        %v3034 = vadd.f32 %v2995, %v3011
        %v3035 = vadd.f32 %v2996, %v3011
        %v3036 = vadd.f32 %v2997, %v3011
        %v3037 = vadd.f32 %v2998, %v3011
        %v3038 = vadd.f32 %v2999, %v3011
        %v3039 = vadd.f32 %v3000, %v3011
        %v3040 = vadd.f32 %v3001, %v3011
        %v3041 = vadd.f32 %v3002, %v3011
        %v3042 = vadd.f32 %v3003, %v3011
        %v3043 = vadd.f32 %v3004, %v3011
        %v3044 = vadd.f32 %v3005, %v3011
        %vm3045 = vcmask 97280
        %3046 = vst.msk [vmem:[%s215] sm:$0xff] %vm3045, %v3013
        %3047 = vst.msk [vmem:[%s215 + $0x8] sm:$0xff] %vm3045, %v3014
        %3048 = vst.msk [vmem:[%s215 + $0x10] sm:$0xff] %vm3045, %v3015
        %3049 = vst.msk [vmem:[%s215 + $0x18] sm:$0xff] %vm3045, %v3016
        %3050 = vst.msk [vmem:[%s215 + $0x20] sm:$0xff] %vm3045, %v3017
        %3051 = vst.msk [vmem:[%s215 + $0x28] sm:$0xff] %vm3045, %v3018
        %3052 = vst.msk [vmem:[%s215 + $0x30] sm:$0xff] %vm3045, %v3019
        %3053 = vst.msk [vmem:[%s215 + $0x38] sm:$0xff] %vm3045, %v3020
        %3054 = vst.msk [vmem:[%s215 + $0x40] sm:$0xff] %vm3045, %v3021
        %3055 = vst.msk [vmem:[%s215 + $0x48] sm:$0xff] %vm3045, %v3022
        %3056 = vst.msk [vmem:[%s215 + $0x50] sm:$0xff] %vm3045, %v3023
        %3057 = vst.msk [vmem:[%s215 + $0x58] sm:$0xff] %vm3045, %v3024
        %3058 = vst.msk [vmem:[%s215 + $0x60] sm:$0xff] %vm3045, %v3025
        %3059 = vst.msk [vmem:[%s215 + $0x68] sm:$0xff] %vm3045, %v3026
        %3060 = vst.msk [vmem:[%s215 + $0x70] sm:$0xff] %vm3045, %v3027
        %3061 = vst.msk [vmem:[%s215 + $0x78] sm:$0xff] %vm3045, %v3028
        %3062 = vst.msk [vmem:[%s215 + $0x80] sm:$0xff] %vm3045, %v3029
        %3063 = vst.msk [vmem:[%s215 + $0x88] sm:$0xff] %vm3045, %v3030
        %3064 = vst.msk [vmem:[%s215 + $0x90] sm:$0xff] %vm3045, %v3031
        %3065 = vst.msk [vmem:[%s215 + $0x98] sm:$0xff] %vm3045, %v3032
        %3066 = vst.msk [vmem:[%s215 + $0xa0] sm:$0xff] %vm3045, %v3033
        %3067 = vst.msk [vmem:[%s215 + $0xa8] sm:$0xff] %vm3045, %v3034
        %3068 = vst.msk [vmem:[%s215 + $0xb0] sm:$0xff] %vm3045, %v3035
        %3069 = vst.msk [vmem:[%s215 + $0xb8] sm:$0xff] %vm3045, %v3036
        %3070 = vst.msk [vmem:[%s215 + $0xc0] sm:$0xff] %vm3045, %v3037
        %3071 = vst.msk [vmem:[%s215 + $0xc8] sm:$0xff] %vm3045, %v3038
        %3072 = vst.msk [vmem:[%s215 + $0xd0] sm:$0xff] %vm3045, %v3039
        %3073 = vst.msk [vmem:[%s215 + $0xd8] sm:$0xff] %vm3045, %v3040
        %3074 = vst.msk [vmem:[%s215 + $0xe0] sm:$0xff] %vm3045, %v3041
        %3075 = vst.msk [vmem:[%s215 + $0xe8] sm:$0xff] %vm3045, %v3042
        %3076 = vst.msk [vmem:[%s215 + $0xf0] sm:$0xff] %vm3045, %v3043
        %3077 = vst.msk [vmem:[%s215 + $0xf8] sm:$0xff] %vm3045, %v3044
        %s3078 = sand.u32 %s97, 1
        %s3079 = scalar_lea.sflag [#allocation5], %s3078
        %s3080 = sand.u32 %s97, 1
        %s3081 = smul.addr %s3080, 256
        %s3082 = scalar_lea.vmem [#allocation9], %s3081
        // Predicated region
        $region45: #{decoder_forward.7} parent=31 // pred_check
          %p3083 = pneg %p107
        $region46: #{decoder_forward.7} parent=31 // pred_check_branch
          %3085 = sbr.rel (%p3083) target = $region48
        $region47: #{decoder_forward.7} parent=31 // pred_region
          %s3087 = ssub.s32 4096, 4096
          %3088 = vsyncadd %s3079, %s3087
          %s3089 = smul.addr %s21, 32
          %s3090 = smul.addr %s3089, 128
          %s3091 = scalar_lea.hbm %s3, %s3090
          %s3092 = sshll.u32 %s3082, 4
          %s3093 = int_to_ptr.vmem [resolvable:$true] %s3092
          %3098 = dma.vmem_to_hbm [thread:$0]  %s3093, 4096, %s3091, %s3079, 128, 128, 8
        $region48: #{decoder_forward.7} parent=31 // pred_fallthru
          _
      $region32: #{decoder_forward.7} parent=5 // pred_fallthru
        _
      %p3099 = scmp.le.s32.totalorder 2, %s16
      // Predicated region
      $region49: #{decoder_forward.7} parent=5 // pred_check
        %p3100 = pneg %p3099
      $region50: #{decoder_forward.7} parent=5 // pred_check_branch
        %3102 = sbr.rel (%p3100) target = $region52
      $region51: #{decoder_forward.7} parent=5 // pred_region
        %s3103 = ssub.s32 %s16, 2
        // Predicated region
        $region53: #{decoder_forward.7} parent=51 // pred_check
          %p3104 = pneg %p113
        $region54: #{decoder_forward.7} parent=51 // pred_check_branch
          %3106 = sbr.rel (%p3104) target = $region56
        $region55: #{decoder_forward.7} parent=51 // pred_region
          %s3107 = sand.u32 %s98, 1
          %s3108 = scalar_lea.sflag [#allocation5], %s3107
          %s3109 = sand.u32 %s98, 1
          %s3110 = smul.addr %s3109, 256
          %s3111 = scalar_lea.vmem [#allocation9], %s3110
          %3112 = dma.done %s3108, 4096
        $region56: #{decoder_forward.7} parent=51 // pred_fallthru
          _
      $region52: #{decoder_forward.7} parent=5 // pred_fallthru
        _
    $region6: #{decoder_forward.7} parent=1 // loop_footer
      %s20 = sadd.s32 1, %s16
    $region7: #{decoder_forward.7} parent=1 // loop_footer_branch
      %15 = sbr.rel target = $region3
    $region8: #{decoder_forward.7} parent=1 // loop_exit
      _
    %3113 = vsyncpa [#allocation4], 1
    %s3114 = scalar_lea.sflag [#allocation4], 1
    %3115 = vsyncpa %s3114, 1
    %3116 = vsyncpa [#allocation7], 1
    %3117 = vsyncpa [#allocation5], 1
    %s3118 = scalar_lea.sflag [#allocation5], 1
    %3119 = vsyncpa %s3118, 1

</llo_original>
